<compile_context>
chip_gen: v5e
topology: v5e:2x2
jax: 0.10.0
libtpu: 0.0.40
codegen_flags: <defaults>
</compile_context>

<pallas_src>
import functools

import jax
import jax.numpy as jnp
from jax.experimental import pallas as pl
from jax.experimental.pallas import tpu as pltpu

_LANE = 128
_SUB = 8                      # sublane chunk: one f32 vreg per slab


def _round_up(x, m):
    return ((x + m - 1) // m) * m


def _treedeliver_kernel(alpha_ref, w_ref, g_ref, a_ref, o_ref, *, n, din, edim):
    """Processes one (features, tile_rows, 128) SoA slab of the B*T axis.

    g_ref: (n*din,  tr, 128) graph      (feature = node*din + d)
    a_ref: (n*n,    tr, 128) adjacency  (feature = i*n + j)
    o_ref: (n*edim, tr, 128) output     (feature = node*edim + e)
    w_ref: (edim*din,) SMEM  flattened nn.Linear weight (row-major (E, Din))
    alpha_ref: (1,)    SMEM  PReLU slope
    """
    alpha = alpha_ref[0]
    # Hoist the tiny Linear weight into scalars once (keeps the scalar slots
    # clear inside the fully unrolled per-node output loops).
    w = [w_ref[k] for k in range(edim * din)]

    def prelu(x):
        return jnp.where(x >= 0, x, alpha * x)

    tr = g_ref.shape[1]
    num_chunks = tr // _SUB

    def emit_outputs(i, upd, rows):
        # Linear (E, Din) applied to upd_i + PReLU, stored straight out.
        for e in range(edim):
            acc = upd[0] * w[e * din]
            for d in range(1, din):
                acc = acc + upd[d] * w[e * din + d]
            o_ref[i * edim + e, rows, :] = prelu(acc)

    def chunk_body(c):
        base = pl.multiple_of(c * _SUB, _SUB)
        rows = pl.ds(base, _SUB)

        # Graph slabs for this chunk: n*din vregs, live through the chunk.
        G = [g_ref[k, rows, :] for k in range(n * din)]

        if n <= 2:
            # out = prelu((A @ G) @ W^T); stream adjacency row i, fuse per i.
            for i in range(n):
                upd = [None] * din
                for j in range(n):
                    a = a_ref[i * n + j, rows, :]
                    for d in range(din):
                        t = a * G[j * din + d]
                        upd[d] = t if upd[d] is None else upd[d] + t
                emit_outputs(i, upd, rows)
        else:
            # Phase 1: p_j = prelu((A @ G)_j), streaming adjacency row j.
            p = []
            for j in range(n):
                acc = [None] * din
                for k in range(n):
                    a = a_ref[j * n + k, rows, :]
                    for d in range(din):
                        t = a * G[k * din + d]
                        acc[d] = t if acc[d] is None else acc[d] + t
                for d in range(din):
                    p.append(prelu(acc[d]))

            # Phase 2 (fused per node i):
            #   upd_i = sum_{j!=i} A[i,j] * p_j + A[i,i] * prelu(G_i)
            # then immediately emit the E embedding outputs for node i.
            for i in range(n):
                pg_i = [prelu(G[i * din + d]) for d in range(din)]
                upd = [None] * din
                for j in range(n):
                    a = a_ref[i * n + j, rows, :]
                    src = pg_i if j == i else p[j * din:(j + 1) * din]
                    for d in range(din):
                        t = a * src[d]
                        upd[d] = t if upd[d] is None else upd[d] + t
                emit_outputs(i, upd, rows)

    pl.loop(0, num_chunks)(chunk_body)


def _forward_jax(graph, adjacency, weight, alpha):
    """Compact pure-JAX forward; used as a tiny-input (B*T < 128) fallback."""
    prelu = lambda x: jnp.where(x >= 0, x, alpha[0] * x)
    N = graph.shape[2]
    hi = jax.lax.Precision.HIGHEST
    ag = jnp.einsum('btij,btjd->btid', adjacency, graph, precision=hi)
    if N <= 2:
        upd = ag
    else:
        p = prelu(ag)
        pg = prelu(graph)
        diag = jnp.einsum('btii->bti', adjacency)[..., None]
        upd = jnp.einsum('btij,btjd->btid', adjacency, p, precision=hi) \
            + diag * (pg - p)
    return prelu(jnp.einsum('btnd,ed->btne', upd, weight, precision=hi))


def treedeliver_spatial(graph, adjacency, weight, alpha, *, tile_rows=128,
                        vmem_budget_bytes=40 << 20):
    """Pallas implementation of Treedeliver_spatial.forward (dropout=0).

    graph:     (B, T, N, Din) float32
    adjacency: (B, T, N, N)   float32
    weight:    (E, Din)       float32   (nn.Linear weight, bias=False)
    alpha:     (1,)           float32   (PReLU slope)
    returns    (B, T, N, E)   float32
    """
    B, T, N, Din = graph.shape
    E = weight.shape[0]
    BT = B * T

    # Tiny inputs: padding BT up to a full 128-lane row wastes >10x work/DMA.
    if BT < _LANE:
        return _forward_jax(graph, adjacency, weight, alpha)

    # ---- tile-row selection -------------------------------------------------
    feats = N * Din + N * N + N * E
    per_row_db = 2 * _LANE * 4 * feats            # double-buffered bytes / row
    tr_cap = max(_SUB, (vmem_budget_bytes // per_row_db) // _SUB * _SUB)
    rows = -(-BT // _LANE)
    rows8 = _round_up(rows, _SUB)
    tr = min(tile_rows, tr_cap, rows8)
    # Keep >=2 grid steps when possible: enables DMA/compute overlap and lets
    # megacore (v7x: 2 TCs) split the "parallel" axis.
    if rows8 // tr < 2 and rows8 >= 2 * _SUB:
        tr = _round_up(-(-rows8 // 2), _SUB)
    rows_pad = _round_up(rows8, tr)
    bt_pad = rows_pad * _LANE

    # ---- SoA re-layout: BT -> (rows, 128) lanes, tiny feature axes leading. --
    # TODO(synk): fuse this relayout (and the inverse on the output) into the
    #             neighbouring ops, or emit natural-layout output via in-kernel
    #             XLU transposes; as standalone XLA transposes they cost extra
    #             HBM passes around the kernel.
    g2 = graph.reshape(BT, N * Din).astype(jnp.float32)
    a2 = adjacency.reshape(BT, N * N).astype(jnp.float32)
    if bt_pad != BT:
        g2 = jnp.pad(g2, ((0, bt_pad - BT), (0, 0)))
        a2 = jnp.pad(a2, ((0, bt_pad - BT), (0, 0)))
    g_soa = g2.T.reshape(N * Din, rows_pad, _LANE)
    a_soa = a2.T.reshape(N * N, rows_pad, _LANE)

    grid = (rows_pad // tr,)
    kernel = functools.partial(_treedeliver_kernel, n=N, din=Din, edim=E)

    flops_per_elem = 4 * N * N * Din + 2 * N * Din * E + 6 * N * Din + 3 * N * E
    bytes_accessed = 4 * bt_pad * feats
    db_bytes = per_row_db * tr
    vmem_limit = int(min(max(db_bytes + (8 << 20), 16 << 20), 56 << 20))

    out_soa = pl.pallas_call(
        kernel,
        out_shape=jax.ShapeDtypeStruct((N * E, rows_pad, _LANE), jnp.float32),
        grid_spec=pltpu.PrefetchScalarGridSpec(
            num_scalar_prefetch=0,
            grid=grid,
            in_specs=[
                pl.BlockSpec(memory_space=pltpu.MemorySpace.SMEM),        # alpha
                pl.BlockSpec(memory_space=pltpu.MemorySpace.SMEM),        # weight
                pl.BlockSpec((N * Din, tr, _LANE), lambda i: (0, i, 0)),  # graph
                pl.BlockSpec((N * N, tr, _LANE), lambda i: (0, i, 0)),    # adjacency
            ],
            out_specs=pl.BlockSpec((N * E, tr, _LANE), lambda i: (0, i, 0)),
        ),
        compiler_params=pltpu.CompilerParams(
            dimension_semantics=("parallel",),
            vmem_limit_bytes=vmem_limit,
        ),
        cost_estimate=pl.CostEstimate(
            flops=int(flops_per_elem * bt_pad),
            transcendentals=0,
            bytes_accessed=int(bytes_accessed)),
    )(alpha, weight.reshape(-1), g_soa, a_soa)

    out = out_soa.reshape(N * E, bt_pad).T[:BT]
    return out.reshape(B, T, N, E).astype(graph.dtype)


def _reference(graph, adjacency, weight, alpha):
    """Pure-JAX replica of the PyTorch forward (with its explicit per-i loop)."""
    B, T, N, Din = graph.shape
    prelu = lambda x: jnp.where(x >= 0, x, alpha[0] * x)
    hi = jax.lax.Precision.HIGHEST
    AG = jnp.einsum('btij,btjd->btid', adjacency, graph, precision=hi)
    if N <= 2:
        updata = AG
    else:
        rows = []
        for i in range(N):
            H = AG.at[:, :, i, :].set(graph[:, :, i, :])
            H = prelu(H)
            AH = jnp.einsum('btij,btjd->btid', adjacency, H, precision=hi)
            rows.append(AH[:, :, i, :])
        updata = jnp.stack(rows, axis=2)
    feats = jnp.einsum('btnd,ed->btne', updata, weight, precision=hi)
    return prelu(feats)


if __name__ == "__main__":
    # Small deterministic example: B=4, T=1024, pednum=8, in_dims=2, embed=16.
    # B*T = 4096 -> 2 grid steps x 2 sub-chunks, no lane padding.
    B, T, N, Din, E = 4, 1024, 8, 2, 16
    key = jax.random.PRNGKey(0)
    k1, k2, k3 = jax.random.split(key, 3)

    graph = jax.random.normal(k1, (B, T, N, Din), dtype=jnp.float32)
    adjacency = jax.random.normal(k2, (B, T, N, N), dtype=jnp.float32)

    # nn.Linear(in_dims, embedding_dims, bias=False): weight (E, Din).
    weight = jax.random.normal(k3, (E, Din), dtype=jnp.float32) * 0.5
    # nn.PReLU() default init: single slope = 0.25.
    alpha = jnp.array([0.25], dtype=jnp.float32)

    out = treedeliver_spatial(graph, adjacency, weight, alpha)
    out = jax.block_until_ready(out)

    ref = _reference(graph, adjacency, weight, alpha)
    assert out.shape == (B, T, N, E)
    err = float(jnp.max(jnp.abs(out - ref)))
    assert jnp.allclose(out, ref, rtol=1e-4, atol=1e-4), f"max err {err}"

    print("KERNEL_OK")
</pallas_src>

<mosaic_0001>
module attributes {stable_mosaic.version = 11 : i64} {
  func.func @_treedeliver_kernel(%arg0: i32, %arg1: memref<1xf32, #tpu.memory_space<smem>>, %arg2: memref<32xf32, #tpu.memory_space<smem>>, %arg3: memref<16x16x128xf32, #tpu.memory_space<vmem>>, %arg4: memref<64x16x128xf32, #tpu.memory_space<vmem>>, %arg5: memref<128x16x128xf32, #tpu.memory_space<vmem>>) attributes {dimension_semantics = [#tpu.dimension_semantics<parallel>], iteration_bounds = array<i64: 2>, scalar_prefetch = 0 : i64, scratch_operands = 0 : i64, tpu.core_type = #tpu.core_type<tc>, window_params = [{transform_indices = @transform_0, window_bounds = array<i64: 1>}, {transform_indices = @transform_1, window_bounds = array<i64: 32>}, {transform_indices = @transform_2, window_bounds = array<i64: 16, 16, 128>}, {transform_indices = @transform_3, window_bounds = array<i64: 64, 16, 128>}, {transform_indices = @transform_4, window_bounds = array<i64: 128, 16, 128>}]} {
    %c0 = arith.constant 0 : index
    %0 = memref.load %arg1[%c0] : memref<1xf32, #tpu.memory_space<smem>>
    %c0_0 = arith.constant 0 : index
    %1 = memref.load %arg2[%c0_0] : memref<32xf32, #tpu.memory_space<smem>>
    %c1 = arith.constant 1 : index
    %2 = memref.load %arg2[%c1] : memref<32xf32, #tpu.memory_space<smem>>
    %c2 = arith.constant 2 : index
    %3 = memref.load %arg2[%c2] : memref<32xf32, #tpu.memory_space<smem>>
    %c3 = arith.constant 3 : index
    %4 = memref.load %arg2[%c3] : memref<32xf32, #tpu.memory_space<smem>>
    %c4 = arith.constant 4 : index
    %5 = memref.load %arg2[%c4] : memref<32xf32, #tpu.memory_space<smem>>
    %c5 = arith.constant 5 : index
    %6 = memref.load %arg2[%c5] : memref<32xf32, #tpu.memory_space<smem>>
    %c6 = arith.constant 6 : index
    %7 = memref.load %arg2[%c6] : memref<32xf32, #tpu.memory_space<smem>>
    %c7 = arith.constant 7 : index
    %8 = memref.load %arg2[%c7] : memref<32xf32, #tpu.memory_space<smem>>
    %c8 = arith.constant 8 : index
    %9 = memref.load %arg2[%c8] : memref<32xf32, #tpu.memory_space<smem>>
    %c9 = arith.constant 9 : index
    %10 = memref.load %arg2[%c9] : memref<32xf32, #tpu.memory_space<smem>>
    %c10 = arith.constant 10 : index
    %11 = memref.load %arg2[%c10] : memref<32xf32, #tpu.memory_space<smem>>
    %c11 = arith.constant 11 : index
    %12 = memref.load %arg2[%c11] : memref<32xf32, #tpu.memory_space<smem>>
    %c12 = arith.constant 12 : index
    %13 = memref.load %arg2[%c12] : memref<32xf32, #tpu.memory_space<smem>>
    %c13 = arith.constant 13 : index
    %14 = memref.load %arg2[%c13] : memref<32xf32, #tpu.memory_space<smem>>
    %c14 = arith.constant 14 : index
    %15 = memref.load %arg2[%c14] : memref<32xf32, #tpu.memory_space<smem>>
    %c15 = arith.constant 15 : index
    %16 = memref.load %arg2[%c15] : memref<32xf32, #tpu.memory_space<smem>>
    %c16 = arith.constant 16 : index
    %17 = memref.load %arg2[%c16] : memref<32xf32, #tpu.memory_space<smem>>
    %c17 = arith.constant 17 : index
    %18 = memref.load %arg2[%c17] : memref<32xf32, #tpu.memory_space<smem>>
    %c18 = arith.constant 18 : index
    %19 = memref.load %arg2[%c18] : memref<32xf32, #tpu.memory_space<smem>>
    %c19 = arith.constant 19 : index
    %20 = memref.load %arg2[%c19] : memref<32xf32, #tpu.memory_space<smem>>
    %c20 = arith.constant 20 : index
    %21 = memref.load %arg2[%c20] : memref<32xf32, #tpu.memory_space<smem>>
    %c21 = arith.constant 21 : index
    %22 = memref.load %arg2[%c21] : memref<32xf32, #tpu.memory_space<smem>>
    %c22 = arith.constant 22 : index
    %23 = memref.load %arg2[%c22] : memref<32xf32, #tpu.memory_space<smem>>
    %c23 = arith.constant 23 : index
    %24 = memref.load %arg2[%c23] : memref<32xf32, #tpu.memory_space<smem>>
    %c24 = arith.constant 24 : index
    %25 = memref.load %arg2[%c24] : memref<32xf32, #tpu.memory_space<smem>>
    %c25 = arith.constant 25 : index
    %26 = memref.load %arg2[%c25] : memref<32xf32, #tpu.memory_space<smem>>
    %c26 = arith.constant 26 : index
    %27 = memref.load %arg2[%c26] : memref<32xf32, #tpu.memory_space<smem>>
    %c27 = arith.constant 27 : index
    %28 = memref.load %arg2[%c27] : memref<32xf32, #tpu.memory_space<smem>>
    %c28 = arith.constant 28 : index
    %29 = memref.load %arg2[%c28] : memref<32xf32, #tpu.memory_space<smem>>
    %c29 = arith.constant 29 : index
    %30 = memref.load %arg2[%c29] : memref<32xf32, #tpu.memory_space<smem>>
    %c30 = arith.constant 30 : index
    %31 = memref.load %arg2[%c30] : memref<32xf32, #tpu.memory_space<smem>>
    %c31 = arith.constant 31 : index
    %32 = memref.load %arg2[%c31] : memref<32xf32, #tpu.memory_space<smem>>
    %c0_i32 = arith.constant 0 : i32
    %c2_i32 = arith.constant 2 : i32
    %33 = arith.addi %c0_i32, %c2_i32 : i32
    %c1_i32 = arith.constant 1 : i32
    scf.for %arg6 = %c0_i32 to %33 step %c1_i32  : i32 {
      %c1_i32_2 = arith.constant 1 : i32
      %34 = arith.muli %arg6, %c1_i32_2 : i32
      %c0_i32_3 = arith.constant 0 : i32
      %35 = arith.addi %c0_i32_3, %34 : i32
      %c8_i32 = arith.constant 8 : i32
      %36 = arith.muli %35, %c8_i32 : i32
      %37 = tpu.assume_multiple %36, 8 : i32
      %c0_4 = arith.constant 0 : index
      %38 = arith.index_cast %37 : i32 to index
      %c0_5 = arith.constant 0 : index
      %39 = vector.load %arg3[%c0_4, %38, %c0_5] : memref<16x16x128xf32, #tpu.memory_space<vmem>>, vector<1x8x128xf32>
      %40 = vector.shape_cast %39 : vector<1x8x128xf32> to vector<8x128xf32>
      %c1_6 = arith.constant 1 : index
      %41 = arith.index_cast %37 : i32 to index
      %c0_7 = arith.constant 0 : index
      %42 = vector.load %arg3[%c1_6, %41, %c0_7] : memref<16x16x128xf32, #tpu.memory_space<vmem>>, vector<1x8x128xf32>
      %43 = vector.shape_cast %42 : vector<1x8x128xf32> to vector<8x128xf32>
      %c2_8 = arith.constant 2 : index
      %44 = arith.index_cast %37 : i32 to index
      %c0_9 = arith.constant 0 : index
      %45 = vector.load %arg3[%c2_8, %44, %c0_9] : memref<16x16x128xf32, #tpu.memory_space<vmem>>, vector<1x8x128xf32>
      %46 = vector.shape_cast %45 : vector<1x8x128xf32> to vector<8x128xf32>
      %c3_10 = arith.constant 3 : index
      %47 = arith.index_cast %37 : i32 to index
      %c0_11 = arith.constant 0 : index
      %48 = vector.load %arg3[%c3_10, %47, %c0_11] : memref<16x16x128xf32, #tpu.memory_space<vmem>>, vector<1x8x128xf32>
      %49 = vector.shape_cast %48 : vector<1x8x128xf32> to vector<8x128xf32>
      %c4_12 = arith.constant 4 : index
      %50 = arith.index_cast %37 : i32 to index
      %c0_13 = arith.constant 0 : index
      %51 = vector.load %arg3[%c4_12, %50, %c0_13] : memref<16x16x128xf32, #tpu.memory_space<vmem>>, vector<1x8x128xf32>
      %52 = vector.shape_cast %51 : vector<1x8x128xf32> to vector<8x128xf32>
      %c5_14 = arith.constant 5 : index
      %53 = arith.index_cast %37 : i32 to index
      %c0_15 = arith.constant 0 : index
      %54 = vector.load %arg3[%c5_14, %53, %c0_15] : memref<16x16x128xf32, #tpu.memory_space<vmem>>, vector<1x8x128xf32>
      %55 = vector.shape_cast %54 : vector<1x8x128xf32> to vector<8x128xf32>
      %c6_16 = arith.constant 6 : index
      %56 = arith.index_cast %37 : i32 to index
      %c0_17 = arith.constant 0 : index
      %57 = vector.load %arg3[%c6_16, %56, %c0_17] : memref<16x16x128xf32, #tpu.memory_space<vmem>>, vector<1x8x128xf32>
      %58 = vector.shape_cast %57 : vector<1x8x128xf32> to vector<8x128xf32>
      %c7_18 = arith.constant 7 : index
      %59 = arith.index_cast %37 : i32 to index
      %c0_19 = arith.constant 0 : index
      %60 = vector.load %arg3[%c7_18, %59, %c0_19] : memref<16x16x128xf32, #tpu.memory_space<vmem>>, vector<1x8x128xf32>
      %61 = vector.shape_cast %60 : vector<1x8x128xf32> to vector<8x128xf32>
      %c8_20 = arith.constant 8 : index
      %62 = arith.index_cast %37 : i32 to index
      %c0_21 = arith.constant 0 : index
      %63 = vector.load %arg3[%c8_20, %62, %c0_21] : memref<16x16x128xf32, #tpu.memory_space<vmem>>, vector<1x8x128xf32>
      %64 = vector.shape_cast %63 : vector<1x8x128xf32> to vector<8x128xf32>
      %c9_22 = arith.constant 9 : index
      %65 = arith.index_cast %37 : i32 to index
      %c0_23 = arith.constant 0 : index
      %66 = vector.load %arg3[%c9_22, %65, %c0_23] : memref<16x16x128xf32, #tpu.memory_space<vmem>>, vector<1x8x128xf32>
      %67 = vector.shape_cast %66 : vector<1x8x128xf32> to vector<8x128xf32>
      %c10_24 = arith.constant 10 : index
      %68 = arith.index_cast %37 : i32 to index
      %c0_25 = arith.constant 0 : index
      %69 = vector.load %arg3[%c10_24, %68, %c0_25] : memref<16x16x128xf32, #tpu.memory_space<vmem>>, vector<1x8x128xf32>
      %70 = vector.shape_cast %69 : vector<1x8x128xf32> to vector<8x128xf32>
      %c11_26 = arith.constant 11 : index
      %71 = arith.index_cast %37 : i32 to index
      %c0_27 = arith.constant 0 : index
      %72 = vector.load %arg3[%c11_26, %71, %c0_27] : memref<16x16x128xf32, #tpu.memory_space<vmem>>, vector<1x8x128xf32>
      %73 = vector.shape_cast %72 : vector<1x8x128xf32> to vector<8x128xf32>
      %c12_28 = arith.constant 12 : index
      %74 = arith.index_cast %37 : i32 to index
      %c0_29 = arith.constant 0 : index
      %75 = vector.load %arg3[%c12_28, %74, %c0_29] : memref<16x16x128xf32, #tpu.memory_space<vmem>>, vector<1x8x128xf32>
      %76 = vector.shape_cast %75 : vector<1x8x128xf32> to vector<8x128xf32>
      %c13_30 = arith.constant 13 : index
      %77 = arith.index_cast %37 : i32 to index
      %c0_31 = arith.constant 0 : index
      %78 = vector.load %arg3[%c13_30, %77, %c0_31] : memref<16x16x128xf32, #tpu.memory_space<vmem>>, vector<1x8x128xf32>
      %79 = vector.shape_cast %78 : vector<1x8x128xf32> to vector<8x128xf32>
      %c14_32 = arith.constant 14 : index
      %80 = arith.index_cast %37 : i32 to index
      %c0_33 = arith.constant 0 : index
      %81 = vector.load %arg3[%c14_32, %80, %c0_33] : memref<16x16x128xf32, #tpu.memory_space<vmem>>, vector<1x8x128xf32>
      %82 = vector.shape_cast %81 : vector<1x8x128xf32> to vector<8x128xf32>
      %c15_34 = arith.constant 15 : index
      %83 = arith.index_cast %37 : i32 to index
      %c0_35 = arith.constant 0 : index
      %84 = vector.load %arg3[%c15_34, %83, %c0_35] : memref<16x16x128xf32, #tpu.memory_space<vmem>>, vector<1x8x128xf32>
      %85 = vector.shape_cast %84 : vector<1x8x128xf32> to vector<8x128xf32>
      %c0_36 = arith.constant 0 : index
      %86 = arith.index_cast %37 : i32 to index
      %c0_37 = arith.constant 0 : index
      %87 = vector.load %arg4[%c0_36, %86, %c0_37] : memref<64x16x128xf32, #tpu.memory_space<vmem>>, vector<1x8x128xf32>
      %88 = vector.shape_cast %87 : vector<1x8x128xf32> to vector<8x128xf32>
      %89 = arith.mulf %88, %40 : vector<8x128xf32>
      %90 = arith.mulf %88, %43 : vector<8x128xf32>
      %c1_38 = arith.constant 1 : index
      %91 = arith.index_cast %37 : i32 to index
      %c0_39 = arith.constant 0 : index
      %92 = vector.load %arg4[%c1_38, %91, %c0_39] : memref<64x16x128xf32, #tpu.memory_space<vmem>>, vector<1x8x128xf32>
      %93 = vector.shape_cast %92 : vector<1x8x128xf32> to vector<8x128xf32>
      %94 = arith.mulf %93, %46 : vector<8x128xf32>
      %95 = arith.addf %89, %94 : vector<8x128xf32>
      %96 = arith.mulf %93, %49 : vector<8x128xf32>
      %97 = arith.addf %90, %96 : vector<8x128xf32>
      %c2_40 = arith.constant 2 : index
      %98 = arith.index_cast %37 : i32 to index
      %c0_41 = arith.constant 0 : index
      %99 = vector.load %arg4[%c2_40, %98, %c0_41] : memref<64x16x128xf32, #tpu.memory_space<vmem>>, vector<1x8x128xf32>
      %100 = vector.shape_cast %99 : vector<1x8x128xf32> to vector<8x128xf32>
      %101 = arith.mulf %100, %52 : vector<8x128xf32>
      %102 = arith.addf %95, %101 : vector<8x128xf32>
      %103 = arith.mulf %100, %55 : vector<8x128xf32>
      %104 = arith.addf %97, %103 : vector<8x128xf32>
      %c3_42 = arith.constant 3 : index
      %105 = arith.index_cast %37 : i32 to index
      %c0_43 = arith.constant 0 : index
      %106 = vector.load %arg4[%c3_42, %105, %c0_43] : memref<64x16x128xf32, #tpu.memory_space<vmem>>, vector<1x8x128xf32>
      %107 = vector.shape_cast %106 : vector<1x8x128xf32> to vector<8x128xf32>
      %108 = arith.mulf %107, %58 : vector<8x128xf32>
      %109 = arith.addf %102, %108 : vector<8x128xf32>
      %110 = arith.mulf %107, %61 : vector<8x128xf32>
      %111 = arith.addf %104, %110 : vector<8x128xf32>
      %c4_44 = arith.constant 4 : index
      %112 = arith.index_cast %37 : i32 to index
      %c0_45 = arith.constant 0 : index
      %113 = vector.load %arg4[%c4_44, %112, %c0_45] : memref<64x16x128xf32, #tpu.memory_space<vmem>>, vector<1x8x128xf32>
      %114 = vector.shape_cast %113 : vector<1x8x128xf32> to vector<8x128xf32>
      %115 = arith.mulf %114, %64 : vector<8x128xf32>
      %116 = arith.addf %109, %115 : vector<8x128xf32>
      %117 = arith.mulf %114, %67 : vector<8x128xf32>
      %118 = arith.addf %111, %117 : vector<8x128xf32>
      %c5_46 = arith.constant 5 : index
      %119 = arith.index_cast %37 : i32 to index
      %c0_47 = arith.constant 0 : index
      %120 = vector.load %arg4[%c5_46, %119, %c0_47] : memref<64x16x128xf32, #tpu.memory_space<vmem>>, vector<1x8x128xf32>
      %121 = vector.shape_cast %120 : vector<1x8x128xf32> to vector<8x128xf32>
      %122 = arith.mulf %121, %70 : vector<8x128xf32>
      %123 = arith.addf %116, %122 : vector<8x128xf32>
      %124 = arith.mulf %121, %73 : vector<8x128xf32>
      %125 = arith.addf %118, %124 : vector<8x128xf32>
      %c6_48 = arith.constant 6 : index
      %126 = arith.index_cast %37 : i32 to index
      %c0_49 = arith.constant 0 : index
      %127 = vector.load %arg4[%c6_48, %126, %c0_49] : memref<64x16x128xf32, #tpu.memory_space<vmem>>, vector<1x8x128xf32>
      %128 = vector.shape_cast %127 : vector<1x8x128xf32> to vector<8x128xf32>
      %129 = arith.mulf %128, %76 : vector<8x128xf32>
      %130 = arith.addf %123, %129 : vector<8x128xf32>
      %131 = arith.mulf %128, %79 : vector<8x128xf32>
      %132 = arith.addf %125, %131 : vector<8x128xf32>
      %c7_50 = arith.constant 7 : index
      %133 = arith.index_cast %37 : i32 to index
      %c0_51 = arith.constant 0 : index
      %134 = vector.load %arg4[%c7_50, %133, %c0_51] : memref<64x16x128xf32, #tpu.memory_space<vmem>>, vector<1x8x128xf32>
      %135 = vector.shape_cast %134 : vector<1x8x128xf32> to vector<8x128xf32>
      %136 = arith.mulf %135, %82 : vector<8x128xf32>
      %137 = arith.addf %130, %136 : vector<8x128xf32>
      %138 = arith.mulf %135, %85 : vector<8x128xf32>
      %139 = arith.addf %132, %138 : vector<8x128xf32>
      %cst = arith.constant 0.000000e+00 : f32
      %140 = vector.broadcast %cst : f32 to vector<8x128xf32>
      %141 = arith.cmpf oge, %137, %140 : vector<8x128xf32>
      %142 = vector.broadcast %0 : f32 to vector<8x128xf32>
      %143 = arith.mulf %142, %137 : vector<8x128xf32>
      %144 = arith.select %141, %137, %143 : vector<8x128xi1>, vector<8x128xf32>
      %cst_52 = arith.constant 0.000000e+00 : f32
      %145 = vector.broadcast %cst_52 : f32 to vector<8x128xf32>
      %146 = arith.cmpf oge, %139, %145 : vector<8x128xf32>
      %147 = vector.broadcast %0 : f32 to vector<8x128xf32>
      %148 = arith.mulf %147, %139 : vector<8x128xf32>
      %149 = arith.select %146, %139, %148 : vector<8x128xi1>, vector<8x128xf32>
      %c8_53 = arith.constant 8 : index
      %150 = arith.index_cast %37 : i32 to index
      %c0_54 = arith.constant 0 : index
      %151 = vector.load %arg4[%c8_53, %150, %c0_54] : memref<64x16x128xf32, #tpu.memory_space<vmem>>, vector<1x8x128xf32>
      %152 = vector.shape_cast %151 : vector<1x8x128xf32> to vector<8x128xf32>
      %153 = arith.mulf %152, %40 : vector<8x128xf32>
      %154 = arith.mulf %152, %43 : vector<8x128xf32>
      %c9_55 = arith.constant 9 : index
      %155 = arith.index_cast %37 : i32 to index
      %c0_56 = arith.constant 0 : index
      %156 = vector.load %arg4[%c9_55, %155, %c0_56] : memref<64x16x128xf32, #tpu.memory_space<vmem>>, vector<1x8x128xf32>
      %157 = vector.shape_cast %156 : vector<1x8x128xf32> to vector<8x128xf32>
      %158 = arith.mulf %157, %46 : vector<8x128xf32>
      %159 = arith.addf %153, %158 : vector<8x128xf32>
      %160 = arith.mulf %157, %49 : vector<8x128xf32>
      %161 = arith.addf %154, %160 : vector<8x128xf32>
      %c10_57 = arith.constant 10 : index
      %162 = arith.index_cast %37 : i32 to index
      %c0_58 = arith.constant 0 : index
      %163 = vector.load %arg4[%c10_57, %162, %c0_58] : memref<64x16x128xf32, #tpu.memory_space<vmem>>, vector<1x8x128xf32>
      %164 = vector.shape_cast %163 : vector<1x8x128xf32> to vector<8x128xf32>
      %165 = arith.mulf %164, %52 : vector<8x128xf32>
      %166 = arith.addf %159, %165 : vector<8x128xf32>
      %167 = arith.mulf %164, %55 : vector<8x128xf32>
      %168 = arith.addf %161, %167 : vector<8x128xf32>
      %c11_59 = arith.constant 11 : index
      %169 = arith.index_cast %37 : i32 to index
      %c0_60 = arith.constant 0 : index
      %170 = vector.load %arg4[%c11_59, %169, %c0_60] : memref<64x16x128xf32, #tpu.memory_space<vmem>>, vector<1x8x128xf32>
      %171 = vector.shape_cast %170 : vector<1x8x128xf32> to vector<8x128xf32>
      %172 = arith.mulf %171, %58 : vector<8x128xf32>
      %173 = arith.addf %166, %172 : vector<8x128xf32>
      %174 = arith.mulf %171, %61 : vector<8x128xf32>
      %175 = arith.addf %168, %174 : vector<8x128xf32>
      %c12_61 = arith.constant 12 : index
      %176 = arith.index_cast %37 : i32 to index
      %c0_62 = arith.constant 0 : index
      %177 = vector.load %arg4[%c12_61, %176, %c0_62] : memref<64x16x128xf32, #tpu.memory_space<vmem>>, vector<1x8x128xf32>
      %178 = vector.shape_cast %177 : vector<1x8x128xf32> to vector<8x128xf32>
      %179 = arith.mulf %178, %64 : vector<8x128xf32>
      %180 = arith.addf %173, %179 : vector<8x128xf32>
      %181 = arith.mulf %178, %67 : vector<8x128xf32>
      %182 = arith.addf %175, %181 : vector<8x128xf32>
      %c13_63 = arith.constant 13 : index
      %183 = arith.index_cast %37 : i32 to index
      %c0_64 = arith.constant 0 : index
      %184 = vector.load %arg4[%c13_63, %183, %c0_64] : memref<64x16x128xf32, #tpu.memory_space<vmem>>, vector<1x8x128xf32>
      %185 = vector.shape_cast %184 : vector<1x8x128xf32> to vector<8x128xf32>
      %186 = arith.mulf %185, %70 : vector<8x128xf32>
      %187 = arith.addf %180, %186 : vector<8x128xf32>
      %188 = arith.mulf %185, %73 : vector<8x128xf32>
      %189 = arith.addf %182, %188 : vector<8x128xf32>
      %c14_65 = arith.constant 14 : index
      %190 = arith.index_cast %37 : i32 to index
      %c0_66 = arith.constant 0 : index
      %191 = vector.load %arg4[%c14_65, %190, %c0_66] : memref<64x16x128xf32, #tpu.memory_space<vmem>>, vector<1x8x128xf32>
      %192 = vector.shape_cast %191 : vector<1x8x128xf32> to vector<8x128xf32>
      %193 = arith.mulf %192, %76 : vector<8x128xf32>
      %194 = arith.addf %187, %193 : vector<8x128xf32>
      %195 = arith.mulf %192, %79 : vector<8x128xf32>
      %196 = arith.addf %189, %195 : vector<8x128xf32>
      %c15_67 = arith.constant 15 : index
      %197 = arith.index_cast %37 : i32 to index
      %c0_68 = arith.constant 0 : index
      %198 = vector.load %arg4[%c15_67, %197, %c0_68] : memref<64x16x128xf32, #tpu.memory_space<vmem>>, vector<1x8x128xf32>
      %199 = vector.shape_cast %198 : vector<1x8x128xf32> to vector<8x128xf32>
      %200 = arith.mulf %199, %82 : vector<8x128xf32>
      %201 = arith.addf %194, %200 : vector<8x128xf32>
      %202 = arith.mulf %199, %85 : vector<8x128xf32>
      %203 = arith.addf %196, %202 : vector<8x128xf32>
      %cst_69 = arith.constant 0.000000e+00 : f32
      %204 = vector.broadcast %cst_69 : f32 to vector<8x128xf32>
      %205 = arith.cmpf oge, %201, %204 : vector<8x128xf32>
      %206 = vector.broadcast %0 : f32 to vector<8x128xf32>
      %207 = arith.mulf %206, %201 : vector<8x128xf32>
      %208 = arith.select %205, %201, %207 : vector<8x128xi1>, vector<8x128xf32>
      %cst_70 = arith.constant 0.000000e+00 : f32
      %209 = vector.broadcast %cst_70 : f32 to vector<8x128xf32>
      %210 = arith.cmpf oge, %203, %209 : vector<8x128xf32>
      %211 = vector.broadcast %0 : f32 to vector<8x128xf32>
      %212 = arith.mulf %211, %203 : vector<8x128xf32>
      %213 = arith.select %210, %203, %212 : vector<8x128xi1>, vector<8x128xf32>
      %c16_71 = arith.constant 16 : index
      %214 = arith.index_cast %37 : i32 to index
      %c0_72 = arith.constant 0 : index
      %215 = vector.load %arg4[%c16_71, %214, %c0_72] : memref<64x16x128xf32, #tpu.memory_space<vmem>>, vector<1x8x128xf32>
      %216 = vector.shape_cast %215 : vector<1x8x128xf32> to vector<8x128xf32>
      %217 = arith.mulf %216, %40 : vector<8x128xf32>
      %218 = arith.mulf %216, %43 : vector<8x128xf32>
      %c17_73 = arith.constant 17 : index
      %219 = arith.index_cast %37 : i32 to index
      %c0_74 = arith.constant 0 : index
      %220 = vector.load %arg4[%c17_73, %219, %c0_74] : memref<64x16x128xf32, #tpu.memory_space<vmem>>, vector<1x8x128xf32>
      %221 = vector.shape_cast %220 : vector<1x8x128xf32> to vector<8x128xf32>
      %222 = arith.mulf %221, %46 : vector<8x128xf32>
      %223 = arith.addf %217, %222 : vector<8x128xf32>
      %224 = arith.mulf %221, %49 : vector<8x128xf32>
      %225 = arith.addf %218, %224 : vector<8x128xf32>
      %c18_75 = arith.constant 18 : index
      %226 = arith.index_cast %37 : i32 to index
      %c0_76 = arith.constant 0 : index
      %227 = vector.load %arg4[%c18_75, %226, %c0_76] : memref<64x16x128xf32, #tpu.memory_space<vmem>>, vector<1x8x128xf32>
      %228 = vector.shape_cast %227 : vector<1x8x128xf32> to vector<8x128xf32>
      %229 = arith.mulf %228, %52 : vector<8x128xf32>
      %230 = arith.addf %223, %229 : vector<8x128xf32>
      %231 = arith.mulf %228, %55 : vector<8x128xf32>
      %232 = arith.addf %225, %231 : vector<8x128xf32>
      %c19_77 = arith.constant 19 : index
      %233 = arith.index_cast %37 : i32 to index
      %c0_78 = arith.constant 0 : index
      %234 = vector.load %arg4[%c19_77, %233, %c0_78] : memref<64x16x128xf32, #tpu.memory_space<vmem>>, vector<1x8x128xf32>
      %235 = vector.shape_cast %234 : vector<1x8x128xf32> to vector<8x128xf32>
      %236 = arith.mulf %235, %58 : vector<8x128xf32>
      %237 = arith.addf %230, %236 : vector<8x128xf32>
      %238 = arith.mulf %235, %61 : vector<8x128xf32>
      %239 = arith.addf %232, %238 : vector<8x128xf32>
      %c20_79 = arith.constant 20 : index
      %240 = arith.index_cast %37 : i32 to index
      %c0_80 = arith.constant 0 : index
      %241 = vector.load %arg4[%c20_79, %240, %c0_80] : memref<64x16x128xf32, #tpu.memory_space<vmem>>, vector<1x8x128xf32>
      %242 = vector.shape_cast %241 : vector<1x8x128xf32> to vector<8x128xf32>
      %243 = arith.mulf %242, %64 : vector<8x128xf32>
      %244 = arith.addf %237, %243 : vector<8x128xf32>
      %245 = arith.mulf %242, %67 : vector<8x128xf32>
      %246 = arith.addf %239, %245 : vector<8x128xf32>
      %c21_81 = arith.constant 21 : index
      %247 = arith.index_cast %37 : i32 to index
      %c0_82 = arith.constant 0 : index
      %248 = vector.load %arg4[%c21_81, %247, %c0_82] : memref<64x16x128xf32, #tpu.memory_space<vmem>>, vector<1x8x128xf32>
      %249 = vector.shape_cast %248 : vector<1x8x128xf32> to vector<8x128xf32>
      %250 = arith.mulf %249, %70 : vector<8x128xf32>
      %251 = arith.addf %244, %250 : vector<8x128xf32>
      %252 = arith.mulf %249, %73 : vector<8x128xf32>
      %253 = arith.addf %246, %252 : vector<8x128xf32>
      %c22_83 = arith.constant 22 : index
      %254 = arith.index_cast %37 : i32 to index
      %c0_84 = arith.constant 0 : index
      %255 = vector.load %arg4[%c22_83, %254, %c0_84] : memref<64x16x128xf32, #tpu.memory_space<vmem>>, vector<1x8x128xf32>
      %256 = vector.shape_cast %255 : vector<1x8x128xf32> to vector<8x128xf32>
      %257 = arith.mulf %256, %76 : vector<8x128xf32>
      %258 = arith.addf %251, %257 : vector<8x128xf32>
      %259 = arith.mulf %256, %79 : vector<8x128xf32>
      %260 = arith.addf %253, %259 : vector<8x128xf32>
      %c23_85 = arith.constant 23 : index
      %261 = arith.index_cast %37 : i32 to index
      %c0_86 = arith.constant 0 : index
      %262 = vector.load %arg4[%c23_85, %261, %c0_86] : memref<64x16x128xf32, #tpu.memory_space<vmem>>, vector<1x8x128xf32>
      %263 = vector.shape_cast %262 : vector<1x8x128xf32> to vector<8x128xf32>
      %264 = arith.mulf %263, %82 : vector<8x128xf32>
      %265 = arith.addf %258, %264 : vector<8x128xf32>
      %266 = arith.mulf %263, %85 : vector<8x128xf32>
      %267 = arith.addf %260, %266 : vector<8x128xf32>
      %cst_87 = arith.constant 0.000000e+00 : f32
      %268 = vector.broadcast %cst_87 : f32 to vector<8x128xf32>
      %269 = arith.cmpf oge, %265, %268 : vector<8x128xf32>
      %270 = vector.broadcast %0 : f32 to vector<8x128xf32>
      %271 = arith.mulf %270, %265 : vector<8x128xf32>
      %272 = arith.select %269, %265, %271 : vector<8x128xi1>, vector<8x128xf32>
      %cst_88 = arith.constant 0.000000e+00 : f32
      %273 = vector.broadcast %cst_88 : f32 to vector<8x128xf32>
      %274 = arith.cmpf oge, %267, %273 : vector<8x128xf32>
      %275 = vector.broadcast %0 : f32 to vector<8x128xf32>
      %276 = arith.mulf %275, %267 : vector<8x128xf32>
      %277 = arith.select %274, %267, %276 : vector<8x128xi1>, vector<8x128xf32>
      %c24_89 = arith.constant 24 : index
      %278 = arith.index_cast %37 : i32 to index
      %c0_90 = arith.constant 0 : index
      %279 = vector.load %arg4[%c24_89, %278, %c0_90] : memref<64x16x128xf32, #tpu.memory_space<vmem>>, vector<1x8x128xf32>
      %280 = vector.shape_cast %279 : vector<1x8x128xf32> to vector<8x128xf32>
      %281 = arith.mulf %280, %40 : vector<8x128xf32>
      %282 = arith.mulf %280, %43 : vector<8x128xf32>
      %c25_91 = arith.constant 25 : index
      %283 = arith.index_cast %37 : i32 to index
      %c0_92 = arith.constant 0 : index
      %284 = vector.load %arg4[%c25_91, %283, %c0_92] : memref<64x16x128xf32, #tpu.memory_space<vmem>>, vector<1x8x128xf32>
      %285 = vector.shape_cast %284 : vector<1x8x128xf32> to vector<8x128xf32>
      %286 = arith.mulf %285, %46 : vector<8x128xf32>
      %287 = arith.addf %281, %286 : vector<8x128xf32>
      %288 = arith.mulf %285, %49 : vector<8x128xf32>
      %289 = arith.addf %282, %288 : vector<8x128xf32>
      %c26_93 = arith.constant 26 : index
      %290 = arith.index_cast %37 : i32 to index
      %c0_94 = arith.constant 0 : index
      %291 = vector.load %arg4[%c26_93, %290, %c0_94] : memref<64x16x128xf32, #tpu.memory_space<vmem>>, vector<1x8x128xf32>
      %292 = vector.shape_cast %291 : vector<1x8x128xf32> to vector<8x128xf32>
      %293 = arith.mulf %292, %52 : vector<8x128xf32>
      %294 = arith.addf %287, %293 : vector<8x128xf32>
      %295 = arith.mulf %292, %55 : vector<8x128xf32>
      %296 = arith.addf %289, %295 : vector<8x128xf32>
      %c27_95 = arith.constant 27 : index
      %297 = arith.index_cast %37 : i32 to index
      %c0_96 = arith.constant 0 : index
      %298 = vector.load %arg4[%c27_95, %297, %c0_96] : memref<64x16x128xf32, #tpu.memory_space<vmem>>, vector<1x8x128xf32>
      %299 = vector.shape_cast %298 : vector<1x8x128xf32> to vector<8x128xf32>
      %300 = arith.mulf %299, %58 : vector<8x128xf32>
      %301 = arith.addf %294, %300 : vector<8x128xf32>
      %302 = arith.mulf %299, %61 : vector<8x128xf32>
      %303 = arith.addf %296, %302 : vector<8x128xf32>
      %c28_97 = arith.constant 28 : index
      %304 = arith.index_cast %37 : i32 to index
      %c0_98 = arith.constant 0 : index
      %305 = vector.load %arg4[%c28_97, %304, %c0_98] : memref<64x16x128xf32, #tpu.memory_space<vmem>>, vector<1x8x128xf32>
      %306 = vector.shape_cast %305 : vector<1x8x128xf32> to vector<8x128xf32>
      %307 = arith.mulf %306, %64 : vector<8x128xf32>
      %308 = arith.addf %301, %307 : vector<8x128xf32>
      %309 = arith.mulf %306, %67 : vector<8x128xf32>
      %310 = arith.addf %303, %309 : vector<8x128xf32>
      %c29_99 = arith.constant 29 : index
      %311 = arith.index_cast %37 : i32 to index
      %c0_100 = arith.constant 0 : index
      %312 = vector.load %arg4[%c29_99, %311, %c0_100] : memref<64x16x128xf32, #tpu.memory_space<vmem>>, vector<1x8x128xf32>
      %313 = vector.shape_cast %312 : vector<1x8x128xf32> to vector<8x128xf32>
      %314 = arith.mulf %313, %70 : vector<8x128xf32>
      %315 = arith.addf %308, %314 : vector<8x128xf32>
      %316 = arith.mulf %313, %73 : vector<8x128xf32>
      %317 = arith.addf %310, %316 : vector<8x128xf32>
      %c30_101 = arith.constant 30 : index
      %318 = arith.index_cast %37 : i32 to index
      %c0_102 = arith.constant 0 : index
      %319 = vector.load %arg4[%c30_101, %318, %c0_102] : memref<64x16x128xf32, #tpu.memory_space<vmem>>, vector<1x8x128xf32>
      %320 = vector.shape_cast %319 : vector<1x8x128xf32> to vector<8x128xf32>
      %321 = arith.mulf %320, %76 : vector<8x128xf32>
      %322 = arith.addf %315, %321 : vector<8x128xf32>
      %323 = arith.mulf %320, %79 : vector<8x128xf32>
      %324 = arith.addf %317, %323 : vector<8x128xf32>
      %c31_103 = arith.constant 31 : index
      %325 = arith.index_cast %37 : i32 to index
      %c0_104 = arith.constant 0 : index
      %326 = vector.load %arg4[%c31_103, %325, %c0_104] : memref<64x16x128xf32, #tpu.memory_space<vmem>>, vector<1x8x128xf32>
      %327 = vector.shape_cast %326 : vector<1x8x128xf32> to vector<8x128xf32>
      %328 = arith.mulf %327, %82 : vector<8x128xf32>
      %329 = arith.addf %322, %328 : vector<8x128xf32>
      %330 = arith.mulf %327, %85 : vector<8x128xf32>
      %331 = arith.addf %324, %330 : vector<8x128xf32>
      %cst_105 = arith.constant 0.000000e+00 : f32
      %332 = vector.broadcast %cst_105 : f32 to vector<8x128xf32>
      %333 = arith.cmpf oge, %329, %332 : vector<8x128xf32>
      %334 = vector.broadcast %0 : f32 to vector<8x128xf32>
      %335 = arith.mulf %334, %329 : vector<8x128xf32>
      %336 = arith.select %333, %329, %335 : vector<8x128xi1>, vector<8x128xf32>
      %cst_106 = arith.constant 0.000000e+00 : f32
      %337 = vector.broadcast %cst_106 : f32 to vector<8x128xf32>
      %338 = arith.cmpf oge, %331, %337 : vector<8x128xf32>
      %339 = vector.broadcast %0 : f32 to vector<8x128xf32>
      %340 = arith.mulf %339, %331 : vector<8x128xf32>
      %341 = arith.select %338, %331, %340 : vector<8x128xi1>, vector<8x128xf32>
      %c32 = arith.constant 32 : index
      %342 = arith.index_cast %37 : i32 to index
      %c0_107 = arith.constant 0 : index
      %343 = vector.load %arg4[%c32, %342, %c0_107] : memref<64x16x128xf32, #tpu.memory_space<vmem>>, vector<1x8x128xf32>
      %344 = vector.shape_cast %343 : vector<1x8x128xf32> to vector<8x128xf32>
      %345 = arith.mulf %344, %40 : vector<8x128xf32>
      %346 = arith.mulf %344, %43 : vector<8x128xf32>
      %c33 = arith.constant 33 : index
      %347 = arith.index_cast %37 : i32 to index
      %c0_108 = arith.constant 0 : index
      %348 = vector.load %arg4[%c33, %347, %c0_108] : memref<64x16x128xf32, #tpu.memory_space<vmem>>, vector<1x8x128xf32>
      %349 = vector.shape_cast %348 : vector<1x8x128xf32> to vector<8x128xf32>
      %350 = arith.mulf %349, %46 : vector<8x128xf32>
      %351 = arith.addf %345, %350 : vector<8x128xf32>
      %352 = arith.mulf %349, %49 : vector<8x128xf32>
      %353 = arith.addf %346, %352 : vector<8x128xf32>
      %c34 = arith.constant 34 : index
      %354 = arith.index_cast %37 : i32 to index
      %c0_109 = arith.constant 0 : index
      %355 = vector.load %arg4[%c34, %354, %c0_109] : memref<64x16x128xf32, #tpu.memory_space<vmem>>, vector<1x8x128xf32>
      %356 = vector.shape_cast %355 : vector<1x8x128xf32> to vector<8x128xf32>
      %357 = arith.mulf %356, %52 : vector<8x128xf32>
      %358 = arith.addf %351, %357 : vector<8x128xf32>
      %359 = arith.mulf %356, %55 : vector<8x128xf32>
      %360 = arith.addf %353, %359 : vector<8x128xf32>
      %c35 = arith.constant 35 : index
      %361 = arith.index_cast %37 : i32 to index
      %c0_110 = arith.constant 0 : index
      %362 = vector.load %arg4[%c35, %361, %c0_110] : memref<64x16x128xf32, #tpu.memory_space<vmem>>, vector<1x8x128xf32>
      %363 = vector.shape_cast %362 : vector<1x8x128xf32> to vector<8x128xf32>
      %364 = arith.mulf %363, %58 : vector<8x128xf32>
      %365 = arith.addf %358, %364 : vector<8x128xf32>
      %366 = arith.mulf %363, %61 : vector<8x128xf32>
      %367 = arith.addf %360, %366 : vector<8x128xf32>
      %c36 = arith.constant 36 : index
      %368 = arith.index_cast %37 : i32 to index
      %c0_111 = arith.constant 0 : index
      %369 = vector.load %arg4[%c36, %368, %c0_111] : memref<64x16x128xf32, #tpu.memory_space<vmem>>, vector<1x8x128xf32>
      %370 = vector.shape_cast %369 : vector<1x8x128xf32> to vector<8x128xf32>
      %371 = arith.mulf %370, %64 : vector<8x128xf32>
      %372 = arith.addf %365, %371 : vector<8x128xf32>
      %373 = arith.mulf %370, %67 : vector<8x128xf32>
      %374 = arith.addf %367, %373 : vector<8x128xf32>
      %c37 = arith.constant 37 : index
      %375 = arith.index_cast %37 : i32 to index
      %c0_112 = arith.constant 0 : index
      %376 = vector.load %arg4[%c37, %375, %c0_112] : memref<64x16x128xf32, #tpu.memory_space<vmem>>, vector<1x8x128xf32>
      %377 = vector.shape_cast %376 : vector<1x8x128xf32> to vector<8x128xf32>
      %378 = arith.mulf %377, %70 : vector<8x128xf32>
      %379 = arith.addf %372, %378 : vector<8x128xf32>
      %380 = arith.mulf %377, %73 : vector<8x128xf32>
      %381 = arith.addf %374, %380 : vector<8x128xf32>
      %c38 = arith.constant 38 : index
      %382 = arith.index_cast %37 : i32 to index
      %c0_113 = arith.constant 0 : index
      %383 = vector.load %arg4[%c38, %382, %c0_113] : memref<64x16x128xf32, #tpu.memory_space<vmem>>, vector<1x8x128xf32>
      %384 = vector.shape_cast %383 : vector<1x8x128xf32> to vector<8x128xf32>
      %385 = arith.mulf %384, %76 : vector<8x128xf32>
      %386 = arith.addf %379, %385 : vector<8x128xf32>
      %387 = arith.mulf %384, %79 : vector<8x128xf32>
      %388 = arith.addf %381, %387 : vector<8x128xf32>
      %c39 = arith.constant 39 : index
      %389 = arith.index_cast %37 : i32 to index
      %c0_114 = arith.constant 0 : index
      %390 = vector.load %arg4[%c39, %389, %c0_114] : memref<64x16x128xf32, #tpu.memory_space<vmem>>, vector<1x8x128xf32>
      %391 = vector.shape_cast %390 : vector<1x8x128xf32> to vector<8x128xf32>
      %392 = arith.mulf %391, %82 : vector<8x128xf32>
      %393 = arith.addf %386, %392 : vector<8x128xf32>
      %394 = arith.mulf %391, %85 : vector<8x128xf32>
      %395 = arith.addf %388, %394 : vector<8x128xf32>
      %cst_115 = arith.constant 0.000000e+00 : f32
      %396 = vector.broadcast %cst_115 : f32 to vector<8x128xf32>
      %397 = arith.cmpf oge, %393, %396 : vector<8x128xf32>
      %398 = vector.broadcast %0 : f32 to vector<8x128xf32>
      %399 = arith.mulf %398, %393 : vector<8x128xf32>
      %400 = arith.select %397, %393, %399 : vector<8x128xi1>, vector<8x128xf32>
      %cst_116 = arith.constant 0.000000e+00 : f32
      %401 = vector.broadcast %cst_116 : f32 to vector<8x128xf32>
      %402 = arith.cmpf oge, %395, %401 : vector<8x128xf32>
      %403 = vector.broadcast %0 : f32 to vector<8x128xf32>
      %404 = arith.mulf %403, %395 : vector<8x128xf32>
      %405 = arith.select %402, %395, %404 : vector<8x128xi1>, vector<8x128xf32>
      %c40 = arith.constant 40 : index
      %406 = arith.index_cast %37 : i32 to index
      %c0_117 = arith.constant 0 : index
      %407 = vector.load %arg4[%c40, %406, %c0_117] : memref<64x16x128xf32, #tpu.memory_space<vmem>>, vector<1x8x128xf32>
      %408 = vector.shape_cast %407 : vector<1x8x128xf32> to vector<8x128xf32>
      %409 = arith.mulf %408, %40 : vector<8x128xf32>
      %410 = arith.mulf %408, %43 : vector<8x128xf32>
      %c41 = arith.constant 41 : index
      %411 = arith.index_cast %37 : i32 to index
      %c0_118 = arith.constant 0 : index
      %412 = vector.load %arg4[%c41, %411, %c0_118] : memref<64x16x128xf32, #tpu.memory_space<vmem>>, vector<1x8x128xf32>
      %413 = vector.shape_cast %412 : vector<1x8x128xf32> to vector<8x128xf32>
      %414 = arith.mulf %413, %46 : vector<8x128xf32>
      %415 = arith.addf %409, %414 : vector<8x128xf32>
      %416 = arith.mulf %413, %49 : vector<8x128xf32>
      %417 = arith.addf %410, %416 : vector<8x128xf32>
      %c42 = arith.constant 42 : index
      %418 = arith.index_cast %37 : i32 to index
      %c0_119 = arith.constant 0 : index
      %419 = vector.load %arg4[%c42, %418, %c0_119] : memref<64x16x128xf32, #tpu.memory_space<vmem>>, vector<1x8x128xf32>
      %420 = vector.shape_cast %419 : vector<1x8x128xf32> to vector<8x128xf32>
      %421 = arith.mulf %420, %52 : vector<8x128xf32>
      %422 = arith.addf %415, %421 : vector<8x128xf32>
      %423 = arith.mulf %420, %55 : vector<8x128xf32>
      %424 = arith.addf %417, %423 : vector<8x128xf32>
      %c43 = arith.constant 43 : index
      %425 = arith.index_cast %37 : i32 to index
      %c0_120 = arith.constant 0 : index
      %426 = vector.load %arg4[%c43, %425, %c0_120] : memref<64x16x128xf32, #tpu.memory_space<vmem>>, vector<1x8x128xf32>
      %427 = vector.shape_cast %426 : vector<1x8x128xf32> to vector<8x128xf32>
      %428 = arith.mulf %427, %58 : vector<8x128xf32>
      %429 = arith.addf %422, %428 : vector<8x128xf32>
      %430 = arith.mulf %427, %61 : vector<8x128xf32>
      %431 = arith.addf %424, %430 : vector<8x128xf32>
      %c44 = arith.constant 44 : index
      %432 = arith.index_cast %37 : i32 to index
      %c0_121 = arith.constant 0 : index
      %433 = vector.load %arg4[%c44, %432, %c0_121] : memref<64x16x128xf32, #tpu.memory_space<vmem>>, vector<1x8x128xf32>
      %434 = vector.shape_cast %433 : vector<1x8x128xf32> to vector<8x128xf32>
      %435 = arith.mulf %434, %64 : vector<8x128xf32>
      %436 = arith.addf %429, %435 : vector<8x128xf32>
      %437 = arith.mulf %434, %67 : vector<8x128xf32>
      %438 = arith.addf %431, %437 : vector<8x128xf32>
      %c45 = arith.constant 45 : index
      %439 = arith.index_cast %37 : i32 to index
      %c0_122 = arith.constant 0 : index
      %440 = vector.load %arg4[%c45, %439, %c0_122] : memref<64x16x128xf32, #tpu.memory_space<vmem>>, vector<1x8x128xf32>
      %441 = vector.shape_cast %440 : vector<1x8x128xf32> to vector<8x128xf32>
      %442 = arith.mulf %441, %70 : vector<8x128xf32>
      %443 = arith.addf %436, %442 : vector<8x128xf32>
      %444 = arith.mulf %441, %73 : vector<8x128xf32>
      %445 = arith.addf %438, %444 : vector<8x128xf32>
      %c46 = arith.constant 46 : index
      %446 = arith.index_cast %37 : i32 to index
      %c0_123 = arith.constant 0 : index
      %447 = vector.load %arg4[%c46, %446, %c0_123] : memref<64x16x128xf32, #tpu.memory_space<vmem>>, vector<1x8x128xf32>
      %448 = vector.shape_cast %447 : vector<1x8x128xf32> to vector<8x128xf32>
      %449 = arith.mulf %448, %76 : vector<8x128xf32>
      %450 = arith.addf %443, %449 : vector<8x128xf32>
      %451 = arith.mulf %448, %79 : vector<8x128xf32>
      %452 = arith.addf %445, %451 : vector<8x128xf32>
      %c47 = arith.constant 47 : index
      %453 = arith.index_cast %37 : i32 to index
      %c0_124 = arith.constant 0 : index
      %454 = vector.load %arg4[%c47, %453, %c0_124] : memref<64x16x128xf32, #tpu.memory_space<vmem>>, vector<1x8x128xf32>
      %455 = vector.shape_cast %454 : vector<1x8x128xf32> to vector<8x128xf32>
      %456 = arith.mulf %455, %82 : vector<8x128xf32>
      %457 = arith.addf %450, %456 : vector<8x128xf32>
      %458 = arith.mulf %455, %85 : vector<8x128xf32>
      %459 = arith.addf %452, %458 : vector<8x128xf32>
      %cst_125 = arith.constant 0.000000e+00 : f32
      %460 = vector.broadcast %cst_125 : f32 to vector<8x128xf32>
      %461 = arith.cmpf oge, %457, %460 : vector<8x128xf32>
      %462 = vector.broadcast %0 : f32 to vector<8x128xf32>
      %463 = arith.mulf %462, %457 : vector<8x128xf32>
      %464 = arith.select %461, %457, %463 : vector<8x128xi1>, vector<8x128xf32>
      %cst_126 = arith.constant 0.000000e+00 : f32
      %465 = vector.broadcast %cst_126 : f32 to vector<8x128xf32>
      %466 = arith.cmpf oge, %459, %465 : vector<8x128xf32>
      %467 = vector.broadcast %0 : f32 to vector<8x128xf32>
      %468 = arith.mulf %467, %459 : vector<8x128xf32>
      %469 = arith.select %466, %459, %468 : vector<8x128xi1>, vector<8x128xf32>
      %c48 = arith.constant 48 : index
      %470 = arith.index_cast %37 : i32 to index
      %c0_127 = arith.constant 0 : index
      %471 = vector.load %arg4[%c48, %470, %c0_127] : memref<64x16x128xf32, #tpu.memory_space<vmem>>, vector<1x8x128xf32>
      %472 = vector.shape_cast %471 : vector<1x8x128xf32> to vector<8x128xf32>
      %473 = arith.mulf %472, %40 : vector<8x128xf32>
      %474 = arith.mulf %472, %43 : vector<8x128xf32>
      %c49 = arith.constant 49 : index
      %475 = arith.index_cast %37 : i32 to index
      %c0_128 = arith.constant 0 : index
      %476 = vector.load %arg4[%c49, %475, %c0_128] : memref<64x16x128xf32, #tpu.memory_space<vmem>>, vector<1x8x128xf32>
      %477 = vector.shape_cast %476 : vector<1x8x128xf32> to vector<8x128xf32>
      %478 = arith.mulf %477, %46 : vector<8x128xf32>
      %479 = arith.addf %473, %478 : vector<8x128xf32>
      %480 = arith.mulf %477, %49 : vector<8x128xf32>
      %481 = arith.addf %474, %480 : vector<8x128xf32>
      %c50 = arith.constant 50 : index
      %482 = arith.index_cast %37 : i32 to index
      %c0_129 = arith.constant 0 : index
      %483 = vector.load %arg4[%c50, %482, %c0_129] : memref<64x16x128xf32, #tpu.memory_space<vmem>>, vector<1x8x128xf32>
      %484 = vector.shape_cast %483 : vector<1x8x128xf32> to vector<8x128xf32>
      %485 = arith.mulf %484, %52 : vector<8x128xf32>
      %486 = arith.addf %479, %485 : vector<8x128xf32>
      %487 = arith.mulf %484, %55 : vector<8x128xf32>
      %488 = arith.addf %481, %487 : vector<8x128xf32>
      %c51 = arith.constant 51 : index
      %489 = arith.index_cast %37 : i32 to index
      %c0_130 = arith.constant 0 : index
      %490 = vector.load %arg4[%c51, %489, %c0_130] : memref<64x16x128xf32, #tpu.memory_space<vmem>>, vector<1x8x128xf32>
      %491 = vector.shape_cast %490 : vector<1x8x128xf32> to vector<8x128xf32>
      %492 = arith.mulf %491, %58 : vector<8x128xf32>
      %493 = arith.addf %486, %492 : vector<8x128xf32>
      %494 = arith.mulf %491, %61 : vector<8x128xf32>
      %495 = arith.addf %488, %494 : vector<8x128xf32>
      %c52 = arith.constant 52 : index
      %496 = arith.index_cast %37 : i32 to index
      %c0_131 = arith.constant 0 : index
      %497 = vector.load %arg4[%c52, %496, %c0_131] : memref<64x16x128xf32, #tpu.memory_space<vmem>>, vector<1x8x128xf32>
      %498 = vector.shape_cast %497 : vector<1x8x128xf32> to vector<8x128xf32>
      %499 = arith.mulf %498, %64 : vector<8x128xf32>
      %500 = arith.addf %493, %499 : vector<8x128xf32>
      %501 = arith.mulf %498, %67 : vector<8x128xf32>
      %502 = arith.addf %495, %501 : vector<8x128xf32>
      %c53 = arith.constant 53 : index
      %503 = arith.index_cast %37 : i32 to index
      %c0_132 = arith.constant 0 : index
      %504 = vector.load %arg4[%c53, %503, %c0_132] : memref<64x16x128xf32, #tpu.memory_space<vmem>>, vector<1x8x128xf32>
      %505 = vector.shape_cast %504 : vector<1x8x128xf32> to vector<8x128xf32>
      %506 = arith.mulf %505, %70 : vector<8x128xf32>
      %507 = arith.addf %500, %506 : vector<8x128xf32>
      %508 = arith.mulf %505, %73 : vector<8x128xf32>
      %509 = arith.addf %502, %508 : vector<8x128xf32>
      %c54 = arith.constant 54 : index
      %510 = arith.index_cast %37 : i32 to index
      %c0_133 = arith.constant 0 : index
      %511 = vector.load %arg4[%c54, %510, %c0_133] : memref<64x16x128xf32, #tpu.memory_space<vmem>>, vector<1x8x128xf32>
      %512 = vector.shape_cast %511 : vector<1x8x128xf32> to vector<8x128xf32>
      %513 = arith.mulf %512, %76 : vector<8x128xf32>
      %514 = arith.addf %507, %513 : vector<8x128xf32>
      %515 = arith.mulf %512, %79 : vector<8x128xf32>
      %516 = arith.addf %509, %515 : vector<8x128xf32>
      %c55 = arith.constant 55 : index
      %517 = arith.index_cast %37 : i32 to index
      %c0_134 = arith.constant 0 : index
      %518 = vector.load %arg4[%c55, %517, %c0_134] : memref<64x16x128xf32, #tpu.memory_space<vmem>>, vector<1x8x128xf32>
      %519 = vector.shape_cast %518 : vector<1x8x128xf32> to vector<8x128xf32>
      %520 = arith.mulf %519, %82 : vector<8x128xf32>
      %521 = arith.addf %514, %520 : vector<8x128xf32>
      %522 = arith.mulf %519, %85 : vector<8x128xf32>
      %523 = arith.addf %516, %522 : vector<8x128xf32>
      %cst_135 = arith.constant 0.000000e+00 : f32
      %524 = vector.broadcast %cst_135 : f32 to vector<8x128xf32>
      %525 = arith.cmpf oge, %521, %524 : vector<8x128xf32>
      %526 = vector.broadcast %0 : f32 to vector<8x128xf32>
      %527 = arith.mulf %526, %521 : vector<8x128xf32>
      %528 = arith.select %525, %521, %527 : vector<8x128xi1>, vector<8x128xf32>
      %cst_136 = arith.constant 0.000000e+00 : f32
      %529 = vector.broadcast %cst_136 : f32 to vector<8x128xf32>
      %530 = arith.cmpf oge, %523, %529 : vector<8x128xf32>
      %531 = vector.broadcast %0 : f32 to vector<8x128xf32>
      %532 = arith.mulf %531, %523 : vector<8x128xf32>
      %533 = arith.select %530, %523, %532 : vector<8x128xi1>, vector<8x128xf32>
      %c56 = arith.constant 56 : index
      %534 = arith.index_cast %37 : i32 to index
      %c0_137 = arith.constant 0 : index
      %535 = vector.load %arg4[%c56, %534, %c0_137] : memref<64x16x128xf32, #tpu.memory_space<vmem>>, vector<1x8x128xf32>
      %536 = vector.shape_cast %535 : vector<1x8x128xf32> to vector<8x128xf32>
      %537 = arith.mulf %536, %40 : vector<8x128xf32>
      %538 = arith.mulf %536, %43 : vector<8x128xf32>
      %c57 = arith.constant 57 : index
      %539 = arith.index_cast %37 : i32 to index
      %c0_138 = arith.constant 0 : index
      %540 = vector.load %arg4[%c57, %539, %c0_138] : memref<64x16x128xf32, #tpu.memory_space<vmem>>, vector<1x8x128xf32>
      %541 = vector.shape_cast %540 : vector<1x8x128xf32> to vector<8x128xf32>
      %542 = arith.mulf %541, %46 : vector<8x128xf32>
      %543 = arith.addf %537, %542 : vector<8x128xf32>
      %544 = arith.mulf %541, %49 : vector<8x128xf32>
      %545 = arith.addf %538, %544 : vector<8x128xf32>
      %c58 = arith.constant 58 : index
      %546 = arith.index_cast %37 : i32 to index
      %c0_139 = arith.constant 0 : index
      %547 = vector.load %arg4[%c58, %546, %c0_139] : memref<64x16x128xf32, #tpu.memory_space<vmem>>, vector<1x8x128xf32>
      %548 = vector.shape_cast %547 : vector<1x8x128xf32> to vector<8x128xf32>
      %549 = arith.mulf %548, %52 : vector<8x128xf32>
      %550 = arith.addf %543, %549 : vector<8x128xf32>
      %551 = arith.mulf %548, %55 : vector<8x128xf32>
      %552 = arith.addf %545, %551 : vector<8x128xf32>
      %c59 = arith.constant 59 : index
      %553 = arith.index_cast %37 : i32 to index
      %c0_140 = arith.constant 0 : index
      %554 = vector.load %arg4[%c59, %553, %c0_140] : memref<64x16x128xf32, #tpu.memory_space<vmem>>, vector<1x8x128xf32>
      %555 = vector.shape_cast %554 : vector<1x8x128xf32> to vector<8x128xf32>
      %556 = arith.mulf %555, %58 : vector<8x128xf32>
      %557 = arith.addf %550, %556 : vector<8x128xf32>
      %558 = arith.mulf %555, %61 : vector<8x128xf32>
      %559 = arith.addf %552, %558 : vector<8x128xf32>
      %c60 = arith.constant 60 : index
      %560 = arith.index_cast %37 : i32 to index
      %c0_141 = arith.constant 0 : index
      %561 = vector.load %arg4[%c60, %560, %c0_141] : memref<64x16x128xf32, #tpu.memory_space<vmem>>, vector<1x8x128xf32>
      %562 = vector.shape_cast %561 : vector<1x8x128xf32> to vector<8x128xf32>
      %563 = arith.mulf %562, %64 : vector<8x128xf32>
      %564 = arith.addf %557, %563 : vector<8x128xf32>
      %565 = arith.mulf %562, %67 : vector<8x128xf32>
      %566 = arith.addf %559, %565 : vector<8x128xf32>
      %c61 = arith.constant 61 : index
      %567 = arith.index_cast %37 : i32 to index
      %c0_142 = arith.constant 0 : index
      %568 = vector.load %arg4[%c61, %567, %c0_142] : memref<64x16x128xf32, #tpu.memory_space<vmem>>, vector<1x8x128xf32>
      %569 = vector.shape_cast %568 : vector<1x8x128xf32> to vector<8x128xf32>
      %570 = arith.mulf %569, %70 : vector<8x128xf32>
      %571 = arith.addf %564, %570 : vector<8x128xf32>
      %572 = arith.mulf %569, %73 : vector<8x128xf32>
      %573 = arith.addf %566, %572 : vector<8x128xf32>
      %c62 = arith.constant 62 : index
      %574 = arith.index_cast %37 : i32 to index
      %c0_143 = arith.constant 0 : index
      %575 = vector.load %arg4[%c62, %574, %c0_143] : memref<64x16x128xf32, #tpu.memory_space<vmem>>, vector<1x8x128xf32>
      %576 = vector.shape_cast %575 : vector<1x8x128xf32> to vector<8x128xf32>
      %577 = arith.mulf %576, %76 : vector<8x128xf32>
      %578 = arith.addf %571, %577 : vector<8x128xf32>
      %579 = arith.mulf %576, %79 : vector<8x128xf32>
      %580 = arith.addf %573, %579 : vector<8x128xf32>
      %c63 = arith.constant 63 : index
      %581 = arith.index_cast %37 : i32 to index
      %c0_144 = arith.constant 0 : index
      %582 = vector.load %arg4[%c63, %581, %c0_144] : memref<64x16x128xf32, #tpu.memory_space<vmem>>, vector<1x8x128xf32>
      %583 = vector.shape_cast %582 : vector<1x8x128xf32> to vector<8x128xf32>
      %584 = arith.mulf %583, %82 : vector<8x128xf32>
      %585 = arith.addf %578, %584 : vector<8x128xf32>
      %586 = arith.mulf %583, %85 : vector<8x128xf32>
      %587 = arith.addf %580, %586 : vector<8x128xf32>
      %cst_145 = arith.constant 0.000000e+00 : f32
      %588 = vector.broadcast %cst_145 : f32 to vector<8x128xf32>
      %589 = arith.cmpf oge, %585, %588 : vector<8x128xf32>
      %590 = vector.broadcast %0 : f32 to vector<8x128xf32>
      %591 = arith.mulf %590, %585 : vector<8x128xf32>
      %592 = arith.select %589, %585, %591 : vector<8x128xi1>, vector<8x128xf32>
      %cst_146 = arith.constant 0.000000e+00 : f32
      %593 = vector.broadcast %cst_146 : f32 to vector<8x128xf32>
      %594 = arith.cmpf oge, %587, %593 : vector<8x128xf32>
      %595 = vector.broadcast %0 : f32 to vector<8x128xf32>
      %596 = arith.mulf %595, %587 : vector<8x128xf32>
      %597 = arith.select %594, %587, %596 : vector<8x128xi1>, vector<8x128xf32>
      %cst_147 = arith.constant 0.000000e+00 : f32
      %598 = vector.broadcast %cst_147 : f32 to vector<8x128xf32>
      %599 = arith.cmpf oge, %40, %598 : vector<8x128xf32>
      %600 = vector.broadcast %0 : f32 to vector<8x128xf32>
      %601 = arith.mulf %600, %40 : vector<8x128xf32>
      %602 = arith.select %599, %40, %601 : vector<8x128xi1>, vector<8x128xf32>
      %cst_148 = arith.constant 0.000000e+00 : f32
      %603 = vector.broadcast %cst_148 : f32 to vector<8x128xf32>
      %604 = arith.cmpf oge, %43, %603 : vector<8x128xf32>
      %605 = vector.broadcast %0 : f32 to vector<8x128xf32>
      %606 = arith.mulf %605, %43 : vector<8x128xf32>
      %607 = arith.select %604, %43, %606 : vector<8x128xi1>, vector<8x128xf32>
      %c0_149 = arith.constant 0 : index
      %608 = arith.index_cast %37 : i32 to index
      %c0_150 = arith.constant 0 : index
      %609 = vector.load %arg4[%c0_149, %608, %c0_150] : memref<64x16x128xf32, #tpu.memory_space<vmem>>, vector<1x8x128xf32>
      %610 = vector.shape_cast %609 : vector<1x8x128xf32> to vector<8x128xf32>
      %611 = arith.mulf %610, %602 : vector<8x128xf32>
      %612 = arith.mulf %610, %607 : vector<8x128xf32>
      %c1_151 = arith.constant 1 : index
      %613 = arith.index_cast %37 : i32 to index
      %c0_152 = arith.constant 0 : index
      %614 = vector.load %arg4[%c1_151, %613, %c0_152] : memref<64x16x128xf32, #tpu.memory_space<vmem>>, vector<1x8x128xf32>
      %615 = vector.shape_cast %614 : vector<1x8x128xf32> to vector<8x128xf32>
      %616 = arith.mulf %615, %208 : vector<8x128xf32>
      %617 = arith.addf %611, %616 : vector<8x128xf32>
      %618 = arith.mulf %615, %213 : vector<8x128xf32>
      %619 = arith.addf %612, %618 : vector<8x128xf32>
      %c2_153 = arith.constant 2 : index
      %620 = arith.index_cast %37 : i32 to index
      %c0_154 = arith.constant 0 : index
      %621 = vector.load %arg4[%c2_153, %620, %c0_154] : memref<64x16x128xf32, #tpu.memory_space<vmem>>, vector<1x8x128xf32>
      %622 = vector.shape_cast %621 : vector<1x8x128xf32> to vector<8x128xf32>
      %623 = arith.mulf %622, %272 : vector<8x128xf32>
      %624 = arith.addf %617, %623 : vector<8x128xf32>
      %625 = arith.mulf %622, %277 : vector<8x128xf32>
      %626 = arith.addf %619, %625 : vector<8x128xf32>
      %c3_155 = arith.constant 3 : index
      %627 = arith.index_cast %37 : i32 to index
      %c0_156 = arith.constant 0 : index
      %628 = vector.load %arg4[%c3_155, %627, %c0_156] : memref<64x16x128xf32, #tpu.memory_space<vmem>>, vector<1x8x128xf32>
      %629 = vector.shape_cast %628 : vector<1x8x128xf32> to vector<8x128xf32>
      %630 = arith.mulf %629, %336 : vector<8x128xf32>
      %631 = arith.addf %624, %630 : vector<8x128xf32>
      %632 = arith.mulf %629, %341 : vector<8x128xf32>
      %633 = arith.addf %626, %632 : vector<8x128xf32>
      %c4_157 = arith.constant 4 : index
      %634 = arith.index_cast %37 : i32 to index
      %c0_158 = arith.constant 0 : index
      %635 = vector.load %arg4[%c4_157, %634, %c0_158] : memref<64x16x128xf32, #tpu.memory_space<vmem>>, vector<1x8x128xf32>
      %636 = vector.shape_cast %635 : vector<1x8x128xf32> to vector<8x128xf32>
      %637 = arith.mulf %636, %400 : vector<8x128xf32>
      %638 = arith.addf %631, %637 : vector<8x128xf32>
      %639 = arith.mulf %636, %405 : vector<8x128xf32>
      %640 = arith.addf %633, %639 : vector<8x128xf32>
      %c5_159 = arith.constant 5 : index
      %641 = arith.index_cast %37 : i32 to index
      %c0_160 = arith.constant 0 : index
      %642 = vector.load %arg4[%c5_159, %641, %c0_160] : memref<64x16x128xf32, #tpu.memory_space<vmem>>, vector<1x8x128xf32>
      %643 = vector.shape_cast %642 : vector<1x8x128xf32> to vector<8x128xf32>
      %644 = arith.mulf %643, %464 : vector<8x128xf32>
      %645 = arith.addf %638, %644 : vector<8x128xf32>
      %646 = arith.mulf %643, %469 : vector<8x128xf32>
      %647 = arith.addf %640, %646 : vector<8x128xf32>
      %c6_161 = arith.constant 6 : index
      %648 = arith.index_cast %37 : i32 to index
      %c0_162 = arith.constant 0 : index
      %649 = vector.load %arg4[%c6_161, %648, %c0_162] : memref<64x16x128xf32, #tpu.memory_space<vmem>>, vector<1x8x128xf32>
      %650 = vector.shape_cast %649 : vector<1x8x128xf32> to vector<8x128xf32>
      %651 = arith.mulf %650, %528 : vector<8x128xf32>
      %652 = arith.addf %645, %651 : vector<8x128xf32>
      %653 = arith.mulf %650, %533 : vector<8x128xf32>
      %654 = arith.addf %647, %653 : vector<8x128xf32>
      %c7_163 = arith.constant 7 : index
      %655 = arith.index_cast %37 : i32 to index
      %c0_164 = arith.constant 0 : index
      %656 = vector.load %arg4[%c7_163, %655, %c0_164] : memref<64x16x128xf32, #tpu.memory_space<vmem>>, vector<1x8x128xf32>
      %657 = vector.shape_cast %656 : vector<1x8x128xf32> to vector<8x128xf32>
      %658 = arith.mulf %657, %592 : vector<8x128xf32>
      %659 = arith.addf %652, %658 : vector<8x128xf32>
      %660 = arith.mulf %657, %597 : vector<8x128xf32>
      %661 = arith.addf %654, %660 : vector<8x128xf32>
      %662 = vector.broadcast %1 : f32 to vector<8x128xf32>
      %663 = arith.mulf %659, %662 : vector<8x128xf32>
      %664 = vector.broadcast %2 : f32 to vector<8x128xf32>
      %665 = arith.mulf %661, %664 : vector<8x128xf32>
      %666 = arith.addf %663, %665 : vector<8x128xf32>
      %cst_165 = arith.constant 0.000000e+00 : f32
      %667 = vector.broadcast %cst_165 : f32 to vector<8x128xf32>
      %668 = arith.cmpf oge, %666, %667 : vector<8x128xf32>
      %669 = vector.broadcast %0 : f32 to vector<8x128xf32>
      %670 = arith.mulf %669, %666 : vector<8x128xf32>
      %671 = arith.select %668, %666, %670 : vector<8x128xi1>, vector<8x128xf32>
      %c0_166 = arith.constant 0 : index
      %672 = arith.index_cast %37 : i32 to index
      %c0_167 = arith.constant 0 : index
      %673 = vector.load %arg5[%c0_166, %672, %c0_167] : memref<128x16x128xf32, #tpu.memory_space<vmem>>, vector<1x8x128xf32>
      %674 = vector.shape_cast %673 : vector<1x8x128xf32> to vector<8x128xf32>
      %675 = vector.shape_cast %671 : vector<8x128xf32> to vector<1x8x128xf32>
      tpu.vector_store %arg5[%c0_166, %672, %c0_167], %675 {strides = array<i32>} : memref<128x16x128xf32, #tpu.memory_space<vmem>>, vector<1x8x128xf32>,
      %676 = vector.broadcast %3 : f32 to vector<8x128xf32>
      %677 = arith.mulf %659, %676 : vector<8x128xf32>
      %678 = vector.broadcast %4 : f32 to vector<8x128xf32>
      %679 = arith.mulf %661, %678 : vector<8x128xf32>
      %680 = arith.addf %677, %679 : vector<8x128xf32>
      %cst_168 = arith.constant 0.000000e+00 : f32
      %681 = vector.broadcast %cst_168 : f32 to vector<8x128xf32>
      %682 = arith.cmpf oge, %680, %681 : vector<8x128xf32>
      %683 = vector.broadcast %0 : f32 to vector<8x128xf32>
      %684 = arith.mulf %683, %680 : vector<8x128xf32>
      %685 = arith.select %682, %680, %684 : vector<8x128xi1>, vector<8x128xf32>
      %c1_169 = arith.constant 1 : index
      %686 = arith.index_cast %37 : i32 to index
      %c0_170 = arith.constant 0 : index
      %687 = vector.load %arg5[%c1_169, %686, %c0_170] : memref<128x16x128xf32, #tpu.memory_space<vmem>>, vector<1x8x128xf32>
      %688 = vector.shape_cast %687 : vector<1x8x128xf32> to vector<8x128xf32>
      %689 = vector.shape_cast %685 : vector<8x128xf32> to vector<1x8x128xf32>
      tpu.vector_store %arg5[%c1_169, %686, %c0_170], %689 {strides = array<i32>} : memref<128x16x128xf32, #tpu.memory_space<vmem>>, vector<1x8x128xf32>,
      %690 = vector.broadcast %5 : f32 to vector<8x128xf32>
      %691 = arith.mulf %659, %690 : vector<8x128xf32>
      %692 = vector.broadcast %6 : f32 to vector<8x128xf32>
      %693 = arith.mulf %661, %692 : vector<8x128xf32>
      %694 = arith.addf %691, %693 : vector<8x128xf32>
      %cst_171 = arith.constant 0.000000e+00 : f32
      %695 = vector.broadcast %cst_171 : f32 to vector<8x128xf32>
      %696 = arith.cmpf oge, %694, %695 : vector<8x128xf32>
      %697 = vector.broadcast %0 : f32 to vector<8x128xf32>
      %698 = arith.mulf %697, %694 : vector<8x128xf32>
      %699 = arith.select %696, %694, %698 : vector<8x128xi1>, vector<8x128xf32>
      %c2_172 = arith.constant 2 : index
      %700 = arith.index_cast %37 : i32 to index
      %c0_173 = arith.constant 0 : index
      %701 = vector.load %arg5[%c2_172, %700, %c0_173] : memref<128x16x128xf32, #tpu.memory_space<vmem>>, vector<1x8x128xf32>
      %702 = vector.shape_cast %701 : vector<1x8x128xf32> to vector<8x128xf32>
      %703 = vector.shape_cast %699 : vector<8x128xf32> to vector<1x8x128xf32>
      tpu.vector_store %arg5[%c2_172, %700, %c0_173], %703 {strides = array<i32>} : memref<128x16x128xf32, #tpu.memory_space<vmem>>, vector<1x8x128xf32>,
      %704 = vector.broadcast %7 : f32 to vector<8x128xf32>
      %705 = arith.mulf %659, %704 : vector<8x128xf32>
      %706 = vector.broadcast %8 : f32 to vector<8x128xf32>
      %707 = arith.mulf %661, %706 : vector<8x128xf32>
      %708 = arith.addf %705, %707 : vector<8x128xf32>
      %cst_174 = arith.constant 0.000000e+00 : f32
      %709 = vector.broadcast %cst_174 : f32 to vector<8x128xf32>
      %710 = arith.cmpf oge, %708, %709 : vector<8x128xf32>
      %711 = vector.broadcast %0 : f32 to vector<8x128xf32>
      %712 = arith.mulf %711, %708 : vector<8x128xf32>
      %713 = arith.select %710, %708, %712 : vector<8x128xi1>, vector<8x128xf32>
      %c3_175 = arith.constant 3 : index
      %714 = arith.index_cast %37 : i32 to index
      %c0_176 = arith.constant 0 : index
      %715 = vector.load %arg5[%c3_175, %714, %c0_176] : memref<128x16x128xf32, #tpu.memory_space<vmem>>, vector<1x8x128xf32>
      %716 = vector.shape_cast %715 : vector<1x8x128xf32> to vector<8x128xf32>
      %717 = vector.shape_cast %713 : vector<8x128xf32> to vector<1x8x128xf32>
      tpu.vector_store %arg5[%c3_175, %714, %c0_176], %717 {strides = array<i32>} : memref<128x16x128xf32, #tpu.memory_space<vmem>>, vector<1x8x128xf32>,
      %718 = vector.broadcast %9 : f32 to vector<8x128xf32>
      %719 = arith.mulf %659, %718 : vector<8x128xf32>
      %720 = vector.broadcast %10 : f32 to vector<8x128xf32>
      %721 = arith.mulf %661, %720 : vector<8x128xf32>
      %722 = arith.addf %719, %721 : vector<8x128xf32>
      %cst_177 = arith.constant 0.000000e+00 : f32
      %723 = vector.broadcast %cst_177 : f32 to vector<8x128xf32>
      %724 = arith.cmpf oge, %722, %723 : vector<8x128xf32>
      %725 = vector.broadcast %0 : f32 to vector<8x128xf32>
      %726 = arith.mulf %725, %722 : vector<8x128xf32>
      %727 = arith.select %724, %722, %726 : vector<8x128xi1>, vector<8x128xf32>
      %c4_178 = arith.constant 4 : index
      %728 = arith.index_cast %37 : i32 to index
      %c0_179 = arith.constant 0 : index
      %729 = vector.load %arg5[%c4_178, %728, %c0_179] : memref<128x16x128xf32, #tpu.memory_space<vmem>>, vector<1x8x128xf32>
      %730 = vector.shape_cast %729 : vector<1x8x128xf32> to vector<8x128xf32>
      %731 = vector.shape_cast %727 : vector<8x128xf32> to vector<1x8x128xf32>
      tpu.vector_store %arg5[%c4_178, %728, %c0_179], %731 {strides = array<i32>} : memref<128x16x128xf32, #tpu.memory_space<vmem>>, vector<1x8x128xf32>,
      %732 = vector.broadcast %11 : f32 to vector<8x128xf32>
      %733 = arith.mulf %659, %732 : vector<8x128xf32>
      %734 = vector.broadcast %12 : f32 to vector<8x128xf32>
      %735 = arith.mulf %661, %734 : vector<8x128xf32>
      %736 = arith.addf %733, %735 : vector<8x128xf32>
      %cst_180 = arith.constant 0.000000e+00 : f32
      %737 = vector.broadcast %cst_180 : f32 to vector<8x128xf32>
      %738 = arith.cmpf oge, %736, %737 : vector<8x128xf32>
      %739 = vector.broadcast %0 : f32 to vector<8x128xf32>
      %740 = arith.mulf %739, %736 : vector<8x128xf32>
      %741 = arith.select %738, %736, %740 : vector<8x128xi1>, vector<8x128xf32>
      %c5_181 = arith.constant 5 : index
      %742 = arith.index_cast %37 : i32 to index
      %c0_182 = arith.constant 0 : index
      %743 = vector.load %arg5[%c5_181, %742, %c0_182] : memref<128x16x128xf32, #tpu.memory_space<vmem>>, vector<1x8x128xf32>
      %744 = vector.shape_cast %743 : vector<1x8x128xf32> to vector<8x128xf32>
      %745 = vector.shape_cast %741 : vector<8x128xf32> to vector<1x8x128xf32>
      tpu.vector_store %arg5[%c5_181, %742, %c0_182], %745 {strides = array<i32>} : memref<128x16x128xf32, #tpu.memory_space<vmem>>, vector<1x8x128xf32>,
      %746 = vector.broadcast %13 : f32 to vector<8x128xf32>
      %747 = arith.mulf %659, %746 : vector<8x128xf32>
      %748 = vector.broadcast %14 : f32 to vector<8x128xf32>
      %749 = arith.mulf %661, %748 : vector<8x128xf32>
      %750 = arith.addf %747, %749 : vector<8x128xf32>
      %cst_183 = arith.constant 0.000000e+00 : f32
      %751 = vector.broadcast %cst_183 : f32 to vector<8x128xf32>
      %752 = arith.cmpf oge, %750, %751 : vector<8x128xf32>
      %753 = vector.broadcast %0 : f32 to vector<8x128xf32>
      %754 = arith.mulf %753, %750 : vector<8x128xf32>
      %755 = arith.select %752, %750, %754 : vector<8x128xi1>, vector<8x128xf32>
      %c6_184 = arith.constant 6 : index
      %756 = arith.index_cast %37 : i32 to index
      %c0_185 = arith.constant 0 : index
      %757 = vector.load %arg5[%c6_184, %756, %c0_185] : memref<128x16x128xf32, #tpu.memory_space<vmem>>, vector<1x8x128xf32>
      %758 = vector.shape_cast %757 : vector<1x8x128xf32> to vector<8x128xf32>
      %759 = vector.shape_cast %755 : vector<8x128xf32> to vector<1x8x128xf32>
      tpu.vector_store %arg5[%c6_184, %756, %c0_185], %759 {strides = array<i32>} : memref<128x16x128xf32, #tpu.memory_space<vmem>>, vector<1x8x128xf32>,
      %760 = vector.broadcast %15 : f32 to vector<8x128xf32>
      %761 = arith.mulf %659, %760 : vector<8x128xf32>
      %762 = vector.broadcast %16 : f32 to vector<8x128xf32>
      %763 = arith.mulf %661, %762 : vector<8x128xf32>
      %764 = arith.addf %761, %763 : vector<8x128xf32>
      %cst_186 = arith.constant 0.000000e+00 : f32
      %765 = vector.broadcast %cst_186 : f32 to vector<8x128xf32>
      %766 = arith.cmpf oge, %764, %765 : vector<8x128xf32>
      %767 = vector.broadcast %0 : f32 to vector<8x128xf32>
      %768 = arith.mulf %767, %764 : vector<8x128xf32>
      %769 = arith.select %766, %764, %768 : vector<8x128xi1>, vector<8x128xf32>
      %c7_187 = arith.constant 7 : index
      %770 = arith.index_cast %37 : i32 to index
      %c0_188 = arith.constant 0 : index
      %771 = vector.load %arg5[%c7_187, %770, %c0_188] : memref<128x16x128xf32, #tpu.memory_space<vmem>>, vector<1x8x128xf32>
      %772 = vector.shape_cast %771 : vector<1x8x128xf32> to vector<8x128xf32>
      %773 = vector.shape_cast %769 : vector<8x128xf32> to vector<1x8x128xf32>
      tpu.vector_store %arg5[%c7_187, %770, %c0_188], %773 {strides = array<i32>} : memref<128x16x128xf32, #tpu.memory_space<vmem>>, vector<1x8x128xf32>,
      %774 = vector.broadcast %17 : f32 to vector<8x128xf32>
      %775 = arith.mulf %659, %774 : vector<8x128xf32>
      %776 = vector.broadcast %18 : f32 to vector<8x128xf32>
      %777 = arith.mulf %661, %776 : vector<8x128xf32>
      %778 = arith.addf %775, %777 : vector<8x128xf32>
      %cst_189 = arith.constant 0.000000e+00 : f32
      %779 = vector.broadcast %cst_189 : f32 to vector<8x128xf32>
      %780 = arith.cmpf oge, %778, %779 : vector<8x128xf32>
      %781 = vector.broadcast %0 : f32 to vector<8x128xf32>
      %782 = arith.mulf %781, %778 : vector<8x128xf32>
      %783 = arith.select %780, %778, %782 : vector<8x128xi1>, vector<8x128xf32>
      %c8_190 = arith.constant 8 : index
      %784 = arith.index_cast %37 : i32 to index
      %c0_191 = arith.constant 0 : index
      %785 = vector.load %arg5[%c8_190, %784, %c0_191] : memref<128x16x128xf32, #tpu.memory_space<vmem>>, vector<1x8x128xf32>
      %786 = vector.shape_cast %785 : vector<1x8x128xf32> to vector<8x128xf32>
      %787 = vector.shape_cast %783 : vector<8x128xf32> to vector<1x8x128xf32>
      tpu.vector_store %arg5[%c8_190, %784, %c0_191], %787 {strides = array<i32>} : memref<128x16x128xf32, #tpu.memory_space<vmem>>, vector<1x8x128xf32>,
      %788 = vector.broadcast %19 : f32 to vector<8x128xf32>
      %789 = arith.mulf %659, %788 : vector<8x128xf32>
      %790 = vector.broadcast %20 : f32 to vector<8x128xf32>
      %791 = arith.mulf %661, %790 : vector<8x128xf32>
      %792 = arith.addf %789, %791 : vector<8x128xf32>
      %cst_192 = arith.constant 0.000000e+00 : f32
      %793 = vector.broadcast %cst_192 : f32 to vector<8x128xf32>
      %794 = arith.cmpf oge, %792, %793 : vector<8x128xf32>
      %795 = vector.broadcast %0 : f32 to vector<8x128xf32>
      %796 = arith.mulf %795, %792 : vector<8x128xf32>
      %797 = arith.select %794, %792, %796 : vector<8x128xi1>, vector<8x128xf32>
      %c9_193 = arith.constant 9 : index
      %798 = arith.index_cast %37 : i32 to index
      %c0_194 = arith.constant 0 : index
      %799 = vector.load %arg5[%c9_193, %798, %c0_194] : memref<128x16x128xf32, #tpu.memory_space<vmem>>, vector<1x8x128xf32>
      %800 = vector.shape_cast %799 : vector<1x8x128xf32> to vector<8x128xf32>
      %801 = vector.shape_cast %797 : vector<8x128xf32> to vector<1x8x128xf32>
      tpu.vector_store %arg5[%c9_193, %798, %c0_194], %801 {strides = array<i32>} : memref<128x16x128xf32, #tpu.memory_space<vmem>>, vector<1x8x128xf32>,
      %802 = vector.broadcast %21 : f32 to vector<8x128xf32>
      %803 = arith.mulf %659, %802 : vector<8x128xf32>
      %804 = vector.broadcast %22 : f32 to vector<8x128xf32>
      %805 = arith.mulf %661, %804 : vector<8x128xf32>
      %806 = arith.addf %803, %805 : vector<8x128xf32>
      %cst_195 = arith.constant 0.000000e+00 : f32
      %807 = vector.broadcast %cst_195 : f32 to vector<8x128xf32>
      %808 = arith.cmpf oge, %806, %807 : vector<8x128xf32>
      %809 = vector.broadcast %0 : f32 to vector<8x128xf32>
      %810 = arith.mulf %809, %806 : vector<8x128xf32>
      %811 = arith.select %808, %806, %810 : vector<8x128xi1>, vector<8x128xf32>
      %c10_196 = arith.constant 10 : index
      %812 = arith.index_cast %37 : i32 to index
      %c0_197 = arith.constant 0 : index
      %813 = vector.load %arg5[%c10_196, %812, %c0_197] : memref<128x16x128xf32, #tpu.memory_space<vmem>>, vector<1x8x128xf32>
      %814 = vector.shape_cast %813 : vector<1x8x128xf32> to vector<8x128xf32>
      %815 = vector.shape_cast %811 : vector<8x128xf32> to vector<1x8x128xf32>
      tpu.vector_store %arg5[%c10_196, %812, %c0_197], %815 {strides = array<i32>} : memref<128x16x128xf32, #tpu.memory_space<vmem>>, vector<1x8x128xf32>,
      %816 = vector.broadcast %23 : f32 to vector<8x128xf32>
      %817 = arith.mulf %659, %816 : vector<8x128xf32>
      %818 = vector.broadcast %24 : f32 to vector<8x128xf32>
      %819 = arith.mulf %661, %818 : vector<8x128xf32>
      %820 = arith.addf %817, %819 : vector<8x128xf32>
      %cst_198 = arith.constant 0.000000e+00 : f32
      %821 = vector.broadcast %cst_198 : f32 to vector<8x128xf32>
      %822 = arith.cmpf oge, %820, %821 : vector<8x128xf32>
      %823 = vector.broadcast %0 : f32 to vector<8x128xf32>
      %824 = arith.mulf %823, %820 : vector<8x128xf32>
      %825 = arith.select %822, %820, %824 : vector<8x128xi1>, vector<8x128xf32>
      %c11_199 = arith.constant 11 : index
      %826 = arith.index_cast %37 : i32 to index
      %c0_200 = arith.constant 0 : index
      %827 = vector.load %arg5[%c11_199, %826, %c0_200] : memref<128x16x128xf32, #tpu.memory_space<vmem>>, vector<1x8x128xf32>
      %828 = vector.shape_cast %827 : vector<1x8x128xf32> to vector<8x128xf32>
      %829 = vector.shape_cast %825 : vector<8x128xf32> to vector<1x8x128xf32>
      tpu.vector_store %arg5[%c11_199, %826, %c0_200], %829 {strides = array<i32>} : memref<128x16x128xf32, #tpu.memory_space<vmem>>, vector<1x8x128xf32>,
      %830 = vector.broadcast %25 : f32 to vector<8x128xf32>
      %831 = arith.mulf %659, %830 : vector<8x128xf32>
      %832 = vector.broadcast %26 : f32 to vector<8x128xf32>
      %833 = arith.mulf %661, %832 : vector<8x128xf32>
      %834 = arith.addf %831, %833 : vector<8x128xf32>
      %cst_201 = arith.constant 0.000000e+00 : f32
      %835 = vector.broadcast %cst_201 : f32 to vector<8x128xf32>
      %836 = arith.cmpf oge, %834, %835 : vector<8x128xf32>
      %837 = vector.broadcast %0 : f32 to vector<8x128xf32>
      %838 = arith.mulf %837, %834 : vector<8x128xf32>
      %839 = arith.select %836, %834, %838 : vector<8x128xi1>, vector<8x128xf32>
      %c12_202 = arith.constant 12 : index
      %840 = arith.index_cast %37 : i32 to index
      %c0_203 = arith.constant 0 : index
      %841 = vector.load %arg5[%c12_202, %840, %c0_203] : memref<128x16x128xf32, #tpu.memory_space<vmem>>, vector<1x8x128xf32>
      %842 = vector.shape_cast %841 : vector<1x8x128xf32> to vector<8x128xf32>
      %843 = vector.shape_cast %839 : vector<8x128xf32> to vector<1x8x128xf32>
      tpu.vector_store %arg5[%c12_202, %840, %c0_203], %843 {strides = array<i32>} : memref<128x16x128xf32, #tpu.memory_space<vmem>>, vector<1x8x128xf32>,
      %844 = vector.broadcast %27 : f32 to vector<8x128xf32>
      %845 = arith.mulf %659, %844 : vector<8x128xf32>
      %846 = vector.broadcast %28 : f32 to vector<8x128xf32>
      %847 = arith.mulf %661, %846 : vector<8x128xf32>
      %848 = arith.addf %845, %847 : vector<8x128xf32>
      %cst_204 = arith.constant 0.000000e+00 : f32
      %849 = vector.broadcast %cst_204 : f32 to vector<8x128xf32>
      %850 = arith.cmpf oge, %848, %849 : vector<8x128xf32>
      %851 = vector.broadcast %0 : f32 to vector<8x128xf32>
      %852 = arith.mulf %851, %848 : vector<8x128xf32>
      %853 = arith.select %850, %848, %852 : vector<8x128xi1>, vector<8x128xf32>
      %c13_205 = arith.constant 13 : index
      %854 = arith.index_cast %37 : i32 to index
      %c0_206 = arith.constant 0 : index
      %855 = vector.load %arg5[%c13_205, %854, %c0_206] : memref<128x16x128xf32, #tpu.memory_space<vmem>>, vector<1x8x128xf32>
      %856 = vector.shape_cast %855 : vector<1x8x128xf32> to vector<8x128xf32>
      %857 = vector.shape_cast %853 : vector<8x128xf32> to vector<1x8x128xf32>
      tpu.vector_store %arg5[%c13_205, %854, %c0_206], %857 {strides = array<i32>} : memref<128x16x128xf32, #tpu.memory_space<vmem>>, vector<1x8x128xf32>,
      %858 = vector.broadcast %29 : f32 to vector<8x128xf32>
      %859 = arith.mulf %659, %858 : vector<8x128xf32>
      %860 = vector.broadcast %30 : f32 to vector<8x128xf32>
      %861 = arith.mulf %661, %860 : vector<8x128xf32>
      %862 = arith.addf %859, %861 : vector<8x128xf32>
      %cst_207 = arith.constant 0.000000e+00 : f32
      %863 = vector.broadcast %cst_207 : f32 to vector<8x128xf32>
      %864 = arith.cmpf oge, %862, %863 : vector<8x128xf32>
      %865 = vector.broadcast %0 : f32 to vector<8x128xf32>
      %866 = arith.mulf %865, %862 : vector<8x128xf32>
      %867 = arith.select %864, %862, %866 : vector<8x128xi1>, vector<8x128xf32>
      %c14_208 = arith.constant 14 : index
      %868 = arith.index_cast %37 : i32 to index
      %c0_209 = arith.constant 0 : index
      %869 = vector.load %arg5[%c14_208, %868, %c0_209] : memref<128x16x128xf32, #tpu.memory_space<vmem>>, vector<1x8x128xf32>
      %870 = vector.shape_cast %869 : vector<1x8x128xf32> to vector<8x128xf32>
      %871 = vector.shape_cast %867 : vector<8x128xf32> to vector<1x8x128xf32>
      tpu.vector_store %arg5[%c14_208, %868, %c0_209], %871 {strides = array<i32>} : memref<128x16x128xf32, #tpu.memory_space<vmem>>, vector<1x8x128xf32>,
      %872 = vector.broadcast %31 : f32 to vector<8x128xf32>
      %873 = arith.mulf %659, %872 : vector<8x128xf32>
      %874 = vector.broadcast %32 : f32 to vector<8x128xf32>
      %875 = arith.mulf %661, %874 : vector<8x128xf32>
      %876 = arith.addf %873, %875 : vector<8x128xf32>
      %cst_210 = arith.constant 0.000000e+00 : f32
      %877 = vector.broadcast %cst_210 : f32 to vector<8x128xf32>
      %878 = arith.cmpf oge, %876, %877 : vector<8x128xf32>
      %879 = vector.broadcast %0 : f32 to vector<8x128xf32>
      %880 = arith.mulf %879, %876 : vector<8x128xf32>
      %881 = arith.select %878, %876, %880 : vector<8x128xi1>, vector<8x128xf32>
      %c15_211 = arith.constant 15 : index
      %882 = arith.index_cast %37 : i32 to index
      %c0_212 = arith.constant 0 : index
      %883 = vector.load %arg5[%c15_211, %882, %c0_212] : memref<128x16x128xf32, #tpu.memory_space<vmem>>, vector<1x8x128xf32>
      %884 = vector.shape_cast %883 : vector<1x8x128xf32> to vector<8x128xf32>
      %885 = vector.shape_cast %881 : vector<8x128xf32> to vector<1x8x128xf32>
      tpu.vector_store %arg5[%c15_211, %882, %c0_212], %885 {strides = array<i32>} : memref<128x16x128xf32, #tpu.memory_space<vmem>>, vector<1x8x128xf32>,
      %cst_213 = arith.constant 0.000000e+00 : f32
      %886 = vector.broadcast %cst_213 : f32 to vector<8x128xf32>
      %887 = arith.cmpf oge, %46, %886 : vector<8x128xf32>
      %888 = vector.broadcast %0 : f32 to vector<8x128xf32>
      %889 = arith.mulf %888, %46 : vector<8x128xf32>
      %890 = arith.select %887, %46, %889 : vector<8x128xi1>, vector<8x128xf32>
      %cst_214 = arith.constant 0.000000e+00 : f32
      %891 = vector.broadcast %cst_214 : f32 to vector<8x128xf32>
      %892 = arith.cmpf oge, %49, %891 : vector<8x128xf32>
      %893 = vector.broadcast %0 : f32 to vector<8x128xf32>
      %894 = arith.mulf %893, %49 : vector<8x128xf32>
      %895 = arith.select %892, %49, %894 : vector<8x128xi1>, vector<8x128xf32>
      %c8_215 = arith.constant 8 : index
      %896 = arith.index_cast %37 : i32 to index
      %c0_216 = arith.constant 0 : index
      %897 = vector.load %arg4[%c8_215, %896, %c0_216] : memref<64x16x128xf32, #tpu.memory_space<vmem>>, vector<1x8x128xf32>
      %898 = vector.shape_cast %897 : vector<1x8x128xf32> to vector<8x128xf32>
      %899 = arith.mulf %898, %144 : vector<8x128xf32>
      %900 = arith.mulf %898, %149 : vector<8x128xf32>
      %c9_217 = arith.constant 9 : index
      %901 = arith.index_cast %37 : i32 to index
      %c0_218 = arith.constant 0 : index
      %902 = vector.load %arg4[%c9_217, %901, %c0_218] : memref<64x16x128xf32, #tpu.memory_space<vmem>>, vector<1x8x128xf32>
      %903 = vector.shape_cast %902 : vector<1x8x128xf32> to vector<8x128xf32>
      %904 = arith.mulf %903, %890 : vector<8x128xf32>
      %905 = arith.addf %899, %904 : vector<8x128xf32>
      %906 = arith.mulf %903, %895 : vector<8x128xf32>
      %907 = arith.addf %900, %906 : vector<8x128xf32>
      %c10_219 = arith.constant 10 : index
      %908 = arith.index_cast %37 : i32 to index
      %c0_220 = arith.constant 0 : index
      %909 = vector.load %arg4[%c10_219, %908, %c0_220] : memref<64x16x128xf32, #tpu.memory_space<vmem>>, vector<1x8x128xf32>
      %910 = vector.shape_cast %909 : vector<1x8x128xf32> to vector<8x128xf32>
      %911 = arith.mulf %910, %272 : vector<8x128xf32>
      %912 = arith.addf %905, %911 : vector<8x128xf32>
      %913 = arith.mulf %910, %277 : vector<8x128xf32>
      %914 = arith.addf %907, %913 : vector<8x128xf32>
      %c11_221 = arith.constant 11 : index
      %915 = arith.index_cast %37 : i32 to index
      %c0_222 = arith.constant 0 : index
      %916 = vector.load %arg4[%c11_221, %915, %c0_222] : memref<64x16x128xf32, #tpu.memory_space<vmem>>, vector<1x8x128xf32>
      %917 = vector.shape_cast %916 : vector<1x8x128xf32> to vector<8x128xf32>
      %918 = arith.mulf %917, %336 : vector<8x128xf32>
      %919 = arith.addf %912, %918 : vector<8x128xf32>
      %920 = arith.mulf %917, %341 : vector<8x128xf32>
      %921 = arith.addf %914, %920 : vector<8x128xf32>
      %c12_223 = arith.constant 12 : index
      %922 = arith.index_cast %37 : i32 to index
      %c0_224 = arith.constant 0 : index
      %923 = vector.load %arg4[%c12_223, %922, %c0_224] : memref<64x16x128xf32, #tpu.memory_space<vmem>>, vector<1x8x128xf32>
      %924 = vector.shape_cast %923 : vector<1x8x128xf32> to vector<8x128xf32>
      %925 = arith.mulf %924, %400 : vector<8x128xf32>
      %926 = arith.addf %919, %925 : vector<8x128xf32>
      %927 = arith.mulf %924, %405 : vector<8x128xf32>
      %928 = arith.addf %921, %927 : vector<8x128xf32>
      %c13_225 = arith.constant 13 : index
      %929 = arith.index_cast %37 : i32 to index
      %c0_226 = arith.constant 0 : index
      %930 = vector.load %arg4[%c13_225, %929, %c0_226] : memref<64x16x128xf32, #tpu.memory_space<vmem>>, vector<1x8x128xf32>
      %931 = vector.shape_cast %930 : vector<1x8x128xf32> to vector<8x128xf32>
      %932 = arith.mulf %931, %464 : vector<8x128xf32>
      %933 = arith.addf %926, %932 : vector<8x128xf32>
      %934 = arith.mulf %931, %469 : vector<8x128xf32>
      %935 = arith.addf %928, %934 : vector<8x128xf32>
      %c14_227 = arith.constant 14 : index
      %936 = arith.index_cast %37 : i32 to index
      %c0_228 = arith.constant 0 : index
      %937 = vector.load %arg4[%c14_227, %936, %c0_228] : memref<64x16x128xf32, #tpu.memory_space<vmem>>, vector<1x8x128xf32>
      %938 = vector.shape_cast %937 : vector<1x8x128xf32> to vector<8x128xf32>
      %939 = arith.mulf %938, %528 : vector<8x128xf32>
      %940 = arith.addf %933, %939 : vector<8x128xf32>
      %941 = arith.mulf %938, %533 : vector<8x128xf32>
      %942 = arith.addf %935, %941 : vector<8x128xf32>
      %c15_229 = arith.constant 15 : index
      %943 = arith.index_cast %37 : i32 to index
      %c0_230 = arith.constant 0 : index
      %944 = vector.load %arg4[%c15_229, %943, %c0_230] : memref<64x16x128xf32, #tpu.memory_space<vmem>>, vector<1x8x128xf32>
      %945 = vector.shape_cast %944 : vector<1x8x128xf32> to vector<8x128xf32>
      %946 = arith.mulf %945, %592 : vector<8x128xf32>
      %947 = arith.addf %940, %946 : vector<8x128xf32>
      %948 = arith.mulf %945, %597 : vector<8x128xf32>
      %949 = arith.addf %942, %948 : vector<8x128xf32>
      %950 = vector.broadcast %1 : f32 to vector<8x128xf32>
      %951 = arith.mulf %947, %950 : vector<8x128xf32>
      %952 = vector.broadcast %2 : f32 to vector<8x128xf32>
      %953 = arith.mulf %949, %952 : vector<8x128xf32>
      %954 = arith.addf %951, %953 : vector<8x128xf32>
      %cst_231 = arith.constant 0.000000e+00 : f32
      %955 = vector.broadcast %cst_231 : f32 to vector<8x128xf32>
      %956 = arith.cmpf oge, %954, %955 : vector<8x128xf32>
      %957 = vector.broadcast %0 : f32 to vector<8x128xf32>
      %958 = arith.mulf %957, %954 : vector<8x128xf32>
      %959 = arith.select %956, %954, %958 : vector<8x128xi1>, vector<8x128xf32>
      %c16_232 = arith.constant 16 : index
      %960 = arith.index_cast %37 : i32 to index
      %c0_233 = arith.constant 0 : index
      %961 = vector.load %arg5[%c16_232, %960, %c0_233] : memref<128x16x128xf32, #tpu.memory_space<vmem>>, vector<1x8x128xf32>
      %962 = vector.shape_cast %961 : vector<1x8x128xf32> to vector<8x128xf32>
      %963 = vector.shape_cast %959 : vector<8x128xf32> to vector<1x8x128xf32>
      tpu.vector_store %arg5[%c16_232, %960, %c0_233], %963 {strides = array<i32>} : memref<128x16x128xf32, #tpu.memory_space<vmem>>, vector<1x8x128xf32>,
      %964 = vector.broadcast %3 : f32 to vector<8x128xf32>
      %965 = arith.mulf %947, %964 : vector<8x128xf32>
      %966 = vector.broadcast %4 : f32 to vector<8x128xf32>
      %967 = arith.mulf %949, %966 : vector<8x128xf32>
      %968 = arith.addf %965, %967 : vector<8x128xf32>
      %cst_234 = arith.constant 0.000000e+00 : f32
      %969 = vector.broadcast %cst_234 : f32 to vector<8x128xf32>
      %970 = arith.cmpf oge, %968, %969 : vector<8x128xf32>
      %971 = vector.broadcast %0 : f32 to vector<8x128xf32>
      %972 = arith.mulf %971, %968 : vector<8x128xf32>
      %973 = arith.select %970, %968, %972 : vector<8x128xi1>, vector<8x128xf32>
      %c17_235 = arith.constant 17 : index
      %974 = arith.index_cast %37 : i32 to index
      %c0_236 = arith.constant 0 : index
      %975 = vector.load %arg5[%c17_235, %974, %c0_236] : memref<128x16x128xf32, #tpu.memory_space<vmem>>, vector<1x8x128xf32>
      %976 = vector.shape_cast %975 : vector<1x8x128xf32> to vector<8x128xf32>
      %977 = vector.shape_cast %973 : vector<8x128xf32> to vector<1x8x128xf32>
      tpu.vector_store %arg5[%c17_235, %974, %c0_236], %977 {strides = array<i32>} : memref<128x16x128xf32, #tpu.memory_space<vmem>>, vector<1x8x128xf32>,
      %978 = vector.broadcast %5 : f32 to vector<8x128xf32>
      %979 = arith.mulf %947, %978 : vector<8x128xf32>
      %980 = vector.broadcast %6 : f32 to vector<8x128xf32>
      %981 = arith.mulf %949, %980 : vector<8x128xf32>
      %982 = arith.addf %979, %981 : vector<8x128xf32>
      %cst_237 = arith.constant 0.000000e+00 : f32
      %983 = vector.broadcast %cst_237 : f32 to vector<8x128xf32>
      %984 = arith.cmpf oge, %982, %983 : vector<8x128xf32>
      %985 = vector.broadcast %0 : f32 to vector<8x128xf32>
      %986 = arith.mulf %985, %982 : vector<8x128xf32>
      %987 = arith.select %984, %982, %986 : vector<8x128xi1>, vector<8x128xf32>
      %c18_238 = arith.constant 18 : index
      %988 = arith.index_cast %37 : i32 to index
      %c0_239 = arith.constant 0 : index
      %989 = vector.load %arg5[%c18_238, %988, %c0_239] : memref<128x16x128xf32, #tpu.memory_space<vmem>>, vector<1x8x128xf32>
      %990 = vector.shape_cast %989 : vector<1x8x128xf32> to vector<8x128xf32>
      %991 = vector.shape_cast %987 : vector<8x128xf32> to vector<1x8x128xf32>
      tpu.vector_store %arg5[%c18_238, %988, %c0_239], %991 {strides = array<i32>} : memref<128x16x128xf32, #tpu.memory_space<vmem>>, vector<1x8x128xf32>,
      %992 = vector.broadcast %7 : f32 to vector<8x128xf32>
      %993 = arith.mulf %947, %992 : vector<8x128xf32>
      %994 = vector.broadcast %8 : f32 to vector<8x128xf32>
      %995 = arith.mulf %949, %994 : vector<8x128xf32>
      %996 = arith.addf %993, %995 : vector<8x128xf32>
      %cst_240 = arith.constant 0.000000e+00 : f32
      %997 = vector.broadcast %cst_240 : f32 to vector<8x128xf32>
      %998 = arith.cmpf oge, %996, %997 : vector<8x128xf32>
      %999 = vector.broadcast %0 : f32 to vector<8x128xf32>
      %1000 = arith.mulf %999, %996 : vector<8x128xf32>
      %1001 = arith.select %998, %996, %1000 : vector<8x128xi1>, vector<8x128xf32>
      %c19_241 = arith.constant 19 : index
      %1002 = arith.index_cast %37 : i32 to index
      %c0_242 = arith.constant 0 : index
      %1003 = vector.load %arg5[%c19_241, %1002, %c0_242] : memref<128x16x128xf32, #tpu.memory_space<vmem>>, vector<1x8x128xf32>
      %1004 = vector.shape_cast %1003 : vector<1x8x128xf32> to vector<8x128xf32>
      %1005 = vector.shape_cast %1001 : vector<8x128xf32> to vector<1x8x128xf32>
      tpu.vector_store %arg5[%c19_241, %1002, %c0_242], %1005 {strides = array<i32>} : memref<128x16x128xf32, #tpu.memory_space<vmem>>, vector<1x8x128xf32>,
      %1006 = vector.broadcast %9 : f32 to vector<8x128xf32>
      %1007 = arith.mulf %947, %1006 : vector<8x128xf32>
      %1008 = vector.broadcast %10 : f32 to vector<8x128xf32>
      %1009 = arith.mulf %949, %1008 : vector<8x128xf32>
      %1010 = arith.addf %1007, %1009 : vector<8x128xf32>
      %cst_243 = arith.constant 0.000000e+00 : f32
      %1011 = vector.broadcast %cst_243 : f32 to vector<8x128xf32>
      %1012 = arith.cmpf oge, %1010, %1011 : vector<8x128xf32>
      %1013 = vector.broadcast %0 : f32 to vector<8x128xf32>
      %1014 = arith.mulf %1013, %1010 : vector<8x128xf32>
      %1015 = arith.select %1012, %1010, %1014 : vector<8x128xi1>, vector<8x128xf32>
      %c20_244 = arith.constant 20 : index
      %1016 = arith.index_cast %37 : i32 to index
      %c0_245 = arith.constant 0 : index
      %1017 = vector.load %arg5[%c20_244, %1016, %c0_245] : memref<128x16x128xf32, #tpu.memory_space<vmem>>, vector<1x8x128xf32>
      %1018 = vector.shape_cast %1017 : vector<1x8x128xf32> to vector<8x128xf32>
      %1019 = vector.shape_cast %1015 : vector<8x128xf32> to vector<1x8x128xf32>
      tpu.vector_store %arg5[%c20_244, %1016, %c0_245], %1019 {strides = array<i32>} : memref<128x16x128xf32, #tpu.memory_space<vmem>>, vector<1x8x128xf32>,
      %1020 = vector.broadcast %11 : f32 to vector<8x128xf32>
      %1021 = arith.mulf %947, %1020 : vector<8x128xf32>
      %1022 = vector.broadcast %12 : f32 to vector<8x128xf32>
      %1023 = arith.mulf %949, %1022 : vector<8x128xf32>
      %1024 = arith.addf %1021, %1023 : vector<8x128xf32>
      %cst_246 = arith.constant 0.000000e+00 : f32
      %1025 = vector.broadcast %cst_246 : f32 to vector<8x128xf32>
      %1026 = arith.cmpf oge, %1024, %1025 : vector<8x128xf32>
      %1027 = vector.broadcast %0 : f32 to vector<8x128xf32>
      %1028 = arith.mulf %1027, %1024 : vector<8x128xf32>
      %1029 = arith.select %1026, %1024, %1028 : vector<8x128xi1>, vector<8x128xf32>
      %c21_247 = arith.constant 21 : index
      %1030 = arith.index_cast %37 : i32 to index
      %c0_248 = arith.constant 0 : index
      %1031 = vector.load %arg5[%c21_247, %1030, %c0_248] : memref<128x16x128xf32, #tpu.memory_space<vmem>>, vector<1x8x128xf32>
      %1032 = vector.shape_cast %1031 : vector<1x8x128xf32> to vector<8x128xf32>
      %1033 = vector.shape_cast %1029 : vector<8x128xf32> to vector<1x8x128xf32>
      tpu.vector_store %arg5[%c21_247, %1030, %c0_248], %1033 {strides = array<i32>} : memref<128x16x128xf32, #tpu.memory_space<vmem>>, vector<1x8x128xf32>,
      %1034 = vector.broadcast %13 : f32 to vector<8x128xf32>
      %1035 = arith.mulf %947, %1034 : vector<8x128xf32>
      %1036 = vector.broadcast %14 : f32 to vector<8x128xf32>
      %1037 = arith.mulf %949, %1036 : vector<8x128xf32>
      %1038 = arith.addf %1035, %1037 : vector<8x128xf32>
      %cst_249 = arith.constant 0.000000e+00 : f32
      %1039 = vector.broadcast %cst_249 : f32 to vector<8x128xf32>
      %1040 = arith.cmpf oge, %1038, %1039 : vector<8x128xf32>
      %1041 = vector.broadcast %0 : f32 to vector<8x128xf32>
      %1042 = arith.mulf %1041, %1038 : vector<8x128xf32>
      %1043 = arith.select %1040, %1038, %1042 : vector<8x128xi1>, vector<8x128xf32>
      %c22_250 = arith.constant 22 : index
      %1044 = arith.index_cast %37 : i32 to index
      %c0_251 = arith.constant 0 : index
      %1045 = vector.load %arg5[%c22_250, %1044, %c0_251] : memref<128x16x128xf32, #tpu.memory_space<vmem>>, vector<1x8x128xf32>
      %1046 = vector.shape_cast %1045 : vector<1x8x128xf32> to vector<8x128xf32>
      %1047 = vector.shape_cast %1043 : vector<8x128xf32> to vector<1x8x128xf32>
      tpu.vector_store %arg5[%c22_250, %1044, %c0_251], %1047 {strides = array<i32>} : memref<128x16x128xf32, #tpu.memory_space<vmem>>, vector<1x8x128xf32>,
      %1048 = vector.broadcast %15 : f32 to vector<8x128xf32>
      %1049 = arith.mulf %947, %1048 : vector<8x128xf32>
      %1050 = vector.broadcast %16 : f32 to vector<8x128xf32>
      %1051 = arith.mulf %949, %1050 : vector<8x128xf32>
      %1052 = arith.addf %1049, %1051 : vector<8x128xf32>
      %cst_252 = arith.constant 0.000000e+00 : f32
      %1053 = vector.broadcast %cst_252 : f32 to vector<8x128xf32>
      %1054 = arith.cmpf oge, %1052, %1053 : vector<8x128xf32>
      %1055 = vector.broadcast %0 : f32 to vector<8x128xf32>
      %1056 = arith.mulf %1055, %1052 : vector<8x128xf32>
      %1057 = arith.select %1054, %1052, %1056 : vector<8x128xi1>, vector<8x128xf32>
      %c23_253 = arith.constant 23 : index
      %1058 = arith.index_cast %37 : i32 to index
      %c0_254 = arith.constant 0 : index
      %1059 = vector.load %arg5[%c23_253, %1058, %c0_254] : memref<128x16x128xf32, #tpu.memory_space<vmem>>, vector<1x8x128xf32>
      %1060 = vector.shape_cast %1059 : vector<1x8x128xf32> to vector<8x128xf32>
      %1061 = vector.shape_cast %1057 : vector<8x128xf32> to vector<1x8x128xf32>
      tpu.vector_store %arg5[%c23_253, %1058, %c0_254], %1061 {strides = array<i32>} : memref<128x16x128xf32, #tpu.memory_space<vmem>>, vector<1x8x128xf32>,
      %1062 = vector.broadcast %17 : f32 to vector<8x128xf32>
      %1063 = arith.mulf %947, %1062 : vector<8x128xf32>
      %1064 = vector.broadcast %18 : f32 to vector<8x128xf32>
      %1065 = arith.mulf %949, %1064 : vector<8x128xf32>
      %1066 = arith.addf %1063, %1065 : vector<8x128xf32>
      %cst_255 = arith.constant 0.000000e+00 : f32
      %1067 = vector.broadcast %cst_255 : f32 to vector<8x128xf32>
      %1068 = arith.cmpf oge, %1066, %1067 : vector<8x128xf32>
      %1069 = vector.broadcast %0 : f32 to vector<8x128xf32>
      %1070 = arith.mulf %1069, %1066 : vector<8x128xf32>
      %1071 = arith.select %1068, %1066, %1070 : vector<8x128xi1>, vector<8x128xf32>
      %c24_256 = arith.constant 24 : index
      %1072 = arith.index_cast %37 : i32 to index
      %c0_257 = arith.constant 0 : index
      %1073 = vector.load %arg5[%c24_256, %1072, %c0_257] : memref<128x16x128xf32, #tpu.memory_space<vmem>>, vector<1x8x128xf32>
      %1074 = vector.shape_cast %1073 : vector<1x8x128xf32> to vector<8x128xf32>
      %1075 = vector.shape_cast %1071 : vector<8x128xf32> to vector<1x8x128xf32>
      tpu.vector_store %arg5[%c24_256, %1072, %c0_257], %1075 {strides = array<i32>} : memref<128x16x128xf32, #tpu.memory_space<vmem>>, vector<1x8x128xf32>,
      %1076 = vector.broadcast %19 : f32 to vector<8x128xf32>
      %1077 = arith.mulf %947, %1076 : vector<8x128xf32>
      %1078 = vector.broadcast %20 : f32 to vector<8x128xf32>
      %1079 = arith.mulf %949, %1078 : vector<8x128xf32>
      %1080 = arith.addf %1077, %1079 : vector<8x128xf32>
      %cst_258 = arith.constant 0.000000e+00 : f32
      %1081 = vector.broadcast %cst_258 : f32 to vector<8x128xf32>
      %1082 = arith.cmpf oge, %1080, %1081 : vector<8x128xf32>
      %1083 = vector.broadcast %0 : f32 to vector<8x128xf32>
      %1084 = arith.mulf %1083, %1080 : vector<8x128xf32>
      %1085 = arith.select %1082, %1080, %1084 : vector<8x128xi1>, vector<8x128xf32>
      %c25_259 = arith.constant 25 : index
      %1086 = arith.index_cast %37 : i32 to index
      %c0_260 = arith.constant 0 : index
      %1087 = vector.load %arg5[%c25_259, %1086, %c0_260] : memref<128x16x128xf32, #tpu.memory_space<vmem>>, vector<1x8x128xf32>
      %1088 = vector.shape_cast %1087 : vector<1x8x128xf32> to vector<8x128xf32>
      %1089 = vector.shape_cast %1085 : vector<8x128xf32> to vector<1x8x128xf32>
      tpu.vector_store %arg5[%c25_259, %1086, %c0_260], %1089 {strides = array<i32>} : memref<128x16x128xf32, #tpu.memory_space<vmem>>, vector<1x8x128xf32>,
      %1090 = vector.broadcast %21 : f32 to vector<8x128xf32>
      %1091 = arith.mulf %947, %1090 : vector<8x128xf32>
      %1092 = vector.broadcast %22 : f32 to vector<8x128xf32>
      %1093 = arith.mulf %949, %1092 : vector<8x128xf32>
      %1094 = arith.addf %1091, %1093 : vector<8x128xf32>
      %cst_261 = arith.constant 0.000000e+00 : f32
      %1095 = vector.broadcast %cst_261 : f32 to vector<8x128xf32>
      %1096 = arith.cmpf oge, %1094, %1095 : vector<8x128xf32>
      %1097 = vector.broadcast %0 : f32 to vector<8x128xf32>
      %1098 = arith.mulf %1097, %1094 : vector<8x128xf32>
      %1099 = arith.select %1096, %1094, %1098 : vector<8x128xi1>, vector<8x128xf32>
      %c26_262 = arith.constant 26 : index
      %1100 = arith.index_cast %37 : i32 to index
      %c0_263 = arith.constant 0 : index
      %1101 = vector.load %arg5[%c26_262, %1100, %c0_263] : memref<128x16x128xf32, #tpu.memory_space<vmem>>, vector<1x8x128xf32>
      %1102 = vector.shape_cast %1101 : vector<1x8x128xf32> to vector<8x128xf32>
      %1103 = vector.shape_cast %1099 : vector<8x128xf32> to vector<1x8x128xf32>
      tpu.vector_store %arg5[%c26_262, %1100, %c0_263], %1103 {strides = array<i32>} : memref<128x16x128xf32, #tpu.memory_space<vmem>>, vector<1x8x128xf32>,
      %1104 = vector.broadcast %23 : f32 to vector<8x128xf32>
      %1105 = arith.mulf %947, %1104 : vector<8x128xf32>
      %1106 = vector.broadcast %24 : f32 to vector<8x128xf32>
      %1107 = arith.mulf %949, %1106 : vector<8x128xf32>
      %1108 = arith.addf %1105, %1107 : vector<8x128xf32>
      %cst_264 = arith.constant 0.000000e+00 : f32
      %1109 = vector.broadcast %cst_264 : f32 to vector<8x128xf32>
      %1110 = arith.cmpf oge, %1108, %1109 : vector<8x128xf32>
      %1111 = vector.broadcast %0 : f32 to vector<8x128xf32>
      %1112 = arith.mulf %1111, %1108 : vector<8x128xf32>
      %1113 = arith.select %1110, %1108, %1112 : vector<8x128xi1>, vector<8x128xf32>
      %c27_265 = arith.constant 27 : index
      %1114 = arith.index_cast %37 : i32 to index
      %c0_266 = arith.constant 0 : index
      %1115 = vector.load %arg5[%c27_265, %1114, %c0_266] : memref<128x16x128xf32, #tpu.memory_space<vmem>>, vector<1x8x128xf32>
      %1116 = vector.shape_cast %1115 : vector<1x8x128xf32> to vector<8x128xf32>
      %1117 = vector.shape_cast %1113 : vector<8x128xf32> to vector<1x8x128xf32>
      tpu.vector_store %arg5[%c27_265, %1114, %c0_266], %1117 {strides = array<i32>} : memref<128x16x128xf32, #tpu.memory_space<vmem>>, vector<1x8x128xf32>,
      %1118 = vector.broadcast %25 : f32 to vector<8x128xf32>
      %1119 = arith.mulf %947, %1118 : vector<8x128xf32>
      %1120 = vector.broadcast %26 : f32 to vector<8x128xf32>
      %1121 = arith.mulf %949, %1120 : vector<8x128xf32>
      %1122 = arith.addf %1119, %1121 : vector<8x128xf32>
      %cst_267 = arith.constant 0.000000e+00 : f32
      %1123 = vector.broadcast %cst_267 : f32 to vector<8x128xf32>
      %1124 = arith.cmpf oge, %1122, %1123 : vector<8x128xf32>
      %1125 = vector.broadcast %0 : f32 to vector<8x128xf32>
      %1126 = arith.mulf %1125, %1122 : vector<8x128xf32>
      %1127 = arith.select %1124, %1122, %1126 : vector<8x128xi1>, vector<8x128xf32>
      %c28_268 = arith.constant 28 : index
      %1128 = arith.index_cast %37 : i32 to index
      %c0_269 = arith.constant 0 : index
      %1129 = vector.load %arg5[%c28_268, %1128, %c0_269] : memref<128x16x128xf32, #tpu.memory_space<vmem>>, vector<1x8x128xf32>
      %1130 = vector.shape_cast %1129 : vector<1x8x128xf32> to vector<8x128xf32>
      %1131 = vector.shape_cast %1127 : vector<8x128xf32> to vector<1x8x128xf32>
      tpu.vector_store %arg5[%c28_268, %1128, %c0_269], %1131 {strides = array<i32>} : memref<128x16x128xf32, #tpu.memory_space<vmem>>, vector<1x8x128xf32>,
      %1132 = vector.broadcast %27 : f32 to vector<8x128xf32>
      %1133 = arith.mulf %947, %1132 : vector<8x128xf32>
      %1134 = vector.broadcast %28 : f32 to vector<8x128xf32>
      %1135 = arith.mulf %949, %1134 : vector<8x128xf32>
      %1136 = arith.addf %1133, %1135 : vector<8x128xf32>
      %cst_270 = arith.constant 0.000000e+00 : f32
      %1137 = vector.broadcast %cst_270 : f32 to vector<8x128xf32>
      %1138 = arith.cmpf oge, %1136, %1137 : vector<8x128xf32>
      %1139 = vector.broadcast %0 : f32 to vector<8x128xf32>
      %1140 = arith.mulf %1139, %1136 : vector<8x128xf32>
      %1141 = arith.select %1138, %1136, %1140 : vector<8x128xi1>, vector<8x128xf32>
      %c29_271 = arith.constant 29 : index
      %1142 = arith.index_cast %37 : i32 to index
      %c0_272 = arith.constant 0 : index
      %1143 = vector.load %arg5[%c29_271, %1142, %c0_272] : memref<128x16x128xf32, #tpu.memory_space<vmem>>, vector<1x8x128xf32>
      %1144 = vector.shape_cast %1143 : vector<1x8x128xf32> to vector<8x128xf32>
      %1145 = vector.shape_cast %1141 : vector<8x128xf32> to vector<1x8x128xf32>
      tpu.vector_store %arg5[%c29_271, %1142, %c0_272], %1145 {strides = array<i32>} : memref<128x16x128xf32, #tpu.memory_space<vmem>>, vector<1x8x128xf32>,
      %1146 = vector.broadcast %29 : f32 to vector<8x128xf32>
      %1147 = arith.mulf %947, %1146 : vector<8x128xf32>
      %1148 = vector.broadcast %30 : f32 to vector<8x128xf32>
      %1149 = arith.mulf %949, %1148 : vector<8x128xf32>
      %1150 = arith.addf %1147, %1149 : vector<8x128xf32>
      %cst_273 = arith.constant 0.000000e+00 : f32
      %1151 = vector.broadcast %cst_273 : f32 to vector<8x128xf32>
      %1152 = arith.cmpf oge, %1150, %1151 : vector<8x128xf32>
      %1153 = vector.broadcast %0 : f32 to vector<8x128xf32>
      %1154 = arith.mulf %1153, %1150 : vector<8x128xf32>
      %1155 = arith.select %1152, %1150, %1154 : vector<8x128xi1>, vector<8x128xf32>
      %c30_274 = arith.constant 30 : index
      %1156 = arith.index_cast %37 : i32 to index
      %c0_275 = arith.constant 0 : index
      %1157 = vector.load %arg5[%c30_274, %1156, %c0_275] : memref<128x16x128xf32, #tpu.memory_space<vmem>>, vector<1x8x128xf32>
      %1158 = vector.shape_cast %1157 : vector<1x8x128xf32> to vector<8x128xf32>
      %1159 = vector.shape_cast %1155 : vector<8x128xf32> to vector<1x8x128xf32>
      tpu.vector_store %arg5[%c30_274, %1156, %c0_275], %1159 {strides = array<i32>} : memref<128x16x128xf32, #tpu.memory_space<vmem>>, vector<1x8x128xf32>,
      %1160 = vector.broadcast %31 : f32 to vector<8x128xf32>
      %1161 = arith.mulf %947, %1160 : vector<8x128xf32>
      %1162 = vector.broadcast %32 : f32 to vector<8x128xf32>
      %1163 = arith.mulf %949, %1162 : vector<8x128xf32>
      %1164 = arith.addf %1161, %1163 : vector<8x128xf32>
      %cst_276 = arith.constant 0.000000e+00 : f32
      %1165 = vector.broadcast %cst_276 : f32 to vector<8x128xf32>
      %1166 = arith.cmpf oge, %1164, %1165 : vector<8x128xf32>
      %1167 = vector.broadcast %0 : f32 to vector<8x128xf32>
      %1168 = arith.mulf %1167, %1164 : vector<8x128xf32>
      %1169 = arith.select %1166, %1164, %1168 : vector<8x128xi1>, vector<8x128xf32>
      %c31_277 = arith.constant 31 : index
      %1170 = arith.index_cast %37 : i32 to index
      %c0_278 = arith.constant 0 : index
      %1171 = vector.load %arg5[%c31_277, %1170, %c0_278] : memref<128x16x128xf32, #tpu.memory_space<vmem>>, vector<1x8x128xf32>
      %1172 = vector.shape_cast %1171 : vector<1x8x128xf32> to vector<8x128xf32>
      %1173 = vector.shape_cast %1169 : vector<8x128xf32> to vector<1x8x128xf32>
      tpu.vector_store %arg5[%c31_277, %1170, %c0_278], %1173 {strides = array<i32>} : memref<128x16x128xf32, #tpu.memory_space<vmem>>, vector<1x8x128xf32>,
      %cst_279 = arith.constant 0.000000e+00 : f32
      %1174 = vector.broadcast %cst_279 : f32 to vector<8x128xf32>
      %1175 = arith.cmpf oge, %52, %1174 : vector<8x128xf32>
      %1176 = vector.broadcast %0 : f32 to vector<8x128xf32>
      %1177 = arith.mulf %1176, %52 : vector<8x128xf32>
      %1178 = arith.select %1175, %52, %1177 : vector<8x128xi1>, vector<8x128xf32>
      %cst_280 = arith.constant 0.000000e+00 : f32
      %1179 = vector.broadcast %cst_280 : f32 to vector<8x128xf32>
      %1180 = arith.cmpf oge, %55, %1179 : vector<8x128xf32>
      %1181 = vector.broadcast %0 : f32 to vector<8x128xf32>
      %1182 = arith.mulf %1181, %55 : vector<8x128xf32>
      %1183 = arith.select %1180, %55, %1182 : vector<8x128xi1>, vector<8x128xf32>
      %c16_281 = arith.constant 16 : index
      %1184 = arith.index_cast %37 : i32 to index
      %c0_282 = arith.constant 0 : index
      %1185 = vector.load %arg4[%c16_281, %1184, %c0_282] : memref<64x16x128xf32, #tpu.memory_space<vmem>>, vector<1x8x128xf32>
      %1186 = vector.shape_cast %1185 : vector<1x8x128xf32> to vector<8x128xf32>
      %1187 = arith.mulf %1186, %144 : vector<8x128xf32>
      %1188 = arith.mulf %1186, %149 : vector<8x128xf32>
      %c17_283 = arith.constant 17 : index
      %1189 = arith.index_cast %37 : i32 to index
      %c0_284 = arith.constant 0 : index
      %1190 = vector.load %arg4[%c17_283, %1189, %c0_284] : memref<64x16x128xf32, #tpu.memory_space<vmem>>, vector<1x8x128xf32>
      %1191 = vector.shape_cast %1190 : vector<1x8x128xf32> to vector<8x128xf32>
      %1192 = arith.mulf %1191, %208 : vector<8x128xf32>
      %1193 = arith.addf %1187, %1192 : vector<8x128xf32>
      %1194 = arith.mulf %1191, %213 : vector<8x128xf32>
      %1195 = arith.addf %1188, %1194 : vector<8x128xf32>
      %c18_285 = arith.constant 18 : index
      %1196 = arith.index_cast %37 : i32 to index
      %c0_286 = arith.constant 0 : index
      %1197 = vector.load %arg4[%c18_285, %1196, %c0_286] : memref<64x16x128xf32, #tpu.memory_space<vmem>>, vector<1x8x128xf32>
      %1198 = vector.shape_cast %1197 : vector<1x8x128xf32> to vector<8x128xf32>
      %1199 = arith.mulf %1198, %1178 : vector<8x128xf32>
      %1200 = arith.addf %1193, %1199 : vector<8x128xf32>
      %1201 = arith.mulf %1198, %1183 : vector<8x128xf32>
      %1202 = arith.addf %1195, %1201 : vector<8x128xf32>
      %c19_287 = arith.constant 19 : index
      %1203 = arith.index_cast %37 : i32 to index
      %c0_288 = arith.constant 0 : index
      %1204 = vector.load %arg4[%c19_287, %1203, %c0_288] : memref<64x16x128xf32, #tpu.memory_space<vmem>>, vector<1x8x128xf32>
      %1205 = vector.shape_cast %1204 : vector<1x8x128xf32> to vector<8x128xf32>
      %1206 = arith.mulf %1205, %336 : vector<8x128xf32>
      %1207 = arith.addf %1200, %1206 : vector<8x128xf32>
      %1208 = arith.mulf %1205, %341 : vector<8x128xf32>
      %1209 = arith.addf %1202, %1208 : vector<8x128xf32>
      %c20_289 = arith.constant 20 : index
      %1210 = arith.index_cast %37 : i32 to index
      %c0_290 = arith.constant 0 : index
      %1211 = vector.load %arg4[%c20_289, %1210, %c0_290] : memref<64x16x128xf32, #tpu.memory_space<vmem>>, vector<1x8x128xf32>
      %1212 = vector.shape_cast %1211 : vector<1x8x128xf32> to vector<8x128xf32>
      %1213 = arith.mulf %1212, %400 : vector<8x128xf32>
      %1214 = arith.addf %1207, %1213 : vector<8x128xf32>
      %1215 = arith.mulf %1212, %405 : vector<8x128xf32>
      %1216 = arith.addf %1209, %1215 : vector<8x128xf32>
      %c21_291 = arith.constant 21 : index
      %1217 = arith.index_cast %37 : i32 to index
      %c0_292 = arith.constant 0 : index
      %1218 = vector.load %arg4[%c21_291, %1217, %c0_292] : memref<64x16x128xf32, #tpu.memory_space<vmem>>, vector<1x8x128xf32>
      %1219 = vector.shape_cast %1218 : vector<1x8x128xf32> to vector<8x128xf32>
      %1220 = arith.mulf %1219, %464 : vector<8x128xf32>
      %1221 = arith.addf %1214, %1220 : vector<8x128xf32>
      %1222 = arith.mulf %1219, %469 : vector<8x128xf32>
      %1223 = arith.addf %1216, %1222 : vector<8x128xf32>
      %c22_293 = arith.constant 22 : index
      %1224 = arith.index_cast %37 : i32 to index
      %c0_294 = arith.constant 0 : index
      %1225 = vector.load %arg4[%c22_293, %1224, %c0_294] : memref<64x16x128xf32, #tpu.memory_space<vmem>>, vector<1x8x128xf32>
      %1226 = vector.shape_cast %1225 : vector<1x8x128xf32> to vector<8x128xf32>
      %1227 = arith.mulf %1226, %528 : vector<8x128xf32>
      %1228 = arith.addf %1221, %1227 : vector<8x128xf32>
      %1229 = arith.mulf %1226, %533 : vector<8x128xf32>
      %1230 = arith.addf %1223, %1229 : vector<8x128xf32>
      %c23_295 = arith.constant 23 : index
      %1231 = arith.index_cast %37 : i32 to index
      %c0_296 = arith.constant 0 : index
      %1232 = vector.load %arg4[%c23_295, %1231, %c0_296] : memref<64x16x128xf32, #tpu.memory_space<vmem>>, vector<1x8x128xf32>
      %1233 = vector.shape_cast %1232 : vector<1x8x128xf32> to vector<8x128xf32>
      %1234 = arith.mulf %1233, %592 : vector<8x128xf32>
      %1235 = arith.addf %1228, %1234 : vector<8x128xf32>
      %1236 = arith.mulf %1233, %597 : vector<8x128xf32>
      %1237 = arith.addf %1230, %1236 : vector<8x128xf32>
      %1238 = vector.broadcast %1 : f32 to vector<8x128xf32>
      %1239 = arith.mulf %1235, %1238 : vector<8x128xf32>
      %1240 = vector.broadcast %2 : f32 to vector<8x128xf32>
      %1241 = arith.mulf %1237, %1240 : vector<8x128xf32>
      %1242 = arith.addf %1239, %1241 : vector<8x128xf32>
      %cst_297 = arith.constant 0.000000e+00 : f32
      %1243 = vector.broadcast %cst_297 : f32 to vector<8x128xf32>
      %1244 = arith.cmpf oge, %1242, %1243 : vector<8x128xf32>
      %1245 = vector.broadcast %0 : f32 to vector<8x128xf32>
      %1246 = arith.mulf %1245, %1242 : vector<8x128xf32>
      %1247 = arith.select %1244, %1242, %1246 : vector<8x128xi1>, vector<8x128xf32>
      %c32_298 = arith.constant 32 : index
      %1248 = arith.index_cast %37 : i32 to index
      %c0_299 = arith.constant 0 : index
      %1249 = vector.load %arg5[%c32_298, %1248, %c0_299] : memref<128x16x128xf32, #tpu.memory_space<vmem>>, vector<1x8x128xf32>
      %1250 = vector.shape_cast %1249 : vector<1x8x128xf32> to vector<8x128xf32>
      %1251 = vector.shape_cast %1247 : vector<8x128xf32> to vector<1x8x128xf32>
      tpu.vector_store %arg5[%c32_298, %1248, %c0_299], %1251 {strides = array<i32>} : memref<128x16x128xf32, #tpu.memory_space<vmem>>, vector<1x8x128xf32>,
      %1252 = vector.broadcast %3 : f32 to vector<8x128xf32>
      %1253 = arith.mulf %1235, %1252 : vector<8x128xf32>
      %1254 = vector.broadcast %4 : f32 to vector<8x128xf32>
      %1255 = arith.mulf %1237, %1254 : vector<8x128xf32>
      %1256 = arith.addf %1253, %1255 : vector<8x128xf32>
      %cst_300 = arith.constant 0.000000e+00 : f32
      %1257 = vector.broadcast %cst_300 : f32 to vector<8x128xf32>
      %1258 = arith.cmpf oge, %1256, %1257 : vector<8x128xf32>
      %1259 = vector.broadcast %0 : f32 to vector<8x128xf32>
      %1260 = arith.mulf %1259, %1256 : vector<8x128xf32>
      %1261 = arith.select %1258, %1256, %1260 : vector<8x128xi1>, vector<8x128xf32>
      %c33_301 = arith.constant 33 : index
      %1262 = arith.index_cast %37 : i32 to index
      %c0_302 = arith.constant 0 : index
      %1263 = vector.load %arg5[%c33_301, %1262, %c0_302] : memref<128x16x128xf32, #tpu.memory_space<vmem>>, vector<1x8x128xf32>
      %1264 = vector.shape_cast %1263 : vector<1x8x128xf32> to vector<8x128xf32>
      %1265 = vector.shape_cast %1261 : vector<8x128xf32> to vector<1x8x128xf32>
      tpu.vector_store %arg5[%c33_301, %1262, %c0_302], %1265 {strides = array<i32>} : memref<128x16x128xf32, #tpu.memory_space<vmem>>, vector<1x8x128xf32>,
      %1266 = vector.broadcast %5 : f32 to vector<8x128xf32>
      %1267 = arith.mulf %1235, %1266 : vector<8x128xf32>
      %1268 = vector.broadcast %6 : f32 to vector<8x128xf32>
      %1269 = arith.mulf %1237, %1268 : vector<8x128xf32>
      %1270 = arith.addf %1267, %1269 : vector<8x128xf32>
      %cst_303 = arith.constant 0.000000e+00 : f32
      %1271 = vector.broadcast %cst_303 : f32 to vector<8x128xf32>
      %1272 = arith.cmpf oge, %1270, %1271 : vector<8x128xf32>
      %1273 = vector.broadcast %0 : f32 to vector<8x128xf32>
      %1274 = arith.mulf %1273, %1270 : vector<8x128xf32>
      %1275 = arith.select %1272, %1270, %1274 : vector<8x128xi1>, vector<8x128xf32>
      %c34_304 = arith.constant 34 : index
      %1276 = arith.index_cast %37 : i32 to index
      %c0_305 = arith.constant 0 : index
      %1277 = vector.load %arg5[%c34_304, %1276, %c0_305] : memref<128x16x128xf32, #tpu.memory_space<vmem>>, vector<1x8x128xf32>
      %1278 = vector.shape_cast %1277 : vector<1x8x128xf32> to vector<8x128xf32>
      %1279 = vector.shape_cast %1275 : vector<8x128xf32> to vector<1x8x128xf32>
      tpu.vector_store %arg5[%c34_304, %1276, %c0_305], %1279 {strides = array<i32>} : memref<128x16x128xf32, #tpu.memory_space<vmem>>, vector<1x8x128xf32>,
      %1280 = vector.broadcast %7 : f32 to vector<8x128xf32>
      %1281 = arith.mulf %1235, %1280 : vector<8x128xf32>
      %1282 = vector.broadcast %8 : f32 to vector<8x128xf32>
      %1283 = arith.mulf %1237, %1282 : vector<8x128xf32>
      %1284 = arith.addf %1281, %1283 : vector<8x128xf32>
      %cst_306 = arith.constant 0.000000e+00 : f32
      %1285 = vector.broadcast %cst_306 : f32 to vector<8x128xf32>
      %1286 = arith.cmpf oge, %1284, %1285 : vector<8x128xf32>
      %1287 = vector.broadcast %0 : f32 to vector<8x128xf32>
      %1288 = arith.mulf %1287, %1284 : vector<8x128xf32>
      %1289 = arith.select %1286, %1284, %1288 : vector<8x128xi1>, vector<8x128xf32>
      %c35_307 = arith.constant 35 : index
      %1290 = arith.index_cast %37 : i32 to index
      %c0_308 = arith.constant 0 : index
      %1291 = vector.load %arg5[%c35_307, %1290, %c0_308] : memref<128x16x128xf32, #tpu.memory_space<vmem>>, vector<1x8x128xf32>
      %1292 = vector.shape_cast %1291 : vector<1x8x128xf32> to vector<8x128xf32>
      %1293 = vector.shape_cast %1289 : vector<8x128xf32> to vector<1x8x128xf32>
      tpu.vector_store %arg5[%c35_307, %1290, %c0_308], %1293 {strides = array<i32>} : memref<128x16x128xf32, #tpu.memory_space<vmem>>, vector<1x8x128xf32>,
      %1294 = vector.broadcast %9 : f32 to vector<8x128xf32>
      %1295 = arith.mulf %1235, %1294 : vector<8x128xf32>
      %1296 = vector.broadcast %10 : f32 to vector<8x128xf32>
      %1297 = arith.mulf %1237, %1296 : vector<8x128xf32>
      %1298 = arith.addf %1295, %1297 : vector<8x128xf32>
      %cst_309 = arith.constant 0.000000e+00 : f32
      %1299 = vector.broadcast %cst_309 : f32 to vector<8x128xf32>
      %1300 = arith.cmpf oge, %1298, %1299 : vector<8x128xf32>
      %1301 = vector.broadcast %0 : f32 to vector<8x128xf32>
      %1302 = arith.mulf %1301, %1298 : vector<8x128xf32>
      %1303 = arith.select %1300, %1298, %1302 : vector<8x128xi1>, vector<8x128xf32>
      %c36_310 = arith.constant 36 : index
      %1304 = arith.index_cast %37 : i32 to index
      %c0_311 = arith.constant 0 : index
      %1305 = vector.load %arg5[%c36_310, %1304, %c0_311] : memref<128x16x128xf32, #tpu.memory_space<vmem>>, vector<1x8x128xf32>
      %1306 = vector.shape_cast %1305 : vector<1x8x128xf32> to vector<8x128xf32>
      %1307 = vector.shape_cast %1303 : vector<8x128xf32> to vector<1x8x128xf32>
      tpu.vector_store %arg5[%c36_310, %1304, %c0_311], %1307 {strides = array<i32>} : memref<128x16x128xf32, #tpu.memory_space<vmem>>, vector<1x8x128xf32>,
      %1308 = vector.broadcast %11 : f32 to vector<8x128xf32>
      %1309 = arith.mulf %1235, %1308 : vector<8x128xf32>
      %1310 = vector.broadcast %12 : f32 to vector<8x128xf32>
      %1311 = arith.mulf %1237, %1310 : vector<8x128xf32>
      %1312 = arith.addf %1309, %1311 : vector<8x128xf32>
      %cst_312 = arith.constant 0.000000e+00 : f32
      %1313 = vector.broadcast %cst_312 : f32 to vector<8x128xf32>
      %1314 = arith.cmpf oge, %1312, %1313 : vector<8x128xf32>
      %1315 = vector.broadcast %0 : f32 to vector<8x128xf32>
      %1316 = arith.mulf %1315, %1312 : vector<8x128xf32>
      %1317 = arith.select %1314, %1312, %1316 : vector<8x128xi1>, vector<8x128xf32>
      %c37_313 = arith.constant 37 : index
      %1318 = arith.index_cast %37 : i32 to index
      %c0_314 = arith.constant 0 : index
      %1319 = vector.load %arg5[%c37_313, %1318, %c0_314] : memref<128x16x128xf32, #tpu.memory_space<vmem>>, vector<1x8x128xf32>
      %1320 = vector.shape_cast %1319 : vector<1x8x128xf32> to vector<8x128xf32>
      %1321 = vector.shape_cast %1317 : vector<8x128xf32> to vector<1x8x128xf32>
      tpu.vector_store %arg5[%c37_313, %1318, %c0_314], %1321 {strides = array<i32>} : memref<128x16x128xf32, #tpu.memory_space<vmem>>, vector<1x8x128xf32>,
      %1322 = vector.broadcast %13 : f32 to vector<8x128xf32>
      %1323 = arith.mulf %1235, %1322 : vector<8x128xf32>
      %1324 = vector.broadcast %14 : f32 to vector<8x128xf32>
      %1325 = arith.mulf %1237, %1324 : vector<8x128xf32>
      %1326 = arith.addf %1323, %1325 : vector<8x128xf32>
      %cst_315 = arith.constant 0.000000e+00 : f32
      %1327 = vector.broadcast %cst_315 : f32 to vector<8x128xf32>
      %1328 = arith.cmpf oge, %1326, %1327 : vector<8x128xf32>
      %1329 = vector.broadcast %0 : f32 to vector<8x128xf32>
      %1330 = arith.mulf %1329, %1326 : vector<8x128xf32>
      %1331 = arith.select %1328, %1326, %1330 : vector<8x128xi1>, vector<8x128xf32>
      %c38_316 = arith.constant 38 : index
      %1332 = arith.index_cast %37 : i32 to index
      %c0_317 = arith.constant 0 : index
      %1333 = vector.load %arg5[%c38_316, %1332, %c0_317] : memref<128x16x128xf32, #tpu.memory_space<vmem>>, vector<1x8x128xf32>
      %1334 = vector.shape_cast %1333 : vector<1x8x128xf32> to vector<8x128xf32>
      %1335 = vector.shape_cast %1331 : vector<8x128xf32> to vector<1x8x128xf32>
      tpu.vector_store %arg5[%c38_316, %1332, %c0_317], %1335 {strides = array<i32>} : memref<128x16x128xf32, #tpu.memory_space<vmem>>, vector<1x8x128xf32>,
      %1336 = vector.broadcast %15 : f32 to vector<8x128xf32>
      %1337 = arith.mulf %1235, %1336 : vector<8x128xf32>
      %1338 = vector.broadcast %16 : f32 to vector<8x128xf32>
      %1339 = arith.mulf %1237, %1338 : vector<8x128xf32>
      %1340 = arith.addf %1337, %1339 : vector<8x128xf32>
      %cst_318 = arith.constant 0.000000e+00 : f32
      %1341 = vector.broadcast %cst_318 : f32 to vector<8x128xf32>
      %1342 = arith.cmpf oge, %1340, %1341 : vector<8x128xf32>
      %1343 = vector.broadcast %0 : f32 to vector<8x128xf32>
      %1344 = arith.mulf %1343, %1340 : vector<8x128xf32>
      %1345 = arith.select %1342, %1340, %1344 : vector<8x128xi1>, vector<8x128xf32>
      %c39_319 = arith.constant 39 : index
      %1346 = arith.index_cast %37 : i32 to index
      %c0_320 = arith.constant 0 : index
      %1347 = vector.load %arg5[%c39_319, %1346, %c0_320] : memref<128x16x128xf32, #tpu.memory_space<vmem>>, vector<1x8x128xf32>
      %1348 = vector.shape_cast %1347 : vector<1x8x128xf32> to vector<8x128xf32>
      %1349 = vector.shape_cast %1345 : vector<8x128xf32> to vector<1x8x128xf32>
      tpu.vector_store %arg5[%c39_319, %1346, %c0_320], %1349 {strides = array<i32>} : memref<128x16x128xf32, #tpu.memory_space<vmem>>, vector<1x8x128xf32>,
      %1350 = vector.broadcast %17 : f32 to vector<8x128xf32>
      %1351 = arith.mulf %1235, %1350 : vector<8x128xf32>
      %1352 = vector.broadcast %18 : f32 to vector<8x128xf32>
      %1353 = arith.mulf %1237, %1352 : vector<8x128xf32>
      %1354 = arith.addf %1351, %1353 : vector<8x128xf32>
      %cst_321 = arith.constant 0.000000e+00 : f32
      %1355 = vector.broadcast %cst_321 : f32 to vector<8x128xf32>
      %1356 = arith.cmpf oge, %1354, %1355 : vector<8x128xf32>
      %1357 = vector.broadcast %0 : f32 to vector<8x128xf32>
      %1358 = arith.mulf %1357, %1354 : vector<8x128xf32>
      %1359 = arith.select %1356, %1354, %1358 : vector<8x128xi1>, vector<8x128xf32>
      %c40_322 = arith.constant 40 : index
      %1360 = arith.index_cast %37 : i32 to index
      %c0_323 = arith.constant 0 : index
      %1361 = vector.load %arg5[%c40_322, %1360, %c0_323] : memref<128x16x128xf32, #tpu.memory_space<vmem>>, vector<1x8x128xf32>
      %1362 = vector.shape_cast %1361 : vector<1x8x128xf32> to vector<8x128xf32>
      %1363 = vector.shape_cast %1359 : vector<8x128xf32> to vector<1x8x128xf32>
      tpu.vector_store %arg5[%c40_322, %1360, %c0_323], %1363 {strides = array<i32>} : memref<128x16x128xf32, #tpu.memory_space<vmem>>, vector<1x8x128xf32>,
      %1364 = vector.broadcast %19 : f32 to vector<8x128xf32>
      %1365 = arith.mulf %1235, %1364 : vector<8x128xf32>
      %1366 = vector.broadcast %20 : f32 to vector<8x128xf32>
      %1367 = arith.mulf %1237, %1366 : vector<8x128xf32>
      %1368 = arith.addf %1365, %1367 : vector<8x128xf32>
      %cst_324 = arith.constant 0.000000e+00 : f32
      %1369 = vector.broadcast %cst_324 : f32 to vector<8x128xf32>
      %1370 = arith.cmpf oge, %1368, %1369 : vector<8x128xf32>
      %1371 = vector.broadcast %0 : f32 to vector<8x128xf32>
      %1372 = arith.mulf %1371, %1368 : vector<8x128xf32>
      %1373 = arith.select %1370, %1368, %1372 : vector<8x128xi1>, vector<8x128xf32>
      %c41_325 = arith.constant 41 : index
      %1374 = arith.index_cast %37 : i32 to index
      %c0_326 = arith.constant 0 : index
      %1375 = vector.load %arg5[%c41_325, %1374, %c0_326] : memref<128x16x128xf32, #tpu.memory_space<vmem>>, vector<1x8x128xf32>
      %1376 = vector.shape_cast %1375 : vector<1x8x128xf32> to vector<8x128xf32>
      %1377 = vector.shape_cast %1373 : vector<8x128xf32> to vector<1x8x128xf32>
      tpu.vector_store %arg5[%c41_325, %1374, %c0_326], %1377 {strides = array<i32>} : memref<128x16x128xf32, #tpu.memory_space<vmem>>, vector<1x8x128xf32>,
      %1378 = vector.broadcast %21 : f32 to vector<8x128xf32>
      %1379 = arith.mulf %1235, %1378 : vector<8x128xf32>
      %1380 = vector.broadcast %22 : f32 to vector<8x128xf32>
      %1381 = arith.mulf %1237, %1380 : vector<8x128xf32>
      %1382 = arith.addf %1379, %1381 : vector<8x128xf32>
      %cst_327 = arith.constant 0.000000e+00 : f32
      %1383 = vector.broadcast %cst_327 : f32 to vector<8x128xf32>
      %1384 = arith.cmpf oge, %1382, %1383 : vector<8x128xf32>
      %1385 = vector.broadcast %0 : f32 to vector<8x128xf32>
      %1386 = arith.mulf %1385, %1382 : vector<8x128xf32>
      %1387 = arith.select %1384, %1382, %1386 : vector<8x128xi1>, vector<8x128xf32>
      %c42_328 = arith.constant 42 : index
      %1388 = arith.index_cast %37 : i32 to index
      %c0_329 = arith.constant 0 : index
      %1389 = vector.load %arg5[%c42_328, %1388, %c0_329] : memref<128x16x128xf32, #tpu.memory_space<vmem>>, vector<1x8x128xf32>
      %1390 = vector.shape_cast %1389 : vector<1x8x128xf32> to vector<8x128xf32>
      %1391 = vector.shape_cast %1387 : vector<8x128xf32> to vector<1x8x128xf32>
      tpu.vector_store %arg5[%c42_328, %1388, %c0_329], %1391 {strides = array<i32>} : memref<128x16x128xf32, #tpu.memory_space<vmem>>, vector<1x8x128xf32>,
      %1392 = vector.broadcast %23 : f32 to vector<8x128xf32>
      %1393 = arith.mulf %1235, %1392 : vector<8x128xf32>
      %1394 = vector.broadcast %24 : f32 to vector<8x128xf32>
      %1395 = arith.mulf %1237, %1394 : vector<8x128xf32>
      %1396 = arith.addf %1393, %1395 : vector<8x128xf32>
      %cst_330 = arith.constant 0.000000e+00 : f32
      %1397 = vector.broadcast %cst_330 : f32 to vector<8x128xf32>
      %1398 = arith.cmpf oge, %1396, %1397 : vector<8x128xf32>
      %1399 = vector.broadcast %0 : f32 to vector<8x128xf32>
      %1400 = arith.mulf %1399, %1396 : vector<8x128xf32>
      %1401 = arith.select %1398, %1396, %1400 : vector<8x128xi1>, vector<8x128xf32>
      %c43_331 = arith.constant 43 : index
      %1402 = arith.index_cast %37 : i32 to index
      %c0_332 = arith.constant 0 : index
      %1403 = vector.load %arg5[%c43_331, %1402, %c0_332] : memref<128x16x128xf32, #tpu.memory_space<vmem>>, vector<1x8x128xf32>
      %1404 = vector.shape_cast %1403 : vector<1x8x128xf32> to vector<8x128xf32>
      %1405 = vector.shape_cast %1401 : vector<8x128xf32> to vector<1x8x128xf32>
      tpu.vector_store %arg5[%c43_331, %1402, %c0_332], %1405 {strides = array<i32>} : memref<128x16x128xf32, #tpu.memory_space<vmem>>, vector<1x8x128xf32>,
      %1406 = vector.broadcast %25 : f32 to vector<8x128xf32>
      %1407 = arith.mulf %1235, %1406 : vector<8x128xf32>
      %1408 = vector.broadcast %26 : f32 to vector<8x128xf32>
      %1409 = arith.mulf %1237, %1408 : vector<8x128xf32>
      %1410 = arith.addf %1407, %1409 : vector<8x128xf32>
      %cst_333 = arith.constant 0.000000e+00 : f32
      %1411 = vector.broadcast %cst_333 : f32 to vector<8x128xf32>
      %1412 = arith.cmpf oge, %1410, %1411 : vector<8x128xf32>
      %1413 = vector.broadcast %0 : f32 to vector<8x128xf32>
      %1414 = arith.mulf %1413, %1410 : vector<8x128xf32>
      %1415 = arith.select %1412, %1410, %1414 : vector<8x128xi1>, vector<8x128xf32>
      %c44_334 = arith.constant 44 : index
      %1416 = arith.index_cast %37 : i32 to index
      %c0_335 = arith.constant 0 : index
      %1417 = vector.load %arg5[%c44_334, %1416, %c0_335] : memref<128x16x128xf32, #tpu.memory_space<vmem>>, vector<1x8x128xf32>
      %1418 = vector.shape_cast %1417 : vector<1x8x128xf32> to vector<8x128xf32>
      %1419 = vector.shape_cast %1415 : vector<8x128xf32> to vector<1x8x128xf32>
      tpu.vector_store %arg5[%c44_334, %1416, %c0_335], %1419 {strides = array<i32>} : memref<128x16x128xf32, #tpu.memory_space<vmem>>, vector<1x8x128xf32>,
      %1420 = vector.broadcast %27 : f32 to vector<8x128xf32>
      %1421 = arith.mulf %1235, %1420 : vector<8x128xf32>
      %1422 = vector.broadcast %28 : f32 to vector<8x128xf32>
      %1423 = arith.mulf %1237, %1422 : vector<8x128xf32>
      %1424 = arith.addf %1421, %1423 : vector<8x128xf32>
      %cst_336 = arith.constant 0.000000e+00 : f32
      %1425 = vector.broadcast %cst_336 : f32 to vector<8x128xf32>
      %1426 = arith.cmpf oge, %1424, %1425 : vector<8x128xf32>
      %1427 = vector.broadcast %0 : f32 to vector<8x128xf32>
      %1428 = arith.mulf %1427, %1424 : vector<8x128xf32>
      %1429 = arith.select %1426, %1424, %1428 : vector<8x128xi1>, vector<8x128xf32>
      %c45_337 = arith.constant 45 : index
      %1430 = arith.index_cast %37 : i32 to index
      %c0_338 = arith.constant 0 : index
      %1431 = vector.load %arg5[%c45_337, %1430, %c0_338] : memref<128x16x128xf32, #tpu.memory_space<vmem>>, vector<1x8x128xf32>
      %1432 = vector.shape_cast %1431 : vector<1x8x128xf32> to vector<8x128xf32>
      %1433 = vector.shape_cast %1429 : vector<8x128xf32> to vector<1x8x128xf32>
      tpu.vector_store %arg5[%c45_337, %1430, %c0_338], %1433 {strides = array<i32>} : memref<128x16x128xf32, #tpu.memory_space<vmem>>, vector<1x8x128xf32>,
      %1434 = vector.broadcast %29 : f32 to vector<8x128xf32>
      %1435 = arith.mulf %1235, %1434 : vector<8x128xf32>
      %1436 = vector.broadcast %30 : f32 to vector<8x128xf32>
      %1437 = arith.mulf %1237, %1436 : vector<8x128xf32>
      %1438 = arith.addf %1435, %1437 : vector<8x128xf32>
      %cst_339 = arith.constant 0.000000e+00 : f32
      %1439 = vector.broadcast %cst_339 : f32 to vector<8x128xf32>
      %1440 = arith.cmpf oge, %1438, %1439 : vector<8x128xf32>
      %1441 = vector.broadcast %0 : f32 to vector<8x128xf32>
      %1442 = arith.mulf %1441, %1438 : vector<8x128xf32>
      %1443 = arith.select %1440, %1438, %1442 : vector<8x128xi1>, vector<8x128xf32>
      %c46_340 = arith.constant 46 : index
      %1444 = arith.index_cast %37 : i32 to index
      %c0_341 = arith.constant 0 : index
      %1445 = vector.load %arg5[%c46_340, %1444, %c0_341] : memref<128x16x128xf32, #tpu.memory_space<vmem>>, vector<1x8x128xf32>
      %1446 = vector.shape_cast %1445 : vector<1x8x128xf32> to vector<8x128xf32>
      %1447 = vector.shape_cast %1443 : vector<8x128xf32> to vector<1x8x128xf32>
      tpu.vector_store %arg5[%c46_340, %1444, %c0_341], %1447 {strides = array<i32>} : memref<128x16x128xf32, #tpu.memory_space<vmem>>, vector<1x8x128xf32>,
      %1448 = vector.broadcast %31 : f32 to vector<8x128xf32>
      %1449 = arith.mulf %1235, %1448 : vector<8x128xf32>
      %1450 = vector.broadcast %32 : f32 to vector<8x128xf32>
      %1451 = arith.mulf %1237, %1450 : vector<8x128xf32>
      %1452 = arith.addf %1449, %1451 : vector<8x128xf32>
      %cst_342 = arith.constant 0.000000e+00 : f32
      %1453 = vector.broadcast %cst_342 : f32 to vector<8x128xf32>
      %1454 = arith.cmpf oge, %1452, %1453 : vector<8x128xf32>
      %1455 = vector.broadcast %0 : f32 to vector<8x128xf32>
      %1456 = arith.mulf %1455, %1452 : vector<8x128xf32>
      %1457 = arith.select %1454, %1452, %1456 : vector<8x128xi1>, vector<8x128xf32>
      %c47_343 = arith.constant 47 : index
      %1458 = arith.index_cast %37 : i32 to index
      %c0_344 = arith.constant 0 : index
      %1459 = vector.load %arg5[%c47_343, %1458, %c0_344] : memref<128x16x128xf32, #tpu.memory_space<vmem>>, vector<1x8x128xf32>
      %1460 = vector.shape_cast %1459 : vector<1x8x128xf32> to vector<8x128xf32>
      %1461 = vector.shape_cast %1457 : vector<8x128xf32> to vector<1x8x128xf32>
      tpu.vector_store %arg5[%c47_343, %1458, %c0_344], %1461 {strides = array<i32>} : memref<128x16x128xf32, #tpu.memory_space<vmem>>, vector<1x8x128xf32>,
      %cst_345 = arith.constant 0.000000e+00 : f32
      %1462 = vector.broadcast %cst_345 : f32 to vector<8x128xf32>
      %1463 = arith.cmpf oge, %58, %1462 : vector<8x128xf32>
      %1464 = vector.broadcast %0 : f32 to vector<8x128xf32>
      %1465 = arith.mulf %1464, %58 : vector<8x128xf32>
      %1466 = arith.select %1463, %58, %1465 : vector<8x128xi1>, vector<8x128xf32>
      %cst_346 = arith.constant 0.000000e+00 : f32
      %1467 = vector.broadcast %cst_346 : f32 to vector<8x128xf32>
      %1468 = arith.cmpf oge, %61, %1467 : vector<8x128xf32>
      %1469 = vector.broadcast %0 : f32 to vector<8x128xf32>
      %1470 = arith.mulf %1469, %61 : vector<8x128xf32>
      %1471 = arith.select %1468, %61, %1470 : vector<8x128xi1>, vector<8x128xf32>
      %c24_347 = arith.constant 24 : index
      %1472 = arith.index_cast %37 : i32 to index
      %c0_348 = arith.constant 0 : index
      %1473 = vector.load %arg4[%c24_347, %1472, %c0_348] : memref<64x16x128xf32, #tpu.memory_space<vmem>>, vector<1x8x128xf32>
      %1474 = vector.shape_cast %1473 : vector<1x8x128xf32> to vector<8x128xf32>
      %1475 = arith.mulf %1474, %144 : vector<8x128xf32>
      %1476 = arith.mulf %1474, %149 : vector<8x128xf32>
      %c25_349 = arith.constant 25 : index
      %1477 = arith.index_cast %37 : i32 to index
      %c0_350 = arith.constant 0 : index
      %1478 = vector.load %arg4[%c25_349, %1477, %c0_350] : memref<64x16x128xf32, #tpu.memory_space<vmem>>, vector<1x8x128xf32>
      %1479 = vector.shape_cast %1478 : vector<1x8x128xf32> to vector<8x128xf32>
      %1480 = arith.mulf %1479, %208 : vector<8x128xf32>
      %1481 = arith.addf %1475, %1480 : vector<8x128xf32>
      %1482 = arith.mulf %1479, %213 : vector<8x128xf32>
      %1483 = arith.addf %1476, %1482 : vector<8x128xf32>
      %c26_351 = arith.constant 26 : index
      %1484 = arith.index_cast %37 : i32 to index
      %c0_352 = arith.constant 0 : index
      %1485 = vector.load %arg4[%c26_351, %1484, %c0_352] : memref<64x16x128xf32, #tpu.memory_space<vmem>>, vector<1x8x128xf32>
      %1486 = vector.shape_cast %1485 : vector<1x8x128xf32> to vector<8x128xf32>
      %1487 = arith.mulf %1486, %272 : vector<8x128xf32>
      %1488 = arith.addf %1481, %1487 : vector<8x128xf32>
      %1489 = arith.mulf %1486, %277 : vector<8x128xf32>
      %1490 = arith.addf %1483, %1489 : vector<8x128xf32>
      %c27_353 = arith.constant 27 : index
      %1491 = arith.index_cast %37 : i32 to index
      %c0_354 = arith.constant 0 : index
      %1492 = vector.load %arg4[%c27_353, %1491, %c0_354] : memref<64x16x128xf32, #tpu.memory_space<vmem>>, vector<1x8x128xf32>
      %1493 = vector.shape_cast %1492 : vector<1x8x128xf32> to vector<8x128xf32>
      %1494 = arith.mulf %1493, %1466 : vector<8x128xf32>
      %1495 = arith.addf %1488, %1494 : vector<8x128xf32>
      %1496 = arith.mulf %1493, %1471 : vector<8x128xf32>
      %1497 = arith.addf %1490, %1496 : vector<8x128xf32>
      %c28_355 = arith.constant 28 : index
      %1498 = arith.index_cast %37 : i32 to index
      %c0_356 = arith.constant 0 : index
      %1499 = vector.load %arg4[%c28_355, %1498, %c0_356] : memref<64x16x128xf32, #tpu.memory_space<vmem>>, vector<1x8x128xf32>
      %1500 = vector.shape_cast %1499 : vector<1x8x128xf32> to vector<8x128xf32>
      %1501 = arith.mulf %1500, %400 : vector<8x128xf32>
      %1502 = arith.addf %1495, %1501 : vector<8x128xf32>
      %1503 = arith.mulf %1500, %405 : vector<8x128xf32>
      %1504 = arith.addf %1497, %1503 : vector<8x128xf32>
      %c29_357 = arith.constant 29 : index
      %1505 = arith.index_cast %37 : i32 to index
      %c0_358 = arith.constant 0 : index
      %1506 = vector.load %arg4[%c29_357, %1505, %c0_358] : memref<64x16x128xf32, #tpu.memory_space<vmem>>, vector<1x8x128xf32>
      %1507 = vector.shape_cast %1506 : vector<1x8x128xf32> to vector<8x128xf32>
      %1508 = arith.mulf %1507, %464 : vector<8x128xf32>
      %1509 = arith.addf %1502, %1508 : vector<8x128xf32>
      %1510 = arith.mulf %1507, %469 : vector<8x128xf32>
      %1511 = arith.addf %1504, %1510 : vector<8x128xf32>
      %c30_359 = arith.constant 30 : index
      %1512 = arith.index_cast %37 : i32 to index
      %c0_360 = arith.constant 0 : index
      %1513 = vector.load %arg4[%c30_359, %1512, %c0_360] : memref<64x16x128xf32, #tpu.memory_space<vmem>>, vector<1x8x128xf32>
      %1514 = vector.shape_cast %1513 : vector<1x8x128xf32> to vector<8x128xf32>
      %1515 = arith.mulf %1514, %528 : vector<8x128xf32>
      %1516 = arith.addf %1509, %1515 : vector<8x128xf32>
      %1517 = arith.mulf %1514, %533 : vector<8x128xf32>
      %1518 = arith.addf %1511, %1517 : vector<8x128xf32>
      %c31_361 = arith.constant 31 : index
      %1519 = arith.index_cast %37 : i32 to index
      %c0_362 = arith.constant 0 : index
      %1520 = vector.load %arg4[%c31_361, %1519, %c0_362] : memref<64x16x128xf32, #tpu.memory_space<vmem>>, vector<1x8x128xf32>
      %1521 = vector.shape_cast %1520 : vector<1x8x128xf32> to vector<8x128xf32>
      %1522 = arith.mulf %1521, %592 : vector<8x128xf32>
      %1523 = arith.addf %1516, %1522 : vector<8x128xf32>
      %1524 = arith.mulf %1521, %597 : vector<8x128xf32>
      %1525 = arith.addf %1518, %1524 : vector<8x128xf32>
      %1526 = vector.broadcast %1 : f32 to vector<8x128xf32>
      %1527 = arith.mulf %1523, %1526 : vector<8x128xf32>
      %1528 = vector.broadcast %2 : f32 to vector<8x128xf32>
      %1529 = arith.mulf %1525, %1528 : vector<8x128xf32>
      %1530 = arith.addf %1527, %1529 : vector<8x128xf32>
      %cst_363 = arith.constant 0.000000e+00 : f32
      %1531 = vector.broadcast %cst_363 : f32 to vector<8x128xf32>
      %1532 = arith.cmpf oge, %1530, %1531 : vector<8x128xf32>
      %1533 = vector.broadcast %0 : f32 to vector<8x128xf32>
      %1534 = arith.mulf %1533, %1530 : vector<8x128xf32>
      %1535 = arith.select %1532, %1530, %1534 : vector<8x128xi1>, vector<8x128xf32>
      %c48_364 = arith.constant 48 : index
      %1536 = arith.index_cast %37 : i32 to index
      %c0_365 = arith.constant 0 : index
      %1537 = vector.load %arg5[%c48_364, %1536, %c0_365] : memref<128x16x128xf32, #tpu.memory_space<vmem>>, vector<1x8x128xf32>
      %1538 = vector.shape_cast %1537 : vector<1x8x128xf32> to vector<8x128xf32>
      %1539 = vector.shape_cast %1535 : vector<8x128xf32> to vector<1x8x128xf32>
      tpu.vector_store %arg5[%c48_364, %1536, %c0_365], %1539 {strides = array<i32>} : memref<128x16x128xf32, #tpu.memory_space<vmem>>, vector<1x8x128xf32>,
      %1540 = vector.broadcast %3 : f32 to vector<8x128xf32>
      %1541 = arith.mulf %1523, %1540 : vector<8x128xf32>
      %1542 = vector.broadcast %4 : f32 to vector<8x128xf32>
      %1543 = arith.mulf %1525, %1542 : vector<8x128xf32>
      %1544 = arith.addf %1541, %1543 : vector<8x128xf32>
      %cst_366 = arith.constant 0.000000e+00 : f32
      %1545 = vector.broadcast %cst_366 : f32 to vector<8x128xf32>
      %1546 = arith.cmpf oge, %1544, %1545 : vector<8x128xf32>
      %1547 = vector.broadcast %0 : f32 to vector<8x128xf32>
      %1548 = arith.mulf %1547, %1544 : vector<8x128xf32>
      %1549 = arith.select %1546, %1544, %1548 : vector<8x128xi1>, vector<8x128xf32>
      %c49_367 = arith.constant 49 : index
      %1550 = arith.index_cast %37 : i32 to index
      %c0_368 = arith.constant 0 : index
      %1551 = vector.load %arg5[%c49_367, %1550, %c0_368] : memref<128x16x128xf32, #tpu.memory_space<vmem>>, vector<1x8x128xf32>
      %1552 = vector.shape_cast %1551 : vector<1x8x128xf32> to vector<8x128xf32>
      %1553 = vector.shape_cast %1549 : vector<8x128xf32> to vector<1x8x128xf32>
      tpu.vector_store %arg5[%c49_367, %1550, %c0_368], %1553 {strides = array<i32>} : memref<128x16x128xf32, #tpu.memory_space<vmem>>, vector<1x8x128xf32>,
      %1554 = vector.broadcast %5 : f32 to vector<8x128xf32>
      %1555 = arith.mulf %1523, %1554 : vector<8x128xf32>
      %1556 = vector.broadcast %6 : f32 to vector<8x128xf32>
      %1557 = arith.mulf %1525, %1556 : vector<8x128xf32>
      %1558 = arith.addf %1555, %1557 : vector<8x128xf32>
      %cst_369 = arith.constant 0.000000e+00 : f32
      %1559 = vector.broadcast %cst_369 : f32 to vector<8x128xf32>
      %1560 = arith.cmpf oge, %1558, %1559 : vector<8x128xf32>
      %1561 = vector.broadcast %0 : f32 to vector<8x128xf32>
      %1562 = arith.mulf %1561, %1558 : vector<8x128xf32>
      %1563 = arith.select %1560, %1558, %1562 : vector<8x128xi1>, vector<8x128xf32>
      %c50_370 = arith.constant 50 : index
      %1564 = arith.index_cast %37 : i32 to index
      %c0_371 = arith.constant 0 : index
      %1565 = vector.load %arg5[%c50_370, %1564, %c0_371] : memref<128x16x128xf32, #tpu.memory_space<vmem>>, vector<1x8x128xf32>
      %1566 = vector.shape_cast %1565 : vector<1x8x128xf32> to vector<8x128xf32>
      %1567 = vector.shape_cast %1563 : vector<8x128xf32> to vector<1x8x128xf32>
      tpu.vector_store %arg5[%c50_370, %1564, %c0_371], %1567 {strides = array<i32>} : memref<128x16x128xf32, #tpu.memory_space<vmem>>, vector<1x8x128xf32>,
      %1568 = vector.broadcast %7 : f32 to vector<8x128xf32>
      %1569 = arith.mulf %1523, %1568 : vector<8x128xf32>
      %1570 = vector.broadcast %8 : f32 to vector<8x128xf32>
      %1571 = arith.mulf %1525, %1570 : vector<8x128xf32>
      %1572 = arith.addf %1569, %1571 : vector<8x128xf32>
      %cst_372 = arith.constant 0.000000e+00 : f32
      %1573 = vector.broadcast %cst_372 : f32 to vector<8x128xf32>
      %1574 = arith.cmpf oge, %1572, %1573 : vector<8x128xf32>
      %1575 = vector.broadcast %0 : f32 to vector<8x128xf32>
      %1576 = arith.mulf %1575, %1572 : vector<8x128xf32>
      %1577 = arith.select %1574, %1572, %1576 : vector<8x128xi1>, vector<8x128xf32>
      %c51_373 = arith.constant 51 : index
      %1578 = arith.index_cast %37 : i32 to index
      %c0_374 = arith.constant 0 : index
      %1579 = vector.load %arg5[%c51_373, %1578, %c0_374] : memref<128x16x128xf32, #tpu.memory_space<vmem>>, vector<1x8x128xf32>
      %1580 = vector.shape_cast %1579 : vector<1x8x128xf32> to vector<8x128xf32>
      %1581 = vector.shape_cast %1577 : vector<8x128xf32> to vector<1x8x128xf32>
      tpu.vector_store %arg5[%c51_373, %1578, %c0_374], %1581 {strides = array<i32>} : memref<128x16x128xf32, #tpu.memory_space<vmem>>, vector<1x8x128xf32>,
      %1582 = vector.broadcast %9 : f32 to vector<8x128xf32>
      %1583 = arith.mulf %1523, %1582 : vector<8x128xf32>
      %1584 = vector.broadcast %10 : f32 to vector<8x128xf32>
      %1585 = arith.mulf %1525, %1584 : vector<8x128xf32>
      %1586 = arith.addf %1583, %1585 : vector<8x128xf32>
      %cst_375 = arith.constant 0.000000e+00 : f32
      %1587 = vector.broadcast %cst_375 : f32 to vector<8x128xf32>
      %1588 = arith.cmpf oge, %1586, %1587 : vector<8x128xf32>
      %1589 = vector.broadcast %0 : f32 to vector<8x128xf32>
      %1590 = arith.mulf %1589, %1586 : vector<8x128xf32>
      %1591 = arith.select %1588, %1586, %1590 : vector<8x128xi1>, vector<8x128xf32>
      %c52_376 = arith.constant 52 : index
      %1592 = arith.index_cast %37 : i32 to index
      %c0_377 = arith.constant 0 : index
      %1593 = vector.load %arg5[%c52_376, %1592, %c0_377] : memref<128x16x128xf32, #tpu.memory_space<vmem>>, vector<1x8x128xf32>
      %1594 = vector.shape_cast %1593 : vector<1x8x128xf32> to vector<8x128xf32>
      %1595 = vector.shape_cast %1591 : vector<8x128xf32> to vector<1x8x128xf32>
      tpu.vector_store %arg5[%c52_376, %1592, %c0_377], %1595 {strides = array<i32>} : memref<128x16x128xf32, #tpu.memory_space<vmem>>, vector<1x8x128xf32>,
      %1596 = vector.broadcast %11 : f32 to vector<8x128xf32>
      %1597 = arith.mulf %1523, %1596 : vector<8x128xf32>
      %1598 = vector.broadcast %12 : f32 to vector<8x128xf32>
      %1599 = arith.mulf %1525, %1598 : vector<8x128xf32>
      %1600 = arith.addf %1597, %1599 : vector<8x128xf32>
      %cst_378 = arith.constant 0.000000e+00 : f32
      %1601 = vector.broadcast %cst_378 : f32 to vector<8x128xf32>
      %1602 = arith.cmpf oge, %1600, %1601 : vector<8x128xf32>
      %1603 = vector.broadcast %0 : f32 to vector<8x128xf32>
      %1604 = arith.mulf %1603, %1600 : vector<8x128xf32>
      %1605 = arith.select %1602, %1600, %1604 : vector<8x128xi1>, vector<8x128xf32>
      %c53_379 = arith.constant 53 : index
      %1606 = arith.index_cast %37 : i32 to index
      %c0_380 = arith.constant 0 : index
      %1607 = vector.load %arg5[%c53_379, %1606, %c0_380] : memref<128x16x128xf32, #tpu.memory_space<vmem>>, vector<1x8x128xf32>
      %1608 = vector.shape_cast %1607 : vector<1x8x128xf32> to vector<8x128xf32>
      %1609 = vector.shape_cast %1605 : vector<8x128xf32> to vector<1x8x128xf32>
      tpu.vector_store %arg5[%c53_379, %1606, %c0_380], %1609 {strides = array<i32>} : memref<128x16x128xf32, #tpu.memory_space<vmem>>, vector<1x8x128xf32>,
      %1610 = vector.broadcast %13 : f32 to vector<8x128xf32>
      %1611 = arith.mulf %1523, %1610 : vector<8x128xf32>
      %1612 = vector.broadcast %14 : f32 to vector<8x128xf32>
      %1613 = arith.mulf %1525, %1612 : vector<8x128xf32>
      %1614 = arith.addf %1611, %1613 : vector<8x128xf32>
      %cst_381 = arith.constant 0.000000e+00 : f32
      %1615 = vector.broadcast %cst_381 : f32 to vector<8x128xf32>
      %1616 = arith.cmpf oge, %1614, %1615 : vector<8x128xf32>
      %1617 = vector.broadcast %0 : f32 to vector<8x128xf32>
      %1618 = arith.mulf %1617, %1614 : vector<8x128xf32>
      %1619 = arith.select %1616, %1614, %1618 : vector<8x128xi1>, vector<8x128xf32>
      %c54_382 = arith.constant 54 : index
      %1620 = arith.index_cast %37 : i32 to index
      %c0_383 = arith.constant 0 : index
      %1621 = vector.load %arg5[%c54_382, %1620, %c0_383] : memref<128x16x128xf32, #tpu.memory_space<vmem>>, vector<1x8x128xf32>
      %1622 = vector.shape_cast %1621 : vector<1x8x128xf32> to vector<8x128xf32>
      %1623 = vector.shape_cast %1619 : vector<8x128xf32> to vector<1x8x128xf32>
      tpu.vector_store %arg5[%c54_382, %1620, %c0_383], %1623 {strides = array<i32>} : memref<128x16x128xf32, #tpu.memory_space<vmem>>, vector<1x8x128xf32>,
      %1624 = vector.broadcast %15 : f32 to vector<8x128xf32>
      %1625 = arith.mulf %1523, %1624 : vector<8x128xf32>
      %1626 = vector.broadcast %16 : f32 to vector<8x128xf32>
      %1627 = arith.mulf %1525, %1626 : vector<8x128xf32>
      %1628 = arith.addf %1625, %1627 : vector<8x128xf32>
      %cst_384 = arith.constant 0.000000e+00 : f32
      %1629 = vector.broadcast %cst_384 : f32 to vector<8x128xf32>
      %1630 = arith.cmpf oge, %1628, %1629 : vector<8x128xf32>
      %1631 = vector.broadcast %0 : f32 to vector<8x128xf32>
      %1632 = arith.mulf %1631, %1628 : vector<8x128xf32>
      %1633 = arith.select %1630, %1628, %1632 : vector<8x128xi1>, vector<8x128xf32>
      %c55_385 = arith.constant 55 : index
      %1634 = arith.index_cast %37 : i32 to index
      %c0_386 = arith.constant 0 : index
      %1635 = vector.load %arg5[%c55_385, %1634, %c0_386] : memref<128x16x128xf32, #tpu.memory_space<vmem>>, vector<1x8x128xf32>
      %1636 = vector.shape_cast %1635 : vector<1x8x128xf32> to vector<8x128xf32>
      %1637 = vector.shape_cast %1633 : vector<8x128xf32> to vector<1x8x128xf32>
      tpu.vector_store %arg5[%c55_385, %1634, %c0_386], %1637 {strides = array<i32>} : memref<128x16x128xf32, #tpu.memory_space<vmem>>, vector<1x8x128xf32>,
      %1638 = vector.broadcast %17 : f32 to vector<8x128xf32>
      %1639 = arith.mulf %1523, %1638 : vector<8x128xf32>
      %1640 = vector.broadcast %18 : f32 to vector<8x128xf32>
      %1641 = arith.mulf %1525, %1640 : vector<8x128xf32>
      %1642 = arith.addf %1639, %1641 : vector<8x128xf32>
      %cst_387 = arith.constant 0.000000e+00 : f32
      %1643 = vector.broadcast %cst_387 : f32 to vector<8x128xf32>
      %1644 = arith.cmpf oge, %1642, %1643 : vector<8x128xf32>
      %1645 = vector.broadcast %0 : f32 to vector<8x128xf32>
      %1646 = arith.mulf %1645, %1642 : vector<8x128xf32>
      %1647 = arith.select %1644, %1642, %1646 : vector<8x128xi1>, vector<8x128xf32>
      %c56_388 = arith.constant 56 : index
      %1648 = arith.index_cast %37 : i32 to index
      %c0_389 = arith.constant 0 : index
      %1649 = vector.load %arg5[%c56_388, %1648, %c0_389] : memref<128x16x128xf32, #tpu.memory_space<vmem>>, vector<1x8x128xf32>
      %1650 = vector.shape_cast %1649 : vector<1x8x128xf32> to vector<8x128xf32>
      %1651 = vector.shape_cast %1647 : vector<8x128xf32> to vector<1x8x128xf32>
      tpu.vector_store %arg5[%c56_388, %1648, %c0_389], %1651 {strides = array<i32>} : memref<128x16x128xf32, #tpu.memory_space<vmem>>, vector<1x8x128xf32>,
      %1652 = vector.broadcast %19 : f32 to vector<8x128xf32>
      %1653 = arith.mulf %1523, %1652 : vector<8x128xf32>
      %1654 = vector.broadcast %20 : f32 to vector<8x128xf32>
      %1655 = arith.mulf %1525, %1654 : vector<8x128xf32>
      %1656 = arith.addf %1653, %1655 : vector<8x128xf32>
      %cst_390 = arith.constant 0.000000e+00 : f32
      %1657 = vector.broadcast %cst_390 : f32 to vector<8x128xf32>
      %1658 = arith.cmpf oge, %1656, %1657 : vector<8x128xf32>
      %1659 = vector.broadcast %0 : f32 to vector<8x128xf32>
      %1660 = arith.mulf %1659, %1656 : vector<8x128xf32>
      %1661 = arith.select %1658, %1656, %1660 : vector<8x128xi1>, vector<8x128xf32>
      %c57_391 = arith.constant 57 : index
      %1662 = arith.index_cast %37 : i32 to index
      %c0_392 = arith.constant 0 : index
      %1663 = vector.load %arg5[%c57_391, %1662, %c0_392] : memref<128x16x128xf32, #tpu.memory_space<vmem>>, vector<1x8x128xf32>
      %1664 = vector.shape_cast %1663 : vector<1x8x128xf32> to vector<8x128xf32>
      %1665 = vector.shape_cast %1661 : vector<8x128xf32> to vector<1x8x128xf32>
      tpu.vector_store %arg5[%c57_391, %1662, %c0_392], %1665 {strides = array<i32>} : memref<128x16x128xf32, #tpu.memory_space<vmem>>, vector<1x8x128xf32>,
      %1666 = vector.broadcast %21 : f32 to vector<8x128xf32>
      %1667 = arith.mulf %1523, %1666 : vector<8x128xf32>
      %1668 = vector.broadcast %22 : f32 to vector<8x128xf32>
      %1669 = arith.mulf %1525, %1668 : vector<8x128xf32>
      %1670 = arith.addf %1667, %1669 : vector<8x128xf32>
      %cst_393 = arith.constant 0.000000e+00 : f32
      %1671 = vector.broadcast %cst_393 : f32 to vector<8x128xf32>
      %1672 = arith.cmpf oge, %1670, %1671 : vector<8x128xf32>
      %1673 = vector.broadcast %0 : f32 to vector<8x128xf32>
      %1674 = arith.mulf %1673, %1670 : vector<8x128xf32>
      %1675 = arith.select %1672, %1670, %1674 : vector<8x128xi1>, vector<8x128xf32>
      %c58_394 = arith.constant 58 : index
      %1676 = arith.index_cast %37 : i32 to index
      %c0_395 = arith.constant 0 : index
      %1677 = vector.load %arg5[%c58_394, %1676, %c0_395] : memref<128x16x128xf32, #tpu.memory_space<vmem>>, vector<1x8x128xf32>
      %1678 = vector.shape_cast %1677 : vector<1x8x128xf32> to vector<8x128xf32>
      %1679 = vector.shape_cast %1675 : vector<8x128xf32> to vector<1x8x128xf32>
      tpu.vector_store %arg5[%c58_394, %1676, %c0_395], %1679 {strides = array<i32>} : memref<128x16x128xf32, #tpu.memory_space<vmem>>, vector<1x8x128xf32>,
      %1680 = vector.broadcast %23 : f32 to vector<8x128xf32>
      %1681 = arith.mulf %1523, %1680 : vector<8x128xf32>
      %1682 = vector.broadcast %24 : f32 to vector<8x128xf32>
      %1683 = arith.mulf %1525, %1682 : vector<8x128xf32>
      %1684 = arith.addf %1681, %1683 : vector<8x128xf32>
      %cst_396 = arith.constant 0.000000e+00 : f32
      %1685 = vector.broadcast %cst_396 : f32 to vector<8x128xf32>
      %1686 = arith.cmpf oge, %1684, %1685 : vector<8x128xf32>
      %1687 = vector.broadcast %0 : f32 to vector<8x128xf32>
      %1688 = arith.mulf %1687, %1684 : vector<8x128xf32>
      %1689 = arith.select %1686, %1684, %1688 : vector<8x128xi1>, vector<8x128xf32>
      %c59_397 = arith.constant 59 : index
      %1690 = arith.index_cast %37 : i32 to index
      %c0_398 = arith.constant 0 : index
      %1691 = vector.load %arg5[%c59_397, %1690, %c0_398] : memref<128x16x128xf32, #tpu.memory_space<vmem>>, vector<1x8x128xf32>
      %1692 = vector.shape_cast %1691 : vector<1x8x128xf32> to vector<8x128xf32>
      %1693 = vector.shape_cast %1689 : vector<8x128xf32> to vector<1x8x128xf32>
      tpu.vector_store %arg5[%c59_397, %1690, %c0_398], %1693 {strides = array<i32>} : memref<128x16x128xf32, #tpu.memory_space<vmem>>, vector<1x8x128xf32>,
      %1694 = vector.broadcast %25 : f32 to vector<8x128xf32>
      %1695 = arith.mulf %1523, %1694 : vector<8x128xf32>
      %1696 = vector.broadcast %26 : f32 to vector<8x128xf32>
      %1697 = arith.mulf %1525, %1696 : vector<8x128xf32>
      %1698 = arith.addf %1695, %1697 : vector<8x128xf32>
      %cst_399 = arith.constant 0.000000e+00 : f32
      %1699 = vector.broadcast %cst_399 : f32 to vector<8x128xf32>
      %1700 = arith.cmpf oge, %1698, %1699 : vector<8x128xf32>
      %1701 = vector.broadcast %0 : f32 to vector<8x128xf32>
      %1702 = arith.mulf %1701, %1698 : vector<8x128xf32>
      %1703 = arith.select %1700, %1698, %1702 : vector<8x128xi1>, vector<8x128xf32>
      %c60_400 = arith.constant 60 : index
      %1704 = arith.index_cast %37 : i32 to index
      %c0_401 = arith.constant 0 : index
      %1705 = vector.load %arg5[%c60_400, %1704, %c0_401] : memref<128x16x128xf32, #tpu.memory_space<vmem>>, vector<1x8x128xf32>
      %1706 = vector.shape_cast %1705 : vector<1x8x128xf32> to vector<8x128xf32>
      %1707 = vector.shape_cast %1703 : vector<8x128xf32> to vector<1x8x128xf32>
      tpu.vector_store %arg5[%c60_400, %1704, %c0_401], %1707 {strides = array<i32>} : memref<128x16x128xf32, #tpu.memory_space<vmem>>, vector<1x8x128xf32>,
      %1708 = vector.broadcast %27 : f32 to vector<8x128xf32>
      %1709 = arith.mulf %1523, %1708 : vector<8x128xf32>
      %1710 = vector.broadcast %28 : f32 to vector<8x128xf32>
      %1711 = arith.mulf %1525, %1710 : vector<8x128xf32>
      %1712 = arith.addf %1709, %1711 : vector<8x128xf32>
      %cst_402 = arith.constant 0.000000e+00 : f32
      %1713 = vector.broadcast %cst_402 : f32 to vector<8x128xf32>
      %1714 = arith.cmpf oge, %1712, %1713 : vector<8x128xf32>
      %1715 = vector.broadcast %0 : f32 to vector<8x128xf32>
      %1716 = arith.mulf %1715, %1712 : vector<8x128xf32>
      %1717 = arith.select %1714, %1712, %1716 : vector<8x128xi1>, vector<8x128xf32>
      %c61_403 = arith.constant 61 : index
      %1718 = arith.index_cast %37 : i32 to index
      %c0_404 = arith.constant 0 : index
      %1719 = vector.load %arg5[%c61_403, %1718, %c0_404] : memref<128x16x128xf32, #tpu.memory_space<vmem>>, vector<1x8x128xf32>
      %1720 = vector.shape_cast %1719 : vector<1x8x128xf32> to vector<8x128xf32>
      %1721 = vector.shape_cast %1717 : vector<8x128xf32> to vector<1x8x128xf32>
      tpu.vector_store %arg5[%c61_403, %1718, %c0_404], %1721 {strides = array<i32>} : memref<128x16x128xf32, #tpu.memory_space<vmem>>, vector<1x8x128xf32>,
      %1722 = vector.broadcast %29 : f32 to vector<8x128xf32>
      %1723 = arith.mulf %1523, %1722 : vector<8x128xf32>
      %1724 = vector.broadcast %30 : f32 to vector<8x128xf32>
      %1725 = arith.mulf %1525, %1724 : vector<8x128xf32>
      %1726 = arith.addf %1723, %1725 : vector<8x128xf32>
      %cst_405 = arith.constant 0.000000e+00 : f32
      %1727 = vector.broadcast %cst_405 : f32 to vector<8x128xf32>
      %1728 = arith.cmpf oge, %1726, %1727 : vector<8x128xf32>
      %1729 = vector.broadcast %0 : f32 to vector<8x128xf32>
      %1730 = arith.mulf %1729, %1726 : vector<8x128xf32>
      %1731 = arith.select %1728, %1726, %1730 : vector<8x128xi1>, vector<8x128xf32>
      %c62_406 = arith.constant 62 : index
      %1732 = arith.index_cast %37 : i32 to index
      %c0_407 = arith.constant 0 : index
      %1733 = vector.load %arg5[%c62_406, %1732, %c0_407] : memref<128x16x128xf32, #tpu.memory_space<vmem>>, vector<1x8x128xf32>
      %1734 = vector.shape_cast %1733 : vector<1x8x128xf32> to vector<8x128xf32>
      %1735 = vector.shape_cast %1731 : vector<8x128xf32> to vector<1x8x128xf32>
      tpu.vector_store %arg5[%c62_406, %1732, %c0_407], %1735 {strides = array<i32>} : memref<128x16x128xf32, #tpu.memory_space<vmem>>, vector<1x8x128xf32>,
      %1736 = vector.broadcast %31 : f32 to vector<8x128xf32>
      %1737 = arith.mulf %1523, %1736 : vector<8x128xf32>
      %1738 = vector.broadcast %32 : f32 to vector<8x128xf32>
      %1739 = arith.mulf %1525, %1738 : vector<8x128xf32>
      %1740 = arith.addf %1737, %1739 : vector<8x128xf32>
      %cst_408 = arith.constant 0.000000e+00 : f32
      %1741 = vector.broadcast %cst_408 : f32 to vector<8x128xf32>
      %1742 = arith.cmpf oge, %1740, %1741 : vector<8x128xf32>
      %1743 = vector.broadcast %0 : f32 to vector<8x128xf32>
      %1744 = arith.mulf %1743, %1740 : vector<8x128xf32>
      %1745 = arith.select %1742, %1740, %1744 : vector<8x128xi1>, vector<8x128xf32>
      %c63_409 = arith.constant 63 : index
      %1746 = arith.index_cast %37 : i32 to index
      %c0_410 = arith.constant 0 : index
      %1747 = vector.load %arg5[%c63_409, %1746, %c0_410] : memref<128x16x128xf32, #tpu.memory_space<vmem>>, vector<1x8x128xf32>
      %1748 = vector.shape_cast %1747 : vector<1x8x128xf32> to vector<8x128xf32>
      %1749 = vector.shape_cast %1745 : vector<8x128xf32> to vector<1x8x128xf32>
      tpu.vector_store %arg5[%c63_409, %1746, %c0_410], %1749 {strides = array<i32>} : memref<128x16x128xf32, #tpu.memory_space<vmem>>, vector<1x8x128xf32>,
      %cst_411 = arith.constant 0.000000e+00 : f32
      %1750 = vector.broadcast %cst_411 : f32 to vector<8x128xf32>
      %1751 = arith.cmpf oge, %64, %1750 : vector<8x128xf32>
      %1752 = vector.broadcast %0 : f32 to vector<8x128xf32>
      %1753 = arith.mulf %1752, %64 : vector<8x128xf32>
      %1754 = arith.select %1751, %64, %1753 : vector<8x128xi1>, vector<8x128xf32>
      %cst_412 = arith.constant 0.000000e+00 : f32
      %1755 = vector.broadcast %cst_412 : f32 to vector<8x128xf32>
      %1756 = arith.cmpf oge, %67, %1755 : vector<8x128xf32>
      %1757 = vector.broadcast %0 : f32 to vector<8x128xf32>
      %1758 = arith.mulf %1757, %67 : vector<8x128xf32>
      %1759 = arith.select %1756, %67, %1758 : vector<8x128xi1>, vector<8x128xf32>
      %c32_413 = arith.constant 32 : index
      %1760 = arith.index_cast %37 : i32 to index
      %c0_414 = arith.constant 0 : index
      %1761 = vector.load %arg4[%c32_413, %1760, %c0_414] : memref<64x16x128xf32, #tpu.memory_space<vmem>>, vector<1x8x128xf32>
      %1762 = vector.shape_cast %1761 : vector<1x8x128xf32> to vector<8x128xf32>
      %1763 = arith.mulf %1762, %144 : vector<8x128xf32>
      %1764 = arith.mulf %1762, %149 : vector<8x128xf32>
      %c33_415 = arith.constant 33 : index
      %1765 = arith.index_cast %37 : i32 to index
      %c0_416 = arith.constant 0 : index
      %1766 = vector.load %arg4[%c33_415, %1765, %c0_416] : memref<64x16x128xf32, #tpu.memory_space<vmem>>, vector<1x8x128xf32>
      %1767 = vector.shape_cast %1766 : vector<1x8x128xf32> to vector<8x128xf32>
      %1768 = arith.mulf %1767, %208 : vector<8x128xf32>
      %1769 = arith.addf %1763, %1768 : vector<8x128xf32>
      %1770 = arith.mulf %1767, %213 : vector<8x128xf32>
      %1771 = arith.addf %1764, %1770 : vector<8x128xf32>
      %c34_417 = arith.constant 34 : index
      %1772 = arith.index_cast %37 : i32 to index
      %c0_418 = arith.constant 0 : index
      %1773 = vector.load %arg4[%c34_417, %1772, %c0_418] : memref<64x16x128xf32, #tpu.memory_space<vmem>>, vector<1x8x128xf32>
      %1774 = vector.shape_cast %1773 : vector<1x8x128xf32> to vector<8x128xf32>
      %1775 = arith.mulf %1774, %272 : vector<8x128xf32>
      %1776 = arith.addf %1769, %1775 : vector<8x128xf32>
      %1777 = arith.mulf %1774, %277 : vector<8x128xf32>
      %1778 = arith.addf %1771, %1777 : vector<8x128xf32>
      %c35_419 = arith.constant 35 : index
      %1779 = arith.index_cast %37 : i32 to index
      %c0_420 = arith.constant 0 : index
      %1780 = vector.load %arg4[%c35_419, %1779, %c0_420] : memref<64x16x128xf32, #tpu.memory_space<vmem>>, vector<1x8x128xf32>
      %1781 = vector.shape_cast %1780 : vector<1x8x128xf32> to vector<8x128xf32>
      %1782 = arith.mulf %1781, %336 : vector<8x128xf32>
      %1783 = arith.addf %1776, %1782 : vector<8x128xf32>
      %1784 = arith.mulf %1781, %341 : vector<8x128xf32>
      %1785 = arith.addf %1778, %1784 : vector<8x128xf32>
      %c36_421 = arith.constant 36 : index
      %1786 = arith.index_cast %37 : i32 to index
      %c0_422 = arith.constant 0 : index
      %1787 = vector.load %arg4[%c36_421, %1786, %c0_422] : memref<64x16x128xf32, #tpu.memory_space<vmem>>, vector<1x8x128xf32>
      %1788 = vector.shape_cast %1787 : vector<1x8x128xf32> to vector<8x128xf32>
      %1789 = arith.mulf %1788, %1754 : vector<8x128xf32>
      %1790 = arith.addf %1783, %1789 : vector<8x128xf32>
      %1791 = arith.mulf %1788, %1759 : vector<8x128xf32>
      %1792 = arith.addf %1785, %1791 : vector<8x128xf32>
      %c37_423 = arith.constant 37 : index
      %1793 = arith.index_cast %37 : i32 to index
      %c0_424 = arith.constant 0 : index
      %1794 = vector.load %arg4[%c37_423, %1793, %c0_424] : memref<64x16x128xf32, #tpu.memory_space<vmem>>, vector<1x8x128xf32>
      %1795 = vector.shape_cast %1794 : vector<1x8x128xf32> to vector<8x128xf32>
      %1796 = arith.mulf %1795, %464 : vector<8x128xf32>
      %1797 = arith.addf %1790, %1796 : vector<8x128xf32>
      %1798 = arith.mulf %1795, %469 : vector<8x128xf32>
      %1799 = arith.addf %1792, %1798 : vector<8x128xf32>
      %c38_425 = arith.constant 38 : index
      %1800 = arith.index_cast %37 : i32 to index
      %c0_426 = arith.constant 0 : index
      %1801 = vector.load %arg4[%c38_425, %1800, %c0_426] : memref<64x16x128xf32, #tpu.memory_space<vmem>>, vector<1x8x128xf32>
      %1802 = vector.shape_cast %1801 : vector<1x8x128xf32> to vector<8x128xf32>
      %1803 = arith.mulf %1802, %528 : vector<8x128xf32>
      %1804 = arith.addf %1797, %1803 : vector<8x128xf32>
      %1805 = arith.mulf %1802, %533 : vector<8x128xf32>
      %1806 = arith.addf %1799, %1805 : vector<8x128xf32>
      %c39_427 = arith.constant 39 : index
      %1807 = arith.index_cast %37 : i32 to index
      %c0_428 = arith.constant 0 : index
      %1808 = vector.load %arg4[%c39_427, %1807, %c0_428] : memref<64x16x128xf32, #tpu.memory_space<vmem>>, vector<1x8x128xf32>
      %1809 = vector.shape_cast %1808 : vector<1x8x128xf32> to vector<8x128xf32>
      %1810 = arith.mulf %1809, %592 : vector<8x128xf32>
      %1811 = arith.addf %1804, %1810 : vector<8x128xf32>
      %1812 = arith.mulf %1809, %597 : vector<8x128xf32>
      %1813 = arith.addf %1806, %1812 : vector<8x128xf32>
      %1814 = vector.broadcast %1 : f32 to vector<8x128xf32>
      %1815 = arith.mulf %1811, %1814 : vector<8x128xf32>
      %1816 = vector.broadcast %2 : f32 to vector<8x128xf32>
      %1817 = arith.mulf %1813, %1816 : vector<8x128xf32>
      %1818 = arith.addf %1815, %1817 : vector<8x128xf32>
      %cst_429 = arith.constant 0.000000e+00 : f32
      %1819 = vector.broadcast %cst_429 : f32 to vector<8x128xf32>
      %1820 = arith.cmpf oge, %1818, %1819 : vector<8x128xf32>
      %1821 = vector.broadcast %0 : f32 to vector<8x128xf32>
      %1822 = arith.mulf %1821, %1818 : vector<8x128xf32>
      %1823 = arith.select %1820, %1818, %1822 : vector<8x128xi1>, vector<8x128xf32>
      %c64 = arith.constant 64 : index
      %1824 = arith.index_cast %37 : i32 to index
      %c0_430 = arith.constant 0 : index
      %1825 = vector.load %arg5[%c64, %1824, %c0_430] : memref<128x16x128xf32, #tpu.memory_space<vmem>>, vector<1x8x128xf32>
      %1826 = vector.shape_cast %1825 : vector<1x8x128xf32> to vector<8x128xf32>
      %1827 = vector.shape_cast %1823 : vector<8x128xf32> to vector<1x8x128xf32>
      tpu.vector_store %arg5[%c64, %1824, %c0_430], %1827 {strides = array<i32>} : memref<128x16x128xf32, #tpu.memory_space<vmem>>, vector<1x8x128xf32>,
      %1828 = vector.broadcast %3 : f32 to vector<8x128xf32>
      %1829 = arith.mulf %1811, %1828 : vector<8x128xf32>
      %1830 = vector.broadcast %4 : f32 to vector<8x128xf32>
      %1831 = arith.mulf %1813, %1830 : vector<8x128xf32>
      %1832 = arith.addf %1829, %1831 : vector<8x128xf32>
      %cst_431 = arith.constant 0.000000e+00 : f32
      %1833 = vector.broadcast %cst_431 : f32 to vector<8x128xf32>
      %1834 = arith.cmpf oge, %1832, %1833 : vector<8x128xf32>
      %1835 = vector.broadcast %0 : f32 to vector<8x128xf32>
      %1836 = arith.mulf %1835, %1832 : vector<8x128xf32>
      %1837 = arith.select %1834, %1832, %1836 : vector<8x128xi1>, vector<8x128xf32>
      %c65 = arith.constant 65 : index
      %1838 = arith.index_cast %37 : i32 to index
      %c0_432 = arith.constant 0 : index
      %1839 = vector.load %arg5[%c65, %1838, %c0_432] : memref<128x16x128xf32, #tpu.memory_space<vmem>>, vector<1x8x128xf32>
      %1840 = vector.shape_cast %1839 : vector<1x8x128xf32> to vector<8x128xf32>
      %1841 = vector.shape_cast %1837 : vector<8x128xf32> to vector<1x8x128xf32>
      tpu.vector_store %arg5[%c65, %1838, %c0_432], %1841 {strides = array<i32>} : memref<128x16x128xf32, #tpu.memory_space<vmem>>, vector<1x8x128xf32>,
      %1842 = vector.broadcast %5 : f32 to vector<8x128xf32>
      %1843 = arith.mulf %1811, %1842 : vector<8x128xf32>
      %1844 = vector.broadcast %6 : f32 to vector<8x128xf32>
      %1845 = arith.mulf %1813, %1844 : vector<8x128xf32>
      %1846 = arith.addf %1843, %1845 : vector<8x128xf32>
      %cst_433 = arith.constant 0.000000e+00 : f32
      %1847 = vector.broadcast %cst_433 : f32 to vector<8x128xf32>
      %1848 = arith.cmpf oge, %1846, %1847 : vector<8x128xf32>
      %1849 = vector.broadcast %0 : f32 to vector<8x128xf32>
      %1850 = arith.mulf %1849, %1846 : vector<8x128xf32>
      %1851 = arith.select %1848, %1846, %1850 : vector<8x128xi1>, vector<8x128xf32>
      %c66 = arith.constant 66 : index
      %1852 = arith.index_cast %37 : i32 to index
      %c0_434 = arith.constant 0 : index
      %1853 = vector.load %arg5[%c66, %1852, %c0_434] : memref<128x16x128xf32, #tpu.memory_space<vmem>>, vector<1x8x128xf32>
      %1854 = vector.shape_cast %1853 : vector<1x8x128xf32> to vector<8x128xf32>
      %1855 = vector.shape_cast %1851 : vector<8x128xf32> to vector<1x8x128xf32>
      tpu.vector_store %arg5[%c66, %1852, %c0_434], %1855 {strides = array<i32>} : memref<128x16x128xf32, #tpu.memory_space<vmem>>, vector<1x8x128xf32>,
      %1856 = vector.broadcast %7 : f32 to vector<8x128xf32>
      %1857 = arith.mulf %1811, %1856 : vector<8x128xf32>
      %1858 = vector.broadcast %8 : f32 to vector<8x128xf32>
      %1859 = arith.mulf %1813, %1858 : vector<8x128xf32>
      %1860 = arith.addf %1857, %1859 : vector<8x128xf32>
      %cst_435 = arith.constant 0.000000e+00 : f32
      %1861 = vector.broadcast %cst_435 : f32 to vector<8x128xf32>
      %1862 = arith.cmpf oge, %1860, %1861 : vector<8x128xf32>
      %1863 = vector.broadcast %0 : f32 to vector<8x128xf32>
      %1864 = arith.mulf %1863, %1860 : vector<8x128xf32>
      %1865 = arith.select %1862, %1860, %1864 : vector<8x128xi1>, vector<8x128xf32>
      %c67 = arith.constant 67 : index
      %1866 = arith.index_cast %37 : i32 to index
      %c0_436 = arith.constant 0 : index
      %1867 = vector.load %arg5[%c67, %1866, %c0_436] : memref<128x16x128xf32, #tpu.memory_space<vmem>>, vector<1x8x128xf32>
      %1868 = vector.shape_cast %1867 : vector<1x8x128xf32> to vector<8x128xf32>
      %1869 = vector.shape_cast %1865 : vector<8x128xf32> to vector<1x8x128xf32>
      tpu.vector_store %arg5[%c67, %1866, %c0_436], %1869 {strides = array<i32>} : memref<128x16x128xf32, #tpu.memory_space<vmem>>, vector<1x8x128xf32>,
      %1870 = vector.broadcast %9 : f32 to vector<8x128xf32>
      %1871 = arith.mulf %1811, %1870 : vector<8x128xf32>
      %1872 = vector.broadcast %10 : f32 to vector<8x128xf32>
      %1873 = arith.mulf %1813, %1872 : vector<8x128xf32>
      %1874 = arith.addf %1871, %1873 : vector<8x128xf32>
      %cst_437 = arith.constant 0.000000e+00 : f32
      %1875 = vector.broadcast %cst_437 : f32 to vector<8x128xf32>
      %1876 = arith.cmpf oge, %1874, %1875 : vector<8x128xf32>
      %1877 = vector.broadcast %0 : f32 to vector<8x128xf32>
      %1878 = arith.mulf %1877, %1874 : vector<8x128xf32>
      %1879 = arith.select %1876, %1874, %1878 : vector<8x128xi1>, vector<8x128xf32>
      %c68 = arith.constant 68 : index
      %1880 = arith.index_cast %37 : i32 to index
      %c0_438 = arith.constant 0 : index
      %1881 = vector.load %arg5[%c68, %1880, %c0_438] : memref<128x16x128xf32, #tpu.memory_space<vmem>>, vector<1x8x128xf32>
      %1882 = vector.shape_cast %1881 : vector<1x8x128xf32> to vector<8x128xf32>
      %1883 = vector.shape_cast %1879 : vector<8x128xf32> to vector<1x8x128xf32>
      tpu.vector_store %arg5[%c68, %1880, %c0_438], %1883 {strides = array<i32>} : memref<128x16x128xf32, #tpu.memory_space<vmem>>, vector<1x8x128xf32>,
      %1884 = vector.broadcast %11 : f32 to vector<8x128xf32>
      %1885 = arith.mulf %1811, %1884 : vector<8x128xf32>
      %1886 = vector.broadcast %12 : f32 to vector<8x128xf32>
      %1887 = arith.mulf %1813, %1886 : vector<8x128xf32>
      %1888 = arith.addf %1885, %1887 : vector<8x128xf32>
      %cst_439 = arith.constant 0.000000e+00 : f32
      %1889 = vector.broadcast %cst_439 : f32 to vector<8x128xf32>
      %1890 = arith.cmpf oge, %1888, %1889 : vector<8x128xf32>
      %1891 = vector.broadcast %0 : f32 to vector<8x128xf32>
      %1892 = arith.mulf %1891, %1888 : vector<8x128xf32>
      %1893 = arith.select %1890, %1888, %1892 : vector<8x128xi1>, vector<8x128xf32>
      %c69 = arith.constant 69 : index
      %1894 = arith.index_cast %37 : i32 to index
      %c0_440 = arith.constant 0 : index
      %1895 = vector.load %arg5[%c69, %1894, %c0_440] : memref<128x16x128xf32, #tpu.memory_space<vmem>>, vector<1x8x128xf32>
      %1896 = vector.shape_cast %1895 : vector<1x8x128xf32> to vector<8x128xf32>
      %1897 = vector.shape_cast %1893 : vector<8x128xf32> to vector<1x8x128xf32>
      tpu.vector_store %arg5[%c69, %1894, %c0_440], %1897 {strides = array<i32>} : memref<128x16x128xf32, #tpu.memory_space<vmem>>, vector<1x8x128xf32>,
      %1898 = vector.broadcast %13 : f32 to vector<8x128xf32>
      %1899 = arith.mulf %1811, %1898 : vector<8x128xf32>
      %1900 = vector.broadcast %14 : f32 to vector<8x128xf32>
      %1901 = arith.mulf %1813, %1900 : vector<8x128xf32>
      %1902 = arith.addf %1899, %1901 : vector<8x128xf32>
      %cst_441 = arith.constant 0.000000e+00 : f32
      %1903 = vector.broadcast %cst_441 : f32 to vector<8x128xf32>
      %1904 = arith.cmpf oge, %1902, %1903 : vector<8x128xf32>
      %1905 = vector.broadcast %0 : f32 to vector<8x128xf32>
      %1906 = arith.mulf %1905, %1902 : vector<8x128xf32>
      %1907 = arith.select %1904, %1902, %1906 : vector<8x128xi1>, vector<8x128xf32>
      %c70 = arith.constant 70 : index
      %1908 = arith.index_cast %37 : i32 to index
      %c0_442 = arith.constant 0 : index
      %1909 = vector.load %arg5[%c70, %1908, %c0_442] : memref<128x16x128xf32, #tpu.memory_space<vmem>>, vector<1x8x128xf32>
      %1910 = vector.shape_cast %1909 : vector<1x8x128xf32> to vector<8x128xf32>
      %1911 = vector.shape_cast %1907 : vector<8x128xf32> to vector<1x8x128xf32>
      tpu.vector_store %arg5[%c70, %1908, %c0_442], %1911 {strides = array<i32>} : memref<128x16x128xf32, #tpu.memory_space<vmem>>, vector<1x8x128xf32>,
      %1912 = vector.broadcast %15 : f32 to vector<8x128xf32>
      %1913 = arith.mulf %1811, %1912 : vector<8x128xf32>
      %1914 = vector.broadcast %16 : f32 to vector<8x128xf32>
      %1915 = arith.mulf %1813, %1914 : vector<8x128xf32>
      %1916 = arith.addf %1913, %1915 : vector<8x128xf32>
      %cst_443 = arith.constant 0.000000e+00 : f32
      %1917 = vector.broadcast %cst_443 : f32 to vector<8x128xf32>
      %1918 = arith.cmpf oge, %1916, %1917 : vector<8x128xf32>
      %1919 = vector.broadcast %0 : f32 to vector<8x128xf32>
      %1920 = arith.mulf %1919, %1916 : vector<8x128xf32>
      %1921 = arith.select %1918, %1916, %1920 : vector<8x128xi1>, vector<8x128xf32>
      %c71 = arith.constant 71 : index
      %1922 = arith.index_cast %37 : i32 to index
      %c0_444 = arith.constant 0 : index
      %1923 = vector.load %arg5[%c71, %1922, %c0_444] : memref<128x16x128xf32, #tpu.memory_space<vmem>>, vector<1x8x128xf32>
      %1924 = vector.shape_cast %1923 : vector<1x8x128xf32> to vector<8x128xf32>
      %1925 = vector.shape_cast %1921 : vector<8x128xf32> to vector<1x8x128xf32>
      tpu.vector_store %arg5[%c71, %1922, %c0_444], %1925 {strides = array<i32>} : memref<128x16x128xf32, #tpu.memory_space<vmem>>, vector<1x8x128xf32>,
      %1926 = vector.broadcast %17 : f32 to vector<8x128xf32>
      %1927 = arith.mulf %1811, %1926 : vector<8x128xf32>
      %1928 = vector.broadcast %18 : f32 to vector<8x128xf32>
      %1929 = arith.mulf %1813, %1928 : vector<8x128xf32>
      %1930 = arith.addf %1927, %1929 : vector<8x128xf32>
      %cst_445 = arith.constant 0.000000e+00 : f32
      %1931 = vector.broadcast %cst_445 : f32 to vector<8x128xf32>
      %1932 = arith.cmpf oge, %1930, %1931 : vector<8x128xf32>
      %1933 = vector.broadcast %0 : f32 to vector<8x128xf32>
      %1934 = arith.mulf %1933, %1930 : vector<8x128xf32>
      %1935 = arith.select %1932, %1930, %1934 : vector<8x128xi1>, vector<8x128xf32>
      %c72 = arith.constant 72 : index
      %1936 = arith.index_cast %37 : i32 to index
      %c0_446 = arith.constant 0 : index
      %1937 = vector.load %arg5[%c72, %1936, %c0_446] : memref<128x16x128xf32, #tpu.memory_space<vmem>>, vector<1x8x128xf32>
      %1938 = vector.shape_cast %1937 : vector<1x8x128xf32> to vector<8x128xf32>
      %1939 = vector.shape_cast %1935 : vector<8x128xf32> to vector<1x8x128xf32>
      tpu.vector_store %arg5[%c72, %1936, %c0_446], %1939 {strides = array<i32>} : memref<128x16x128xf32, #tpu.memory_space<vmem>>, vector<1x8x128xf32>,
      %1940 = vector.broadcast %19 : f32 to vector<8x128xf32>
      %1941 = arith.mulf %1811, %1940 : vector<8x128xf32>
      %1942 = vector.broadcast %20 : f32 to vector<8x128xf32>
      %1943 = arith.mulf %1813, %1942 : vector<8x128xf32>
      %1944 = arith.addf %1941, %1943 : vector<8x128xf32>
      %cst_447 = arith.constant 0.000000e+00 : f32
      %1945 = vector.broadcast %cst_447 : f32 to vector<8x128xf32>
      %1946 = arith.cmpf oge, %1944, %1945 : vector<8x128xf32>
      %1947 = vector.broadcast %0 : f32 to vector<8x128xf32>
      %1948 = arith.mulf %1947, %1944 : vector<8x128xf32>
      %1949 = arith.select %1946, %1944, %1948 : vector<8x128xi1>, vector<8x128xf32>
      %c73 = arith.constant 73 : index
      %1950 = arith.index_cast %37 : i32 to index
      %c0_448 = arith.constant 0 : index
      %1951 = vector.load %arg5[%c73, %1950, %c0_448] : memref<128x16x128xf32, #tpu.memory_space<vmem>>, vector<1x8x128xf32>
      %1952 = vector.shape_cast %1951 : vector<1x8x128xf32> to vector<8x128xf32>
      %1953 = vector.shape_cast %1949 : vector<8x128xf32> to vector<1x8x128xf32>
      tpu.vector_store %arg5[%c73, %1950, %c0_448], %1953 {strides = array<i32>} : memref<128x16x128xf32, #tpu.memory_space<vmem>>, vector<1x8x128xf32>,
      %1954 = vector.broadcast %21 : f32 to vector<8x128xf32>
      %1955 = arith.mulf %1811, %1954 : vector<8x128xf32>
      %1956 = vector.broadcast %22 : f32 to vector<8x128xf32>
      %1957 = arith.mulf %1813, %1956 : vector<8x128xf32>
      %1958 = arith.addf %1955, %1957 : vector<8x128xf32>
      %cst_449 = arith.constant 0.000000e+00 : f32
      %1959 = vector.broadcast %cst_449 : f32 to vector<8x128xf32>
      %1960 = arith.cmpf oge, %1958, %1959 : vector<8x128xf32>
      %1961 = vector.broadcast %0 : f32 to vector<8x128xf32>
      %1962 = arith.mulf %1961, %1958 : vector<8x128xf32>
      %1963 = arith.select %1960, %1958, %1962 : vector<8x128xi1>, vector<8x128xf32>
      %c74 = arith.constant 74 : index
      %1964 = arith.index_cast %37 : i32 to index
      %c0_450 = arith.constant 0 : index
      %1965 = vector.load %arg5[%c74, %1964, %c0_450] : memref<128x16x128xf32, #tpu.memory_space<vmem>>, vector<1x8x128xf32>
      %1966 = vector.shape_cast %1965 : vector<1x8x128xf32> to vector<8x128xf32>
      %1967 = vector.shape_cast %1963 : vector<8x128xf32> to vector<1x8x128xf32>
      tpu.vector_store %arg5[%c74, %1964, %c0_450], %1967 {strides = array<i32>} : memref<128x16x128xf32, #tpu.memory_space<vmem>>, vector<1x8x128xf32>,
      %1968 = vector.broadcast %23 : f32 to vector<8x128xf32>
      %1969 = arith.mulf %1811, %1968 : vector<8x128xf32>
      %1970 = vector.broadcast %24 : f32 to vector<8x128xf32>
      %1971 = arith.mulf %1813, %1970 : vector<8x128xf32>
      %1972 = arith.addf %1969, %1971 : vector<8x128xf32>
      %cst_451 = arith.constant 0.000000e+00 : f32
      %1973 = vector.broadcast %cst_451 : f32 to vector<8x128xf32>
      %1974 = arith.cmpf oge, %1972, %1973 : vector<8x128xf32>
      %1975 = vector.broadcast %0 : f32 to vector<8x128xf32>
      %1976 = arith.mulf %1975, %1972 : vector<8x128xf32>
      %1977 = arith.select %1974, %1972, %1976 : vector<8x128xi1>, vector<8x128xf32>
      %c75 = arith.constant 75 : index
      %1978 = arith.index_cast %37 : i32 to index
      %c0_452 = arith.constant 0 : index
      %1979 = vector.load %arg5[%c75, %1978, %c0_452] : memref<128x16x128xf32, #tpu.memory_space<vmem>>, vector<1x8x128xf32>
      %1980 = vector.shape_cast %1979 : vector<1x8x128xf32> to vector<8x128xf32>
      %1981 = vector.shape_cast %1977 : vector<8x128xf32> to vector<1x8x128xf32>
      tpu.vector_store %arg5[%c75, %1978, %c0_452], %1981 {strides = array<i32>} : memref<128x16x128xf32, #tpu.memory_space<vmem>>, vector<1x8x128xf32>,
      %1982 = vector.broadcast %25 : f32 to vector<8x128xf32>
      %1983 = arith.mulf %1811, %1982 : vector<8x128xf32>
      %1984 = vector.broadcast %26 : f32 to vector<8x128xf32>
      %1985 = arith.mulf %1813, %1984 : vector<8x128xf32>
      %1986 = arith.addf %1983, %1985 : vector<8x128xf32>
      %cst_453 = arith.constant 0.000000e+00 : f32
      %1987 = vector.broadcast %cst_453 : f32 to vector<8x128xf32>
      %1988 = arith.cmpf oge, %1986, %1987 : vector<8x128xf32>
      %1989 = vector.broadcast %0 : f32 to vector<8x128xf32>
      %1990 = arith.mulf %1989, %1986 : vector<8x128xf32>
      %1991 = arith.select %1988, %1986, %1990 : vector<8x128xi1>, vector<8x128xf32>
      %c76 = arith.constant 76 : index
      %1992 = arith.index_cast %37 : i32 to index
      %c0_454 = arith.constant 0 : index
      %1993 = vector.load %arg5[%c76, %1992, %c0_454] : memref<128x16x128xf32, #tpu.memory_space<vmem>>, vector<1x8x128xf32>
      %1994 = vector.shape_cast %1993 : vector<1x8x128xf32> to vector<8x128xf32>
      %1995 = vector.shape_cast %1991 : vector<8x128xf32> to vector<1x8x128xf32>
      tpu.vector_store %arg5[%c76, %1992, %c0_454], %1995 {strides = array<i32>} : memref<128x16x128xf32, #tpu.memory_space<vmem>>, vector<1x8x128xf32>,
      %1996 = vector.broadcast %27 : f32 to vector<8x128xf32>
      %1997 = arith.mulf %1811, %1996 : vector<8x128xf32>
      %1998 = vector.broadcast %28 : f32 to vector<8x128xf32>
      %1999 = arith.mulf %1813, %1998 : vector<8x128xf32>
      %2000 = arith.addf %1997, %1999 : vector<8x128xf32>
      %cst_455 = arith.constant 0.000000e+00 : f32
      %2001 = vector.broadcast %cst_455 : f32 to vector<8x128xf32>
      %2002 = arith.cmpf oge, %2000, %2001 : vector<8x128xf32>
      %2003 = vector.broadcast %0 : f32 to vector<8x128xf32>
      %2004 = arith.mulf %2003, %2000 : vector<8x128xf32>
      %2005 = arith.select %2002, %2000, %2004 : vector<8x128xi1>, vector<8x128xf32>
      %c77 = arith.constant 77 : index
      %2006 = arith.index_cast %37 : i32 to index
      %c0_456 = arith.constant 0 : index
      %2007 = vector.load %arg5[%c77, %2006, %c0_456] : memref<128x16x128xf32, #tpu.memory_space<vmem>>, vector<1x8x128xf32>
      %2008 = vector.shape_cast %2007 : vector<1x8x128xf32> to vector<8x128xf32>
      %2009 = vector.shape_cast %2005 : vector<8x128xf32> to vector<1x8x128xf32>
      tpu.vector_store %arg5[%c77, %2006, %c0_456], %2009 {strides = array<i32>} : memref<128x16x128xf32, #tpu.memory_space<vmem>>, vector<1x8x128xf32>,
      %2010 = vector.broadcast %29 : f32 to vector<8x128xf32>
      %2011 = arith.mulf %1811, %2010 : vector<8x128xf32>
      %2012 = vector.broadcast %30 : f32 to vector<8x128xf32>
      %2013 = arith.mulf %1813, %2012 : vector<8x128xf32>
      %2014 = arith.addf %2011, %2013 : vector<8x128xf32>
      %cst_457 = arith.constant 0.000000e+00 : f32
      %2015 = vector.broadcast %cst_457 : f32 to vector<8x128xf32>
      %2016 = arith.cmpf oge, %2014, %2015 : vector<8x128xf32>
      %2017 = vector.broadcast %0 : f32 to vector<8x128xf32>
      %2018 = arith.mulf %2017, %2014 : vector<8x128xf32>
      %2019 = arith.select %2016, %2014, %2018 : vector<8x128xi1>, vector<8x128xf32>
      %c78 = arith.constant 78 : index
      %2020 = arith.index_cast %37 : i32 to index
      %c0_458 = arith.constant 0 : index
      %2021 = vector.load %arg5[%c78, %2020, %c0_458] : memref<128x16x128xf32, #tpu.memory_space<vmem>>, vector<1x8x128xf32>
      %2022 = vector.shape_cast %2021 : vector<1x8x128xf32> to vector<8x128xf32>
      %2023 = vector.shape_cast %2019 : vector<8x128xf32> to vector<1x8x128xf32>
      tpu.vector_store %arg5[%c78, %2020, %c0_458], %2023 {strides = array<i32>} : memref<128x16x128xf32, #tpu.memory_space<vmem>>, vector<1x8x128xf32>,
      %2024 = vector.broadcast %31 : f32 to vector<8x128xf32>
      %2025 = arith.mulf %1811, %2024 : vector<8x128xf32>
      %2026 = vector.broadcast %32 : f32 to vector<8x128xf32>
      %2027 = arith.mulf %1813, %2026 : vector<8x128xf32>
      %2028 = arith.addf %2025, %2027 : vector<8x128xf32>
      %cst_459 = arith.constant 0.000000e+00 : f32
      %2029 = vector.broadcast %cst_459 : f32 to vector<8x128xf32>
      %2030 = arith.cmpf oge, %2028, %2029 : vector<8x128xf32>
      %2031 = vector.broadcast %0 : f32 to vector<8x128xf32>
      %2032 = arith.mulf %2031, %2028 : vector<8x128xf32>
      %2033 = arith.select %2030, %2028, %2032 : vector<8x128xi1>, vector<8x128xf32>
      %c79 = arith.constant 79 : index
      %2034 = arith.index_cast %37 : i32 to index
      %c0_460 = arith.constant 0 : index
      %2035 = vector.load %arg5[%c79, %2034, %c0_460] : memref<128x16x128xf32, #tpu.memory_space<vmem>>, vector<1x8x128xf32>
      %2036 = vector.shape_cast %2035 : vector<1x8x128xf32> to vector<8x128xf32>
      %2037 = vector.shape_cast %2033 : vector<8x128xf32> to vector<1x8x128xf32>
      tpu.vector_store %arg5[%c79, %2034, %c0_460], %2037 {strides = array<i32>} : memref<128x16x128xf32, #tpu.memory_space<vmem>>, vector<1x8x128xf32>,
      %cst_461 = arith.constant 0.000000e+00 : f32
      %2038 = vector.broadcast %cst_461 : f32 to vector<8x128xf32>
      %2039 = arith.cmpf oge, %70, %2038 : vector<8x128xf32>
      %2040 = vector.broadcast %0 : f32 to vector<8x128xf32>
      %2041 = arith.mulf %2040, %70 : vector<8x128xf32>
      %2042 = arith.select %2039, %70, %2041 : vector<8x128xi1>, vector<8x128xf32>
      %cst_462 = arith.constant 0.000000e+00 : f32
      %2043 = vector.broadcast %cst_462 : f32 to vector<8x128xf32>
      %2044 = arith.cmpf oge, %73, %2043 : vector<8x128xf32>
      %2045 = vector.broadcast %0 : f32 to vector<8x128xf32>
      %2046 = arith.mulf %2045, %73 : vector<8x128xf32>
      %2047 = arith.select %2044, %73, %2046 : vector<8x128xi1>, vector<8x128xf32>
      %c40_463 = arith.constant 40 : index
      %2048 = arith.index_cast %37 : i32 to index
      %c0_464 = arith.constant 0 : index
      %2049 = vector.load %arg4[%c40_463, %2048, %c0_464] : memref<64x16x128xf32, #tpu.memory_space<vmem>>, vector<1x8x128xf32>
      %2050 = vector.shape_cast %2049 : vector<1x8x128xf32> to vector<8x128xf32>
      %2051 = arith.mulf %2050, %144 : vector<8x128xf32>
      %2052 = arith.mulf %2050, %149 : vector<8x128xf32>
      %c41_465 = arith.constant 41 : index
      %2053 = arith.index_cast %37 : i32 to index
      %c0_466 = arith.constant 0 : index
      %2054 = vector.load %arg4[%c41_465, %2053, %c0_466] : memref<64x16x128xf32, #tpu.memory_space<vmem>>, vector<1x8x128xf32>
      %2055 = vector.shape_cast %2054 : vector<1x8x128xf32> to vector<8x128xf32>
      %2056 = arith.mulf %2055, %208 : vector<8x128xf32>
      %2057 = arith.addf %2051, %2056 : vector<8x128xf32>
      %2058 = arith.mulf %2055, %213 : vector<8x128xf32>
      %2059 = arith.addf %2052, %2058 : vector<8x128xf32>
      %c42_467 = arith.constant 42 : index
      %2060 = arith.index_cast %37 : i32 to index
      %c0_468 = arith.constant 0 : index
      %2061 = vector.load %arg4[%c42_467, %2060, %c0_468] : memref<64x16x128xf32, #tpu.memory_space<vmem>>, vector<1x8x128xf32>
      %2062 = vector.shape_cast %2061 : vector<1x8x128xf32> to vector<8x128xf32>
      %2063 = arith.mulf %2062, %272 : vector<8x128xf32>
      %2064 = arith.addf %2057, %2063 : vector<8x128xf32>
      %2065 = arith.mulf %2062, %277 : vector<8x128xf32>
      %2066 = arith.addf %2059, %2065 : vector<8x128xf32>
      %c43_469 = arith.constant 43 : index
      %2067 = arith.index_cast %37 : i32 to index
      %c0_470 = arith.constant 0 : index
      %2068 = vector.load %arg4[%c43_469, %2067, %c0_470] : memref<64x16x128xf32, #tpu.memory_space<vmem>>, vector<1x8x128xf32>
      %2069 = vector.shape_cast %2068 : vector<1x8x128xf32> to vector<8x128xf32>
      %2070 = arith.mulf %2069, %336 : vector<8x128xf32>
      %2071 = arith.addf %2064, %2070 : vector<8x128xf32>
      %2072 = arith.mulf %2069, %341 : vector<8x128xf32>
      %2073 = arith.addf %2066, %2072 : vector<8x128xf32>
      %c44_471 = arith.constant 44 : index
      %2074 = arith.index_cast %37 : i32 to index
      %c0_472 = arith.constant 0 : index
      %2075 = vector.load %arg4[%c44_471, %2074, %c0_472] : memref<64x16x128xf32, #tpu.memory_space<vmem>>, vector<1x8x128xf32>
      %2076 = vector.shape_cast %2075 : vector<1x8x128xf32> to vector<8x128xf32>
      %2077 = arith.mulf %2076, %400 : vector<8x128xf32>
      %2078 = arith.addf %2071, %2077 : vector<8x128xf32>
      %2079 = arith.mulf %2076, %405 : vector<8x128xf32>
      %2080 = arith.addf %2073, %2079 : vector<8x128xf32>
      %c45_473 = arith.constant 45 : index
      %2081 = arith.index_cast %37 : i32 to index
      %c0_474 = arith.constant 0 : index
      %2082 = vector.load %arg4[%c45_473, %2081, %c0_474] : memref<64x16x128xf32, #tpu.memory_space<vmem>>, vector<1x8x128xf32>
      %2083 = vector.shape_cast %2082 : vector<1x8x128xf32> to vector<8x128xf32>
      %2084 = arith.mulf %2083, %2042 : vector<8x128xf32>
      %2085 = arith.addf %2078, %2084 : vector<8x128xf32>
      %2086 = arith.mulf %2083, %2047 : vector<8x128xf32>
      %2087 = arith.addf %2080, %2086 : vector<8x128xf32>
      %c46_475 = arith.constant 46 : index
      %2088 = arith.index_cast %37 : i32 to index
      %c0_476 = arith.constant 0 : index
      %2089 = vector.load %arg4[%c46_475, %2088, %c0_476] : memref<64x16x128xf32, #tpu.memory_space<vmem>>, vector<1x8x128xf32>
      %2090 = vector.shape_cast %2089 : vector<1x8x128xf32> to vector<8x128xf32>
      %2091 = arith.mulf %2090, %528 : vector<8x128xf32>
      %2092 = arith.addf %2085, %2091 : vector<8x128xf32>
      %2093 = arith.mulf %2090, %533 : vector<8x128xf32>
      %2094 = arith.addf %2087, %2093 : vector<8x128xf32>
      %c47_477 = arith.constant 47 : index
      %2095 = arith.index_cast %37 : i32 to index
      %c0_478 = arith.constant 0 : index
      %2096 = vector.load %arg4[%c47_477, %2095, %c0_478] : memref<64x16x128xf32, #tpu.memory_space<vmem>>, vector<1x8x128xf32>
      %2097 = vector.shape_cast %2096 : vector<1x8x128xf32> to vector<8x128xf32>
      %2098 = arith.mulf %2097, %592 : vector<8x128xf32>
      %2099 = arith.addf %2092, %2098 : vector<8x128xf32>
      %2100 = arith.mulf %2097, %597 : vector<8x128xf32>
      %2101 = arith.addf %2094, %2100 : vector<8x128xf32>
      %2102 = vector.broadcast %1 : f32 to vector<8x128xf32>
      %2103 = arith.mulf %2099, %2102 : vector<8x128xf32>
      %2104 = vector.broadcast %2 : f32 to vector<8x128xf32>
      %2105 = arith.mulf %2101, %2104 : vector<8x128xf32>
      %2106 = arith.addf %2103, %2105 : vector<8x128xf32>
      %cst_479 = arith.constant 0.000000e+00 : f32
      %2107 = vector.broadcast %cst_479 : f32 to vector<8x128xf32>
      %2108 = arith.cmpf oge, %2106, %2107 : vector<8x128xf32>
      %2109 = vector.broadcast %0 : f32 to vector<8x128xf32>
      %2110 = arith.mulf %2109, %2106 : vector<8x128xf32>
      %2111 = arith.select %2108, %2106, %2110 : vector<8x128xi1>, vector<8x128xf32>
      %c80 = arith.constant 80 : index
      %2112 = arith.index_cast %37 : i32 to index
      %c0_480 = arith.constant 0 : index
      %2113 = vector.load %arg5[%c80, %2112, %c0_480] : memref<128x16x128xf32, #tpu.memory_space<vmem>>, vector<1x8x128xf32>
      %2114 = vector.shape_cast %2113 : vector<1x8x128xf32> to vector<8x128xf32>
      %2115 = vector.shape_cast %2111 : vector<8x128xf32> to vector<1x8x128xf32>
      tpu.vector_store %arg5[%c80, %2112, %c0_480], %2115 {strides = array<i32>} : memref<128x16x128xf32, #tpu.memory_space<vmem>>, vector<1x8x128xf32>,
      %2116 = vector.broadcast %3 : f32 to vector<8x128xf32>
      %2117 = arith.mulf %2099, %2116 : vector<8x128xf32>
      %2118 = vector.broadcast %4 : f32 to vector<8x128xf32>
      %2119 = arith.mulf %2101, %2118 : vector<8x128xf32>
      %2120 = arith.addf %2117, %2119 : vector<8x128xf32>
      %cst_481 = arith.constant 0.000000e+00 : f32
      %2121 = vector.broadcast %cst_481 : f32 to vector<8x128xf32>
      %2122 = arith.cmpf oge, %2120, %2121 : vector<8x128xf32>
      %2123 = vector.broadcast %0 : f32 to vector<8x128xf32>
      %2124 = arith.mulf %2123, %2120 : vector<8x128xf32>
      %2125 = arith.select %2122, %2120, %2124 : vector<8x128xi1>, vector<8x128xf32>
      %c81 = arith.constant 81 : index
      %2126 = arith.index_cast %37 : i32 to index
      %c0_482 = arith.constant 0 : index
      %2127 = vector.load %arg5[%c81, %2126, %c0_482] : memref<128x16x128xf32, #tpu.memory_space<vmem>>, vector<1x8x128xf32>
      %2128 = vector.shape_cast %2127 : vector<1x8x128xf32> to vector<8x128xf32>
      %2129 = vector.shape_cast %2125 : vector<8x128xf32> to vector<1x8x128xf32>
      tpu.vector_store %arg5[%c81, %2126, %c0_482], %2129 {strides = array<i32>} : memref<128x16x128xf32, #tpu.memory_space<vmem>>, vector<1x8x128xf32>,
      %2130 = vector.broadcast %5 : f32 to vector<8x128xf32>
      %2131 = arith.mulf %2099, %2130 : vector<8x128xf32>
      %2132 = vector.broadcast %6 : f32 to vector<8x128xf32>
      %2133 = arith.mulf %2101, %2132 : vector<8x128xf32>
      %2134 = arith.addf %2131, %2133 : vector<8x128xf32>
      %cst_483 = arith.constant 0.000000e+00 : f32
      %2135 = vector.broadcast %cst_483 : f32 to vector<8x128xf32>
      %2136 = arith.cmpf oge, %2134, %2135 : vector<8x128xf32>
      %2137 = vector.broadcast %0 : f32 to vector<8x128xf32>
      %2138 = arith.mulf %2137, %2134 : vector<8x128xf32>
      %2139 = arith.select %2136, %2134, %2138 : vector<8x128xi1>, vector<8x128xf32>
      %c82 = arith.constant 82 : index
      %2140 = arith.index_cast %37 : i32 to index
      %c0_484 = arith.constant 0 : index
      %2141 = vector.load %arg5[%c82, %2140, %c0_484] : memref<128x16x128xf32, #tpu.memory_space<vmem>>, vector<1x8x128xf32>
      %2142 = vector.shape_cast %2141 : vector<1x8x128xf32> to vector<8x128xf32>
      %2143 = vector.shape_cast %2139 : vector<8x128xf32> to vector<1x8x128xf32>
      tpu.vector_store %arg5[%c82, %2140, %c0_484], %2143 {strides = array<i32>} : memref<128x16x128xf32, #tpu.memory_space<vmem>>, vector<1x8x128xf32>,
      %2144 = vector.broadcast %7 : f32 to vector<8x128xf32>
      %2145 = arith.mulf %2099, %2144 : vector<8x128xf32>
      %2146 = vector.broadcast %8 : f32 to vector<8x128xf32>
      %2147 = arith.mulf %2101, %2146 : vector<8x128xf32>
      %2148 = arith.addf %2145, %2147 : vector<8x128xf32>
      %cst_485 = arith.constant 0.000000e+00 : f32
      %2149 = vector.broadcast %cst_485 : f32 to vector<8x128xf32>
      %2150 = arith.cmpf oge, %2148, %2149 : vector<8x128xf32>
      %2151 = vector.broadcast %0 : f32 to vector<8x128xf32>
      %2152 = arith.mulf %2151, %2148 : vector<8x128xf32>
      %2153 = arith.select %2150, %2148, %2152 : vector<8x128xi1>, vector<8x128xf32>
      %c83 = arith.constant 83 : index
      %2154 = arith.index_cast %37 : i32 to index
      %c0_486 = arith.constant 0 : index
      %2155 = vector.load %arg5[%c83, %2154, %c0_486] : memref<128x16x128xf32, #tpu.memory_space<vmem>>, vector<1x8x128xf32>
      %2156 = vector.shape_cast %2155 : vector<1x8x128xf32> to vector<8x128xf32>
      %2157 = vector.shape_cast %2153 : vector<8x128xf32> to vector<1x8x128xf32>
      tpu.vector_store %arg5[%c83, %2154, %c0_486], %2157 {strides = array<i32>} : memref<128x16x128xf32, #tpu.memory_space<vmem>>, vector<1x8x128xf32>,
      %2158 = vector.broadcast %9 : f32 to vector<8x128xf32>
      %2159 = arith.mulf %2099, %2158 : vector<8x128xf32>
      %2160 = vector.broadcast %10 : f32 to vector<8x128xf32>
      %2161 = arith.mulf %2101, %2160 : vector<8x128xf32>
      %2162 = arith.addf %2159, %2161 : vector<8x128xf32>
      %cst_487 = arith.constant 0.000000e+00 : f32
      %2163 = vector.broadcast %cst_487 : f32 to vector<8x128xf32>
      %2164 = arith.cmpf oge, %2162, %2163 : vector<8x128xf32>
      %2165 = vector.broadcast %0 : f32 to vector<8x128xf32>
      %2166 = arith.mulf %2165, %2162 : vector<8x128xf32>
      %2167 = arith.select %2164, %2162, %2166 : vector<8x128xi1>, vector<8x128xf32>
      %c84 = arith.constant 84 : index
      %2168 = arith.index_cast %37 : i32 to index
      %c0_488 = arith.constant 0 : index
      %2169 = vector.load %arg5[%c84, %2168, %c0_488] : memref<128x16x128xf32, #tpu.memory_space<vmem>>, vector<1x8x128xf32>
      %2170 = vector.shape_cast %2169 : vector<1x8x128xf32> to vector<8x128xf32>
      %2171 = vector.shape_cast %2167 : vector<8x128xf32> to vector<1x8x128xf32>
      tpu.vector_store %arg5[%c84, %2168, %c0_488], %2171 {strides = array<i32>} : memref<128x16x128xf32, #tpu.memory_space<vmem>>, vector<1x8x128xf32>,
      %2172 = vector.broadcast %11 : f32 to vector<8x128xf32>
      %2173 = arith.mulf %2099, %2172 : vector<8x128xf32>
      %2174 = vector.broadcast %12 : f32 to vector<8x128xf32>
      %2175 = arith.mulf %2101, %2174 : vector<8x128xf32>
      %2176 = arith.addf %2173, %2175 : vector<8x128xf32>
      %cst_489 = arith.constant 0.000000e+00 : f32
      %2177 = vector.broadcast %cst_489 : f32 to vector<8x128xf32>
      %2178 = arith.cmpf oge, %2176, %2177 : vector<8x128xf32>
      %2179 = vector.broadcast %0 : f32 to vector<8x128xf32>
      %2180 = arith.mulf %2179, %2176 : vector<8x128xf32>
      %2181 = arith.select %2178, %2176, %2180 : vector<8x128xi1>, vector<8x128xf32>
      %c85 = arith.constant 85 : index
      %2182 = arith.index_cast %37 : i32 to index
      %c0_490 = arith.constant 0 : index
      %2183 = vector.load %arg5[%c85, %2182, %c0_490] : memref<128x16x128xf32, #tpu.memory_space<vmem>>, vector<1x8x128xf32>
      %2184 = vector.shape_cast %2183 : vector<1x8x128xf32> to vector<8x128xf32>
      %2185 = vector.shape_cast %2181 : vector<8x128xf32> to vector<1x8x128xf32>
      tpu.vector_store %arg5[%c85, %2182, %c0_490], %2185 {strides = array<i32>} : memref<128x16x128xf32, #tpu.memory_space<vmem>>, vector<1x8x128xf32>,
      %2186 = vector.broadcast %13 : f32 to vector<8x128xf32>
      %2187 = arith.mulf %2099, %2186 : vector<8x128xf32>
      %2188 = vector.broadcast %14 : f32 to vector<8x128xf32>
      %2189 = arith.mulf %2101, %2188 : vector<8x128xf32>
      %2190 = arith.addf %2187, %2189 : vector<8x128xf32>
      %cst_491 = arith.constant 0.000000e+00 : f32
      %2191 = vector.broadcast %cst_491 : f32 to vector<8x128xf32>
      %2192 = arith.cmpf oge, %2190, %2191 : vector<8x128xf32>
      %2193 = vector.broadcast %0 : f32 to vector<8x128xf32>
      %2194 = arith.mulf %2193, %2190 : vector<8x128xf32>
      %2195 = arith.select %2192, %2190, %2194 : vector<8x128xi1>, vector<8x128xf32>
      %c86 = arith.constant 86 : index
      %2196 = arith.index_cast %37 : i32 to index
      %c0_492 = arith.constant 0 : index
      %2197 = vector.load %arg5[%c86, %2196, %c0_492] : memref<128x16x128xf32, #tpu.memory_space<vmem>>, vector<1x8x128xf32>
      %2198 = vector.shape_cast %2197 : vector<1x8x128xf32> to vector<8x128xf32>
      %2199 = vector.shape_cast %2195 : vector<8x128xf32> to vector<1x8x128xf32>
      tpu.vector_store %arg5[%c86, %2196, %c0_492], %2199 {strides = array<i32>} : memref<128x16x128xf32, #tpu.memory_space<vmem>>, vector<1x8x128xf32>,
      %2200 = vector.broadcast %15 : f32 to vector<8x128xf32>
      %2201 = arith.mulf %2099, %2200 : vector<8x128xf32>
      %2202 = vector.broadcast %16 : f32 to vector<8x128xf32>
      %2203 = arith.mulf %2101, %2202 : vector<8x128xf32>
      %2204 = arith.addf %2201, %2203 : vector<8x128xf32>
      %cst_493 = arith.constant 0.000000e+00 : f32
      %2205 = vector.broadcast %cst_493 : f32 to vector<8x128xf32>
      %2206 = arith.cmpf oge, %2204, %2205 : vector<8x128xf32>
      %2207 = vector.broadcast %0 : f32 to vector<8x128xf32>
      %2208 = arith.mulf %2207, %2204 : vector<8x128xf32>
      %2209 = arith.select %2206, %2204, %2208 : vector<8x128xi1>, vector<8x128xf32>
      %c87 = arith.constant 87 : index
      %2210 = arith.index_cast %37 : i32 to index
      %c0_494 = arith.constant 0 : index
      %2211 = vector.load %arg5[%c87, %2210, %c0_494] : memref<128x16x128xf32, #tpu.memory_space<vmem>>, vector<1x8x128xf32>
      %2212 = vector.shape_cast %2211 : vector<1x8x128xf32> to vector<8x128xf32>
      %2213 = vector.shape_cast %2209 : vector<8x128xf32> to vector<1x8x128xf32>
      tpu.vector_store %arg5[%c87, %2210, %c0_494], %2213 {strides = array<i32>} : memref<128x16x128xf32, #tpu.memory_space<vmem>>, vector<1x8x128xf32>,
      %2214 = vector.broadcast %17 : f32 to vector<8x128xf32>
      %2215 = arith.mulf %2099, %2214 : vector<8x128xf32>
      %2216 = vector.broadcast %18 : f32 to vector<8x128xf32>
      %2217 = arith.mulf %2101, %2216 : vector<8x128xf32>
      %2218 = arith.addf %2215, %2217 : vector<8x128xf32>
      %cst_495 = arith.constant 0.000000e+00 : f32
      %2219 = vector.broadcast %cst_495 : f32 to vector<8x128xf32>
      %2220 = arith.cmpf oge, %2218, %2219 : vector<8x128xf32>
      %2221 = vector.broadcast %0 : f32 to vector<8x128xf32>
      %2222 = arith.mulf %2221, %2218 : vector<8x128xf32>
      %2223 = arith.select %2220, %2218, %2222 : vector<8x128xi1>, vector<8x128xf32>
      %c88 = arith.constant 88 : index
      %2224 = arith.index_cast %37 : i32 to index
      %c0_496 = arith.constant 0 : index
      %2225 = vector.load %arg5[%c88, %2224, %c0_496] : memref<128x16x128xf32, #tpu.memory_space<vmem>>, vector<1x8x128xf32>
      %2226 = vector.shape_cast %2225 : vector<1x8x128xf32> to vector<8x128xf32>
      %2227 = vector.shape_cast %2223 : vector<8x128xf32> to vector<1x8x128xf32>
      tpu.vector_store %arg5[%c88, %2224, %c0_496], %2227 {strides = array<i32>} : memref<128x16x128xf32, #tpu.memory_space<vmem>>, vector<1x8x128xf32>,
      %2228 = vector.broadcast %19 : f32 to vector<8x128xf32>
      %2229 = arith.mulf %2099, %2228 : vector<8x128xf32>
      %2230 = vector.broadcast %20 : f32 to vector<8x128xf32>
      %2231 = arith.mulf %2101, %2230 : vector<8x128xf32>
      %2232 = arith.addf %2229, %2231 : vector<8x128xf32>
      %cst_497 = arith.constant 0.000000e+00 : f32
      %2233 = vector.broadcast %cst_497 : f32 to vector<8x128xf32>
      %2234 = arith.cmpf oge, %2232, %2233 : vector<8x128xf32>
      %2235 = vector.broadcast %0 : f32 to vector<8x128xf32>
      %2236 = arith.mulf %2235, %2232 : vector<8x128xf32>
      %2237 = arith.select %2234, %2232, %2236 : vector<8x128xi1>, vector<8x128xf32>
      %c89 = arith.constant 89 : index
      %2238 = arith.index_cast %37 : i32 to index
      %c0_498 = arith.constant 0 : index
      %2239 = vector.load %arg5[%c89, %2238, %c0_498] : memref<128x16x128xf32, #tpu.memory_space<vmem>>, vector<1x8x128xf32>
      %2240 = vector.shape_cast %2239 : vector<1x8x128xf32> to vector<8x128xf32>
      %2241 = vector.shape_cast %2237 : vector<8x128xf32> to vector<1x8x128xf32>
      tpu.vector_store %arg5[%c89, %2238, %c0_498], %2241 {strides = array<i32>} : memref<128x16x128xf32, #tpu.memory_space<vmem>>, vector<1x8x128xf32>,
      %2242 = vector.broadcast %21 : f32 to vector<8x128xf32>
      %2243 = arith.mulf %2099, %2242 : vector<8x128xf32>
      %2244 = vector.broadcast %22 : f32 to vector<8x128xf32>
      %2245 = arith.mulf %2101, %2244 : vector<8x128xf32>
      %2246 = arith.addf %2243, %2245 : vector<8x128xf32>
      %cst_499 = arith.constant 0.000000e+00 : f32
      %2247 = vector.broadcast %cst_499 : f32 to vector<8x128xf32>
      %2248 = arith.cmpf oge, %2246, %2247 : vector<8x128xf32>
      %2249 = vector.broadcast %0 : f32 to vector<8x128xf32>
      %2250 = arith.mulf %2249, %2246 : vector<8x128xf32>
      %2251 = arith.select %2248, %2246, %2250 : vector<8x128xi1>, vector<8x128xf32>
      %c90 = arith.constant 90 : index
      %2252 = arith.index_cast %37 : i32 to index
      %c0_500 = arith.constant 0 : index
      %2253 = vector.load %arg5[%c90, %2252, %c0_500] : memref<128x16x128xf32, #tpu.memory_space<vmem>>, vector<1x8x128xf32>
      %2254 = vector.shape_cast %2253 : vector<1x8x128xf32> to vector<8x128xf32>
      %2255 = vector.shape_cast %2251 : vector<8x128xf32> to vector<1x8x128xf32>
      tpu.vector_store %arg5[%c90, %2252, %c0_500], %2255 {strides = array<i32>} : memref<128x16x128xf32, #tpu.memory_space<vmem>>, vector<1x8x128xf32>,
      %2256 = vector.broadcast %23 : f32 to vector<8x128xf32>
      %2257 = arith.mulf %2099, %2256 : vector<8x128xf32>
      %2258 = vector.broadcast %24 : f32 to vector<8x128xf32>
      %2259 = arith.mulf %2101, %2258 : vector<8x128xf32>
      %2260 = arith.addf %2257, %2259 : vector<8x128xf32>
      %cst_501 = arith.constant 0.000000e+00 : f32
      %2261 = vector.broadcast %cst_501 : f32 to vector<8x128xf32>
      %2262 = arith.cmpf oge, %2260, %2261 : vector<8x128xf32>
      %2263 = vector.broadcast %0 : f32 to vector<8x128xf32>
      %2264 = arith.mulf %2263, %2260 : vector<8x128xf32>
      %2265 = arith.select %2262, %2260, %2264 : vector<8x128xi1>, vector<8x128xf32>
      %c91 = arith.constant 91 : index
      %2266 = arith.index_cast %37 : i32 to index
      %c0_502 = arith.constant 0 : index
      %2267 = vector.load %arg5[%c91, %2266, %c0_502] : memref<128x16x128xf32, #tpu.memory_space<vmem>>, vector<1x8x128xf32>
      %2268 = vector.shape_cast %2267 : vector<1x8x128xf32> to vector<8x128xf32>
      %2269 = vector.shape_cast %2265 : vector<8x128xf32> to vector<1x8x128xf32>
      tpu.vector_store %arg5[%c91, %2266, %c0_502], %2269 {strides = array<i32>} : memref<128x16x128xf32, #tpu.memory_space<vmem>>, vector<1x8x128xf32>,
      %2270 = vector.broadcast %25 : f32 to vector<8x128xf32>
      %2271 = arith.mulf %2099, %2270 : vector<8x128xf32>
      %2272 = vector.broadcast %26 : f32 to vector<8x128xf32>
      %2273 = arith.mulf %2101, %2272 : vector<8x128xf32>
      %2274 = arith.addf %2271, %2273 : vector<8x128xf32>
      %cst_503 = arith.constant 0.000000e+00 : f32
      %2275 = vector.broadcast %cst_503 : f32 to vector<8x128xf32>
      %2276 = arith.cmpf oge, %2274, %2275 : vector<8x128xf32>
      %2277 = vector.broadcast %0 : f32 to vector<8x128xf32>
      %2278 = arith.mulf %2277, %2274 : vector<8x128xf32>
      %2279 = arith.select %2276, %2274, %2278 : vector<8x128xi1>, vector<8x128xf32>
      %c92 = arith.constant 92 : index
      %2280 = arith.index_cast %37 : i32 to index
      %c0_504 = arith.constant 0 : index
      %2281 = vector.load %arg5[%c92, %2280, %c0_504] : memref<128x16x128xf32, #tpu.memory_space<vmem>>, vector<1x8x128xf32>
      %2282 = vector.shape_cast %2281 : vector<1x8x128xf32> to vector<8x128xf32>
      %2283 = vector.shape_cast %2279 : vector<8x128xf32> to vector<1x8x128xf32>
      tpu.vector_store %arg5[%c92, %2280, %c0_504], %2283 {strides = array<i32>} : memref<128x16x128xf32, #tpu.memory_space<vmem>>, vector<1x8x128xf32>,
      %2284 = vector.broadcast %27 : f32 to vector<8x128xf32>
      %2285 = arith.mulf %2099, %2284 : vector<8x128xf32>
      %2286 = vector.broadcast %28 : f32 to vector<8x128xf32>
      %2287 = arith.mulf %2101, %2286 : vector<8x128xf32>
      %2288 = arith.addf %2285, %2287 : vector<8x128xf32>
      %cst_505 = arith.constant 0.000000e+00 : f32
      %2289 = vector.broadcast %cst_505 : f32 to vector<8x128xf32>
      %2290 = arith.cmpf oge, %2288, %2289 : vector<8x128xf32>
      %2291 = vector.broadcast %0 : f32 to vector<8x128xf32>
      %2292 = arith.mulf %2291, %2288 : vector<8x128xf32>
      %2293 = arith.select %2290, %2288, %2292 : vector<8x128xi1>, vector<8x128xf32>
      %c93 = arith.constant 93 : index
      %2294 = arith.index_cast %37 : i32 to index
      %c0_506 = arith.constant 0 : index
      %2295 = vector.load %arg5[%c93, %2294, %c0_506] : memref<128x16x128xf32, #tpu.memory_space<vmem>>, vector<1x8x128xf32>
      %2296 = vector.shape_cast %2295 : vector<1x8x128xf32> to vector<8x128xf32>
      %2297 = vector.shape_cast %2293 : vector<8x128xf32> to vector<1x8x128xf32>
      tpu.vector_store %arg5[%c93, %2294, %c0_506], %2297 {strides = array<i32>} : memref<128x16x128xf32, #tpu.memory_space<vmem>>, vector<1x8x128xf32>,
      %2298 = vector.broadcast %29 : f32 to vector<8x128xf32>
      %2299 = arith.mulf %2099, %2298 : vector<8x128xf32>
      %2300 = vector.broadcast %30 : f32 to vector<8x128xf32>
      %2301 = arith.mulf %2101, %2300 : vector<8x128xf32>
      %2302 = arith.addf %2299, %2301 : vector<8x128xf32>
      %cst_507 = arith.constant 0.000000e+00 : f32
      %2303 = vector.broadcast %cst_507 : f32 to vector<8x128xf32>
      %2304 = arith.cmpf oge, %2302, %2303 : vector<8x128xf32>
      %2305 = vector.broadcast %0 : f32 to vector<8x128xf32>
      %2306 = arith.mulf %2305, %2302 : vector<8x128xf32>
      %2307 = arith.select %2304, %2302, %2306 : vector<8x128xi1>, vector<8x128xf32>
      %c94 = arith.constant 94 : index
      %2308 = arith.index_cast %37 : i32 to index
      %c0_508 = arith.constant 0 : index
      %2309 = vector.load %arg5[%c94, %2308, %c0_508] : memref<128x16x128xf32, #tpu.memory_space<vmem>>, vector<1x8x128xf32>
      %2310 = vector.shape_cast %2309 : vector<1x8x128xf32> to vector<8x128xf32>
      %2311 = vector.shape_cast %2307 : vector<8x128xf32> to vector<1x8x128xf32>
      tpu.vector_store %arg5[%c94, %2308, %c0_508], %2311 {strides = array<i32>} : memref<128x16x128xf32, #tpu.memory_space<vmem>>, vector<1x8x128xf32>,
      %2312 = vector.broadcast %31 : f32 to vector<8x128xf32>
      %2313 = arith.mulf %2099, %2312 : vector<8x128xf32>
      %2314 = vector.broadcast %32 : f32 to vector<8x128xf32>
      %2315 = arith.mulf %2101, %2314 : vector<8x128xf32>
      %2316 = arith.addf %2313, %2315 : vector<8x128xf32>
      %cst_509 = arith.constant 0.000000e+00 : f32
      %2317 = vector.broadcast %cst_509 : f32 to vector<8x128xf32>
      %2318 = arith.cmpf oge, %2316, %2317 : vector<8x128xf32>
      %2319 = vector.broadcast %0 : f32 to vector<8x128xf32>
      %2320 = arith.mulf %2319, %2316 : vector<8x128xf32>
      %2321 = arith.select %2318, %2316, %2320 : vector<8x128xi1>, vector<8x128xf32>
      %c95 = arith.constant 95 : index
      %2322 = arith.index_cast %37 : i32 to index
      %c0_510 = arith.constant 0 : index
      %2323 = vector.load %arg5[%c95, %2322, %c0_510] : memref<128x16x128xf32, #tpu.memory_space<vmem>>, vector<1x8x128xf32>
      %2324 = vector.shape_cast %2323 : vector<1x8x128xf32> to vector<8x128xf32>
      %2325 = vector.shape_cast %2321 : vector<8x128xf32> to vector<1x8x128xf32>
      tpu.vector_store %arg5[%c95, %2322, %c0_510], %2325 {strides = array<i32>} : memref<128x16x128xf32, #tpu.memory_space<vmem>>, vector<1x8x128xf32>,
      %cst_511 = arith.constant 0.000000e+00 : f32
      %2326 = vector.broadcast %cst_511 : f32 to vector<8x128xf32>
      %2327 = arith.cmpf oge, %76, %2326 : vector<8x128xf32>
      %2328 = vector.broadcast %0 : f32 to vector<8x128xf32>
      %2329 = arith.mulf %2328, %76 : vector<8x128xf32>
      %2330 = arith.select %2327, %76, %2329 : vector<8x128xi1>, vector<8x128xf32>
      %cst_512 = arith.constant 0.000000e+00 : f32
      %2331 = vector.broadcast %cst_512 : f32 to vector<8x128xf32>
      %2332 = arith.cmpf oge, %79, %2331 : vector<8x128xf32>
      %2333 = vector.broadcast %0 : f32 to vector<8x128xf32>
      %2334 = arith.mulf %2333, %79 : vector<8x128xf32>
      %2335 = arith.select %2332, %79, %2334 : vector<8x128xi1>, vector<8x128xf32>
      %c48_513 = arith.constant 48 : index
      %2336 = arith.index_cast %37 : i32 to index
      %c0_514 = arith.constant 0 : index
      %2337 = vector.load %arg4[%c48_513, %2336, %c0_514] : memref<64x16x128xf32, #tpu.memory_space<vmem>>, vector<1x8x128xf32>
      %2338 = vector.shape_cast %2337 : vector<1x8x128xf32> to vector<8x128xf32>
      %2339 = arith.mulf %2338, %144 : vector<8x128xf32>
      %2340 = arith.mulf %2338, %149 : vector<8x128xf32>
      %c49_515 = arith.constant 49 : index
      %2341 = arith.index_cast %37 : i32 to index
      %c0_516 = arith.constant 0 : index
      %2342 = vector.load %arg4[%c49_515, %2341, %c0_516] : memref<64x16x128xf32, #tpu.memory_space<vmem>>, vector<1x8x128xf32>
      %2343 = vector.shape_cast %2342 : vector<1x8x128xf32> to vector<8x128xf32>
      %2344 = arith.mulf %2343, %208 : vector<8x128xf32>
      %2345 = arith.addf %2339, %2344 : vector<8x128xf32>
      %2346 = arith.mulf %2343, %213 : vector<8x128xf32>
      %2347 = arith.addf %2340, %2346 : vector<8x128xf32>
      %c50_517 = arith.constant 50 : index
      %2348 = arith.index_cast %37 : i32 to index
      %c0_518 = arith.constant 0 : index
      %2349 = vector.load %arg4[%c50_517, %2348, %c0_518] : memref<64x16x128xf32, #tpu.memory_space<vmem>>, vector<1x8x128xf32>
      %2350 = vector.shape_cast %2349 : vector<1x8x128xf32> to vector<8x128xf32>
      %2351 = arith.mulf %2350, %272 : vector<8x128xf32>
      %2352 = arith.addf %2345, %2351 : vector<8x128xf32>
      %2353 = arith.mulf %2350, %277 : vector<8x128xf32>
      %2354 = arith.addf %2347, %2353 : vector<8x128xf32>
      %c51_519 = arith.constant 51 : index
      %2355 = arith.index_cast %37 : i32 to index
      %c0_520 = arith.constant 0 : index
      %2356 = vector.load %arg4[%c51_519, %2355, %c0_520] : memref<64x16x128xf32, #tpu.memory_space<vmem>>, vector<1x8x128xf32>
      %2357 = vector.shape_cast %2356 : vector<1x8x128xf32> to vector<8x128xf32>
      %2358 = arith.mulf %2357, %336 : vector<8x128xf32>
      %2359 = arith.addf %2352, %2358 : vector<8x128xf32>
      %2360 = arith.mulf %2357, %341 : vector<8x128xf32>
      %2361 = arith.addf %2354, %2360 : vector<8x128xf32>
      %c52_521 = arith.constant 52 : index
      %2362 = arith.index_cast %37 : i32 to index
      %c0_522 = arith.constant 0 : index
      %2363 = vector.load %arg4[%c52_521, %2362, %c0_522] : memref<64x16x128xf32, #tpu.memory_space<vmem>>, vector<1x8x128xf32>
      %2364 = vector.shape_cast %2363 : vector<1x8x128xf32> to vector<8x128xf32>
      %2365 = arith.mulf %2364, %400 : vector<8x128xf32>
      %2366 = arith.addf %2359, %2365 : vector<8x128xf32>
      %2367 = arith.mulf %2364, %405 : vector<8x128xf32>
      %2368 = arith.addf %2361, %2367 : vector<8x128xf32>
      %c53_523 = arith.constant 53 : index
      %2369 = arith.index_cast %37 : i32 to index
      %c0_524 = arith.constant 0 : index
      %2370 = vector.load %arg4[%c53_523, %2369, %c0_524] : memref<64x16x128xf32, #tpu.memory_space<vmem>>, vector<1x8x128xf32>
      %2371 = vector.shape_cast %2370 : vector<1x8x128xf32> to vector<8x128xf32>
      %2372 = arith.mulf %2371, %464 : vector<8x128xf32>
      %2373 = arith.addf %2366, %2372 : vector<8x128xf32>
      %2374 = arith.mulf %2371, %469 : vector<8x128xf32>
      %2375 = arith.addf %2368, %2374 : vector<8x128xf32>
      %c54_525 = arith.constant 54 : index
      %2376 = arith.index_cast %37 : i32 to index
      %c0_526 = arith.constant 0 : index
      %2377 = vector.load %arg4[%c54_525, %2376, %c0_526] : memref<64x16x128xf32, #tpu.memory_space<vmem>>, vector<1x8x128xf32>
      %2378 = vector.shape_cast %2377 : vector<1x8x128xf32> to vector<8x128xf32>
      %2379 = arith.mulf %2378, %2330 : vector<8x128xf32>
      %2380 = arith.addf %2373, %2379 : vector<8x128xf32>
      %2381 = arith.mulf %2378, %2335 : vector<8x128xf32>
      %2382 = arith.addf %2375, %2381 : vector<8x128xf32>
      %c55_527 = arith.constant 55 : index
      %2383 = arith.index_cast %37 : i32 to index
      %c0_528 = arith.constant 0 : index
      %2384 = vector.load %arg4[%c55_527, %2383, %c0_528] : memref<64x16x128xf32, #tpu.memory_space<vmem>>, vector<1x8x128xf32>
      %2385 = vector.shape_cast %2384 : vector<1x8x128xf32> to vector<8x128xf32>
      %2386 = arith.mulf %2385, %592 : vector<8x128xf32>
      %2387 = arith.addf %2380, %2386 : vector<8x128xf32>
      %2388 = arith.mulf %2385, %597 : vector<8x128xf32>
      %2389 = arith.addf %2382, %2388 : vector<8x128xf32>
      %2390 = vector.broadcast %1 : f32 to vector<8x128xf32>
      %2391 = arith.mulf %2387, %2390 : vector<8x128xf32>
      %2392 = vector.broadcast %2 : f32 to vector<8x128xf32>
      %2393 = arith.mulf %2389, %2392 : vector<8x128xf32>
      %2394 = arith.addf %2391, %2393 : vector<8x128xf32>
      %cst_529 = arith.constant 0.000000e+00 : f32
      %2395 = vector.broadcast %cst_529 : f32 to vector<8x128xf32>
      %2396 = arith.cmpf oge, %2394, %2395 : vector<8x128xf32>
      %2397 = vector.broadcast %0 : f32 to vector<8x128xf32>
      %2398 = arith.mulf %2397, %2394 : vector<8x128xf32>
      %2399 = arith.select %2396, %2394, %2398 : vector<8x128xi1>, vector<8x128xf32>
      %c96 = arith.constant 96 : index
      %2400 = arith.index_cast %37 : i32 to index
      %c0_530 = arith.constant 0 : index
      %2401 = vector.load %arg5[%c96, %2400, %c0_530] : memref<128x16x128xf32, #tpu.memory_space<vmem>>, vector<1x8x128xf32>
      %2402 = vector.shape_cast %2401 : vector<1x8x128xf32> to vector<8x128xf32>
      %2403 = vector.shape_cast %2399 : vector<8x128xf32> to vector<1x8x128xf32>
      tpu.vector_store %arg5[%c96, %2400, %c0_530], %2403 {strides = array<i32>} : memref<128x16x128xf32, #tpu.memory_space<vmem>>, vector<1x8x128xf32>,
      %2404 = vector.broadcast %3 : f32 to vector<8x128xf32>
      %2405 = arith.mulf %2387, %2404 : vector<8x128xf32>
      %2406 = vector.broadcast %4 : f32 to vector<8x128xf32>
      %2407 = arith.mulf %2389, %2406 : vector<8x128xf32>
      %2408 = arith.addf %2405, %2407 : vector<8x128xf32>
      %cst_531 = arith.constant 0.000000e+00 : f32
      %2409 = vector.broadcast %cst_531 : f32 to vector<8x128xf32>
      %2410 = arith.cmpf oge, %2408, %2409 : vector<8x128xf32>
      %2411 = vector.broadcast %0 : f32 to vector<8x128xf32>
      %2412 = arith.mulf %2411, %2408 : vector<8x128xf32>
      %2413 = arith.select %2410, %2408, %2412 : vector<8x128xi1>, vector<8x128xf32>
      %c97 = arith.constant 97 : index
      %2414 = arith.index_cast %37 : i32 to index
      %c0_532 = arith.constant 0 : index
      %2415 = vector.load %arg5[%c97, %2414, %c0_532] : memref<128x16x128xf32, #tpu.memory_space<vmem>>, vector<1x8x128xf32>
      %2416 = vector.shape_cast %2415 : vector<1x8x128xf32> to vector<8x128xf32>
      %2417 = vector.shape_cast %2413 : vector<8x128xf32> to vector<1x8x128xf32>
      tpu.vector_store %arg5[%c97, %2414, %c0_532], %2417 {strides = array<i32>} : memref<128x16x128xf32, #tpu.memory_space<vmem>>, vector<1x8x128xf32>,
      %2418 = vector.broadcast %5 : f32 to vector<8x128xf32>
      %2419 = arith.mulf %2387, %2418 : vector<8x128xf32>
      %2420 = vector.broadcast %6 : f32 to vector<8x128xf32>
      %2421 = arith.mulf %2389, %2420 : vector<8x128xf32>
      %2422 = arith.addf %2419, %2421 : vector<8x128xf32>
      %cst_533 = arith.constant 0.000000e+00 : f32
      %2423 = vector.broadcast %cst_533 : f32 to vector<8x128xf32>
      %2424 = arith.cmpf oge, %2422, %2423 : vector<8x128xf32>
      %2425 = vector.broadcast %0 : f32 to vector<8x128xf32>
      %2426 = arith.mulf %2425, %2422 : vector<8x128xf32>
      %2427 = arith.select %2424, %2422, %2426 : vector<8x128xi1>, vector<8x128xf32>
      %c98 = arith.constant 98 : index
      %2428 = arith.index_cast %37 : i32 to index
      %c0_534 = arith.constant 0 : index
      %2429 = vector.load %arg5[%c98, %2428, %c0_534] : memref<128x16x128xf32, #tpu.memory_space<vmem>>, vector<1x8x128xf32>
      %2430 = vector.shape_cast %2429 : vector<1x8x128xf32> to vector<8x128xf32>
      %2431 = vector.shape_cast %2427 : vector<8x128xf32> to vector<1x8x128xf32>
      tpu.vector_store %arg5[%c98, %2428, %c0_534], %2431 {strides = array<i32>} : memref<128x16x128xf32, #tpu.memory_space<vmem>>, vector<1x8x128xf32>,
      %2432 = vector.broadcast %7 : f32 to vector<8x128xf32>
      %2433 = arith.mulf %2387, %2432 : vector<8x128xf32>
      %2434 = vector.broadcast %8 : f32 to vector<8x128xf32>
      %2435 = arith.mulf %2389, %2434 : vector<8x128xf32>
      %2436 = arith.addf %2433, %2435 : vector<8x128xf32>
      %cst_535 = arith.constant 0.000000e+00 : f32
      %2437 = vector.broadcast %cst_535 : f32 to vector<8x128xf32>
      %2438 = arith.cmpf oge, %2436, %2437 : vector<8x128xf32>
      %2439 = vector.broadcast %0 : f32 to vector<8x128xf32>
      %2440 = arith.mulf %2439, %2436 : vector<8x128xf32>
      %2441 = arith.select %2438, %2436, %2440 : vector<8x128xi1>, vector<8x128xf32>
      %c99 = arith.constant 99 : index
      %2442 = arith.index_cast %37 : i32 to index
      %c0_536 = arith.constant 0 : index
      %2443 = vector.load %arg5[%c99, %2442, %c0_536] : memref<128x16x128xf32, #tpu.memory_space<vmem>>, vector<1x8x128xf32>
      %2444 = vector.shape_cast %2443 : vector<1x8x128xf32> to vector<8x128xf32>
      %2445 = vector.shape_cast %2441 : vector<8x128xf32> to vector<1x8x128xf32>
      tpu.vector_store %arg5[%c99, %2442, %c0_536], %2445 {strides = array<i32>} : memref<128x16x128xf32, #tpu.memory_space<vmem>>, vector<1x8x128xf32>,
      %2446 = vector.broadcast %9 : f32 to vector<8x128xf32>
      %2447 = arith.mulf %2387, %2446 : vector<8x128xf32>
      %2448 = vector.broadcast %10 : f32 to vector<8x128xf32>
      %2449 = arith.mulf %2389, %2448 : vector<8x128xf32>
      %2450 = arith.addf %2447, %2449 : vector<8x128xf32>
      %cst_537 = arith.constant 0.000000e+00 : f32
      %2451 = vector.broadcast %cst_537 : f32 to vector<8x128xf32>
      %2452 = arith.cmpf oge, %2450, %2451 : vector<8x128xf32>
      %2453 = vector.broadcast %0 : f32 to vector<8x128xf32>
      %2454 = arith.mulf %2453, %2450 : vector<8x128xf32>
      %2455 = arith.select %2452, %2450, %2454 : vector<8x128xi1>, vector<8x128xf32>
      %c100 = arith.constant 100 : index
      %2456 = arith.index_cast %37 : i32 to index
      %c0_538 = arith.constant 0 : index
      %2457 = vector.load %arg5[%c100, %2456, %c0_538] : memref<128x16x128xf32, #tpu.memory_space<vmem>>, vector<1x8x128xf32>
      %2458 = vector.shape_cast %2457 : vector<1x8x128xf32> to vector<8x128xf32>
      %2459 = vector.shape_cast %2455 : vector<8x128xf32> to vector<1x8x128xf32>
      tpu.vector_store %arg5[%c100, %2456, %c0_538], %2459 {strides = array<i32>} : memref<128x16x128xf32, #tpu.memory_space<vmem>>, vector<1x8x128xf32>,
      %2460 = vector.broadcast %11 : f32 to vector<8x128xf32>
      %2461 = arith.mulf %2387, %2460 : vector<8x128xf32>
      %2462 = vector.broadcast %12 : f32 to vector<8x128xf32>
      %2463 = arith.mulf %2389, %2462 : vector<8x128xf32>
      %2464 = arith.addf %2461, %2463 : vector<8x128xf32>
      %cst_539 = arith.constant 0.000000e+00 : f32
      %2465 = vector.broadcast %cst_539 : f32 to vector<8x128xf32>
      %2466 = arith.cmpf oge, %2464, %2465 : vector<8x128xf32>
      %2467 = vector.broadcast %0 : f32 to vector<8x128xf32>
      %2468 = arith.mulf %2467, %2464 : vector<8x128xf32>
      %2469 = arith.select %2466, %2464, %2468 : vector<8x128xi1>, vector<8x128xf32>
      %c101 = arith.constant 101 : index
      %2470 = arith.index_cast %37 : i32 to index
      %c0_540 = arith.constant 0 : index
      %2471 = vector.load %arg5[%c101, %2470, %c0_540] : memref<128x16x128xf32, #tpu.memory_space<vmem>>, vector<1x8x128xf32>
      %2472 = vector.shape_cast %2471 : vector<1x8x128xf32> to vector<8x128xf32>
      %2473 = vector.shape_cast %2469 : vector<8x128xf32> to vector<1x8x128xf32>
      tpu.vector_store %arg5[%c101, %2470, %c0_540], %2473 {strides = array<i32>} : memref<128x16x128xf32, #tpu.memory_space<vmem>>, vector<1x8x128xf32>,
      %2474 = vector.broadcast %13 : f32 to vector<8x128xf32>
      %2475 = arith.mulf %2387, %2474 : vector<8x128xf32>
      %2476 = vector.broadcast %14 : f32 to vector<8x128xf32>
      %2477 = arith.mulf %2389, %2476 : vector<8x128xf32>
      %2478 = arith.addf %2475, %2477 : vector<8x128xf32>
      %cst_541 = arith.constant 0.000000e+00 : f32
      %2479 = vector.broadcast %cst_541 : f32 to vector<8x128xf32>
      %2480 = arith.cmpf oge, %2478, %2479 : vector<8x128xf32>
      %2481 = vector.broadcast %0 : f32 to vector<8x128xf32>
      %2482 = arith.mulf %2481, %2478 : vector<8x128xf32>
      %2483 = arith.select %2480, %2478, %2482 : vector<8x128xi1>, vector<8x128xf32>
      %c102 = arith.constant 102 : index
      %2484 = arith.index_cast %37 : i32 to index
      %c0_542 = arith.constant 0 : index
      %2485 = vector.load %arg5[%c102, %2484, %c0_542] : memref<128x16x128xf32, #tpu.memory_space<vmem>>, vector<1x8x128xf32>
      %2486 = vector.shape_cast %2485 : vector<1x8x128xf32> to vector<8x128xf32>
      %2487 = vector.shape_cast %2483 : vector<8x128xf32> to vector<1x8x128xf32>
      tpu.vector_store %arg5[%c102, %2484, %c0_542], %2487 {strides = array<i32>} : memref<128x16x128xf32, #tpu.memory_space<vmem>>, vector<1x8x128xf32>,
      %2488 = vector.broadcast %15 : f32 to vector<8x128xf32>
      %2489 = arith.mulf %2387, %2488 : vector<8x128xf32>
      %2490 = vector.broadcast %16 : f32 to vector<8x128xf32>
      %2491 = arith.mulf %2389, %2490 : vector<8x128xf32>
      %2492 = arith.addf %2489, %2491 : vector<8x128xf32>
      %cst_543 = arith.constant 0.000000e+00 : f32
      %2493 = vector.broadcast %cst_543 : f32 to vector<8x128xf32>
      %2494 = arith.cmpf oge, %2492, %2493 : vector<8x128xf32>
      %2495 = vector.broadcast %0 : f32 to vector<8x128xf32>
      %2496 = arith.mulf %2495, %2492 : vector<8x128xf32>
      %2497 = arith.select %2494, %2492, %2496 : vector<8x128xi1>, vector<8x128xf32>
      %c103 = arith.constant 103 : index
      %2498 = arith.index_cast %37 : i32 to index
      %c0_544 = arith.constant 0 : index
      %2499 = vector.load %arg5[%c103, %2498, %c0_544] : memref<128x16x128xf32, #tpu.memory_space<vmem>>, vector<1x8x128xf32>
      %2500 = vector.shape_cast %2499 : vector<1x8x128xf32> to vector<8x128xf32>
      %2501 = vector.shape_cast %2497 : vector<8x128xf32> to vector<1x8x128xf32>
      tpu.vector_store %arg5[%c103, %2498, %c0_544], %2501 {strides = array<i32>} : memref<128x16x128xf32, #tpu.memory_space<vmem>>, vector<1x8x128xf32>,
      %2502 = vector.broadcast %17 : f32 to vector<8x128xf32>
      %2503 = arith.mulf %2387, %2502 : vector<8x128xf32>
      %2504 = vector.broadcast %18 : f32 to vector<8x128xf32>
      %2505 = arith.mulf %2389, %2504 : vector<8x128xf32>
      %2506 = arith.addf %2503, %2505 : vector<8x128xf32>
      %cst_545 = arith.constant 0.000000e+00 : f32
      %2507 = vector.broadcast %cst_545 : f32 to vector<8x128xf32>
      %2508 = arith.cmpf oge, %2506, %2507 : vector<8x128xf32>
      %2509 = vector.broadcast %0 : f32 to vector<8x128xf32>
      %2510 = arith.mulf %2509, %2506 : vector<8x128xf32>
      %2511 = arith.select %2508, %2506, %2510 : vector<8x128xi1>, vector<8x128xf32>
      %c104 = arith.constant 104 : index
      %2512 = arith.index_cast %37 : i32 to index
      %c0_546 = arith.constant 0 : index
      %2513 = vector.load %arg5[%c104, %2512, %c0_546] : memref<128x16x128xf32, #tpu.memory_space<vmem>>, vector<1x8x128xf32>
      %2514 = vector.shape_cast %2513 : vector<1x8x128xf32> to vector<8x128xf32>
      %2515 = vector.shape_cast %2511 : vector<8x128xf32> to vector<1x8x128xf32>
      tpu.vector_store %arg5[%c104, %2512, %c0_546], %2515 {strides = array<i32>} : memref<128x16x128xf32, #tpu.memory_space<vmem>>, vector<1x8x128xf32>,
      %2516 = vector.broadcast %19 : f32 to vector<8x128xf32>
      %2517 = arith.mulf %2387, %2516 : vector<8x128xf32>
      %2518 = vector.broadcast %20 : f32 to vector<8x128xf32>
      %2519 = arith.mulf %2389, %2518 : vector<8x128xf32>
      %2520 = arith.addf %2517, %2519 : vector<8x128xf32>
      %cst_547 = arith.constant 0.000000e+00 : f32
      %2521 = vector.broadcast %cst_547 : f32 to vector<8x128xf32>
      %2522 = arith.cmpf oge, %2520, %2521 : vector<8x128xf32>
      %2523 = vector.broadcast %0 : f32 to vector<8x128xf32>
      %2524 = arith.mulf %2523, %2520 : vector<8x128xf32>
      %2525 = arith.select %2522, %2520, %2524 : vector<8x128xi1>, vector<8x128xf32>
      %c105 = arith.constant 105 : index
      %2526 = arith.index_cast %37 : i32 to index
      %c0_548 = arith.constant 0 : index
      %2527 = vector.load %arg5[%c105, %2526, %c0_548] : memref<128x16x128xf32, #tpu.memory_space<vmem>>, vector<1x8x128xf32>
      %2528 = vector.shape_cast %2527 : vector<1x8x128xf32> to vector<8x128xf32>
      %2529 = vector.shape_cast %2525 : vector<8x128xf32> to vector<1x8x128xf32>
      tpu.vector_store %arg5[%c105, %2526, %c0_548], %2529 {strides = array<i32>} : memref<128x16x128xf32, #tpu.memory_space<vmem>>, vector<1x8x128xf32>,
      %2530 = vector.broadcast %21 : f32 to vector<8x128xf32>
      %2531 = arith.mulf %2387, %2530 : vector<8x128xf32>
      %2532 = vector.broadcast %22 : f32 to vector<8x128xf32>
      %2533 = arith.mulf %2389, %2532 : vector<8x128xf32>
      %2534 = arith.addf %2531, %2533 : vector<8x128xf32>
      %cst_549 = arith.constant 0.000000e+00 : f32
      %2535 = vector.broadcast %cst_549 : f32 to vector<8x128xf32>
      %2536 = arith.cmpf oge, %2534, %2535 : vector<8x128xf32>
      %2537 = vector.broadcast %0 : f32 to vector<8x128xf32>
      %2538 = arith.mulf %2537, %2534 : vector<8x128xf32>
      %2539 = arith.select %2536, %2534, %2538 : vector<8x128xi1>, vector<8x128xf32>
      %c106 = arith.constant 106 : index
      %2540 = arith.index_cast %37 : i32 to index
      %c0_550 = arith.constant 0 : index
      %2541 = vector.load %arg5[%c106, %2540, %c0_550] : memref<128x16x128xf32, #tpu.memory_space<vmem>>, vector<1x8x128xf32>
      %2542 = vector.shape_cast %2541 : vector<1x8x128xf32> to vector<8x128xf32>
      %2543 = vector.shape_cast %2539 : vector<8x128xf32> to vector<1x8x128xf32>
      tpu.vector_store %arg5[%c106, %2540, %c0_550], %2543 {strides = array<i32>} : memref<128x16x128xf32, #tpu.memory_space<vmem>>, vector<1x8x128xf32>,
      %2544 = vector.broadcast %23 : f32 to vector<8x128xf32>
      %2545 = arith.mulf %2387, %2544 : vector<8x128xf32>
      %2546 = vector.broadcast %24 : f32 to vector<8x128xf32>
      %2547 = arith.mulf %2389, %2546 : vector<8x128xf32>
      %2548 = arith.addf %2545, %2547 : vector<8x128xf32>
      %cst_551 = arith.constant 0.000000e+00 : f32
      %2549 = vector.broadcast %cst_551 : f32 to vector<8x128xf32>
      %2550 = arith.cmpf oge, %2548, %2549 : vector<8x128xf32>
      %2551 = vector.broadcast %0 : f32 to vector<8x128xf32>
      %2552 = arith.mulf %2551, %2548 : vector<8x128xf32>
      %2553 = arith.select %2550, %2548, %2552 : vector<8x128xi1>, vector<8x128xf32>
      %c107 = arith.constant 107 : index
      %2554 = arith.index_cast %37 : i32 to index
      %c0_552 = arith.constant 0 : index
      %2555 = vector.load %arg5[%c107, %2554, %c0_552] : memref<128x16x128xf32, #tpu.memory_space<vmem>>, vector<1x8x128xf32>
      %2556 = vector.shape_cast %2555 : vector<1x8x128xf32> to vector<8x128xf32>
      %2557 = vector.shape_cast %2553 : vector<8x128xf32> to vector<1x8x128xf32>
      tpu.vector_store %arg5[%c107, %2554, %c0_552], %2557 {strides = array<i32>} : memref<128x16x128xf32, #tpu.memory_space<vmem>>, vector<1x8x128xf32>,
      %2558 = vector.broadcast %25 : f32 to vector<8x128xf32>
      %2559 = arith.mulf %2387, %2558 : vector<8x128xf32>
      %2560 = vector.broadcast %26 : f32 to vector<8x128xf32>
      %2561 = arith.mulf %2389, %2560 : vector<8x128xf32>
      %2562 = arith.addf %2559, %2561 : vector<8x128xf32>
      %cst_553 = arith.constant 0.000000e+00 : f32
      %2563 = vector.broadcast %cst_553 : f32 to vector<8x128xf32>
      %2564 = arith.cmpf oge, %2562, %2563 : vector<8x128xf32>
      %2565 = vector.broadcast %0 : f32 to vector<8x128xf32>
      %2566 = arith.mulf %2565, %2562 : vector<8x128xf32>
      %2567 = arith.select %2564, %2562, %2566 : vector<8x128xi1>, vector<8x128xf32>
      %c108 = arith.constant 108 : index
      %2568 = arith.index_cast %37 : i32 to index
      %c0_554 = arith.constant 0 : index
      %2569 = vector.load %arg5[%c108, %2568, %c0_554] : memref<128x16x128xf32, #tpu.memory_space<vmem>>, vector<1x8x128xf32>
      %2570 = vector.shape_cast %2569 : vector<1x8x128xf32> to vector<8x128xf32>
      %2571 = vector.shape_cast %2567 : vector<8x128xf32> to vector<1x8x128xf32>
      tpu.vector_store %arg5[%c108, %2568, %c0_554], %2571 {strides = array<i32>} : memref<128x16x128xf32, #tpu.memory_space<vmem>>, vector<1x8x128xf32>,
      %2572 = vector.broadcast %27 : f32 to vector<8x128xf32>
      %2573 = arith.mulf %2387, %2572 : vector<8x128xf32>
      %2574 = vector.broadcast %28 : f32 to vector<8x128xf32>
      %2575 = arith.mulf %2389, %2574 : vector<8x128xf32>
      %2576 = arith.addf %2573, %2575 : vector<8x128xf32>
      %cst_555 = arith.constant 0.000000e+00 : f32
      %2577 = vector.broadcast %cst_555 : f32 to vector<8x128xf32>
      %2578 = arith.cmpf oge, %2576, %2577 : vector<8x128xf32>
      %2579 = vector.broadcast %0 : f32 to vector<8x128xf32>
      %2580 = arith.mulf %2579, %2576 : vector<8x128xf32>
      %2581 = arith.select %2578, %2576, %2580 : vector<8x128xi1>, vector<8x128xf32>
      %c109 = arith.constant 109 : index
      %2582 = arith.index_cast %37 : i32 to index
      %c0_556 = arith.constant 0 : index
      %2583 = vector.load %arg5[%c109, %2582, %c0_556] : memref<128x16x128xf32, #tpu.memory_space<vmem>>, vector<1x8x128xf32>
      %2584 = vector.shape_cast %2583 : vector<1x8x128xf32> to vector<8x128xf32>
      %2585 = vector.shape_cast %2581 : vector<8x128xf32> to vector<1x8x128xf32>
      tpu.vector_store %arg5[%c109, %2582, %c0_556], %2585 {strides = array<i32>} : memref<128x16x128xf32, #tpu.memory_space<vmem>>, vector<1x8x128xf32>,
      %2586 = vector.broadcast %29 : f32 to vector<8x128xf32>
      %2587 = arith.mulf %2387, %2586 : vector<8x128xf32>
      %2588 = vector.broadcast %30 : f32 to vector<8x128xf32>
      %2589 = arith.mulf %2389, %2588 : vector<8x128xf32>
      %2590 = arith.addf %2587, %2589 : vector<8x128xf32>
      %cst_557 = arith.constant 0.000000e+00 : f32
      %2591 = vector.broadcast %cst_557 : f32 to vector<8x128xf32>
      %2592 = arith.cmpf oge, %2590, %2591 : vector<8x128xf32>
      %2593 = vector.broadcast %0 : f32 to vector<8x128xf32>
      %2594 = arith.mulf %2593, %2590 : vector<8x128xf32>
      %2595 = arith.select %2592, %2590, %2594 : vector<8x128xi1>, vector<8x128xf32>
      %c110 = arith.constant 110 : index
      %2596 = arith.index_cast %37 : i32 to index
      %c0_558 = arith.constant 0 : index
      %2597 = vector.load %arg5[%c110, %2596, %c0_558] : memref<128x16x128xf32, #tpu.memory_space<vmem>>, vector<1x8x128xf32>
      %2598 = vector.shape_cast %2597 : vector<1x8x128xf32> to vector<8x128xf32>
      %2599 = vector.shape_cast %2595 : vector<8x128xf32> to vector<1x8x128xf32>
      tpu.vector_store %arg5[%c110, %2596, %c0_558], %2599 {strides = array<i32>} : memref<128x16x128xf32, #tpu.memory_space<vmem>>, vector<1x8x128xf32>,
      %2600 = vector.broadcast %31 : f32 to vector<8x128xf32>
      %2601 = arith.mulf %2387, %2600 : vector<8x128xf32>
      %2602 = vector.broadcast %32 : f32 to vector<8x128xf32>
      %2603 = arith.mulf %2389, %2602 : vector<8x128xf32>
      %2604 = arith.addf %2601, %2603 : vector<8x128xf32>
      %cst_559 = arith.constant 0.000000e+00 : f32
      %2605 = vector.broadcast %cst_559 : f32 to vector<8x128xf32>
      %2606 = arith.cmpf oge, %2604, %2605 : vector<8x128xf32>
      %2607 = vector.broadcast %0 : f32 to vector<8x128xf32>
      %2608 = arith.mulf %2607, %2604 : vector<8x128xf32>
      %2609 = arith.select %2606, %2604, %2608 : vector<8x128xi1>, vector<8x128xf32>
      %c111 = arith.constant 111 : index
      %2610 = arith.index_cast %37 : i32 to index
      %c0_560 = arith.constant 0 : index
      %2611 = vector.load %arg5[%c111, %2610, %c0_560] : memref<128x16x128xf32, #tpu.memory_space<vmem>>, vector<1x8x128xf32>
      %2612 = vector.shape_cast %2611 : vector<1x8x128xf32> to vector<8x128xf32>
      %2613 = vector.shape_cast %2609 : vector<8x128xf32> to vector<1x8x128xf32>
      tpu.vector_store %arg5[%c111, %2610, %c0_560], %2613 {strides = array<i32>} : memref<128x16x128xf32, #tpu.memory_space<vmem>>, vector<1x8x128xf32>,
      %cst_561 = arith.constant 0.000000e+00 : f32
      %2614 = vector.broadcast %cst_561 : f32 to vector<8x128xf32>
      %2615 = arith.cmpf oge, %82, %2614 : vector<8x128xf32>
      %2616 = vector.broadcast %0 : f32 to vector<8x128xf32>
      %2617 = arith.mulf %2616, %82 : vector<8x128xf32>
      %2618 = arith.select %2615, %82, %2617 : vector<8x128xi1>, vector<8x128xf32>
      %cst_562 = arith.constant 0.000000e+00 : f32
      %2619 = vector.broadcast %cst_562 : f32 to vector<8x128xf32>
      %2620 = arith.cmpf oge, %85, %2619 : vector<8x128xf32>
      %2621 = vector.broadcast %0 : f32 to vector<8x128xf32>
      %2622 = arith.mulf %2621, %85 : vector<8x128xf32>
      %2623 = arith.select %2620, %85, %2622 : vector<8x128xi1>, vector<8x128xf32>
      %c56_563 = arith.constant 56 : index
      %2624 = arith.index_cast %37 : i32 to index
      %c0_564 = arith.constant 0 : index
      %2625 = vector.load %arg4[%c56_563, %2624, %c0_564] : memref<64x16x128xf32, #tpu.memory_space<vmem>>, vector<1x8x128xf32>
      %2626 = vector.shape_cast %2625 : vector<1x8x128xf32> to vector<8x128xf32>
      %2627 = arith.mulf %2626, %144 : vector<8x128xf32>
      %2628 = arith.mulf %2626, %149 : vector<8x128xf32>
      %c57_565 = arith.constant 57 : index
      %2629 = arith.index_cast %37 : i32 to index
      %c0_566 = arith.constant 0 : index
      %2630 = vector.load %arg4[%c57_565, %2629, %c0_566] : memref<64x16x128xf32, #tpu.memory_space<vmem>>, vector<1x8x128xf32>
      %2631 = vector.shape_cast %2630 : vector<1x8x128xf32> to vector<8x128xf32>
      %2632 = arith.mulf %2631, %208 : vector<8x128xf32>
      %2633 = arith.addf %2627, %2632 : vector<8x128xf32>
      %2634 = arith.mulf %2631, %213 : vector<8x128xf32>
      %2635 = arith.addf %2628, %2634 : vector<8x128xf32>
      %c58_567 = arith.constant 58 : index
      %2636 = arith.index_cast %37 : i32 to index
      %c0_568 = arith.constant 0 : index
      %2637 = vector.load %arg4[%c58_567, %2636, %c0_568] : memref<64x16x128xf32, #tpu.memory_space<vmem>>, vector<1x8x128xf32>
      %2638 = vector.shape_cast %2637 : vector<1x8x128xf32> to vector<8x128xf32>
      %2639 = arith.mulf %2638, %272 : vector<8x128xf32>
      %2640 = arith.addf %2633, %2639 : vector<8x128xf32>
      %2641 = arith.mulf %2638, %277 : vector<8x128xf32>
      %2642 = arith.addf %2635, %2641 : vector<8x128xf32>
      %c59_569 = arith.constant 59 : index
      %2643 = arith.index_cast %37 : i32 to index
      %c0_570 = arith.constant 0 : index
      %2644 = vector.load %arg4[%c59_569, %2643, %c0_570] : memref<64x16x128xf32, #tpu.memory_space<vmem>>, vector<1x8x128xf32>
      %2645 = vector.shape_cast %2644 : vector<1x8x128xf32> to vector<8x128xf32>
      %2646 = arith.mulf %2645, %336 : vector<8x128xf32>
      %2647 = arith.addf %2640, %2646 : vector<8x128xf32>
      %2648 = arith.mulf %2645, %341 : vector<8x128xf32>
      %2649 = arith.addf %2642, %2648 : vector<8x128xf32>
      %c60_571 = arith.constant 60 : index
      %2650 = arith.index_cast %37 : i32 to index
      %c0_572 = arith.constant 0 : index
      %2651 = vector.load %arg4[%c60_571, %2650, %c0_572] : memref<64x16x128xf32, #tpu.memory_space<vmem>>, vector<1x8x128xf32>
      %2652 = vector.shape_cast %2651 : vector<1x8x128xf32> to vector<8x128xf32>
      %2653 = arith.mulf %2652, %400 : vector<8x128xf32>
      %2654 = arith.addf %2647, %2653 : vector<8x128xf32>
      %2655 = arith.mulf %2652, %405 : vector<8x128xf32>
      %2656 = arith.addf %2649, %2655 : vector<8x128xf32>
      %c61_573 = arith.constant 61 : index
      %2657 = arith.index_cast %37 : i32 to index
      %c0_574 = arith.constant 0 : index
      %2658 = vector.load %arg4[%c61_573, %2657, %c0_574] : memref<64x16x128xf32, #tpu.memory_space<vmem>>, vector<1x8x128xf32>
      %2659 = vector.shape_cast %2658 : vector<1x8x128xf32> to vector<8x128xf32>
      %2660 = arith.mulf %2659, %464 : vector<8x128xf32>
      %2661 = arith.addf %2654, %2660 : vector<8x128xf32>
      %2662 = arith.mulf %2659, %469 : vector<8x128xf32>
      %2663 = arith.addf %2656, %2662 : vector<8x128xf32>
      %c62_575 = arith.constant 62 : index
      %2664 = arith.index_cast %37 : i32 to index
      %c0_576 = arith.constant 0 : index
      %2665 = vector.load %arg4[%c62_575, %2664, %c0_576] : memref<64x16x128xf32, #tpu.memory_space<vmem>>, vector<1x8x128xf32>
      %2666 = vector.shape_cast %2665 : vector<1x8x128xf32> to vector<8x128xf32>
      %2667 = arith.mulf %2666, %528 : vector<8x128xf32>
      %2668 = arith.addf %2661, %2667 : vector<8x128xf32>
      %2669 = arith.mulf %2666, %533 : vector<8x128xf32>
      %2670 = arith.addf %2663, %2669 : vector<8x128xf32>
      %c63_577 = arith.constant 63 : index
      %2671 = arith.index_cast %37 : i32 to index
      %c0_578 = arith.constant 0 : index
      %2672 = vector.load %arg4[%c63_577, %2671, %c0_578] : memref<64x16x128xf32, #tpu.memory_space<vmem>>, vector<1x8x128xf32>
      %2673 = vector.shape_cast %2672 : vector<1x8x128xf32> to vector<8x128xf32>
      %2674 = arith.mulf %2673, %2618 : vector<8x128xf32>
      %2675 = arith.addf %2668, %2674 : vector<8x128xf32>
      %2676 = arith.mulf %2673, %2623 : vector<8x128xf32>
      %2677 = arith.addf %2670, %2676 : vector<8x128xf32>
      %2678 = vector.broadcast %1 : f32 to vector<8x128xf32>
      %2679 = arith.mulf %2675, %2678 : vector<8x128xf32>
      %2680 = vector.broadcast %2 : f32 to vector<8x128xf32>
      %2681 = arith.mulf %2677, %2680 : vector<8x128xf32>
      %2682 = arith.addf %2679, %2681 : vector<8x128xf32>
      %cst_579 = arith.constant 0.000000e+00 : f32
      %2683 = vector.broadcast %cst_579 : f32 to vector<8x128xf32>
      %2684 = arith.cmpf oge, %2682, %2683 : vector<8x128xf32>
      %2685 = vector.broadcast %0 : f32 to vector<8x128xf32>
      %2686 = arith.mulf %2685, %2682 : vector<8x128xf32>
      %2687 = arith.select %2684, %2682, %2686 : vector<8x128xi1>, vector<8x128xf32>
      %c112 = arith.constant 112 : index
      %2688 = arith.index_cast %37 : i32 to index
      %c0_580 = arith.constant 0 : index
      %2689 = vector.load %arg5[%c112, %2688, %c0_580] : memref<128x16x128xf32, #tpu.memory_space<vmem>>, vector<1x8x128xf32>
      %2690 = vector.shape_cast %2689 : vector<1x8x128xf32> to vector<8x128xf32>
      %2691 = vector.shape_cast %2687 : vector<8x128xf32> to vector<1x8x128xf32>
      tpu.vector_store %arg5[%c112, %2688, %c0_580], %2691 {strides = array<i32>} : memref<128x16x128xf32, #tpu.memory_space<vmem>>, vector<1x8x128xf32>,
      %2692 = vector.broadcast %3 : f32 to vector<8x128xf32>
      %2693 = arith.mulf %2675, %2692 : vector<8x128xf32>
      %2694 = vector.broadcast %4 : f32 to vector<8x128xf32>
      %2695 = arith.mulf %2677, %2694 : vector<8x128xf32>
      %2696 = arith.addf %2693, %2695 : vector<8x128xf32>
      %cst_581 = arith.constant 0.000000e+00 : f32
      %2697 = vector.broadcast %cst_581 : f32 to vector<8x128xf32>
      %2698 = arith.cmpf oge, %2696, %2697 : vector<8x128xf32>
      %2699 = vector.broadcast %0 : f32 to vector<8x128xf32>
      %2700 = arith.mulf %2699, %2696 : vector<8x128xf32>
      %2701 = arith.select %2698, %2696, %2700 : vector<8x128xi1>, vector<8x128xf32>
      %c113 = arith.constant 113 : index
      %2702 = arith.index_cast %37 : i32 to index
      %c0_582 = arith.constant 0 : index
      %2703 = vector.load %arg5[%c113, %2702, %c0_582] : memref<128x16x128xf32, #tpu.memory_space<vmem>>, vector<1x8x128xf32>
      %2704 = vector.shape_cast %2703 : vector<1x8x128xf32> to vector<8x128xf32>
      %2705 = vector.shape_cast %2701 : vector<8x128xf32> to vector<1x8x128xf32>
      tpu.vector_store %arg5[%c113, %2702, %c0_582], %2705 {strides = array<i32>} : memref<128x16x128xf32, #tpu.memory_space<vmem>>, vector<1x8x128xf32>,
      %2706 = vector.broadcast %5 : f32 to vector<8x128xf32>
      %2707 = arith.mulf %2675, %2706 : vector<8x128xf32>
      %2708 = vector.broadcast %6 : f32 to vector<8x128xf32>
      %2709 = arith.mulf %2677, %2708 : vector<8x128xf32>
      %2710 = arith.addf %2707, %2709 : vector<8x128xf32>
      %cst_583 = arith.constant 0.000000e+00 : f32
      %2711 = vector.broadcast %cst_583 : f32 to vector<8x128xf32>
      %2712 = arith.cmpf oge, %2710, %2711 : vector<8x128xf32>
      %2713 = vector.broadcast %0 : f32 to vector<8x128xf32>
      %2714 = arith.mulf %2713, %2710 : vector<8x128xf32>
      %2715 = arith.select %2712, %2710, %2714 : vector<8x128xi1>, vector<8x128xf32>
      %c114 = arith.constant 114 : index
      %2716 = arith.index_cast %37 : i32 to index
      %c0_584 = arith.constant 0 : index
      %2717 = vector.load %arg5[%c114, %2716, %c0_584] : memref<128x16x128xf32, #tpu.memory_space<vmem>>, vector<1x8x128xf32>
      %2718 = vector.shape_cast %2717 : vector<1x8x128xf32> to vector<8x128xf32>
      %2719 = vector.shape_cast %2715 : vector<8x128xf32> to vector<1x8x128xf32>
      tpu.vector_store %arg5[%c114, %2716, %c0_584], %2719 {strides = array<i32>} : memref<128x16x128xf32, #tpu.memory_space<vmem>>, vector<1x8x128xf32>,
      %2720 = vector.broadcast %7 : f32 to vector<8x128xf32>
      %2721 = arith.mulf %2675, %2720 : vector<8x128xf32>
      %2722 = vector.broadcast %8 : f32 to vector<8x128xf32>
      %2723 = arith.mulf %2677, %2722 : vector<8x128xf32>
      %2724 = arith.addf %2721, %2723 : vector<8x128xf32>
      %cst_585 = arith.constant 0.000000e+00 : f32
      %2725 = vector.broadcast %cst_585 : f32 to vector<8x128xf32>
      %2726 = arith.cmpf oge, %2724, %2725 : vector<8x128xf32>
      %2727 = vector.broadcast %0 : f32 to vector<8x128xf32>
      %2728 = arith.mulf %2727, %2724 : vector<8x128xf32>
      %2729 = arith.select %2726, %2724, %2728 : vector<8x128xi1>, vector<8x128xf32>
      %c115 = arith.constant 115 : index
      %2730 = arith.index_cast %37 : i32 to index
      %c0_586 = arith.constant 0 : index
      %2731 = vector.load %arg5[%c115, %2730, %c0_586] : memref<128x16x128xf32, #tpu.memory_space<vmem>>, vector<1x8x128xf32>
      %2732 = vector.shape_cast %2731 : vector<1x8x128xf32> to vector<8x128xf32>
      %2733 = vector.shape_cast %2729 : vector<8x128xf32> to vector<1x8x128xf32>
      tpu.vector_store %arg5[%c115, %2730, %c0_586], %2733 {strides = array<i32>} : memref<128x16x128xf32, #tpu.memory_space<vmem>>, vector<1x8x128xf32>,
      %2734 = vector.broadcast %9 : f32 to vector<8x128xf32>
      %2735 = arith.mulf %2675, %2734 : vector<8x128xf32>
      %2736 = vector.broadcast %10 : f32 to vector<8x128xf32>
      %2737 = arith.mulf %2677, %2736 : vector<8x128xf32>
      %2738 = arith.addf %2735, %2737 : vector<8x128xf32>
      %cst_587 = arith.constant 0.000000e+00 : f32
      %2739 = vector.broadcast %cst_587 : f32 to vector<8x128xf32>
      %2740 = arith.cmpf oge, %2738, %2739 : vector<8x128xf32>
      %2741 = vector.broadcast %0 : f32 to vector<8x128xf32>
      %2742 = arith.mulf %2741, %2738 : vector<8x128xf32>
      %2743 = arith.select %2740, %2738, %2742 : vector<8x128xi1>, vector<8x128xf32>
      %c116 = arith.constant 116 : index
      %2744 = arith.index_cast %37 : i32 to index
      %c0_588 = arith.constant 0 : index
      %2745 = vector.load %arg5[%c116, %2744, %c0_588] : memref<128x16x128xf32, #tpu.memory_space<vmem>>, vector<1x8x128xf32>
      %2746 = vector.shape_cast %2745 : vector<1x8x128xf32> to vector<8x128xf32>
      %2747 = vector.shape_cast %2743 : vector<8x128xf32> to vector<1x8x128xf32>
      tpu.vector_store %arg5[%c116, %2744, %c0_588], %2747 {strides = array<i32>} : memref<128x16x128xf32, #tpu.memory_space<vmem>>, vector<1x8x128xf32>,
      %2748 = vector.broadcast %11 : f32 to vector<8x128xf32>
      %2749 = arith.mulf %2675, %2748 : vector<8x128xf32>
      %2750 = vector.broadcast %12 : f32 to vector<8x128xf32>
      %2751 = arith.mulf %2677, %2750 : vector<8x128xf32>
      %2752 = arith.addf %2749, %2751 : vector<8x128xf32>
      %cst_589 = arith.constant 0.000000e+00 : f32
      %2753 = vector.broadcast %cst_589 : f32 to vector<8x128xf32>
      %2754 = arith.cmpf oge, %2752, %2753 : vector<8x128xf32>
      %2755 = vector.broadcast %0 : f32 to vector<8x128xf32>
      %2756 = arith.mulf %2755, %2752 : vector<8x128xf32>
      %2757 = arith.select %2754, %2752, %2756 : vector<8x128xi1>, vector<8x128xf32>
      %c117 = arith.constant 117 : index
      %2758 = arith.index_cast %37 : i32 to index
      %c0_590 = arith.constant 0 : index
      %2759 = vector.load %arg5[%c117, %2758, %c0_590] : memref<128x16x128xf32, #tpu.memory_space<vmem>>, vector<1x8x128xf32>
      %2760 = vector.shape_cast %2759 : vector<1x8x128xf32> to vector<8x128xf32>
      %2761 = vector.shape_cast %2757 : vector<8x128xf32> to vector<1x8x128xf32>
      tpu.vector_store %arg5[%c117, %2758, %c0_590], %2761 {strides = array<i32>} : memref<128x16x128xf32, #tpu.memory_space<vmem>>, vector<1x8x128xf32>,
      %2762 = vector.broadcast %13 : f32 to vector<8x128xf32>
      %2763 = arith.mulf %2675, %2762 : vector<8x128xf32>
      %2764 = vector.broadcast %14 : f32 to vector<8x128xf32>
      %2765 = arith.mulf %2677, %2764 : vector<8x128xf32>
      %2766 = arith.addf %2763, %2765 : vector<8x128xf32>
      %cst_591 = arith.constant 0.000000e+00 : f32
      %2767 = vector.broadcast %cst_591 : f32 to vector<8x128xf32>
      %2768 = arith.cmpf oge, %2766, %2767 : vector<8x128xf32>
      %2769 = vector.broadcast %0 : f32 to vector<8x128xf32>
      %2770 = arith.mulf %2769, %2766 : vector<8x128xf32>
      %2771 = arith.select %2768, %2766, %2770 : vector<8x128xi1>, vector<8x128xf32>
      %c118 = arith.constant 118 : index
      %2772 = arith.index_cast %37 : i32 to index
      %c0_592 = arith.constant 0 : index
      %2773 = vector.load %arg5[%c118, %2772, %c0_592] : memref<128x16x128xf32, #tpu.memory_space<vmem>>, vector<1x8x128xf32>
      %2774 = vector.shape_cast %2773 : vector<1x8x128xf32> to vector<8x128xf32>
      %2775 = vector.shape_cast %2771 : vector<8x128xf32> to vector<1x8x128xf32>
      tpu.vector_store %arg5[%c118, %2772, %c0_592], %2775 {strides = array<i32>} : memref<128x16x128xf32, #tpu.memory_space<vmem>>, vector<1x8x128xf32>,
      %2776 = vector.broadcast %15 : f32 to vector<8x128xf32>
      %2777 = arith.mulf %2675, %2776 : vector<8x128xf32>
      %2778 = vector.broadcast %16 : f32 to vector<8x128xf32>
      %2779 = arith.mulf %2677, %2778 : vector<8x128xf32>
      %2780 = arith.addf %2777, %2779 : vector<8x128xf32>
      %cst_593 = arith.constant 0.000000e+00 : f32
      %2781 = vector.broadcast %cst_593 : f32 to vector<8x128xf32>
      %2782 = arith.cmpf oge, %2780, %2781 : vector<8x128xf32>
      %2783 = vector.broadcast %0 : f32 to vector<8x128xf32>
      %2784 = arith.mulf %2783, %2780 : vector<8x128xf32>
      %2785 = arith.select %2782, %2780, %2784 : vector<8x128xi1>, vector<8x128xf32>
      %c119 = arith.constant 119 : index
      %2786 = arith.index_cast %37 : i32 to index
      %c0_594 = arith.constant 0 : index
      %2787 = vector.load %arg5[%c119, %2786, %c0_594] : memref<128x16x128xf32, #tpu.memory_space<vmem>>, vector<1x8x128xf32>
      %2788 = vector.shape_cast %2787 : vector<1x8x128xf32> to vector<8x128xf32>
      %2789 = vector.shape_cast %2785 : vector<8x128xf32> to vector<1x8x128xf32>
      tpu.vector_store %arg5[%c119, %2786, %c0_594], %2789 {strides = array<i32>} : memref<128x16x128xf32, #tpu.memory_space<vmem>>, vector<1x8x128xf32>,
      %2790 = vector.broadcast %17 : f32 to vector<8x128xf32>
      %2791 = arith.mulf %2675, %2790 : vector<8x128xf32>
      %2792 = vector.broadcast %18 : f32 to vector<8x128xf32>
      %2793 = arith.mulf %2677, %2792 : vector<8x128xf32>
      %2794 = arith.addf %2791, %2793 : vector<8x128xf32>
      %cst_595 = arith.constant 0.000000e+00 : f32
      %2795 = vector.broadcast %cst_595 : f32 to vector<8x128xf32>
      %2796 = arith.cmpf oge, %2794, %2795 : vector<8x128xf32>
      %2797 = vector.broadcast %0 : f32 to vector<8x128xf32>
      %2798 = arith.mulf %2797, %2794 : vector<8x128xf32>
      %2799 = arith.select %2796, %2794, %2798 : vector<8x128xi1>, vector<8x128xf32>
      %c120 = arith.constant 120 : index
      %2800 = arith.index_cast %37 : i32 to index
      %c0_596 = arith.constant 0 : index
      %2801 = vector.load %arg5[%c120, %2800, %c0_596] : memref<128x16x128xf32, #tpu.memory_space<vmem>>, vector<1x8x128xf32>
      %2802 = vector.shape_cast %2801 : vector<1x8x128xf32> to vector<8x128xf32>
      %2803 = vector.shape_cast %2799 : vector<8x128xf32> to vector<1x8x128xf32>
      tpu.vector_store %arg5[%c120, %2800, %c0_596], %2803 {strides = array<i32>} : memref<128x16x128xf32, #tpu.memory_space<vmem>>, vector<1x8x128xf32>,
      %2804 = vector.broadcast %19 : f32 to vector<8x128xf32>
      %2805 = arith.mulf %2675, %2804 : vector<8x128xf32>
      %2806 = vector.broadcast %20 : f32 to vector<8x128xf32>
      %2807 = arith.mulf %2677, %2806 : vector<8x128xf32>
      %2808 = arith.addf %2805, %2807 : vector<8x128xf32>
      %cst_597 = arith.constant 0.000000e+00 : f32
      %2809 = vector.broadcast %cst_597 : f32 to vector<8x128xf32>
      %2810 = arith.cmpf oge, %2808, %2809 : vector<8x128xf32>
      %2811 = vector.broadcast %0 : f32 to vector<8x128xf32>
      %2812 = arith.mulf %2811, %2808 : vector<8x128xf32>
      %2813 = arith.select %2810, %2808, %2812 : vector<8x128xi1>, vector<8x128xf32>
      %c121 = arith.constant 121 : index
      %2814 = arith.index_cast %37 : i32 to index
      %c0_598 = arith.constant 0 : index
      %2815 = vector.load %arg5[%c121, %2814, %c0_598] : memref<128x16x128xf32, #tpu.memory_space<vmem>>, vector<1x8x128xf32>
      %2816 = vector.shape_cast %2815 : vector<1x8x128xf32> to vector<8x128xf32>
      %2817 = vector.shape_cast %2813 : vector<8x128xf32> to vector<1x8x128xf32>
      tpu.vector_store %arg5[%c121, %2814, %c0_598], %2817 {strides = array<i32>} : memref<128x16x128xf32, #tpu.memory_space<vmem>>, vector<1x8x128xf32>,
      %2818 = vector.broadcast %21 : f32 to vector<8x128xf32>
      %2819 = arith.mulf %2675, %2818 : vector<8x128xf32>
      %2820 = vector.broadcast %22 : f32 to vector<8x128xf32>
      %2821 = arith.mulf %2677, %2820 : vector<8x128xf32>
      %2822 = arith.addf %2819, %2821 : vector<8x128xf32>
      %cst_599 = arith.constant 0.000000e+00 : f32
      %2823 = vector.broadcast %cst_599 : f32 to vector<8x128xf32>
      %2824 = arith.cmpf oge, %2822, %2823 : vector<8x128xf32>
      %2825 = vector.broadcast %0 : f32 to vector<8x128xf32>
      %2826 = arith.mulf %2825, %2822 : vector<8x128xf32>
      %2827 = arith.select %2824, %2822, %2826 : vector<8x128xi1>, vector<8x128xf32>
      %c122 = arith.constant 122 : index
      %2828 = arith.index_cast %37 : i32 to index
      %c0_600 = arith.constant 0 : index
      %2829 = vector.load %arg5[%c122, %2828, %c0_600] : memref<128x16x128xf32, #tpu.memory_space<vmem>>, vector<1x8x128xf32>
      %2830 = vector.shape_cast %2829 : vector<1x8x128xf32> to vector<8x128xf32>
      %2831 = vector.shape_cast %2827 : vector<8x128xf32> to vector<1x8x128xf32>
      tpu.vector_store %arg5[%c122, %2828, %c0_600], %2831 {strides = array<i32>} : memref<128x16x128xf32, #tpu.memory_space<vmem>>, vector<1x8x128xf32>,
      %2832 = vector.broadcast %23 : f32 to vector<8x128xf32>
      %2833 = arith.mulf %2675, %2832 : vector<8x128xf32>
      %2834 = vector.broadcast %24 : f32 to vector<8x128xf32>
      %2835 = arith.mulf %2677, %2834 : vector<8x128xf32>
      %2836 = arith.addf %2833, %2835 : vector<8x128xf32>
      %cst_601 = arith.constant 0.000000e+00 : f32
      %2837 = vector.broadcast %cst_601 : f32 to vector<8x128xf32>
      %2838 = arith.cmpf oge, %2836, %2837 : vector<8x128xf32>
      %2839 = vector.broadcast %0 : f32 to vector<8x128xf32>
      %2840 = arith.mulf %2839, %2836 : vector<8x128xf32>
      %2841 = arith.select %2838, %2836, %2840 : vector<8x128xi1>, vector<8x128xf32>
      %c123 = arith.constant 123 : index
      %2842 = arith.index_cast %37 : i32 to index
      %c0_602 = arith.constant 0 : index
      %2843 = vector.load %arg5[%c123, %2842, %c0_602] : memref<128x16x128xf32, #tpu.memory_space<vmem>>, vector<1x8x128xf32>
      %2844 = vector.shape_cast %2843 : vector<1x8x128xf32> to vector<8x128xf32>
      %2845 = vector.shape_cast %2841 : vector<8x128xf32> to vector<1x8x128xf32>
      tpu.vector_store %arg5[%c123, %2842, %c0_602], %2845 {strides = array<i32>} : memref<128x16x128xf32, #tpu.memory_space<vmem>>, vector<1x8x128xf32>,
      %2846 = vector.broadcast %25 : f32 to vector<8x128xf32>
      %2847 = arith.mulf %2675, %2846 : vector<8x128xf32>
      %2848 = vector.broadcast %26 : f32 to vector<8x128xf32>
      %2849 = arith.mulf %2677, %2848 : vector<8x128xf32>
      %2850 = arith.addf %2847, %2849 : vector<8x128xf32>
      %cst_603 = arith.constant 0.000000e+00 : f32
      %2851 = vector.broadcast %cst_603 : f32 to vector<8x128xf32>
      %2852 = arith.cmpf oge, %2850, %2851 : vector<8x128xf32>
      %2853 = vector.broadcast %0 : f32 to vector<8x128xf32>
      %2854 = arith.mulf %2853, %2850 : vector<8x128xf32>
      %2855 = arith.select %2852, %2850, %2854 : vector<8x128xi1>, vector<8x128xf32>
      %c124 = arith.constant 124 : index
      %2856 = arith.index_cast %37 : i32 to index
      %c0_604 = arith.constant 0 : index
      %2857 = vector.load %arg5[%c124, %2856, %c0_604] : memref<128x16x128xf32, #tpu.memory_space<vmem>>, vector<1x8x128xf32>
      %2858 = vector.shape_cast %2857 : vector<1x8x128xf32> to vector<8x128xf32>
      %2859 = vector.shape_cast %2855 : vector<8x128xf32> to vector<1x8x128xf32>
      tpu.vector_store %arg5[%c124, %2856, %c0_604], %2859 {strides = array<i32>} : memref<128x16x128xf32, #tpu.memory_space<vmem>>, vector<1x8x128xf32>,
      %2860 = vector.broadcast %27 : f32 to vector<8x128xf32>
      %2861 = arith.mulf %2675, %2860 : vector<8x128xf32>
      %2862 = vector.broadcast %28 : f32 to vector<8x128xf32>
      %2863 = arith.mulf %2677, %2862 : vector<8x128xf32>
      %2864 = arith.addf %2861, %2863 : vector<8x128xf32>
      %cst_605 = arith.constant 0.000000e+00 : f32
      %2865 = vector.broadcast %cst_605 : f32 to vector<8x128xf32>
      %2866 = arith.cmpf oge, %2864, %2865 : vector<8x128xf32>
      %2867 = vector.broadcast %0 : f32 to vector<8x128xf32>
      %2868 = arith.mulf %2867, %2864 : vector<8x128xf32>
      %2869 = arith.select %2866, %2864, %2868 : vector<8x128xi1>, vector<8x128xf32>
      %c125 = arith.constant 125 : index
      %2870 = arith.index_cast %37 : i32 to index
      %c0_606 = arith.constant 0 : index
      %2871 = vector.load %arg5[%c125, %2870, %c0_606] : memref<128x16x128xf32, #tpu.memory_space<vmem>>, vector<1x8x128xf32>
      %2872 = vector.shape_cast %2871 : vector<1x8x128xf32> to vector<8x128xf32>
      %2873 = vector.shape_cast %2869 : vector<8x128xf32> to vector<1x8x128xf32>
      tpu.vector_store %arg5[%c125, %2870, %c0_606], %2873 {strides = array<i32>} : memref<128x16x128xf32, #tpu.memory_space<vmem>>, vector<1x8x128xf32>,
      %2874 = vector.broadcast %29 : f32 to vector<8x128xf32>
      %2875 = arith.mulf %2675, %2874 : vector<8x128xf32>
      %2876 = vector.broadcast %30 : f32 to vector<8x128xf32>
      %2877 = arith.mulf %2677, %2876 : vector<8x128xf32>
      %2878 = arith.addf %2875, %2877 : vector<8x128xf32>
      %cst_607 = arith.constant 0.000000e+00 : f32
      %2879 = vector.broadcast %cst_607 : f32 to vector<8x128xf32>
      %2880 = arith.cmpf oge, %2878, %2879 : vector<8x128xf32>
      %2881 = vector.broadcast %0 : f32 to vector<8x128xf32>
      %2882 = arith.mulf %2881, %2878 : vector<8x128xf32>
      %2883 = arith.select %2880, %2878, %2882 : vector<8x128xi1>, vector<8x128xf32>
      %c126 = arith.constant 126 : index
      %2884 = arith.index_cast %37 : i32 to index
      %c0_608 = arith.constant 0 : index
      %2885 = vector.load %arg5[%c126, %2884, %c0_608] : memref<128x16x128xf32, #tpu.memory_space<vmem>>, vector<1x8x128xf32>
      %2886 = vector.shape_cast %2885 : vector<1x8x128xf32> to vector<8x128xf32>
      %2887 = vector.shape_cast %2883 : vector<8x128xf32> to vector<1x8x128xf32>
      tpu.vector_store %arg5[%c126, %2884, %c0_608], %2887 {strides = array<i32>} : memref<128x16x128xf32, #tpu.memory_space<vmem>>, vector<1x8x128xf32>,
      %2888 = vector.broadcast %31 : f32 to vector<8x128xf32>
      %2889 = arith.mulf %2675, %2888 : vector<8x128xf32>
      %2890 = vector.broadcast %32 : f32 to vector<8x128xf32>
      %2891 = arith.mulf %2677, %2890 : vector<8x128xf32>
      %2892 = arith.addf %2889, %2891 : vector<8x128xf32>
      %cst_609 = arith.constant 0.000000e+00 : f32
      %2893 = vector.broadcast %cst_609 : f32 to vector<8x128xf32>
      %2894 = arith.cmpf oge, %2892, %2893 : vector<8x128xf32>
      %2895 = vector.broadcast %0 : f32 to vector<8x128xf32>
      %2896 = arith.mulf %2895, %2892 : vector<8x128xf32>
      %2897 = arith.select %2894, %2892, %2896 : vector<8x128xi1>, vector<8x128xf32>
      %c127 = arith.constant 127 : index
      %2898 = arith.index_cast %37 : i32 to index
      %c0_610 = arith.constant 0 : index
      %2899 = vector.load %arg5[%c127, %2898, %c0_610] : memref<128x16x128xf32, #tpu.memory_space<vmem>>, vector<1x8x128xf32>
      %2900 = vector.shape_cast %2899 : vector<1x8x128xf32> to vector<8x128xf32>
      %2901 = vector.shape_cast %2897 : vector<8x128xf32> to vector<1x8x128xf32>
      tpu.vector_store %arg5[%c127, %2898, %c0_610], %2901 {strides = array<i32>} : memref<128x16x128xf32, #tpu.memory_space<vmem>>, vector<1x8x128xf32>,
    }
    %c2_i32_1 = arith.constant 2 : i32
    return
  }
  func.func @transform_0(%arg0: i32) -> i32 {
    %c0_i32 = arith.constant 0 : i32
    %c0_i32_0 = arith.constant 0 : i32
    return %c0_i32 : i32
  }
  func.func @transform_1(%arg0: i32) -> i32 {
    %c0_i32 = arith.constant 0 : i32
    %c0_i32_0 = arith.constant 0 : i32
    return %c0_i32 : i32
  }
  func.func @transform_2(%arg0: i32) -> (i32, i32, i32) {
    %c0_i32 = arith.constant 0 : i32
    %c0_i32_0 = arith.constant 0 : i32
    %c0_i32_1 = arith.constant 0 : i32
    return %c0_i32, %arg0, %c0_i32_0 : i32, i32, i32
  }
  func.func @transform_3(%arg0: i32) -> (i32, i32, i32) {
    %c0_i32 = arith.constant 0 : i32
    %c0_i32_0 = arith.constant 0 : i32
    %c0_i32_1 = arith.constant 0 : i32
    return %c0_i32, %arg0, %c0_i32_0 : i32, i32, i32
  }
  func.func @transform_4(%arg0: i32) -> (i32, i32, i32) {
    %c0_i32 = arith.constant 0 : i32
    %c0_i32_0 = arith.constant 0 : i32
    %c0_i32_1 = arith.constant 0 : i32
    return %c0_i32, %arg0, %c0_i32_0 : i32, i32, i32
  }
}

</mosaic_0001>

<llo_original>
// kernel: tpu_custom_call.1
$region0: #{tpu_custom_call.1}
  #allocation0 [shape = 'u32[]', space=smem, size = 0x4, offset = 0x4, fixed_abs, tag = 'smem constant byte address 0x4 - core index']
  #allocation1 [shape = 'u32[72,128]{1,0:T(1,128)}', space=vmem, size = 0x9000, scoped, tag = 'internal scratch']
  #allocation2 [shape = 'f32[1]{0:T(128)S(6)}', space=smem, size = 0x200, scoped, tag = 'scoped memory for tpu_custom_call.1']
  #allocation11 [shape = 's32[]', space=sflag, size = 0x4, offset = 0, fixed_abs, tag = 'sflag constant byte address 0x0 - dummy sync flag']
  #allocation13 [shape = 's32[]', space=sflag, size = 0x4, offset = 0, fixed_abs, tag = 'sflag constant byte address 0x0 - dummy sync flag']
  #allocation15 [shape = 's32[]', space=sflag, size = 0x4, offset = 0, fixed_abs, tag = 'sflag constant byte address 0x0 - dummy sync flag']
  %s0 = inlined_call_operand.<no memory space> [shape: f32[1], index: 0, kind: input, shape index: {}]
  %s1 = inlined_call_operand.hbm [shape: f32[32], index: 1, kind: input, shape index: {}]
  %s2 = inlined_call_operand.hbm [shape: f32[16,32,128], index: 2, kind: input, shape index: {}]
  %s3 = inlined_call_operand.hbm [shape: f32[64,32,128], index: 3, kind: input, shape index: {}]
  %s4 = inlined_call_operand.hbm [shape: f32[128,32,128], index: 4, kind: output, shape index: {}]
  %s5 = sld [smem:[#allocation0]]
  $region68: #{tpu_custom_call.1} parent=0
    _
  %s7 = ssub.s32 1, %s5
  %s8 = scalar_select 0, %s7, %s5
  %9 = sst [smem:[#allocation2]] %s0
  $region1: #{tpu_custom_call.1} parent=0
    #allocation3 [shape = 'u8[512]{0}', space=smem, size = 0x200, scoped, tag = 'input window, operand 1, single buffered']
    #allocation4 [shape = 's32[2]{0}', space=sflag, size = 0x8, scoped, tag = 'scoped memory for tpu_custom_call.1']
    #allocation5 [shape = 's32[2]{0}', space=sflag, size = 0x8, scoped, tag = 'scoped memory for tpu_custom_call.1']
    #allocation6 [shape = 's32[2]{0}', space=sflag, size = 0x8, scoped, tag = 'scoped memory for tpu_custom_call.1']
    #allocation7 [shape = 'u8[262144]{0}', space=vmem, size = 0x40000, scoped, tag = 'input window, operand 2']
    #allocation8 [shape = 'u8[1048576]{0}', space=vmem, size = 0x100000, scoped, tag = 'input window, operand 3']
    #allocation9 [shape = 's32[2]{0}', space=sflag, size = 0x8, scoped, tag = 'scoped memory for tpu_custom_call.1']
    #allocation10 [shape = 'u8[2097152]{0}', space=vmem, size = 0x200000, scoped, tag = 'output window, operand 0']
    %10 = vsyncpa [#allocation6], 0
    %11 = vsyncpa [#allocation4], 0
    %s12 = scalar_lea.sflag [#allocation4], 1
    %13 = vsyncpa %s12, 0
    %14 = vsyncpa [#allocation9], 0
    %s15 = scalar_lea.sflag [#allocation9], 1
    %16 = vsyncpa %s15, 0
    %17 = vsyncpa [#allocation5], 0
    %s18 = scalar_lea.sflag [#allocation5], 1
    %19 = vsyncpa %s18, 0
    loop: start=0, step=1, limit=4
    $region2: #{tpu_custom_call.1} parent=1 // loop_pre_header
      _
    $region3: #{tpu_custom_call.1} parent=1 // loop_header
      %s21 = sphi 0, %s25
      %p22 = scmp.ge.s32.totalorder %s21, 4
      %s29 = sphi 0, %s29
      %s31 = sphi 0, %s29
      %s32 = sphi 0, %s31
      %s46 = sphi 0, %s32
      %s50 = sphi 0, %s50
      %s52 = sphi 0, %s50
      %s53 = sphi 0, %s52
      %s67 = sphi 0, %s53
      %s73 = sphi 0, %s75
      %s76 = sphi 0, %s73
      %s77 = sphi 0, %s76
      %s93 = sphi 0, %s77
      %s99 = sphi 0, %s101
      %s102 = sphi 0, %s99
      %s103 = sphi 0, %s102
      %s119 = sphi 0, %s103
      %s125 = sphi 0, %s127
      %s128 = sphi 0, %s125
      %s129 = sphi 0, %s128
      %s145 = sphi 0, %s129
    $region4: #{tpu_custom_call.1} parent=1 // loop_header_branch
      %24 = sbr.rel (%p22) target = $region8
    $region5: #{tpu_custom_call.1} parent=1 // loop_body
      %s26 = ssub.s32 %s21, 1
      %s27 = ssub.s32 %s21, 2
      %s28 = sadd.s32 %s21, 1
      %s30 = sadd.s32 %s29, 1
      %p33 = scmp.eq.s32.totalorder %s21, 1
      %p34 = scmp.ne.s32.totalorder %s29, %s31
      %p35 = scmp.eq.s32.totalorder %s21, 0
      %p36 = por %p34, %p35
      %p37 = scmp.ne.s32.totalorder %s29, %s31
      %p38 = scmp.eq.s32.totalorder %s26, 1
      %p39 = por %p37, %p38
      %p40 = scmp.ne.s32.totalorder %s31, %s32
      %p41 = scmp.eq.s32.totalorder %s26, 0
      %p42 = por %p40, %p41
      %p43 = scmp.ne.s32.totalorder %s31, %s32
      %p44 = scmp.eq.s32.totalorder %s27, 1
      %p45 = por %p43, %p44
      %p47 = scmp.ne.s32.totalorder %s32, %s46
      %p48 = scmp.eq.s32.totalorder %s27, 0
      %p49 = por %p47, %p48
      %s51 = sadd.s32 %s50, 1
      %p54 = scmp.eq.s32.totalorder %s21, 1
      %p55 = scmp.ne.s32.totalorder %s50, %s52
      %p56 = scmp.eq.s32.totalorder %s21, 0
      %p57 = por %p55, %p56
      %p58 = scmp.ne.s32.totalorder %s50, %s52
      %p59 = scmp.eq.s32.totalorder %s26, 1
      %p60 = por %p58, %p59
      %p61 = scmp.ne.s32.totalorder %s52, %s53
      %p62 = scmp.eq.s32.totalorder %s26, 0
      %p63 = por %p61, %p62
      %p64 = scmp.ne.s32.totalorder %s52, %s53
      %p65 = scmp.eq.s32.totalorder %s27, 1
      %p66 = por %p64, %p65
      %p68 = scmp.ne.s32.totalorder %s53, %s67
      %p69 = scmp.eq.s32.totalorder %s27, 0
      %p70 = por %p68, %p69
      %s71 = ssub.s32 %s21, %s28
      %p72 = scmp.eq.s32.totalorder %s71, 0
      %s74 = sadd.s32 %s73, 1
      %s75 = scalar_select %p72, %s73, %s74
      %p78 = pneg %p72
      %p79 = scmp.eq.s32.totalorder %s21, 1
      %p80 = por %p78, %p79
      %p81 = scmp.ne.s32.totalorder %s73, %s76
      %p82 = scmp.eq.s32.totalorder %s21, 0
      %p83 = por %p81, %p82
      %p84 = scmp.ne.s32.totalorder %s73, %s76
      %p85 = scmp.eq.s32.totalorder %s26, 1
      %p86 = por %p84, %p85
      %p87 = scmp.ne.s32.totalorder %s76, %s77
      %p88 = scmp.eq.s32.totalorder %s26, 0
      %p89 = por %p87, %p88
      %p90 = scmp.ne.s32.totalorder %s76, %s77
      %p91 = scmp.eq.s32.totalorder %s27, 1
      %p92 = por %p90, %p91
      %p94 = scmp.ne.s32.totalorder %s77, %s93
      %p95 = scmp.eq.s32.totalorder %s27, 0
      %p96 = por %p94, %p95
      %s97 = ssub.s32 %s21, %s28
      %p98 = scmp.eq.s32.totalorder %s97, 0
      %s100 = sadd.s32 %s99, 1
      %s101 = scalar_select %p98, %s99, %s100
      %p104 = pneg %p98
      %p105 = scmp.eq.s32.totalorder %s21, 1
      %p106 = por %p104, %p105
      %p107 = scmp.ne.s32.totalorder %s99, %s102
      %p108 = scmp.eq.s32.totalorder %s21, 0
      %p109 = por %p107, %p108
      %p110 = scmp.ne.s32.totalorder %s99, %s102
      %p111 = scmp.eq.s32.totalorder %s26, 1
      %p112 = por %p110, %p111
      %p113 = scmp.ne.s32.totalorder %s102, %s103
      %p114 = scmp.eq.s32.totalorder %s26, 0
      %p115 = por %p113, %p114
      %p116 = scmp.ne.s32.totalorder %s102, %s103
      %p117 = scmp.eq.s32.totalorder %s27, 1
      %p118 = por %p116, %p117
      %p120 = scmp.ne.s32.totalorder %s103, %s119
      %p121 = scmp.eq.s32.totalorder %s27, 0
      %p122 = por %p120, %p121
      %s123 = ssub.s32 %s21, %s28
      %p124 = scmp.eq.s32.totalorder %s123, 0
      %s126 = sadd.s32 %s125, 1
      %s127 = scalar_select %p124, %s125, %s126
      %p130 = pneg %p124
      %p131 = scmp.eq.s32.totalorder %s21, 1
      %p132 = por %p130, %p131
      %p133 = scmp.ne.s32.totalorder %s125, %s128
      %p134 = scmp.eq.s32.totalorder %s21, 0
      %p135 = por %p133, %p134
      %p136 = scmp.ne.s32.totalorder %s125, %s128
      %p137 = scmp.eq.s32.totalorder %s26, 1
      %p138 = por %p136, %p137
      %p139 = scmp.ne.s32.totalorder %s128, %s129
      %p140 = scmp.eq.s32.totalorder %s26, 0
      %p141 = por %p139, %p140
      %p142 = scmp.ne.s32.totalorder %s128, %s129
      %p143 = scmp.eq.s32.totalorder %s27, 1
      %p144 = por %p142, %p143
      %p146 = scmp.ne.s32.totalorder %s129, %s145
      %p147 = scmp.eq.s32.totalorder %s27, 0
      %p148 = por %p146, %p147
      %p149 = scmp.le.s32.totalorder 1, %s21
      %p150 = scmp.lt.s32.totalorder %s21, 3
      %p151 = pnand %p149, %p150
      %p152 = pneg %p151
      // Predicated region
      $region9: #{tpu_custom_call.1} parent=5 // pred_check
        _
      $region10: #{tpu_custom_call.1} parent=5 // pred_check_branch
        %154 = sbr.rel (%p151) target = $region12
      $region11: #{tpu_custom_call.1} parent=5 // pred_region
        %s155 = ssub.s32 %s21, 1
        // Predicated region
        $region13: #{tpu_custom_call.1} parent=11 // pred_check
          %p156 = pneg %p42
        $region14: #{tpu_custom_call.1} parent=11 // pred_check_branch
          %158 = sbr.rel (%p156) target = $region16
        $region15: #{tpu_custom_call.1} parent=11 // pred_region
          _
        $region16: #{tpu_custom_call.1} parent=11 // pred_fallthru
          _
        // Predicated region
        $region17: #{tpu_custom_call.1} parent=11 // pred_check
          %p159 = pneg %p63
        $region18: #{tpu_custom_call.1} parent=11 // pred_check_branch
          %161 = sbr.rel (%p159) target = $region20
        $region19: #{tpu_custom_call.1} parent=11 // pred_region
          %163 = vsyncadd [#allocation6], 0
          %s165 = sshll.u32 %s1, 4
          %s166 = int_to_ptr.hbm [resolvable:$true] %s165
          %168 = dma.hbm_to_smem %s166, 16, [#allocation3], [#allocation6]
        $region20: #{tpu_custom_call.1} parent=11 // pred_fallthru
          _
      $region12: #{tpu_custom_call.1} parent=5 // pred_fallthru
        _
      %p169 = scmp.lt.s32.totalorder %s21, 2
      // Predicated region
      $region21: #{tpu_custom_call.1} parent=5 // pred_check
        %p170 = pneg %p169
      $region22: #{tpu_custom_call.1} parent=5 // pred_check_branch
        %172 = sbr.rel (%p170) target = $region24
      $region23: #{tpu_custom_call.1} parent=5 // pred_region
        // Predicated region
        $region25: #{tpu_custom_call.1} parent=23 // pred_check
          %p173 = pneg %p83
        $region26: #{tpu_custom_call.1} parent=23 // pred_check_branch
          %175 = sbr.rel (%p173) target = $region28
        $region27: #{tpu_custom_call.1} parent=23 // pred_region
          #allocation12 [shape = 'u32[6]{0}', space=smem, size = 0x18, scoped, tag = 'DMA stride descriptor']
          %s176 = sand.u32 %s73, 1
          %s177 = scalar_lea.sflag [#allocation4], %s176
          %s178 = sand.u32 %s73, 1
          %s179 = smul.addr %s178, 256
          %s180 = scalar_lea.vmem [#allocation7], %s179
          %s181 = smul.u32 2, %s21
          %183 = vsyncadd %s177, 0
          %s184 = smul.addr %s181, 8
          %s185 = scalar_lea.hbm %s2, %s184
          %s187 = sshll.u32 1, 14
          %s188 = sxor.u32 4294967295, %s187
          %s190 = sld [smem:[#allocation0]]
          %s191 = sadd.s32 2, %s190
          %s193 = sshll.u32 7, 26
          %s194 = sxor.u32 4294967295, %s193
          %s195 = sand.u32 0, %s194
          %s196 = sshll.u32 %s191, 26
          %s197 = sor.u32 %s195, %s196
          %s198 = sshll.u32 %s185, 4
          %s199 = int_to_ptr.hbm [resolvable:$true] %s198
          %s200 = sshll.u32 %s180, 4
          %s201 = int_to_ptr.vmem [resolvable:$true] %s200
          %207 = sst [smem:[#allocation12]] 512
          %s208 = scalar_lea.smem [#allocation12], 1
          %209 = sst [smem:[%s208]] 256
          %s210 = scalar_lea.smem [#allocation12], 2
          %211 = sst [smem:[%s210]] 2
          %s212 = scalar_lea.smem [#allocation12], 3
          %213 = sst [smem:[%s212]] 128
          %s214 = scalar_lea.smem [#allocation12], 4
          %215 = sst [smem:[%s214]] 128
          %s216 = scalar_lea.smem [#allocation12], 5
          %217 = sst [smem:[%s216]] 8
          %219 = dma.general %s199, 4096, %s201, %s177, [#allocation11], [#allocation12], %s197, 0
        $region28: #{tpu_custom_call.1} parent=23 // pred_fallthru
          _
        // Predicated region
        $region29: #{tpu_custom_call.1} parent=23 // pred_check
          %p220 = pneg %p109
        $region30: #{tpu_custom_call.1} parent=23 // pred_check_branch
          %222 = sbr.rel (%p220) target = $region32
        $region31: #{tpu_custom_call.1} parent=23 // pred_region
          #allocation14 [shape = 'u32[6]{0}', space=smem, size = 0x18, scoped, tag = 'DMA stride descriptor']
          %s223 = sand.u32 %s99, 1
          %s224 = scalar_lea.sflag [#allocation9], %s223
          %s225 = sand.u32 %s99, 1
          %s226 = smul.addr %s225, 1024
          %s227 = scalar_lea.vmem [#allocation8], %s226
          %s228 = smul.u32 2, %s21
          %230 = vsyncadd %s224, 0
          %s231 = smul.addr %s228, 8
          %s232 = scalar_lea.hbm %s3, %s231
          %s234 = sshll.u32 1, 14
          %s235 = sxor.u32 4294967295, %s234
          %s237 = sld [smem:[#allocation0]]
          %s238 = sadd.s32 2, %s237
          %s240 = sshll.u32 7, 26
          %s241 = sxor.u32 4294967295, %s240
          %s242 = sand.u32 0, %s241
          %s243 = sshll.u32 %s238, 26
          %s244 = sor.u32 %s242, %s243
          %s245 = sshll.u32 %s232, 4
          %s246 = int_to_ptr.hbm [resolvable:$true] %s245
          %s247 = sshll.u32 %s227, 4
          %s248 = int_to_ptr.vmem [resolvable:$true] %s247
          %254 = sst [smem:[#allocation14]] 512
          %s255 = scalar_lea.smem [#allocation14], 1
          %256 = sst [smem:[%s255]] 256
          %s257 = scalar_lea.smem [#allocation14], 2
          %258 = sst [smem:[%s257]] 2
          %s259 = scalar_lea.smem [#allocation14], 3
          %260 = sst [smem:[%s259]] 128
          %s261 = scalar_lea.smem [#allocation14], 4
          %262 = sst [smem:[%s261]] 128
          %s263 = scalar_lea.smem [#allocation14], 5
          %264 = sst [smem:[%s263]] 8
          %266 = dma.general %s246, 16384, %s248, %s224, [#allocation13], [#allocation14], %s244, 0
        $region32: #{tpu_custom_call.1} parent=23 // pred_fallthru
          _
      $region24: #{tpu_custom_call.1} parent=5 // pred_fallthru
        _
      %p267 = scmp.le.s32.totalorder 1, %s21
      %p268 = scmp.lt.s32.totalorder %s21, 3
      %p269 = pnand %p267, %p268
      %p270 = pneg %p269
      // Predicated region
      $region33: #{tpu_custom_call.1} parent=5 // pred_check
        _
      $region34: #{tpu_custom_call.1} parent=5 // pred_check_branch
        %272 = sbr.rel (%p269) target = $region36
      $region35: #{tpu_custom_call.1} parent=5 // pred_region
        %s273 = ssub.s32 %s21, 1
        // Predicated region
        $region37: #{tpu_custom_call.1} parent=35 // pred_check
          %p274 = pneg %p63
        $region38: #{tpu_custom_call.1} parent=35 // pred_check_branch
          %276 = sbr.rel (%p274) target = $region40
        $region39: #{tpu_custom_call.1} parent=35 // pred_region
          %278 = dma.done [#allocation6], 16
        $region40: #{tpu_custom_call.1} parent=35 // pred_fallthru
          _
        %s279 = sand.u32 %s76, 1
        %s280 = scalar_lea.sflag [#allocation4], %s279
        %s281 = sand.u32 %s76, 1
        %s282 = smul.addr %s281, 256
        %s283 = scalar_lea.vmem [#allocation7], %s282
        // Predicated region
        $region41: #{tpu_custom_call.1} parent=35 // pred_check
          %p284 = pneg %p89
        $region42: #{tpu_custom_call.1} parent=35 // pred_check_branch
          %286 = sbr.rel (%p284) target = $region44
        $region43: #{tpu_custom_call.1} parent=35 // pred_region
          %288 = dma.done %s280, 4096
        $region44: #{tpu_custom_call.1} parent=35 // pred_fallthru
          _
        %s289 = sand.u32 %s102, 1
        %s290 = scalar_lea.sflag [#allocation9], %s289
        %s291 = sand.u32 %s102, 1
        %s292 = smul.addr %s291, 1024
        %s293 = scalar_lea.vmem [#allocation8], %s292
        // Predicated region
        $region45: #{tpu_custom_call.1} parent=35 // pred_check
          %p294 = pneg %p115
        $region46: #{tpu_custom_call.1} parent=35 // pred_check_branch
          %296 = sbr.rel (%p294) target = $region48
        $region47: #{tpu_custom_call.1} parent=35 // pred_region
          %298 = dma.done %s290, 16384
        $region48: #{tpu_custom_call.1} parent=35 // pred_fallthru
          _
        %299 = sfence
        %p300 = pneg %p42
        %p301 = pneg %p39
        %p302 = pneg %p63
        %p303 = pneg %p60
        %s304 = sand.u32 %s76, 1
        %s305 = scalar_lea.sflag [#allocation4], %s304
        %s306 = sand.u32 %s76, 1
        %s307 = smul.addr %s306, 256
        %s308 = scalar_lea.vmem [#allocation7], %s307
        %p309 = pneg %p89
        %p310 = pneg %p86
        %s311 = sand.u32 %s102, 1
        %s312 = scalar_lea.sflag [#allocation9], %s311
        %s313 = sand.u32 %s102, 1
        %s314 = smul.addr %s313, 1024
        %s315 = scalar_lea.vmem [#allocation8], %s314
        %p316 = pneg %p115
        %p317 = pneg %p112
        %p318 = pneg %p141
        %p319 = pneg %p138
        %s320 = sand.u32 %s128, 1
        %s321 = scalar_lea.sflag [#allocation5], %s320
        %s322 = sand.u32 %s128, 1
        %s323 = smul.addr %s322, 2048
        %s324 = scalar_lea.vmem [#allocation10], %s323
        %s325 = smul.u32 2, %s26
        %s326 = smul.u32 2, %s26
        %s327 = smul.u32 2, %s26
        %s328 = sld [smem:[#allocation2]]
        %s329 = sld [smem:[#allocation3]]
        %s330 = sld [smem:[#allocation3 + $0x1]]
        %s331 = sld [smem:[#allocation3 + $0x2]]
        %s332 = sld [smem:[#allocation3 + $0x3]]
        %s333 = sld [smem:[#allocation3 + $0x4]]
        %s334 = sld [smem:[#allocation3 + $0x5]]
        %s335 = sld [smem:[#allocation3 + $0x6]]
        %s336 = sld [smem:[#allocation3 + $0x7]]
        %s337 = sld [smem:[#allocation3 + $0x8]]
        %s338 = sld [smem:[#allocation3 + $0x9]]
        %s339 = sld [smem:[#allocation3 + $0xa]]
        %s340 = sld [smem:[#allocation3 + $0xb]]
        %s341 = sld [smem:[#allocation3 + $0xc]]
        %s342 = sld [smem:[#allocation3 + $0xd]]
        %s343 = sld [smem:[#allocation3 + $0xe]]
        %s344 = sld [smem:[#allocation3 + $0xf]]
        %s345 = sld [smem:[#allocation3 + $0x10]]
        %s346 = sld [smem:[#allocation3 + $0x11]]
        %s347 = sld [smem:[#allocation3 + $0x12]]
        %s348 = sld [smem:[#allocation3 + $0x13]]
        %s349 = sld [smem:[#allocation3 + $0x14]]
        %s350 = sld [smem:[#allocation3 + $0x15]]
        %s351 = sld [smem:[#allocation3 + $0x16]]
        %s352 = sld [smem:[#allocation3 + $0x17]]
        %s353 = sld [smem:[#allocation3 + $0x18]]
        %s354 = sld [smem:[#allocation3 + $0x19]]
        %s355 = sld [smem:[#allocation3 + $0x1a]]
        %s356 = sld [smem:[#allocation3 + $0x1b]]
        %s357 = sld [smem:[#allocation3 + $0x1c]]
        %s358 = sld [smem:[#allocation3 + $0x1d]]
        %s359 = sld [smem:[#allocation3 + $0x1e]]
        %s360 = sld [smem:[#allocation3 + $0x1f]]
        loop: start=0, step=1, limit=2
        $region49: #{tpu_custom_call.1} parent=35 // loop_pre_header
          _
        $region50: #{tpu_custom_call.1} parent=35 // loop_header
          %s362 = sphi 0, %s366
          %p363 = scmp.ge.s32.totalorder %s362, 2
        $region51: #{tpu_custom_call.1} parent=35 // loop_header_branch
          %365 = sbr.rel (%p363) target = $region55
        $region52: #{tpu_custom_call.1} parent=35 // loop_body
          %s367 = smul.u32 %s362, 8
          %s368 = scalar_lea.vmem %s283, %s367 [#allocation7]
          %v369 = vld [vmem:[%s368] sm:$0xff]
          %s370 = sadd.s32 %s367, 16
          %s371 = scalar_lea.vmem %s283, %s370 [#allocation7]
          %v372 = vld [vmem:[%s371] sm:$0xff]
          %s373 = sadd.s32 %s367, 32
          %s374 = scalar_lea.vmem %s283, %s373 [#allocation7]
          %v375 = vld [vmem:[%s374] sm:$0xff]
          %s376 = sadd.s32 %s367, 48
          %s377 = scalar_lea.vmem %s283, %s376 [#allocation7]
          %v378 = vld [vmem:[%s377] sm:$0xff]
          %s379 = sadd.s32 %s367, 64
          %s380 = scalar_lea.vmem %s283, %s379 [#allocation7]
          %v381 = vld [vmem:[%s380] sm:$0xff]
          %s382 = sadd.s32 %s367, 80
          %s383 = scalar_lea.vmem %s283, %s382 [#allocation7]
          %v384 = vld [vmem:[%s383] sm:$0xff]
          %s385 = sadd.s32 %s367, 96
          %s386 = scalar_lea.vmem %s283, %s385 [#allocation7]
          %v387 = vld [vmem:[%s386] sm:$0xff]
          %s388 = sadd.s32 %s367, 112
          %s389 = scalar_lea.vmem %s283, %s388 [#allocation7]
          %v390 = vld [vmem:[%s389] sm:$0xff]
          %s391 = sadd.s32 %s367, 128
          %s392 = scalar_lea.vmem %s283, %s391 [#allocation7]
          %v393 = vld [vmem:[%s392] sm:$0xff]
          %s394 = sadd.s32 %s367, 144
          %s395 = scalar_lea.vmem %s283, %s394 [#allocation7]
          %v396 = vld [vmem:[%s395] sm:$0xff]
          %s397 = sadd.s32 %s367, 160
          %s398 = scalar_lea.vmem %s283, %s397 [#allocation7]
          %v399 = vld [vmem:[%s398] sm:$0xff]
          %s400 = sadd.s32 %s367, 176
          %s401 = scalar_lea.vmem %s283, %s400 [#allocation7]
          %v402 = vld [vmem:[%s401] sm:$0xff]
          %s403 = sadd.s32 %s367, 192
          %s404 = scalar_lea.vmem %s283, %s403 [#allocation7]
          %v405 = vld [vmem:[%s404] sm:$0xff]
          %s406 = sadd.s32 %s367, 208
          %s407 = scalar_lea.vmem %s283, %s406 [#allocation7]
          %v408 = vld [vmem:[%s407] sm:$0xff]
          %s409 = sadd.s32 %s367, 224
          %s410 = scalar_lea.vmem %s283, %s409 [#allocation7]
          %v411 = vld [vmem:[%s410] sm:$0xff]
          %s412 = sadd.s32 %s367, 240
          %s413 = scalar_lea.vmem %s283, %s412 [#allocation7]
          %v414 = vld [vmem:[%s413] sm:$0xff]
          %s415 = scalar_lea.vmem %s293, %s367 [#allocation8]
          %v416 = vld [vmem:[%s415] sm:$0xff]
          %v417 = vmul.f32 %v416, %v369
          %v418 = vmul.f32 %v416, %v372
          %s419 = scalar_lea.vmem %s293, %s370 [#allocation8]
          %v420 = vld [vmem:[%s419] sm:$0xff]
          %v421 = vmul.f32 %v420, %v375
          %v422 = vadd.f32 %v417, %v421
          %v423 = vmul.f32 %v420, %v378
          %v424 = vadd.f32 %v418, %v423
          %s425 = scalar_lea.vmem %s293, %s373 [#allocation8]
          %v426 = vld [vmem:[%s425] sm:$0xff]
          %v427 = vmul.f32 %v426, %v381
          %v428 = vadd.f32 %v422, %v427
          %v429 = vmul.f32 %v426, %v384
          %v430 = vadd.f32 %v424, %v429
          %s431 = scalar_lea.vmem %s293, %s376 [#allocation8]
          %v432 = vld [vmem:[%s431] sm:$0xff]
          %v433 = vmul.f32 %v432, %v387
          %v434 = vadd.f32 %v428, %v433
          %v435 = vmul.f32 %v432, %v390
          %v436 = vadd.f32 %v430, %v435
          %s437 = scalar_lea.vmem %s293, %s379 [#allocation8]
          %v438 = vld [vmem:[%s437] sm:$0xff]
          %v439 = vmul.f32 %v438, %v393
          %v440 = vadd.f32 %v434, %v439
          %v441 = vmul.f32 %v438, %v396
          %v442 = vadd.f32 %v436, %v441
          %s443 = scalar_lea.vmem %s293, %s382 [#allocation8]
          %v444 = vld [vmem:[%s443] sm:$0xff]
          %v445 = vmul.f32 %v444, %v399
          %v446 = vadd.f32 %v440, %v445
          %v447 = vmul.f32 %v444, %v402
          %v448 = vadd.f32 %v442, %v447
          %s449 = scalar_lea.vmem %s293, %s385 [#allocation8]
          %v450 = vld [vmem:[%s449] sm:$0xff]
          %v451 = vmul.f32 %v450, %v405
          %v452 = vadd.f32 %v446, %v451
          %v453 = vmul.f32 %v450, %v408
          %v454 = vadd.f32 %v448, %v453
          %s455 = scalar_lea.vmem %s293, %s388 [#allocation8]
          %v456 = vld [vmem:[%s455] sm:$0xff]
          %v457 = vmul.f32 %v456, %v411
          %v458 = vadd.f32 %v452, %v457
          %v459 = vmul.f32 %v456, %v414
          %v460 = vadd.f32 %v454, %v459
          %vm461 = vcmp.ge.f32.partialorder %v458, 0.0
          %v462 = vstv %s328
          %v463 = vmul.f32 %v462, %v458
          %v464 = vsel %vm461, %v458, %v463
          %vm465 = vcmp.ge.f32.partialorder %v460, 0.0
          %v466 = vmul.f32 %v462, %v460
          %v467 = vsel %vm465, %v460, %v466
          %s468 = scalar_lea.vmem %s293, %s391 [#allocation8]
          %v469 = vld [vmem:[%s468] sm:$0xff]
          %v470 = vmul.f32 %v469, %v369
          %v471 = vmul.f32 %v469, %v372
          %s472 = scalar_lea.vmem %s293, %s394 [#allocation8]
          %v473 = vld [vmem:[%s472] sm:$0xff]
          %v474 = vmul.f32 %v473, %v375
          %v475 = vadd.f32 %v470, %v474
          %v476 = vmul.f32 %v473, %v378
          %v477 = vadd.f32 %v471, %v476
          %s478 = scalar_lea.vmem %s293, %s397 [#allocation8]
          %v479 = vld [vmem:[%s478] sm:$0xff]
          %v480 = vmul.f32 %v479, %v381
          %v481 = vadd.f32 %v475, %v480
          %v482 = vmul.f32 %v479, %v384
          %v483 = vadd.f32 %v477, %v482
          %s484 = scalar_lea.vmem %s293, %s400 [#allocation8]
          %v485 = vld [vmem:[%s484] sm:$0xff]
          %v486 = vmul.f32 %v485, %v387
          %v487 = vadd.f32 %v481, %v486
          %v488 = vmul.f32 %v485, %v390
          %v489 = vadd.f32 %v483, %v488
          %s490 = scalar_lea.vmem %s293, %s403 [#allocation8]
          %v491 = vld [vmem:[%s490] sm:$0xff]
          %v492 = vmul.f32 %v491, %v393
          %v493 = vadd.f32 %v487, %v492
          %v494 = vmul.f32 %v491, %v396
          %v495 = vadd.f32 %v489, %v494
          %s496 = scalar_lea.vmem %s293, %s406 [#allocation8]
          %v497 = vld [vmem:[%s496] sm:$0xff]
          %v498 = vmul.f32 %v497, %v399
          %v499 = vadd.f32 %v493, %v498
          %v500 = vmul.f32 %v497, %v402
          %v501 = vadd.f32 %v495, %v500
          %s502 = scalar_lea.vmem %s293, %s409 [#allocation8]
          %v503 = vld [vmem:[%s502] sm:$0xff]
          %v504 = vmul.f32 %v503, %v405
          %v505 = vadd.f32 %v499, %v504
          %v506 = vmul.f32 %v503, %v408
          %v507 = vadd.f32 %v501, %v506
          %s508 = scalar_lea.vmem %s293, %s412 [#allocation8]
          %v509 = vld [vmem:[%s508] sm:$0xff]
          %v510 = vmul.f32 %v509, %v411
          %v511 = vadd.f32 %v505, %v510
          %v512 = vmul.f32 %v509, %v414
          %v513 = vadd.f32 %v507, %v512
          %vm514 = vcmp.ge.f32.partialorder %v511, 0.0
          %v515 = vmul.f32 %v462, %v511
          %v516 = vsel %vm514, %v511, %v515
          %vm517 = vcmp.ge.f32.partialorder %v513, 0.0
          %v518 = vmul.f32 %v462, %v513
          %v519 = vsel %vm517, %v513, %v518
          %s520 = sadd.s32 %s367, 256
          %s521 = scalar_lea.vmem %s293, %s520 [#allocation8]
          %v522 = vld [vmem:[%s521] sm:$0xff]
          %v523 = vmul.f32 %v522, %v369
          %v524 = vmul.f32 %v522, %v372
          %s525 = sadd.s32 %s367, 272
          %s526 = scalar_lea.vmem %s293, %s525 [#allocation8]
          %v527 = vld [vmem:[%s526] sm:$0xff]
          %v528 = vmul.f32 %v527, %v375
          %v529 = vadd.f32 %v523, %v528
          %v530 = vmul.f32 %v527, %v378
          %v531 = vadd.f32 %v524, %v530
          %s532 = sadd.s32 %s367, 288
          %s533 = scalar_lea.vmem %s293, %s532 [#allocation8]
          %v534 = vld [vmem:[%s533] sm:$0xff]
          %v535 = vmul.f32 %v534, %v381
          %v536 = vadd.f32 %v529, %v535
          %v537 = vmul.f32 %v534, %v384
          %v538 = vadd.f32 %v531, %v537
          %s539 = sadd.s32 %s367, 304
          %s540 = scalar_lea.vmem %s293, %s539 [#allocation8]
          %v541 = vld [vmem:[%s540] sm:$0xff]
          %v542 = vmul.f32 %v541, %v387
          %v543 = vadd.f32 %v536, %v542
          %v544 = vmul.f32 %v541, %v390
          %v545 = vadd.f32 %v538, %v544
          %s546 = sadd.s32 %s367, 320
          %s547 = scalar_lea.vmem %s293, %s546 [#allocation8]
          %v548 = vld [vmem:[%s547] sm:$0xff]
          %v549 = vmul.f32 %v548, %v393
          %v550 = vadd.f32 %v543, %v549
          %v551 = vmul.f32 %v548, %v396
          %v552 = vadd.f32 %v545, %v551
          %s553 = sadd.s32 %s367, 336
          %s554 = scalar_lea.vmem %s293, %s553 [#allocation8]
          %v555 = vld [vmem:[%s554] sm:$0xff]
          %v556 = vmul.f32 %v555, %v399
          %v557 = vadd.f32 %v550, %v556
          %v558 = vmul.f32 %v555, %v402
          %v559 = vadd.f32 %v552, %v558
          %s560 = sadd.s32 %s367, 352
          %s561 = scalar_lea.vmem %s293, %s560 [#allocation8]
          %v562 = vld [vmem:[%s561] sm:$0xff]
          %v563 = vmul.f32 %v562, %v405
          %v564 = vadd.f32 %v557, %v563
          %v565 = vmul.f32 %v562, %v408
          %v566 = vadd.f32 %v559, %v565
          %s567 = sadd.s32 %s367, 368
          %s568 = scalar_lea.vmem %s293, %s567 [#allocation8]
          %v569 = vld [vmem:[%s568] sm:$0xff]
          %v570 = vmul.f32 %v569, %v411
          %v571 = vadd.f32 %v564, %v570
          %v572 = vmul.f32 %v569, %v414
          %v573 = vadd.f32 %v566, %v572
          %vm574 = vcmp.ge.f32.partialorder %v571, 0.0
          %v575 = vmul.f32 %v462, %v571
          %v576 = vsel %vm574, %v571, %v575
          %vm577 = vcmp.ge.f32.partialorder %v573, 0.0
          %v578 = vmul.f32 %v462, %v573
          %v579 = vsel %vm577, %v573, %v578
          %s580 = sadd.s32 %s367, 384
          %s581 = scalar_lea.vmem %s293, %s580 [#allocation8]
          %v582 = vld [vmem:[%s581] sm:$0xff]
          %v583 = vmul.f32 %v582, %v369
          %v584 = vmul.f32 %v582, %v372
          %s585 = sadd.s32 %s367, 400
          %s586 = scalar_lea.vmem %s293, %s585 [#allocation8]
          %v587 = vld [vmem:[%s586] sm:$0xff]
          %v588 = vmul.f32 %v587, %v375
          %v589 = vadd.f32 %v583, %v588
          %v590 = vmul.f32 %v587, %v378
          %v591 = vadd.f32 %v584, %v590
          %s592 = sadd.s32 %s367, 416
          %s593 = scalar_lea.vmem %s293, %s592 [#allocation8]
          %v594 = vld [vmem:[%s593] sm:$0xff]
          %v595 = vmul.f32 %v594, %v381
          %v596 = vadd.f32 %v589, %v595
          %v597 = vmul.f32 %v594, %v384
          %v598 = vadd.f32 %v591, %v597
          %s599 = sadd.s32 %s367, 432
          %s600 = scalar_lea.vmem %s293, %s599 [#allocation8]
          %v601 = vld [vmem:[%s600] sm:$0xff]
          %v602 = vmul.f32 %v601, %v387
          %v603 = vadd.f32 %v596, %v602
          %v604 = vmul.f32 %v601, %v390
          %v605 = vadd.f32 %v598, %v604
          %s606 = sadd.s32 %s367, 448
          %s607 = scalar_lea.vmem %s293, %s606 [#allocation8]
          %v608 = vld [vmem:[%s607] sm:$0xff]
          %v609 = vmul.f32 %v608, %v393
          %v610 = vadd.f32 %v603, %v609
          %v611 = vmul.f32 %v608, %v396
          %v612 = vadd.f32 %v605, %v611
          %s613 = sadd.s32 %s367, 464
          %s614 = scalar_lea.vmem %s293, %s613 [#allocation8]
          %v615 = vld [vmem:[%s614] sm:$0xff]
          %v616 = vmul.f32 %v615, %v399
          %v617 = vadd.f32 %v610, %v616
          %v618 = vmul.f32 %v615, %v402
          %v619 = vadd.f32 %v612, %v618
          %s620 = sadd.s32 %s367, 480
          %s621 = scalar_lea.vmem %s293, %s620 [#allocation8]
          %v622 = vld [vmem:[%s621] sm:$0xff]
          %v623 = vmul.f32 %v622, %v405
          %v624 = vadd.f32 %v617, %v623
          %v625 = vmul.f32 %v622, %v408
          %v626 = vadd.f32 %v619, %v625
          %s627 = sadd.s32 %s367, 496
          %s628 = scalar_lea.vmem %s293, %s627 [#allocation8]
          %v629 = vld [vmem:[%s628] sm:$0xff]
          %v630 = vmul.f32 %v629, %v411
          %v631 = vadd.f32 %v624, %v630
          %v632 = vmul.f32 %v629, %v414
          %v633 = vadd.f32 %v626, %v632
          %vm634 = vcmp.ge.f32.partialorder %v631, 0.0
          %v635 = vmul.f32 %v462, %v631
          %v636 = vsel %vm634, %v631, %v635
          %vm637 = vcmp.ge.f32.partialorder %v633, 0.0
          %v638 = vmul.f32 %v462, %v633
          %v639 = vsel %vm637, %v633, %v638
          %s640 = sadd.s32 %s367, 512
          %s641 = scalar_lea.vmem %s293, %s640 [#allocation8]
          %v642 = vld [vmem:[%s641] sm:$0xff]
          %v643 = vmul.f32 %v642, %v369
          %v644 = vmul.f32 %v642, %v372
          %s645 = sadd.s32 %s367, 528
          %s646 = scalar_lea.vmem %s293, %s645 [#allocation8]
          %v647 = vld [vmem:[%s646] sm:$0xff]
          %v648 = vmul.f32 %v647, %v375
          %v649 = vadd.f32 %v643, %v648
          %v650 = vmul.f32 %v647, %v378
          %v651 = vadd.f32 %v644, %v650
          %s652 = sadd.s32 %s367, 544
          %s653 = scalar_lea.vmem %s293, %s652 [#allocation8]
          %v654 = vld [vmem:[%s653] sm:$0xff]
          %v655 = vmul.f32 %v654, %v381
          %v656 = vadd.f32 %v649, %v655
          %v657 = vmul.f32 %v654, %v384
          %v658 = vadd.f32 %v651, %v657
          %s659 = sadd.s32 %s367, 560
          %s660 = scalar_lea.vmem %s293, %s659 [#allocation8]
          %v661 = vld [vmem:[%s660] sm:$0xff]
          %v662 = vmul.f32 %v661, %v387
          %v663 = vadd.f32 %v656, %v662
          %v664 = vmul.f32 %v661, %v390
          %v665 = vadd.f32 %v658, %v664
          %s666 = sadd.s32 %s367, 576
          %s667 = scalar_lea.vmem %s293, %s666 [#allocation8]
          %v668 = vld [vmem:[%s667] sm:$0xff]
          %v669 = vmul.f32 %v668, %v393
          %v670 = vadd.f32 %v663, %v669
          %v671 = vmul.f32 %v668, %v396
          %v672 = vadd.f32 %v665, %v671
          %s673 = sadd.s32 %s367, 592
          %s674 = scalar_lea.vmem %s293, %s673 [#allocation8]
          %v675 = vld [vmem:[%s674] sm:$0xff]
          %v676 = vmul.f32 %v675, %v399
          %v677 = vadd.f32 %v670, %v676
          %v678 = vmul.f32 %v675, %v402
          %v679 = vadd.f32 %v672, %v678
          %s680 = sadd.s32 %s367, 608
          %s681 = scalar_lea.vmem %s293, %s680 [#allocation8]
          %v682 = vld [vmem:[%s681] sm:$0xff]
          %v683 = vmul.f32 %v682, %v405
          %v684 = vadd.f32 %v677, %v683
          %v685 = vmul.f32 %v682, %v408
          %v686 = vadd.f32 %v679, %v685
          %s687 = sadd.s32 %s367, 624
          %s688 = scalar_lea.vmem %s293, %s687 [#allocation8]
          %v689 = vld [vmem:[%s688] sm:$0xff]
          %v690 = vmul.f32 %v689, %v411
          %v691 = vadd.f32 %v684, %v690
          %v692 = vmul.f32 %v689, %v414
          %v693 = vadd.f32 %v686, %v692
          %vm694 = vcmp.ge.f32.partialorder %v691, 0.0
          %v695 = vmul.f32 %v462, %v691
          %v696 = vsel %vm694, %v691, %v695
          %vm697 = vcmp.ge.f32.partialorder %v693, 0.0
          %v698 = vmul.f32 %v462, %v693
          %v699 = vsel %vm697, %v693, %v698
          %s700 = sadd.s32 %s367, 640
          %s701 = scalar_lea.vmem %s293, %s700 [#allocation8]
          %v702 = vld [vmem:[%s701] sm:$0xff]
          %v703 = vmul.f32 %v702, %v369
          %v704 = vmul.f32 %v702, %v372
          %s705 = sadd.s32 %s367, 656
          %s706 = scalar_lea.vmem %s293, %s705 [#allocation8]
          %v707 = vld [vmem:[%s706] sm:$0xff]
          %v708 = vmul.f32 %v707, %v375
          %v709 = vadd.f32 %v703, %v708
          %v710 = vmul.f32 %v707, %v378
          %v711 = vadd.f32 %v704, %v710
          %s712 = sadd.s32 %s367, 672
          %s713 = scalar_lea.vmem %s293, %s712 [#allocation8]
          %v714 = vld [vmem:[%s713] sm:$0xff]
          %v715 = vmul.f32 %v714, %v381
          %v716 = vadd.f32 %v709, %v715
          %v717 = vmul.f32 %v714, %v384
          %v718 = vadd.f32 %v711, %v717
          %s719 = sadd.s32 %s367, 688
          %s720 = scalar_lea.vmem %s293, %s719 [#allocation8]
          %v721 = vld [vmem:[%s720] sm:$0xff]
          %v722 = vmul.f32 %v721, %v387
          %v723 = vadd.f32 %v716, %v722
          %v724 = vmul.f32 %v721, %v390
          %v725 = vadd.f32 %v718, %v724
          %s726 = sadd.s32 %s367, 704
          %s727 = scalar_lea.vmem %s293, %s726 [#allocation8]
          %v728 = vld [vmem:[%s727] sm:$0xff]
          %v729 = vmul.f32 %v728, %v393
          %v730 = vadd.f32 %v723, %v729
          %v731 = vmul.f32 %v728, %v396
          %v732 = vadd.f32 %v725, %v731
          %s733 = sadd.s32 %s367, 720
          %s734 = scalar_lea.vmem %s293, %s733 [#allocation8]
          %v735 = vld [vmem:[%s734] sm:$0xff]
          %v736 = vmul.f32 %v735, %v399
          %v737 = vadd.f32 %v730, %v736
          %v738 = vmul.f32 %v735, %v402
          %v739 = vadd.f32 %v732, %v738
          %s740 = sadd.s32 %s367, 736
          %s741 = scalar_lea.vmem %s293, %s740 [#allocation8]
          %v742 = vld [vmem:[%s741] sm:$0xff]
          %v743 = vmul.f32 %v742, %v405
          %v744 = vadd.f32 %v737, %v743
          %v745 = vmul.f32 %v742, %v408
          %v746 = vadd.f32 %v739, %v745
          %s747 = sadd.s32 %s367, 752
          %s748 = scalar_lea.vmem %s293, %s747 [#allocation8]
          %v749 = vld [vmem:[%s748] sm:$0xff]
          %v750 = vmul.f32 %v749, %v411
          %v751 = vadd.f32 %v744, %v750
          %v752 = vmul.f32 %v749, %v414
          %v753 = vadd.f32 %v746, %v752
          %vm754 = vcmp.ge.f32.partialorder %v751, 0.0
          %v755 = vmul.f32 %v462, %v751
          %v756 = vsel %vm754, %v751, %v755
          %vm757 = vcmp.ge.f32.partialorder %v753, 0.0
          %v758 = vmul.f32 %v462, %v753
          %v759 = vsel %vm757, %v753, %v758
          %s760 = sadd.s32 %s367, 768
          %s761 = scalar_lea.vmem %s293, %s760 [#allocation8]
          %v762 = vld [vmem:[%s761] sm:$0xff]
          %v763 = vmul.f32 %v762, %v369
          %v764 = vmul.f32 %v762, %v372
          %s765 = sadd.s32 %s367, 784
          %s766 = scalar_lea.vmem %s293, %s765 [#allocation8]
          %v767 = vld [vmem:[%s766] sm:$0xff]
          %v768 = vmul.f32 %v767, %v375
          %v769 = vadd.f32 %v763, %v768
          %v770 = vmul.f32 %v767, %v378
          %v771 = vadd.f32 %v764, %v770
          %s772 = sadd.s32 %s367, 800
          %s773 = scalar_lea.vmem %s293, %s772 [#allocation8]
          %v774 = vld [vmem:[%s773] sm:$0xff]
          %v775 = vmul.f32 %v774, %v381
          %v776 = vadd.f32 %v769, %v775
          %v777 = vmul.f32 %v774, %v384
          %v778 = vadd.f32 %v771, %v777
          %s779 = sadd.s32 %s367, 816
          %s780 = scalar_lea.vmem %s293, %s779 [#allocation8]
          %v781 = vld [vmem:[%s780] sm:$0xff]
          %v782 = vmul.f32 %v781, %v387
          %v783 = vadd.f32 %v776, %v782
          %v784 = vmul.f32 %v781, %v390
          %v785 = vadd.f32 %v778, %v784
          %s786 = sadd.s32 %s367, 832
          %s787 = scalar_lea.vmem %s293, %s786 [#allocation8]
          %v788 = vld [vmem:[%s787] sm:$0xff]
          %v789 = vmul.f32 %v788, %v393
          %v790 = vadd.f32 %v783, %v789
          %v791 = vmul.f32 %v788, %v396
          %v792 = vadd.f32 %v785, %v791
          %s793 = sadd.s32 %s367, 848
          %s794 = scalar_lea.vmem %s293, %s793 [#allocation8]
          %v795 = vld [vmem:[%s794] sm:$0xff]
          %v796 = vmul.f32 %v795, %v399
          %v797 = vadd.f32 %v790, %v796
          %v798 = vmul.f32 %v795, %v402
          %v799 = vadd.f32 %v792, %v798
          %s800 = sadd.s32 %s367, 864
          %s801 = scalar_lea.vmem %s293, %s800 [#allocation8]
          %v802 = vld [vmem:[%s801] sm:$0xff]
          %v803 = vmul.f32 %v802, %v405
          %v804 = vadd.f32 %v797, %v803
          %v805 = vmul.f32 %v802, %v408
          %v806 = vadd.f32 %v799, %v805
          %s807 = sadd.s32 %s367, 880
          %s808 = scalar_lea.vmem %s293, %s807 [#allocation8]
          %v809 = vld [vmem:[%s808] sm:$0xff]
          %v810 = vmul.f32 %v809, %v411
          %v811 = vadd.f32 %v804, %v810
          %v812 = vmul.f32 %v809, %v414
          %v813 = vadd.f32 %v806, %v812
          %vm814 = vcmp.ge.f32.partialorder %v811, 0.0
          %v815 = vmul.f32 %v462, %v811
          %v816 = vsel %vm814, %v811, %v815
          %vm817 = vcmp.ge.f32.partialorder %v813, 0.0
          %v818 = vmul.f32 %v462, %v813
          %v819 = vsel %vm817, %v813, %v818
          %s820 = sadd.s32 %s367, 896
          %s821 = scalar_lea.vmem %s293, %s820 [#allocation8]
          %v822 = vld [vmem:[%s821] sm:$0xff]
          %v823 = vmul.f32 %v822, %v369
          %v824 = vmul.f32 %v822, %v372
          %s825 = sadd.s32 %s367, 912
          %s826 = scalar_lea.vmem %s293, %s825 [#allocation8]
          %v827 = vld [vmem:[%s826] sm:$0xff]
          %v828 = vmul.f32 %v827, %v375
          %v829 = vadd.f32 %v823, %v828
          %v830 = vmul.f32 %v827, %v378
          %v831 = vadd.f32 %v824, %v830
          %s832 = sadd.s32 %s367, 928
          %s833 = scalar_lea.vmem %s293, %s832 [#allocation8]
          %v834 = vld [vmem:[%s833] sm:$0xff]
          %v835 = vmul.f32 %v834, %v381
          %v836 = vadd.f32 %v829, %v835
          %v837 = vmul.f32 %v834, %v384
          %v838 = vadd.f32 %v831, %v837
          %s839 = sadd.s32 %s367, 944
          %s840 = scalar_lea.vmem %s293, %s839 [#allocation8]
          %v841 = vld [vmem:[%s840] sm:$0xff]
          %v842 = vmul.f32 %v841, %v387
          %v843 = vadd.f32 %v836, %v842
          %v844 = vmul.f32 %v841, %v390
          %v845 = vadd.f32 %v838, %v844
          %s846 = sadd.s32 %s367, 960
          %s847 = scalar_lea.vmem %s293, %s846 [#allocation8]
          %v848 = vld [vmem:[%s847] sm:$0xff]
          %v849 = vmul.f32 %v848, %v393
          %v850 = vadd.f32 %v843, %v849
          %v851 = vmul.f32 %v848, %v396
          %v852 = vadd.f32 %v845, %v851
          %s853 = sadd.s32 %s367, 976
          %s854 = scalar_lea.vmem %s293, %s853 [#allocation8]
          %v855 = vld [vmem:[%s854] sm:$0xff]
          %v856 = vmul.f32 %v855, %v399
          %v857 = vadd.f32 %v850, %v856
          %v858 = vmul.f32 %v855, %v402
          %v859 = vadd.f32 %v852, %v858
          %s860 = sadd.s32 %s367, 992
          %s861 = scalar_lea.vmem %s293, %s860 [#allocation8]
          %v862 = vld [vmem:[%s861] sm:$0xff]
          %v863 = vmul.f32 %v862, %v405
          %v864 = vadd.f32 %v857, %v863
          %v865 = vmul.f32 %v862, %v408
          %v866 = vadd.f32 %v859, %v865
          %s867 = sadd.s32 %s367, 1008
          %s868 = scalar_lea.vmem %s293, %s867 [#allocation8]
          %v869 = vld [vmem:[%s868] sm:$0xff]
          %v870 = vmul.f32 %v869, %v411
          %v871 = vadd.f32 %v864, %v870
          %v872 = vmul.f32 %v869, %v414
          %v873 = vadd.f32 %v866, %v872
          %vm874 = vcmp.ge.f32.partialorder %v871, 0.0
          %v875 = vmul.f32 %v462, %v871
          %v876 = vsel %vm874, %v871, %v875
          %vm877 = vcmp.ge.f32.partialorder %v873, 0.0
          %v878 = vmul.f32 %v462, %v873
          %v879 = vsel %vm877, %v873, %v878
          %vm880 = vcmp.ge.f32.partialorder %v369, 0.0
          %v881 = vmul.f32 %v462, %v369
          %v882 = vsel %vm880, %v369, %v881
          %vm883 = vcmp.ge.f32.partialorder %v372, 0.0
          %v884 = vmul.f32 %v462, %v372
          %v885 = vsel %vm883, %v372, %v884
          %v886 = vmul.f32 %v416, %v882
          %v887 = vmul.f32 %v416, %v885
          %v888 = vmul.f32 %v420, %v516
          %v889 = vadd.f32 %v886, %v888
          %v890 = vmul.f32 %v420, %v519
          %v891 = vadd.f32 %v887, %v890
          %v892 = vmul.f32 %v426, %v576
          %v893 = vadd.f32 %v889, %v892
          %v894 = vmul.f32 %v426, %v579
          %v895 = vadd.f32 %v891, %v894
          %v896 = vmul.f32 %v432, %v636
          %v897 = vadd.f32 %v893, %v896
          %v898 = vmul.f32 %v432, %v639
          %v899 = vadd.f32 %v895, %v898
          %v900 = vmul.f32 %v438, %v696
          %v901 = vadd.f32 %v897, %v900
          %v902 = vmul.f32 %v438, %v699
          %v903 = vadd.f32 %v899, %v902
          %v904 = vmul.f32 %v444, %v756
          %v905 = vadd.f32 %v901, %v904
          %v906 = vmul.f32 %v444, %v759
          %v907 = vadd.f32 %v903, %v906
          %v908 = vmul.f32 %v450, %v816
          %v909 = vadd.f32 %v905, %v908
          %v910 = vmul.f32 %v450, %v819
          %v911 = vadd.f32 %v907, %v910
          %v912 = vmul.f32 %v456, %v876
          %v913 = vadd.f32 %v909, %v912
          %v914 = vmul.f32 %v456, %v879
          %v915 = vadd.f32 %v911, %v914
          %v916 = vstv %s329
          %v917 = vmul.f32 %v913, %v916
          %v918 = vstv %s330
          %v919 = vmul.f32 %v915, %v918
          %v920 = vadd.f32 %v917, %v919
          %vm921 = vcmp.ge.f32.partialorder %v920, 0.0
          %v922 = vmul.f32 %v462, %v920
          %v923 = vsel %vm921, %v920, %v922
          %s924 = scalar_lea.vmem %s324, %s367 [#allocation10]
          %925 = vst [vmem:[%s924] sm:$0xff] %v923
          %v926 = vstv %s331
          %v927 = vmul.f32 %v913, %v926
          %v928 = vstv %s332
          %v929 = vmul.f32 %v915, %v928
          %v930 = vadd.f32 %v927, %v929
          %vm931 = vcmp.ge.f32.partialorder %v930, 0.0
          %v932 = vmul.f32 %v462, %v930
          %v933 = vsel %vm931, %v930, %v932
          %s934 = scalar_lea.vmem %s324, %s370 [#allocation10]
          %935 = vst [vmem:[%s934] sm:$0xff] %v933
          %v936 = vstv %s333
          %v937 = vmul.f32 %v913, %v936
          %v938 = vstv %s334
          %v939 = vmul.f32 %v915, %v938
          %v940 = vadd.f32 %v937, %v939
          %vm941 = vcmp.ge.f32.partialorder %v940, 0.0
          %v942 = vmul.f32 %v462, %v940
          %v943 = vsel %vm941, %v940, %v942
          %s944 = scalar_lea.vmem %s324, %s373 [#allocation10]
          %945 = vst [vmem:[%s944] sm:$0xff] %v943
          %v946 = vstv %s335
          %v947 = vmul.f32 %v913, %v946
          %v948 = vstv %s336
          %v949 = vmul.f32 %v915, %v948
          %v950 = vadd.f32 %v947, %v949
          %vm951 = vcmp.ge.f32.partialorder %v950, 0.0
          %v952 = vmul.f32 %v462, %v950
          %v953 = vsel %vm951, %v950, %v952
          %s954 = scalar_lea.vmem %s324, %s376 [#allocation10]
          %955 = vst [vmem:[%s954] sm:$0xff] %v953
          %v956 = vstv %s337
          %v957 = vmul.f32 %v913, %v956
          %v958 = vstv %s338
          %v959 = vmul.f32 %v915, %v958
          %v960 = vadd.f32 %v957, %v959
          %vm961 = vcmp.ge.f32.partialorder %v960, 0.0
          %v962 = vmul.f32 %v462, %v960
          %v963 = vsel %vm961, %v960, %v962
          %s964 = scalar_lea.vmem %s324, %s379 [#allocation10]
          %965 = vst [vmem:[%s964] sm:$0xff] %v963
          %v966 = vstv %s339
          %v967 = vmul.f32 %v913, %v966
          %v968 = vstv %s340
          %v969 = vmul.f32 %v915, %v968
          %v970 = vadd.f32 %v967, %v969
          %vm971 = vcmp.ge.f32.partialorder %v970, 0.0
          %v972 = vmul.f32 %v462, %v970
          %v973 = vsel %vm971, %v970, %v972
          %s974 = scalar_lea.vmem %s324, %s382 [#allocation10]
          %975 = vst [vmem:[%s974] sm:$0xff] %v973
          %v976 = vstv %s341
          %v977 = vmul.f32 %v913, %v976
          %v978 = vstv %s342
          %v979 = vmul.f32 %v915, %v978
          %v980 = vadd.f32 %v977, %v979
          %vm981 = vcmp.ge.f32.partialorder %v980, 0.0
          %v982 = vmul.f32 %v462, %v980
          %v983 = vsel %vm981, %v980, %v982
          %s984 = scalar_lea.vmem %s324, %s385 [#allocation10]
          %985 = vst [vmem:[%s984] sm:$0xff] %v983
          %v986 = vstv %s343
          %v987 = vmul.f32 %v913, %v986
          %v988 = vstv %s344
          %v989 = vmul.f32 %v915, %v988
          %v990 = vadd.f32 %v987, %v989
          %vm991 = vcmp.ge.f32.partialorder %v990, 0.0
          %v992 = vmul.f32 %v462, %v990
          %v993 = vsel %vm991, %v990, %v992
          %s994 = scalar_lea.vmem %s324, %s388 [#allocation10]
          %995 = vst [vmem:[%s994] sm:$0xff] %v993
          %v996 = vstv %s345
          %v997 = vmul.f32 %v913, %v996
          %v998 = vstv %s346
          %v999 = vmul.f32 %v915, %v998
          %v1000 = vadd.f32 %v997, %v999
          %vm1001 = vcmp.ge.f32.partialorder %v1000, 0.0
          %v1002 = vmul.f32 %v462, %v1000
          %v1003 = vsel %vm1001, %v1000, %v1002
          %s1004 = scalar_lea.vmem %s324, %s391 [#allocation10]
          %1005 = vst [vmem:[%s1004] sm:$0xff] %v1003
          %v1006 = vstv %s347
          %v1007 = vmul.f32 %v913, %v1006
          %v1008 = vstv %s348
          %v1009 = vmul.f32 %v915, %v1008
          %v1010 = vadd.f32 %v1007, %v1009
          %vm1011 = vcmp.ge.f32.partialorder %v1010, 0.0
          %v1012 = vmul.f32 %v462, %v1010
          %v1013 = vsel %vm1011, %v1010, %v1012
          %s1014 = scalar_lea.vmem %s324, %s394 [#allocation10]
          %1015 = vst [vmem:[%s1014] sm:$0xff] %v1013
          %v1016 = vstv %s349
          %v1017 = vmul.f32 %v913, %v1016
          %v1018 = vstv %s350
          %v1019 = vmul.f32 %v915, %v1018
          %v1020 = vadd.f32 %v1017, %v1019
          %vm1021 = vcmp.ge.f32.partialorder %v1020, 0.0
          %v1022 = vmul.f32 %v462, %v1020
          %v1023 = vsel %vm1021, %v1020, %v1022
          %s1024 = scalar_lea.vmem %s324, %s397 [#allocation10]
          %1025 = vst [vmem:[%s1024] sm:$0xff] %v1023
          %v1026 = vstv %s351
          %v1027 = vmul.f32 %v913, %v1026
          %v1028 = vstv %s352
          %v1029 = vmul.f32 %v915, %v1028
          %v1030 = vadd.f32 %v1027, %v1029
          %vm1031 = vcmp.ge.f32.partialorder %v1030, 0.0
          %v1032 = vmul.f32 %v462, %v1030
          %v1033 = vsel %vm1031, %v1030, %v1032
          %s1034 = scalar_lea.vmem %s324, %s400 [#allocation10]
          %1035 = vst [vmem:[%s1034] sm:$0xff] %v1033
          %v1036 = vstv %s353
          %v1037 = vmul.f32 %v913, %v1036
          %v1038 = vstv %s354
          %v1039 = vmul.f32 %v915, %v1038
          %v1040 = vadd.f32 %v1037, %v1039
          %vm1041 = vcmp.ge.f32.partialorder %v1040, 0.0
          %v1042 = vmul.f32 %v462, %v1040
          %v1043 = vsel %vm1041, %v1040, %v1042
          %s1044 = scalar_lea.vmem %s324, %s403 [#allocation10]
          %1045 = vst [vmem:[%s1044] sm:$0xff] %v1043
          %v1046 = vstv %s355
          %v1047 = vmul.f32 %v913, %v1046
          %v1048 = vstv %s356
          %v1049 = vmul.f32 %v915, %v1048
          %v1050 = vadd.f32 %v1047, %v1049
          %vm1051 = vcmp.ge.f32.partialorder %v1050, 0.0
          %v1052 = vmul.f32 %v462, %v1050
          %v1053 = vsel %vm1051, %v1050, %v1052
          %s1054 = scalar_lea.vmem %s324, %s406 [#allocation10]
          %1055 = vst [vmem:[%s1054] sm:$0xff] %v1053
          %v1056 = vstv %s357
          %v1057 = vmul.f32 %v913, %v1056
          %v1058 = vstv %s358
          %v1059 = vmul.f32 %v915, %v1058
          %v1060 = vadd.f32 %v1057, %v1059
          %vm1061 = vcmp.ge.f32.partialorder %v1060, 0.0
          %v1062 = vmul.f32 %v462, %v1060
          %v1063 = vsel %vm1061, %v1060, %v1062
          %s1064 = scalar_lea.vmem %s324, %s409 [#allocation10]
          %1065 = vst [vmem:[%s1064] sm:$0xff] %v1063
          %v1066 = vstv %s359
          %v1067 = vmul.f32 %v913, %v1066
          %v1068 = vstv %s360
          %v1069 = vmul.f32 %v915, %v1068
          %v1070 = vadd.f32 %v1067, %v1069
          %vm1071 = vcmp.ge.f32.partialorder %v1070, 0.0
          %v1072 = vmul.f32 %v462, %v1070
          %v1073 = vsel %vm1071, %v1070, %v1072
          %s1074 = scalar_lea.vmem %s324, %s412 [#allocation10]
          %1075 = vst [vmem:[%s1074] sm:$0xff] %v1073
          %vm1076 = vcmp.ge.f32.partialorder %v375, 0.0
          %v1077 = vmul.f32 %v462, %v375
          %v1078 = vsel %vm1076, %v375, %v1077
          %vm1079 = vcmp.ge.f32.partialorder %v378, 0.0
          %v1080 = vmul.f32 %v462, %v378
          %v1081 = vsel %vm1079, %v378, %v1080
          %v1082 = vld [vmem:[%s468] sm:$0xff]
          %v1083 = vmul.f32 %v1082, %v464
          %v1084 = vmul.f32 %v1082, %v467
          %v1085 = vld [vmem:[%s472] sm:$0xff]
          %v1086 = vmul.f32 %v1085, %v1078
          %v1087 = vadd.f32 %v1083, %v1086
          %v1088 = vmul.f32 %v1085, %v1081
          %v1089 = vadd.f32 %v1084, %v1088
          %v1090 = vld [vmem:[%s478] sm:$0xff]
          %v1091 = vmul.f32 %v1090, %v576
          %v1092 = vadd.f32 %v1087, %v1091
          %v1093 = vmul.f32 %v1090, %v579
          %v1094 = vadd.f32 %v1089, %v1093
          %v1095 = vld [vmem:[%s484] sm:$0xff]
          %v1096 = vmul.f32 %v1095, %v636
          %v1097 = vadd.f32 %v1092, %v1096
          %v1098 = vmul.f32 %v1095, %v639
          %v1099 = vadd.f32 %v1094, %v1098
          %v1100 = vld [vmem:[%s490] sm:$0xff]
          %v1101 = vmul.f32 %v1100, %v696
          %v1102 = vadd.f32 %v1097, %v1101
          %v1103 = vmul.f32 %v1100, %v699
          %v1104 = vadd.f32 %v1099, %v1103
          %v1105 = vld [vmem:[%s496] sm:$0xff]
          %v1106 = vmul.f32 %v1105, %v756
          %v1107 = vadd.f32 %v1102, %v1106
          %v1108 = vmul.f32 %v1105, %v759
          %v1109 = vadd.f32 %v1104, %v1108
          %v1110 = vld [vmem:[%s502] sm:$0xff]
          %v1111 = vmul.f32 %v1110, %v816
          %v1112 = vadd.f32 %v1107, %v1111
          %v1113 = vmul.f32 %v1110, %v819
          %v1114 = vadd.f32 %v1109, %v1113
          %v1115 = vld [vmem:[%s508] sm:$0xff]
          %v1116 = vmul.f32 %v1115, %v876
          %v1117 = vadd.f32 %v1112, %v1116
          %v1118 = vmul.f32 %v1115, %v879
          %v1119 = vadd.f32 %v1114, %v1118
          %v1120 = vmul.f32 %v1117, %v916
          %v1121 = vmul.f32 %v1119, %v918
          %v1122 = vadd.f32 %v1120, %v1121
          %vm1123 = vcmp.ge.f32.partialorder %v1122, 0.0
          %v1124 = vmul.f32 %v462, %v1122
          %v1125 = vsel %vm1123, %v1122, %v1124
          %s1126 = scalar_lea.vmem %s324, %s520 [#allocation10]
          %1127 = vst [vmem:[%s1126] sm:$0xff] %v1125
          %v1128 = vmul.f32 %v1117, %v926
          %v1129 = vmul.f32 %v1119, %v928
          %v1130 = vadd.f32 %v1128, %v1129
          %vm1131 = vcmp.ge.f32.partialorder %v1130, 0.0
          %v1132 = vmul.f32 %v462, %v1130
          %v1133 = vsel %vm1131, %v1130, %v1132
          %s1134 = scalar_lea.vmem %s324, %s525 [#allocation10]
          %1135 = vst [vmem:[%s1134] sm:$0xff] %v1133
          %v1136 = vmul.f32 %v1117, %v936
          %v1137 = vmul.f32 %v1119, %v938
          %v1138 = vadd.f32 %v1136, %v1137
          %vm1139 = vcmp.ge.f32.partialorder %v1138, 0.0
          %v1140 = vmul.f32 %v462, %v1138
          %v1141 = vsel %vm1139, %v1138, %v1140
          %s1142 = scalar_lea.vmem %s324, %s532 [#allocation10]
          %1143 = vst [vmem:[%s1142] sm:$0xff] %v1141
          %v1144 = vmul.f32 %v1117, %v946
          %v1145 = vmul.f32 %v1119, %v948
          %v1146 = vadd.f32 %v1144, %v1145
          %vm1147 = vcmp.ge.f32.partialorder %v1146, 0.0
          %v1148 = vmul.f32 %v462, %v1146
          %v1149 = vsel %vm1147, %v1146, %v1148
          %s1150 = scalar_lea.vmem %s324, %s539 [#allocation10]
          %1151 = vst [vmem:[%s1150] sm:$0xff] %v1149
          %v1152 = vmul.f32 %v1117, %v956
          %v1153 = vmul.f32 %v1119, %v958
          %v1154 = vadd.f32 %v1152, %v1153
          %vm1155 = vcmp.ge.f32.partialorder %v1154, 0.0
          %v1156 = vmul.f32 %v462, %v1154
          %v1157 = vsel %vm1155, %v1154, %v1156
          %s1158 = scalar_lea.vmem %s324, %s546 [#allocation10]
          %1159 = vst [vmem:[%s1158] sm:$0xff] %v1157
          %v1160 = vmul.f32 %v1117, %v966
          %v1161 = vmul.f32 %v1119, %v968
          %v1162 = vadd.f32 %v1160, %v1161
          %vm1163 = vcmp.ge.f32.partialorder %v1162, 0.0
          %v1164 = vmul.f32 %v462, %v1162
          %v1165 = vsel %vm1163, %v1162, %v1164
          %s1166 = scalar_lea.vmem %s324, %s553 [#allocation10]
          %1167 = vst [vmem:[%s1166] sm:$0xff] %v1165
          %v1168 = vmul.f32 %v1117, %v976
          %v1169 = vmul.f32 %v1119, %v978
          %v1170 = vadd.f32 %v1168, %v1169
          %vm1171 = vcmp.ge.f32.partialorder %v1170, 0.0
          %v1172 = vmul.f32 %v462, %v1170
          %v1173 = vsel %vm1171, %v1170, %v1172
          %s1174 = scalar_lea.vmem %s324, %s560 [#allocation10]
          %1175 = vst [vmem:[%s1174] sm:$0xff] %v1173
          %v1176 = vmul.f32 %v1117, %v986
          %v1177 = vmul.f32 %v1119, %v988
          %v1178 = vadd.f32 %v1176, %v1177
          %vm1179 = vcmp.ge.f32.partialorder %v1178, 0.0
          %v1180 = vmul.f32 %v462, %v1178
          %v1181 = vsel %vm1179, %v1178, %v1180
          %s1182 = scalar_lea.vmem %s324, %s567 [#allocation10]
          %1183 = vst [vmem:[%s1182] sm:$0xff] %v1181
          %v1184 = vmul.f32 %v1117, %v996
          %v1185 = vmul.f32 %v1119, %v998
          %v1186 = vadd.f32 %v1184, %v1185
          %vm1187 = vcmp.ge.f32.partialorder %v1186, 0.0
          %v1188 = vmul.f32 %v462, %v1186
          %v1189 = vsel %vm1187, %v1186, %v1188
          %s1190 = scalar_lea.vmem %s324, %s580 [#allocation10]
          %1191 = vst [vmem:[%s1190] sm:$0xff] %v1189
          %v1192 = vmul.f32 %v1117, %v1006
          %v1193 = vmul.f32 %v1119, %v1008
          %v1194 = vadd.f32 %v1192, %v1193
          %vm1195 = vcmp.ge.f32.partialorder %v1194, 0.0
          %v1196 = vmul.f32 %v462, %v1194
          %v1197 = vsel %vm1195, %v1194, %v1196
          %s1198 = scalar_lea.vmem %s324, %s585 [#allocation10]
          %1199 = vst [vmem:[%s1198] sm:$0xff] %v1197
          %v1200 = vmul.f32 %v1117, %v1016
          %v1201 = vmul.f32 %v1119, %v1018
          %v1202 = vadd.f32 %v1200, %v1201
          %vm1203 = vcmp.ge.f32.partialorder %v1202, 0.0
          %v1204 = vmul.f32 %v462, %v1202
          %v1205 = vsel %vm1203, %v1202, %v1204
          %s1206 = scalar_lea.vmem %s324, %s592 [#allocation10]
          %1207 = vst [vmem:[%s1206] sm:$0xff] %v1205
          %v1208 = vmul.f32 %v1117, %v1026
          %v1209 = vmul.f32 %v1119, %v1028
          %v1210 = vadd.f32 %v1208, %v1209
          %vm1211 = vcmp.ge.f32.partialorder %v1210, 0.0
          %v1212 = vmul.f32 %v462, %v1210
          %v1213 = vsel %vm1211, %v1210, %v1212
          %s1214 = scalar_lea.vmem %s324, %s599 [#allocation10]
          %1215 = vst [vmem:[%s1214] sm:$0xff] %v1213
          %v1216 = vmul.f32 %v1117, %v1036
          %v1217 = vmul.f32 %v1119, %v1038
          %v1218 = vadd.f32 %v1216, %v1217
          %vm1219 = vcmp.ge.f32.partialorder %v1218, 0.0
          %v1220 = vmul.f32 %v462, %v1218
          %v1221 = vsel %vm1219, %v1218, %v1220
          %s1222 = scalar_lea.vmem %s324, %s606 [#allocation10]
          %1223 = vst [vmem:[%s1222] sm:$0xff] %v1221
          %v1224 = vmul.f32 %v1117, %v1046
          %v1225 = vmul.f32 %v1119, %v1048
          %v1226 = vadd.f32 %v1224, %v1225
          %vm1227 = vcmp.ge.f32.partialorder %v1226, 0.0
          %v1228 = vmul.f32 %v462, %v1226
          %v1229 = vsel %vm1227, %v1226, %v1228
          %s1230 = scalar_lea.vmem %s324, %s613 [#allocation10]
          %1231 = vst [vmem:[%s1230] sm:$0xff] %v1229
          %v1232 = vmul.f32 %v1117, %v1056
          %v1233 = vmul.f32 %v1119, %v1058
          %v1234 = vadd.f32 %v1232, %v1233
          %vm1235 = vcmp.ge.f32.partialorder %v1234, 0.0
          %v1236 = vmul.f32 %v462, %v1234
          %v1237 = vsel %vm1235, %v1234, %v1236
          %s1238 = scalar_lea.vmem %s324, %s620 [#allocation10]
          %1239 = vst [vmem:[%s1238] sm:$0xff] %v1237
          %v1240 = vmul.f32 %v1117, %v1066
          %v1241 = vmul.f32 %v1119, %v1068
          %v1242 = vadd.f32 %v1240, %v1241
          %vm1243 = vcmp.ge.f32.partialorder %v1242, 0.0
          %v1244 = vmul.f32 %v462, %v1242
          %v1245 = vsel %vm1243, %v1242, %v1244
          %s1246 = scalar_lea.vmem %s324, %s627 [#allocation10]
          %1247 = vst [vmem:[%s1246] sm:$0xff] %v1245
          %vm1248 = vcmp.ge.f32.partialorder %v381, 0.0
          %v1249 = vmul.f32 %v462, %v381
          %v1250 = vsel %vm1248, %v381, %v1249
          %vm1251 = vcmp.ge.f32.partialorder %v384, 0.0
          %v1252 = vmul.f32 %v462, %v384
          %v1253 = vsel %vm1251, %v384, %v1252
          %v1254 = vld [vmem:[%s521] sm:$0xff]
          %v1255 = vmul.f32 %v1254, %v464
          %v1256 = vmul.f32 %v1254, %v467
          %v1257 = vld [vmem:[%s526] sm:$0xff]
          %v1258 = vmul.f32 %v1257, %v516
          %v1259 = vadd.f32 %v1255, %v1258
          %v1260 = vmul.f32 %v1257, %v519
          %v1261 = vadd.f32 %v1256, %v1260
          %v1262 = vld [vmem:[%s533] sm:$0xff]
          %v1263 = vmul.f32 %v1262, %v1250
          %v1264 = vadd.f32 %v1259, %v1263
          %v1265 = vmul.f32 %v1262, %v1253
          %v1266 = vadd.f32 %v1261, %v1265
          %v1267 = vld [vmem:[%s540] sm:$0xff]
          %v1268 = vmul.f32 %v1267, %v636
          %v1269 = vadd.f32 %v1264, %v1268
          %v1270 = vmul.f32 %v1267, %v639
          %v1271 = vadd.f32 %v1266, %v1270
          %v1272 = vld [vmem:[%s547] sm:$0xff]
          %v1273 = vmul.f32 %v1272, %v696
          %v1274 = vadd.f32 %v1269, %v1273
          %v1275 = vmul.f32 %v1272, %v699
          %v1276 = vadd.f32 %v1271, %v1275
          %v1277 = vld [vmem:[%s554] sm:$0xff]
          %v1278 = vmul.f32 %v1277, %v756
          %v1279 = vadd.f32 %v1274, %v1278
          %v1280 = vmul.f32 %v1277, %v759
          %v1281 = vadd.f32 %v1276, %v1280
          %v1282 = vld [vmem:[%s561] sm:$0xff]
          %v1283 = vmul.f32 %v1282, %v816
          %v1284 = vadd.f32 %v1279, %v1283
          %v1285 = vmul.f32 %v1282, %v819
          %v1286 = vadd.f32 %v1281, %v1285
          %v1287 = vld [vmem:[%s568] sm:$0xff]
          %v1288 = vmul.f32 %v1287, %v876
          %v1289 = vadd.f32 %v1284, %v1288
          %v1290 = vmul.f32 %v1287, %v879
          %v1291 = vadd.f32 %v1286, %v1290
          %v1292 = vmul.f32 %v1289, %v916
          %v1293 = vmul.f32 %v1291, %v918
          %v1294 = vadd.f32 %v1292, %v1293
          %vm1295 = vcmp.ge.f32.partialorder %v1294, 0.0
          %v1296 = vmul.f32 %v462, %v1294
          %v1297 = vsel %vm1295, %v1294, %v1296
          %s1298 = scalar_lea.vmem %s324, %s640 [#allocation10]
          %1299 = vst [vmem:[%s1298] sm:$0xff] %v1297
          %v1300 = vmul.f32 %v1289, %v926
          %v1301 = vmul.f32 %v1291, %v928
          %v1302 = vadd.f32 %v1300, %v1301
          %vm1303 = vcmp.ge.f32.partialorder %v1302, 0.0
          %v1304 = vmul.f32 %v462, %v1302
          %v1305 = vsel %vm1303, %v1302, %v1304
          %s1306 = scalar_lea.vmem %s324, %s645 [#allocation10]
          %1307 = vst [vmem:[%s1306] sm:$0xff] %v1305
          %v1308 = vmul.f32 %v1289, %v936
          %v1309 = vmul.f32 %v1291, %v938
          %v1310 = vadd.f32 %v1308, %v1309
          %vm1311 = vcmp.ge.f32.partialorder %v1310, 0.0
          %v1312 = vmul.f32 %v462, %v1310
          %v1313 = vsel %vm1311, %v1310, %v1312
          %s1314 = scalar_lea.vmem %s324, %s652 [#allocation10]
          %1315 = vst [vmem:[%s1314] sm:$0xff] %v1313
          %v1316 = vmul.f32 %v1289, %v946
          %v1317 = vmul.f32 %v1291, %v948
          %v1318 = vadd.f32 %v1316, %v1317
          %vm1319 = vcmp.ge.f32.partialorder %v1318, 0.0
          %v1320 = vmul.f32 %v462, %v1318
          %v1321 = vsel %vm1319, %v1318, %v1320
          %s1322 = scalar_lea.vmem %s324, %s659 [#allocation10]
          %1323 = vst [vmem:[%s1322] sm:$0xff] %v1321
          %v1324 = vmul.f32 %v1289, %v956
          %v1325 = vmul.f32 %v1291, %v958
          %v1326 = vadd.f32 %v1324, %v1325
          %vm1327 = vcmp.ge.f32.partialorder %v1326, 0.0
          %v1328 = vmul.f32 %v462, %v1326
          %v1329 = vsel %vm1327, %v1326, %v1328
          %s1330 = scalar_lea.vmem %s324, %s666 [#allocation10]
          %1331 = vst [vmem:[%s1330] sm:$0xff] %v1329
          %v1332 = vmul.f32 %v1289, %v966
          %v1333 = vmul.f32 %v1291, %v968
          %v1334 = vadd.f32 %v1332, %v1333
          %vm1335 = vcmp.ge.f32.partialorder %v1334, 0.0
          %v1336 = vmul.f32 %v462, %v1334
          %v1337 = vsel %vm1335, %v1334, %v1336
          %s1338 = scalar_lea.vmem %s324, %s673 [#allocation10]
          %1339 = vst [vmem:[%s1338] sm:$0xff] %v1337
          %v1340 = vmul.f32 %v1289, %v976
          %v1341 = vmul.f32 %v1291, %v978
          %v1342 = vadd.f32 %v1340, %v1341
          %vm1343 = vcmp.ge.f32.partialorder %v1342, 0.0
          %v1344 = vmul.f32 %v462, %v1342
          %v1345 = vsel %vm1343, %v1342, %v1344
          %s1346 = scalar_lea.vmem %s324, %s680 [#allocation10]
          %1347 = vst [vmem:[%s1346] sm:$0xff] %v1345
          %v1348 = vmul.f32 %v1289, %v986
          %v1349 = vmul.f32 %v1291, %v988
          %v1350 = vadd.f32 %v1348, %v1349
          %vm1351 = vcmp.ge.f32.partialorder %v1350, 0.0
          %v1352 = vmul.f32 %v462, %v1350
          %v1353 = vsel %vm1351, %v1350, %v1352
          %s1354 = scalar_lea.vmem %s324, %s687 [#allocation10]
          %1355 = vst [vmem:[%s1354] sm:$0xff] %v1353
          %v1356 = vmul.f32 %v1289, %v996
          %v1357 = vmul.f32 %v1291, %v998
          %v1358 = vadd.f32 %v1356, %v1357
          %vm1359 = vcmp.ge.f32.partialorder %v1358, 0.0
          %v1360 = vmul.f32 %v462, %v1358
          %v1361 = vsel %vm1359, %v1358, %v1360
          %s1362 = scalar_lea.vmem %s324, %s700 [#allocation10]
          %1363 = vst [vmem:[%s1362] sm:$0xff] %v1361
          %v1364 = vmul.f32 %v1289, %v1006
          %v1365 = vmul.f32 %v1291, %v1008
          %v1366 = vadd.f32 %v1364, %v1365
          %vm1367 = vcmp.ge.f32.partialorder %v1366, 0.0
          %v1368 = vmul.f32 %v462, %v1366
          %v1369 = vsel %vm1367, %v1366, %v1368
          %s1370 = scalar_lea.vmem %s324, %s705 [#allocation10]
          %1371 = vst [vmem:[%s1370] sm:$0xff] %v1369
          %v1372 = vmul.f32 %v1289, %v1016
          %v1373 = vmul.f32 %v1291, %v1018
          %v1374 = vadd.f32 %v1372, %v1373
          %vm1375 = vcmp.ge.f32.partialorder %v1374, 0.0
          %v1376 = vmul.f32 %v462, %v1374
          %v1377 = vsel %vm1375, %v1374, %v1376
          %s1378 = scalar_lea.vmem %s324, %s712 [#allocation10]
          %1379 = vst [vmem:[%s1378] sm:$0xff] %v1377
          %v1380 = vmul.f32 %v1289, %v1026
          %v1381 = vmul.f32 %v1291, %v1028
          %v1382 = vadd.f32 %v1380, %v1381
          %vm1383 = vcmp.ge.f32.partialorder %v1382, 0.0
          %v1384 = vmul.f32 %v462, %v1382
          %v1385 = vsel %vm1383, %v1382, %v1384
          %s1386 = scalar_lea.vmem %s324, %s719 [#allocation10]
          %1387 = vst [vmem:[%s1386] sm:$0xff] %v1385
          %v1388 = vmul.f32 %v1289, %v1036
          %v1389 = vmul.f32 %v1291, %v1038
          %v1390 = vadd.f32 %v1388, %v1389
          %vm1391 = vcmp.ge.f32.partialorder %v1390, 0.0
          %v1392 = vmul.f32 %v462, %v1390
          %v1393 = vsel %vm1391, %v1390, %v1392
          %s1394 = scalar_lea.vmem %s324, %s726 [#allocation10]
          %1395 = vst [vmem:[%s1394] sm:$0xff] %v1393
          %v1396 = vmul.f32 %v1289, %v1046
          %v1397 = vmul.f32 %v1291, %v1048
          %v1398 = vadd.f32 %v1396, %v1397
          %vm1399 = vcmp.ge.f32.partialorder %v1398, 0.0
          %v1400 = vmul.f32 %v462, %v1398
          %v1401 = vsel %vm1399, %v1398, %v1400
          %s1402 = scalar_lea.vmem %s324, %s733 [#allocation10]
          %1403 = vst [vmem:[%s1402] sm:$0xff] %v1401
          %v1404 = vmul.f32 %v1289, %v1056
          %v1405 = vmul.f32 %v1291, %v1058
          %v1406 = vadd.f32 %v1404, %v1405
          %vm1407 = vcmp.ge.f32.partialorder %v1406, 0.0
          %v1408 = vmul.f32 %v462, %v1406
          %v1409 = vsel %vm1407, %v1406, %v1408
          %s1410 = scalar_lea.vmem %s324, %s740 [#allocation10]
          %1411 = vst [vmem:[%s1410] sm:$0xff] %v1409
          %v1412 = vmul.f32 %v1289, %v1066
          %v1413 = vmul.f32 %v1291, %v1068
          %v1414 = vadd.f32 %v1412, %v1413
          %vm1415 = vcmp.ge.f32.partialorder %v1414, 0.0
          %v1416 = vmul.f32 %v462, %v1414
          %v1417 = vsel %vm1415, %v1414, %v1416
          %s1418 = scalar_lea.vmem %s324, %s747 [#allocation10]
          %1419 = vst [vmem:[%s1418] sm:$0xff] %v1417
          %vm1420 = vcmp.ge.f32.partialorder %v387, 0.0
          %v1421 = vmul.f32 %v462, %v387
          %v1422 = vsel %vm1420, %v387, %v1421
          %vm1423 = vcmp.ge.f32.partialorder %v390, 0.0
          %v1424 = vmul.f32 %v462, %v390
          %v1425 = vsel %vm1423, %v390, %v1424
          %v1426 = vld [vmem:[%s581] sm:$0xff]
          %v1427 = vmul.f32 %v1426, %v464
          %v1428 = vmul.f32 %v1426, %v467
          %v1429 = vld [vmem:[%s586] sm:$0xff]
          %v1430 = vmul.f32 %v1429, %v516
          %v1431 = vadd.f32 %v1427, %v1430
          %v1432 = vmul.f32 %v1429, %v519
          %v1433 = vadd.f32 %v1428, %v1432
          %v1434 = vld [vmem:[%s593] sm:$0xff]
          %v1435 = vmul.f32 %v1434, %v576
          %v1436 = vadd.f32 %v1431, %v1435
          %v1437 = vmul.f32 %v1434, %v579
          %v1438 = vadd.f32 %v1433, %v1437
          %v1439 = vld [vmem:[%s600] sm:$0xff]
          %v1440 = vmul.f32 %v1439, %v1422
          %v1441 = vadd.f32 %v1436, %v1440
          %v1442 = vmul.f32 %v1439, %v1425
          %v1443 = vadd.f32 %v1438, %v1442
          %v1444 = vld [vmem:[%s607] sm:$0xff]
          %v1445 = vmul.f32 %v1444, %v696
          %v1446 = vadd.f32 %v1441, %v1445
          %v1447 = vmul.f32 %v1444, %v699
          %v1448 = vadd.f32 %v1443, %v1447
          %v1449 = vld [vmem:[%s614] sm:$0xff]
          %v1450 = vmul.f32 %v1449, %v756
          %v1451 = vadd.f32 %v1446, %v1450
          %v1452 = vmul.f32 %v1449, %v759
          %v1453 = vadd.f32 %v1448, %v1452
          %v1454 = vld [vmem:[%s621] sm:$0xff]
          %v1455 = vmul.f32 %v1454, %v816
          %v1456 = vadd.f32 %v1451, %v1455
          %v1457 = vmul.f32 %v1454, %v819
          %v1458 = vadd.f32 %v1453, %v1457
          %v1459 = vld [vmem:[%s628] sm:$0xff]
          %v1460 = vmul.f32 %v1459, %v876
          %v1461 = vadd.f32 %v1456, %v1460
          %v1462 = vmul.f32 %v1459, %v879
          %v1463 = vadd.f32 %v1458, %v1462
          %v1464 = vmul.f32 %v1461, %v916
          %v1465 = vmul.f32 %v1463, %v918
          %v1466 = vadd.f32 %v1464, %v1465
          %vm1467 = vcmp.ge.f32.partialorder %v1466, 0.0
          %v1468 = vmul.f32 %v462, %v1466
          %v1469 = vsel %vm1467, %v1466, %v1468
          %s1470 = scalar_lea.vmem %s324, %s760 [#allocation10]
          %1471 = vst [vmem:[%s1470] sm:$0xff] %v1469
          %v1472 = vmul.f32 %v1461, %v926
          %v1473 = vmul.f32 %v1463, %v928
          %v1474 = vadd.f32 %v1472, %v1473
          %vm1475 = vcmp.ge.f32.partialorder %v1474, 0.0
          %v1476 = vmul.f32 %v462, %v1474
          %v1477 = vsel %vm1475, %v1474, %v1476
          %s1478 = scalar_lea.vmem %s324, %s765 [#allocation10]
          %1479 = vst [vmem:[%s1478] sm:$0xff] %v1477
          %v1480 = vmul.f32 %v1461, %v936
          %v1481 = vmul.f32 %v1463, %v938
          %v1482 = vadd.f32 %v1480, %v1481
          %vm1483 = vcmp.ge.f32.partialorder %v1482, 0.0
          %v1484 = vmul.f32 %v462, %v1482
          %v1485 = vsel %vm1483, %v1482, %v1484
          %s1486 = scalar_lea.vmem %s324, %s772 [#allocation10]
          %1487 = vst [vmem:[%s1486] sm:$0xff] %v1485
          %v1488 = vmul.f32 %v1461, %v946
          %v1489 = vmul.f32 %v1463, %v948
          %v1490 = vadd.f32 %v1488, %v1489
          %vm1491 = vcmp.ge.f32.partialorder %v1490, 0.0
          %v1492 = vmul.f32 %v462, %v1490
          %v1493 = vsel %vm1491, %v1490, %v1492
          %s1494 = scalar_lea.vmem %s324, %s779 [#allocation10]
          %1495 = vst [vmem:[%s1494] sm:$0xff] %v1493
          %v1496 = vmul.f32 %v1461, %v956
          %v1497 = vmul.f32 %v1463, %v958
          %v1498 = vadd.f32 %v1496, %v1497
          %vm1499 = vcmp.ge.f32.partialorder %v1498, 0.0
          %v1500 = vmul.f32 %v462, %v1498
          %v1501 = vsel %vm1499, %v1498, %v1500
          %s1502 = scalar_lea.vmem %s324, %s786 [#allocation10]
          %1503 = vst [vmem:[%s1502] sm:$0xff] %v1501
          %v1504 = vmul.f32 %v1461, %v966
          %v1505 = vmul.f32 %v1463, %v968
          %v1506 = vadd.f32 %v1504, %v1505
          %vm1507 = vcmp.ge.f32.partialorder %v1506, 0.0
          %v1508 = vmul.f32 %v462, %v1506
          %v1509 = vsel %vm1507, %v1506, %v1508
          %s1510 = scalar_lea.vmem %s324, %s793 [#allocation10]
          %1511 = vst [vmem:[%s1510] sm:$0xff] %v1509
          %v1512 = vmul.f32 %v1461, %v976
          %v1513 = vmul.f32 %v1463, %v978
          %v1514 = vadd.f32 %v1512, %v1513
          %vm1515 = vcmp.ge.f32.partialorder %v1514, 0.0
          %v1516 = vmul.f32 %v462, %v1514
          %v1517 = vsel %vm1515, %v1514, %v1516
          %s1518 = scalar_lea.vmem %s324, %s800 [#allocation10]
          %1519 = vst [vmem:[%s1518] sm:$0xff] %v1517
          %v1520 = vmul.f32 %v1461, %v986
          %v1521 = vmul.f32 %v1463, %v988
          %v1522 = vadd.f32 %v1520, %v1521
          %vm1523 = vcmp.ge.f32.partialorder %v1522, 0.0
          %v1524 = vmul.f32 %v462, %v1522
          %v1525 = vsel %vm1523, %v1522, %v1524
          %s1526 = scalar_lea.vmem %s324, %s807 [#allocation10]
          %1527 = vst [vmem:[%s1526] sm:$0xff] %v1525
          %v1528 = vmul.f32 %v1461, %v996
          %v1529 = vmul.f32 %v1463, %v998
          %v1530 = vadd.f32 %v1528, %v1529
          %vm1531 = vcmp.ge.f32.partialorder %v1530, 0.0
          %v1532 = vmul.f32 %v462, %v1530
          %v1533 = vsel %vm1531, %v1530, %v1532
          %s1534 = scalar_lea.vmem %s324, %s820 [#allocation10]
          %1535 = vst [vmem:[%s1534] sm:$0xff] %v1533
          %v1536 = vmul.f32 %v1461, %v1006
          %v1537 = vmul.f32 %v1463, %v1008
          %v1538 = vadd.f32 %v1536, %v1537
          %vm1539 = vcmp.ge.f32.partialorder %v1538, 0.0
          %v1540 = vmul.f32 %v462, %v1538
          %v1541 = vsel %vm1539, %v1538, %v1540
          %s1542 = scalar_lea.vmem %s324, %s825 [#allocation10]
          %1543 = vst [vmem:[%s1542] sm:$0xff] %v1541
          %v1544 = vmul.f32 %v1461, %v1016
          %v1545 = vmul.f32 %v1463, %v1018
          %v1546 = vadd.f32 %v1544, %v1545
          %vm1547 = vcmp.ge.f32.partialorder %v1546, 0.0
          %v1548 = vmul.f32 %v462, %v1546
          %v1549 = vsel %vm1547, %v1546, %v1548
          %s1550 = scalar_lea.vmem %s324, %s832 [#allocation10]
          %1551 = vst [vmem:[%s1550] sm:$0xff] %v1549
          %v1552 = vmul.f32 %v1461, %v1026
          %v1553 = vmul.f32 %v1463, %v1028
          %v1554 = vadd.f32 %v1552, %v1553
          %vm1555 = vcmp.ge.f32.partialorder %v1554, 0.0
          %v1556 = vmul.f32 %v462, %v1554
          %v1557 = vsel %vm1555, %v1554, %v1556
          %s1558 = scalar_lea.vmem %s324, %s839 [#allocation10]
          %1559 = vst [vmem:[%s1558] sm:$0xff] %v1557
          %v1560 = vmul.f32 %v1461, %v1036
          %v1561 = vmul.f32 %v1463, %v1038
          %v1562 = vadd.f32 %v1560, %v1561
          %vm1563 = vcmp.ge.f32.partialorder %v1562, 0.0
          %v1564 = vmul.f32 %v462, %v1562
          %v1565 = vsel %vm1563, %v1562, %v1564
          %s1566 = scalar_lea.vmem %s324, %s846 [#allocation10]
          %1567 = vst [vmem:[%s1566] sm:$0xff] %v1565
          %v1568 = vmul.f32 %v1461, %v1046
          %v1569 = vmul.f32 %v1463, %v1048
          %v1570 = vadd.f32 %v1568, %v1569
          %vm1571 = vcmp.ge.f32.partialorder %v1570, 0.0
          %v1572 = vmul.f32 %v462, %v1570
          %v1573 = vsel %vm1571, %v1570, %v1572
          %s1574 = scalar_lea.vmem %s324, %s853 [#allocation10]
          %1575 = vst [vmem:[%s1574] sm:$0xff] %v1573
          %v1576 = vmul.f32 %v1461, %v1056
          %v1577 = vmul.f32 %v1463, %v1058
          %v1578 = vadd.f32 %v1576, %v1577
          %vm1579 = vcmp.ge.f32.partialorder %v1578, 0.0
          %v1580 = vmul.f32 %v462, %v1578
          %v1581 = vsel %vm1579, %v1578, %v1580
          %s1582 = scalar_lea.vmem %s324, %s860 [#allocation10]
          %1583 = vst [vmem:[%s1582] sm:$0xff] %v1581
          %v1584 = vmul.f32 %v1461, %v1066
          %v1585 = vmul.f32 %v1463, %v1068
          %v1586 = vadd.f32 %v1584, %v1585
          %vm1587 = vcmp.ge.f32.partialorder %v1586, 0.0
          %v1588 = vmul.f32 %v462, %v1586
          %v1589 = vsel %vm1587, %v1586, %v1588
          %s1590 = scalar_lea.vmem %s324, %s867 [#allocation10]
          %1591 = vst [vmem:[%s1590] sm:$0xff] %v1589
          %vm1592 = vcmp.ge.f32.partialorder %v393, 0.0
          %v1593 = vmul.f32 %v462, %v393
          %v1594 = vsel %vm1592, %v393, %v1593
          %vm1595 = vcmp.ge.f32.partialorder %v396, 0.0
          %v1596 = vmul.f32 %v462, %v396
          %v1597 = vsel %vm1595, %v396, %v1596
          %v1598 = vld [vmem:[%s641] sm:$0xff]
          %v1599 = vmul.f32 %v1598, %v464
          %v1600 = vmul.f32 %v1598, %v467
          %v1601 = vld [vmem:[%s646] sm:$0xff]
          %v1602 = vmul.f32 %v1601, %v516
          %v1603 = vadd.f32 %v1599, %v1602
          %v1604 = vmul.f32 %v1601, %v519
          %v1605 = vadd.f32 %v1600, %v1604
          %v1606 = vld [vmem:[%s653] sm:$0xff]
          %v1607 = vmul.f32 %v1606, %v576
          %v1608 = vadd.f32 %v1603, %v1607
          %v1609 = vmul.f32 %v1606, %v579
          %v1610 = vadd.f32 %v1605, %v1609
          %v1611 = vld [vmem:[%s660] sm:$0xff]
          %v1612 = vmul.f32 %v1611, %v636
          %v1613 = vadd.f32 %v1608, %v1612
          %v1614 = vmul.f32 %v1611, %v639
          %v1615 = vadd.f32 %v1610, %v1614
          %v1616 = vld [vmem:[%s667] sm:$0xff]
          %v1617 = vmul.f32 %v1616, %v1594
          %v1618 = vadd.f32 %v1613, %v1617
          %v1619 = vmul.f32 %v1616, %v1597
          %v1620 = vadd.f32 %v1615, %v1619
          %v1621 = vld [vmem:[%s674] sm:$0xff]
          %v1622 = vmul.f32 %v1621, %v756
          %v1623 = vadd.f32 %v1618, %v1622
          %v1624 = vmul.f32 %v1621, %v759
          %v1625 = vadd.f32 %v1620, %v1624
          %v1626 = vld [vmem:[%s681] sm:$0xff]
          %v1627 = vmul.f32 %v1626, %v816
          %v1628 = vadd.f32 %v1623, %v1627
          %v1629 = vmul.f32 %v1626, %v819
          %v1630 = vadd.f32 %v1625, %v1629
          %v1631 = vld [vmem:[%s688] sm:$0xff]
          %v1632 = vmul.f32 %v1631, %v876
          %v1633 = vadd.f32 %v1628, %v1632
          %v1634 = vmul.f32 %v1631, %v879
          %v1635 = vadd.f32 %v1630, %v1634
          %v1636 = vmul.f32 %v1633, %v916
          %v1637 = vmul.f32 %v1635, %v918
          %v1638 = vadd.f32 %v1636, %v1637
          %vm1639 = vcmp.ge.f32.partialorder %v1638, 0.0
          %v1640 = vmul.f32 %v462, %v1638
          %v1641 = vsel %vm1639, %v1638, %v1640
          %s1642 = sadd.s32 %s367, 1024
          %s1643 = scalar_lea.vmem %s324, %s1642 [#allocation10]
          %1644 = vst [vmem:[%s1643] sm:$0xff] %v1641
          %v1645 = vmul.f32 %v1633, %v926
          %v1646 = vmul.f32 %v1635, %v928
          %v1647 = vadd.f32 %v1645, %v1646
          %vm1648 = vcmp.ge.f32.partialorder %v1647, 0.0
          %v1649 = vmul.f32 %v462, %v1647
          %v1650 = vsel %vm1648, %v1647, %v1649
          %s1651 = sadd.s32 %s367, 1040
          %s1652 = scalar_lea.vmem %s324, %s1651 [#allocation10]
          %1653 = vst [vmem:[%s1652] sm:$0xff] %v1650
          %v1654 = vmul.f32 %v1633, %v936
          %v1655 = vmul.f32 %v1635, %v938
          %v1656 = vadd.f32 %v1654, %v1655
          %vm1657 = vcmp.ge.f32.partialorder %v1656, 0.0
          %v1658 = vmul.f32 %v462, %v1656
          %v1659 = vsel %vm1657, %v1656, %v1658
          %s1660 = sadd.s32 %s367, 1056
          %s1661 = scalar_lea.vmem %s324, %s1660 [#allocation10]
          %1662 = vst [vmem:[%s1661] sm:$0xff] %v1659
          %v1663 = vmul.f32 %v1633, %v946
          %v1664 = vmul.f32 %v1635, %v948
          %v1665 = vadd.f32 %v1663, %v1664
          %vm1666 = vcmp.ge.f32.partialorder %v1665, 0.0
          %v1667 = vmul.f32 %v462, %v1665
          %v1668 = vsel %vm1666, %v1665, %v1667
          %s1669 = sadd.s32 %s367, 1072
          %s1670 = scalar_lea.vmem %s324, %s1669 [#allocation10]
          %1671 = vst [vmem:[%s1670] sm:$0xff] %v1668
          %v1672 = vmul.f32 %v1633, %v956
          %v1673 = vmul.f32 %v1635, %v958
          %v1674 = vadd.f32 %v1672, %v1673
          %vm1675 = vcmp.ge.f32.partialorder %v1674, 0.0
          %v1676 = vmul.f32 %v462, %v1674
          %v1677 = vsel %vm1675, %v1674, %v1676
          %s1678 = sadd.s32 %s367, 1088
          %s1679 = scalar_lea.vmem %s324, %s1678 [#allocation10]
          %1680 = vst [vmem:[%s1679] sm:$0xff] %v1677
          %v1681 = vmul.f32 %v1633, %v966
          %v1682 = vmul.f32 %v1635, %v968
          %v1683 = vadd.f32 %v1681, %v1682
          %vm1684 = vcmp.ge.f32.partialorder %v1683, 0.0
          %v1685 = vmul.f32 %v462, %v1683
          %v1686 = vsel %vm1684, %v1683, %v1685
          %s1687 = sadd.s32 %s367, 1104
          %s1688 = scalar_lea.vmem %s324, %s1687 [#allocation10]
          %1689 = vst [vmem:[%s1688] sm:$0xff] %v1686
          %v1690 = vmul.f32 %v1633, %v976
          %v1691 = vmul.f32 %v1635, %v978
          %v1692 = vadd.f32 %v1690, %v1691
          %vm1693 = vcmp.ge.f32.partialorder %v1692, 0.0
          %v1694 = vmul.f32 %v462, %v1692
          %v1695 = vsel %vm1693, %v1692, %v1694
          %s1696 = sadd.s32 %s367, 1120
          %s1697 = scalar_lea.vmem %s324, %s1696 [#allocation10]
          %1698 = vst [vmem:[%s1697] sm:$0xff] %v1695
          %v1699 = vmul.f32 %v1633, %v986
          %v1700 = vmul.f32 %v1635, %v988
          %v1701 = vadd.f32 %v1699, %v1700
          %vm1702 = vcmp.ge.f32.partialorder %v1701, 0.0
          %v1703 = vmul.f32 %v462, %v1701
          %v1704 = vsel %vm1702, %v1701, %v1703
          %s1705 = sadd.s32 %s367, 1136
          %s1706 = scalar_lea.vmem %s324, %s1705 [#allocation10]
          %1707 = vst [vmem:[%s1706] sm:$0xff] %v1704
          %v1708 = vmul.f32 %v1633, %v996
          %v1709 = vmul.f32 %v1635, %v998
          %v1710 = vadd.f32 %v1708, %v1709
          %vm1711 = vcmp.ge.f32.partialorder %v1710, 0.0
          %v1712 = vmul.f32 %v462, %v1710
          %v1713 = vsel %vm1711, %v1710, %v1712
          %s1714 = sadd.s32 %s367, 1152
          %s1715 = scalar_lea.vmem %s324, %s1714 [#allocation10]
          %1716 = vst [vmem:[%s1715] sm:$0xff] %v1713
          %v1717 = vmul.f32 %v1633, %v1006
          %v1718 = vmul.f32 %v1635, %v1008
          %v1719 = vadd.f32 %v1717, %v1718
          %vm1720 = vcmp.ge.f32.partialorder %v1719, 0.0
          %v1721 = vmul.f32 %v462, %v1719
          %v1722 = vsel %vm1720, %v1719, %v1721
          %s1723 = sadd.s32 %s367, 1168
          %s1724 = scalar_lea.vmem %s324, %s1723 [#allocation10]
          %1725 = vst [vmem:[%s1724] sm:$0xff] %v1722
          %v1726 = vmul.f32 %v1633, %v1016
          %v1727 = vmul.f32 %v1635, %v1018
          %v1728 = vadd.f32 %v1726, %v1727
          %vm1729 = vcmp.ge.f32.partialorder %v1728, 0.0
          %v1730 = vmul.f32 %v462, %v1728
          %v1731 = vsel %vm1729, %v1728, %v1730
          %s1732 = sadd.s32 %s367, 1184
          %s1733 = scalar_lea.vmem %s324, %s1732 [#allocation10]
          %1734 = vst [vmem:[%s1733] sm:$0xff] %v1731
          %v1735 = vmul.f32 %v1633, %v1026
          %v1736 = vmul.f32 %v1635, %v1028
          %v1737 = vadd.f32 %v1735, %v1736
          %vm1738 = vcmp.ge.f32.partialorder %v1737, 0.0
          %v1739 = vmul.f32 %v462, %v1737
          %v1740 = vsel %vm1738, %v1737, %v1739
          %s1741 = sadd.s32 %s367, 1200
          %s1742 = scalar_lea.vmem %s324, %s1741 [#allocation10]
          %1743 = vst [vmem:[%s1742] sm:$0xff] %v1740
          %v1744 = vmul.f32 %v1633, %v1036
          %v1745 = vmul.f32 %v1635, %v1038
          %v1746 = vadd.f32 %v1744, %v1745
          %vm1747 = vcmp.ge.f32.partialorder %v1746, 0.0
          %v1748 = vmul.f32 %v462, %v1746
          %v1749 = vsel %vm1747, %v1746, %v1748
          %s1750 = sadd.s32 %s367, 1216
          %s1751 = scalar_lea.vmem %s324, %s1750 [#allocation10]
          %1752 = vst [vmem:[%s1751] sm:$0xff] %v1749
          %v1753 = vmul.f32 %v1633, %v1046
          %v1754 = vmul.f32 %v1635, %v1048
          %v1755 = vadd.f32 %v1753, %v1754
          %vm1756 = vcmp.ge.f32.partialorder %v1755, 0.0
          %v1757 = vmul.f32 %v462, %v1755
          %v1758 = vsel %vm1756, %v1755, %v1757
          %s1759 = sadd.s32 %s367, 1232
          %s1760 = scalar_lea.vmem %s324, %s1759 [#allocation10]
          %1761 = vst [vmem:[%s1760] sm:$0xff] %v1758
          %v1762 = vmul.f32 %v1633, %v1056
          %v1763 = vmul.f32 %v1635, %v1058
          %v1764 = vadd.f32 %v1762, %v1763
          %vm1765 = vcmp.ge.f32.partialorder %v1764, 0.0
          %v1766 = vmul.f32 %v462, %v1764
          %v1767 = vsel %vm1765, %v1764, %v1766
          %s1768 = sadd.s32 %s367, 1248
          %s1769 = scalar_lea.vmem %s324, %s1768 [#allocation10]
          %1770 = vst [vmem:[%s1769] sm:$0xff] %v1767
          %v1771 = vmul.f32 %v1633, %v1066
          %v1772 = vmul.f32 %v1635, %v1068
          %v1773 = vadd.f32 %v1771, %v1772
          %vm1774 = vcmp.ge.f32.partialorder %v1773, 0.0
          %v1775 = vmul.f32 %v462, %v1773
          %v1776 = vsel %vm1774, %v1773, %v1775
          %s1777 = sadd.s32 %s367, 1264
          %s1778 = scalar_lea.vmem %s324, %s1777 [#allocation10]
          %1779 = vst [vmem:[%s1778] sm:$0xff] %v1776
          %vm1780 = vcmp.ge.f32.partialorder %v399, 0.0
          %v1781 = vmul.f32 %v462, %v399
          %v1782 = vsel %vm1780, %v399, %v1781
          %vm1783 = vcmp.ge.f32.partialorder %v402, 0.0
          %v1784 = vmul.f32 %v462, %v402
          %v1785 = vsel %vm1783, %v402, %v1784
          %v1786 = vld [vmem:[%s701] sm:$0xff]
          %v1787 = vmul.f32 %v1786, %v464
          %v1788 = vmul.f32 %v1786, %v467
          %v1789 = vld [vmem:[%s706] sm:$0xff]
          %v1790 = vmul.f32 %v1789, %v516
          %v1791 = vadd.f32 %v1787, %v1790
          %v1792 = vmul.f32 %v1789, %v519
          %v1793 = vadd.f32 %v1788, %v1792
          %v1794 = vld [vmem:[%s713] sm:$0xff]
          %v1795 = vmul.f32 %v1794, %v576
          %v1796 = vadd.f32 %v1791, %v1795
          %v1797 = vmul.f32 %v1794, %v579
          %v1798 = vadd.f32 %v1793, %v1797
          %v1799 = vld [vmem:[%s720] sm:$0xff]
          %v1800 = vmul.f32 %v1799, %v636
          %v1801 = vadd.f32 %v1796, %v1800
          %v1802 = vmul.f32 %v1799, %v639
          %v1803 = vadd.f32 %v1798, %v1802
          %v1804 = vld [vmem:[%s727] sm:$0xff]
          %v1805 = vmul.f32 %v1804, %v696
          %v1806 = vadd.f32 %v1801, %v1805
          %v1807 = vmul.f32 %v1804, %v699
          %v1808 = vadd.f32 %v1803, %v1807
          %v1809 = vld [vmem:[%s734] sm:$0xff]
          %v1810 = vmul.f32 %v1809, %v1782
          %v1811 = vadd.f32 %v1806, %v1810
          %v1812 = vmul.f32 %v1809, %v1785
          %v1813 = vadd.f32 %v1808, %v1812
          %v1814 = vld [vmem:[%s741] sm:$0xff]
          %v1815 = vmul.f32 %v1814, %v816
          %v1816 = vadd.f32 %v1811, %v1815
          %v1817 = vmul.f32 %v1814, %v819
          %v1818 = vadd.f32 %v1813, %v1817
          %v1819 = vld [vmem:[%s748] sm:$0xff]
          %v1820 = vmul.f32 %v1819, %v876
          %v1821 = vadd.f32 %v1816, %v1820
          %v1822 = vmul.f32 %v1819, %v879
          %v1823 = vadd.f32 %v1818, %v1822
          %v1824 = vmul.f32 %v1821, %v916
          %v1825 = vmul.f32 %v1823, %v918
          %v1826 = vadd.f32 %v1824, %v1825
          %vm1827 = vcmp.ge.f32.partialorder %v1826, 0.0
          %v1828 = vmul.f32 %v462, %v1826
          %v1829 = vsel %vm1827, %v1826, %v1828
          %s1830 = sadd.s32 %s367, 1280
          %s1831 = scalar_lea.vmem %s324, %s1830 [#allocation10]
          %1832 = vst [vmem:[%s1831] sm:$0xff] %v1829
          %v1833 = vmul.f32 %v1821, %v926
          %v1834 = vmul.f32 %v1823, %v928
          %v1835 = vadd.f32 %v1833, %v1834
          %vm1836 = vcmp.ge.f32.partialorder %v1835, 0.0
          %v1837 = vmul.f32 %v462, %v1835
          %v1838 = vsel %vm1836, %v1835, %v1837
          %s1839 = sadd.s32 %s367, 1296
          %s1840 = scalar_lea.vmem %s324, %s1839 [#allocation10]
          %1841 = vst [vmem:[%s1840] sm:$0xff] %v1838
          %v1842 = vmul.f32 %v1821, %v936
          %v1843 = vmul.f32 %v1823, %v938
          %v1844 = vadd.f32 %v1842, %v1843
          %vm1845 = vcmp.ge.f32.partialorder %v1844, 0.0
          %v1846 = vmul.f32 %v462, %v1844
          %v1847 = vsel %vm1845, %v1844, %v1846
          %s1848 = sadd.s32 %s367, 1312
          %s1849 = scalar_lea.vmem %s324, %s1848 [#allocation10]
          %1850 = vst [vmem:[%s1849] sm:$0xff] %v1847
          %v1851 = vmul.f32 %v1821, %v946
          %v1852 = vmul.f32 %v1823, %v948
          %v1853 = vadd.f32 %v1851, %v1852
          %vm1854 = vcmp.ge.f32.partialorder %v1853, 0.0
          %v1855 = vmul.f32 %v462, %v1853
          %v1856 = vsel %vm1854, %v1853, %v1855
          %s1857 = sadd.s32 %s367, 1328
          %s1858 = scalar_lea.vmem %s324, %s1857 [#allocation10]
          %1859 = vst [vmem:[%s1858] sm:$0xff] %v1856
          %v1860 = vmul.f32 %v1821, %v956
          %v1861 = vmul.f32 %v1823, %v958
          %v1862 = vadd.f32 %v1860, %v1861
          %vm1863 = vcmp.ge.f32.partialorder %v1862, 0.0
          %v1864 = vmul.f32 %v462, %v1862
          %v1865 = vsel %vm1863, %v1862, %v1864
          %s1866 = sadd.s32 %s367, 1344
          %s1867 = scalar_lea.vmem %s324, %s1866 [#allocation10]
          %1868 = vst [vmem:[%s1867] sm:$0xff] %v1865
          %v1869 = vmul.f32 %v1821, %v966
          %v1870 = vmul.f32 %v1823, %v968
          %v1871 = vadd.f32 %v1869, %v1870
          %vm1872 = vcmp.ge.f32.partialorder %v1871, 0.0
          %v1873 = vmul.f32 %v462, %v1871
          %v1874 = vsel %vm1872, %v1871, %v1873
          %s1875 = sadd.s32 %s367, 1360
          %s1876 = scalar_lea.vmem %s324, %s1875 [#allocation10]
          %1877 = vst [vmem:[%s1876] sm:$0xff] %v1874
          %v1878 = vmul.f32 %v1821, %v976
          %v1879 = vmul.f32 %v1823, %v978
          %v1880 = vadd.f32 %v1878, %v1879
          %vm1881 = vcmp.ge.f32.partialorder %v1880, 0.0
          %v1882 = vmul.f32 %v462, %v1880
          %v1883 = vsel %vm1881, %v1880, %v1882
          %s1884 = sadd.s32 %s367, 1376
          %s1885 = scalar_lea.vmem %s324, %s1884 [#allocation10]
          %1886 = vst [vmem:[%s1885] sm:$0xff] %v1883
          %v1887 = vmul.f32 %v1821, %v986
          %v1888 = vmul.f32 %v1823, %v988
          %v1889 = vadd.f32 %v1887, %v1888
          %vm1890 = vcmp.ge.f32.partialorder %v1889, 0.0
          %v1891 = vmul.f32 %v462, %v1889
          %v1892 = vsel %vm1890, %v1889, %v1891
          %s1893 = sadd.s32 %s367, 1392
          %s1894 = scalar_lea.vmem %s324, %s1893 [#allocation10]
          %1895 = vst [vmem:[%s1894] sm:$0xff] %v1892
          %v1896 = vmul.f32 %v1821, %v996
          %v1897 = vmul.f32 %v1823, %v998
          %v1898 = vadd.f32 %v1896, %v1897
          %vm1899 = vcmp.ge.f32.partialorder %v1898, 0.0
          %v1900 = vmul.f32 %v462, %v1898
          %v1901 = vsel %vm1899, %v1898, %v1900
          %s1902 = sadd.s32 %s367, 1408
          %s1903 = scalar_lea.vmem %s324, %s1902 [#allocation10]
          %1904 = vst [vmem:[%s1903] sm:$0xff] %v1901
          %v1905 = vmul.f32 %v1821, %v1006
          %v1906 = vmul.f32 %v1823, %v1008
          %v1907 = vadd.f32 %v1905, %v1906
          %vm1908 = vcmp.ge.f32.partialorder %v1907, 0.0
          %v1909 = vmul.f32 %v462, %v1907
          %v1910 = vsel %vm1908, %v1907, %v1909
          %s1911 = sadd.s32 %s367, 1424
          %s1912 = scalar_lea.vmem %s324, %s1911 [#allocation10]
          %1913 = vst [vmem:[%s1912] sm:$0xff] %v1910
          %v1914 = vmul.f32 %v1821, %v1016
          %v1915 = vmul.f32 %v1823, %v1018
          %v1916 = vadd.f32 %v1914, %v1915
          %vm1917 = vcmp.ge.f32.partialorder %v1916, 0.0
          %v1918 = vmul.f32 %v462, %v1916
          %v1919 = vsel %vm1917, %v1916, %v1918
          %s1920 = sadd.s32 %s367, 1440
          %s1921 = scalar_lea.vmem %s324, %s1920 [#allocation10]
          %1922 = vst [vmem:[%s1921] sm:$0xff] %v1919
          %v1923 = vmul.f32 %v1821, %v1026
          %v1924 = vmul.f32 %v1823, %v1028
          %v1925 = vadd.f32 %v1923, %v1924
          %vm1926 = vcmp.ge.f32.partialorder %v1925, 0.0
          %v1927 = vmul.f32 %v462, %v1925
          %v1928 = vsel %vm1926, %v1925, %v1927
          %s1929 = sadd.s32 %s367, 1456
          %s1930 = scalar_lea.vmem %s324, %s1929 [#allocation10]
          %1931 = vst [vmem:[%s1930] sm:$0xff] %v1928
          %v1932 = vmul.f32 %v1821, %v1036
          %v1933 = vmul.f32 %v1823, %v1038
          %v1934 = vadd.f32 %v1932, %v1933
          %vm1935 = vcmp.ge.f32.partialorder %v1934, 0.0
          %v1936 = vmul.f32 %v462, %v1934
          %v1937 = vsel %vm1935, %v1934, %v1936
          %s1938 = sadd.s32 %s367, 1472
          %s1939 = scalar_lea.vmem %s324, %s1938 [#allocation10]
          %1940 = vst [vmem:[%s1939] sm:$0xff] %v1937
          %v1941 = vmul.f32 %v1821, %v1046
          %v1942 = vmul.f32 %v1823, %v1048
          %v1943 = vadd.f32 %v1941, %v1942
          %vm1944 = vcmp.ge.f32.partialorder %v1943, 0.0
          %v1945 = vmul.f32 %v462, %v1943
          %v1946 = vsel %vm1944, %v1943, %v1945
          %s1947 = sadd.s32 %s367, 1488
          %s1948 = scalar_lea.vmem %s324, %s1947 [#allocation10]
          %1949 = vst [vmem:[%s1948] sm:$0xff] %v1946
          %v1950 = vmul.f32 %v1821, %v1056
          %v1951 = vmul.f32 %v1823, %v1058
          %v1952 = vadd.f32 %v1950, %v1951
          %vm1953 = vcmp.ge.f32.partialorder %v1952, 0.0
          %v1954 = vmul.f32 %v462, %v1952
          %v1955 = vsel %vm1953, %v1952, %v1954
          %s1956 = sadd.s32 %s367, 1504
          %s1957 = scalar_lea.vmem %s324, %s1956 [#allocation10]
          %1958 = vst [vmem:[%s1957] sm:$0xff] %v1955
          %v1959 = vmul.f32 %v1821, %v1066
          %v1960 = vmul.f32 %v1823, %v1068
          %v1961 = vadd.f32 %v1959, %v1960
          %vm1962 = vcmp.ge.f32.partialorder %v1961, 0.0
          %v1963 = vmul.f32 %v462, %v1961
          %v1964 = vsel %vm1962, %v1961, %v1963
          %s1965 = sadd.s32 %s367, 1520
          %s1966 = scalar_lea.vmem %s324, %s1965 [#allocation10]
          %1967 = vst [vmem:[%s1966] sm:$0xff] %v1964
          %vm1968 = vcmp.ge.f32.partialorder %v405, 0.0
          %v1969 = vmul.f32 %v462, %v405
          %v1970 = vsel %vm1968, %v405, %v1969
          %vm1971 = vcmp.ge.f32.partialorder %v408, 0.0
          %v1972 = vmul.f32 %v462, %v408
          %v1973 = vsel %vm1971, %v408, %v1972
          %v1974 = vld [vmem:[%s761] sm:$0xff]
          %v1975 = vmul.f32 %v1974, %v464
          %v1976 = vmul.f32 %v1974, %v467
          %v1977 = vld [vmem:[%s766] sm:$0xff]
          %v1978 = vmul.f32 %v1977, %v516
          %v1979 = vadd.f32 %v1975, %v1978
          %v1980 = vmul.f32 %v1977, %v519
          %v1981 = vadd.f32 %v1976, %v1980
          %v1982 = vld [vmem:[%s773] sm:$0xff]
          %v1983 = vmul.f32 %v1982, %v576
          %v1984 = vadd.f32 %v1979, %v1983
          %v1985 = vmul.f32 %v1982, %v579
          %v1986 = vadd.f32 %v1981, %v1985
          %v1987 = vld [vmem:[%s780] sm:$0xff]
          %v1988 = vmul.f32 %v1987, %v636
          %v1989 = vadd.f32 %v1984, %v1988
          %v1990 = vmul.f32 %v1987, %v639
          %v1991 = vadd.f32 %v1986, %v1990
          %v1992 = vld [vmem:[%s787] sm:$0xff]
          %v1993 = vmul.f32 %v1992, %v696
          %v1994 = vadd.f32 %v1989, %v1993
          %v1995 = vmul.f32 %v1992, %v699
          %v1996 = vadd.f32 %v1991, %v1995
          %v1997 = vld [vmem:[%s794] sm:$0xff]
          %v1998 = vmul.f32 %v1997, %v756
          %v1999 = vadd.f32 %v1994, %v1998
          %v2000 = vmul.f32 %v1997, %v759
          %v2001 = vadd.f32 %v1996, %v2000
          %v2002 = vld [vmem:[%s801] sm:$0xff]
          %v2003 = vmul.f32 %v2002, %v1970
          %v2004 = vadd.f32 %v1999, %v2003
          %v2005 = vmul.f32 %v2002, %v1973
          %v2006 = vadd.f32 %v2001, %v2005
          %v2007 = vld [vmem:[%s808] sm:$0xff]
          %v2008 = vmul.f32 %v2007, %v876
          %v2009 = vadd.f32 %v2004, %v2008
          %v2010 = vmul.f32 %v2007, %v879
          %v2011 = vadd.f32 %v2006, %v2010
          %v2012 = vmul.f32 %v2009, %v916
          %v2013 = vmul.f32 %v2011, %v918
          %v2014 = vadd.f32 %v2012, %v2013
          %vm2015 = vcmp.ge.f32.partialorder %v2014, 0.0
          %v2016 = vmul.f32 %v462, %v2014
          %v2017 = vsel %vm2015, %v2014, %v2016
          %s2018 = sadd.s32 %s367, 1536
          %s2019 = scalar_lea.vmem %s324, %s2018 [#allocation10]
          %2020 = vst [vmem:[%s2019] sm:$0xff] %v2017
          %v2021 = vmul.f32 %v2009, %v926
          %v2022 = vmul.f32 %v2011, %v928
          %v2023 = vadd.f32 %v2021, %v2022
          %vm2024 = vcmp.ge.f32.partialorder %v2023, 0.0
          %v2025 = vmul.f32 %v462, %v2023
          %v2026 = vsel %vm2024, %v2023, %v2025
          %s2027 = sadd.s32 %s367, 1552
          %s2028 = scalar_lea.vmem %s324, %s2027 [#allocation10]
          %2029 = vst [vmem:[%s2028] sm:$0xff] %v2026
          %v2030 = vmul.f32 %v2009, %v936
          %v2031 = vmul.f32 %v2011, %v938
          %v2032 = vadd.f32 %v2030, %v2031
          %vm2033 = vcmp.ge.f32.partialorder %v2032, 0.0
          %v2034 = vmul.f32 %v462, %v2032
          %v2035 = vsel %vm2033, %v2032, %v2034
          %s2036 = sadd.s32 %s367, 1568
          %s2037 = scalar_lea.vmem %s324, %s2036 [#allocation10]
          %2038 = vst [vmem:[%s2037] sm:$0xff] %v2035
          %v2039 = vmul.f32 %v2009, %v946
          %v2040 = vmul.f32 %v2011, %v948
          %v2041 = vadd.f32 %v2039, %v2040
          %vm2042 = vcmp.ge.f32.partialorder %v2041, 0.0
          %v2043 = vmul.f32 %v462, %v2041
          %v2044 = vsel %vm2042, %v2041, %v2043
          %s2045 = sadd.s32 %s367, 1584
          %s2046 = scalar_lea.vmem %s324, %s2045 [#allocation10]
          %2047 = vst [vmem:[%s2046] sm:$0xff] %v2044
          %v2048 = vmul.f32 %v2009, %v956
          %v2049 = vmul.f32 %v2011, %v958
          %v2050 = vadd.f32 %v2048, %v2049
          %vm2051 = vcmp.ge.f32.partialorder %v2050, 0.0
          %v2052 = vmul.f32 %v462, %v2050
          %v2053 = vsel %vm2051, %v2050, %v2052
          %s2054 = sadd.s32 %s367, 1600
          %s2055 = scalar_lea.vmem %s324, %s2054 [#allocation10]
          %2056 = vst [vmem:[%s2055] sm:$0xff] %v2053
          %v2057 = vmul.f32 %v2009, %v966
          %v2058 = vmul.f32 %v2011, %v968
          %v2059 = vadd.f32 %v2057, %v2058
          %vm2060 = vcmp.ge.f32.partialorder %v2059, 0.0
          %v2061 = vmul.f32 %v462, %v2059
          %v2062 = vsel %vm2060, %v2059, %v2061
          %s2063 = sadd.s32 %s367, 1616
          %s2064 = scalar_lea.vmem %s324, %s2063 [#allocation10]
          %2065 = vst [vmem:[%s2064] sm:$0xff] %v2062
          %v2066 = vmul.f32 %v2009, %v976
          %v2067 = vmul.f32 %v2011, %v978
          %v2068 = vadd.f32 %v2066, %v2067
          %vm2069 = vcmp.ge.f32.partialorder %v2068, 0.0
          %v2070 = vmul.f32 %v462, %v2068
          %v2071 = vsel %vm2069, %v2068, %v2070
          %s2072 = sadd.s32 %s367, 1632
          %s2073 = scalar_lea.vmem %s324, %s2072 [#allocation10]
          %2074 = vst [vmem:[%s2073] sm:$0xff] %v2071
          %v2075 = vmul.f32 %v2009, %v986
          %v2076 = vmul.f32 %v2011, %v988
          %v2077 = vadd.f32 %v2075, %v2076
          %vm2078 = vcmp.ge.f32.partialorder %v2077, 0.0
          %v2079 = vmul.f32 %v462, %v2077
          %v2080 = vsel %vm2078, %v2077, %v2079
          %s2081 = sadd.s32 %s367, 1648
          %s2082 = scalar_lea.vmem %s324, %s2081 [#allocation10]
          %2083 = vst [vmem:[%s2082] sm:$0xff] %v2080
          %v2084 = vmul.f32 %v2009, %v996
          %v2085 = vmul.f32 %v2011, %v998
          %v2086 = vadd.f32 %v2084, %v2085
          %vm2087 = vcmp.ge.f32.partialorder %v2086, 0.0
          %v2088 = vmul.f32 %v462, %v2086
          %v2089 = vsel %vm2087, %v2086, %v2088
          %s2090 = sadd.s32 %s367, 1664
          %s2091 = scalar_lea.vmem %s324, %s2090 [#allocation10]
          %2092 = vst [vmem:[%s2091] sm:$0xff] %v2089
          %v2093 = vmul.f32 %v2009, %v1006
          %v2094 = vmul.f32 %v2011, %v1008
          %v2095 = vadd.f32 %v2093, %v2094
          %vm2096 = vcmp.ge.f32.partialorder %v2095, 0.0
          %v2097 = vmul.f32 %v462, %v2095
          %v2098 = vsel %vm2096, %v2095, %v2097
          %s2099 = sadd.s32 %s367, 1680
          %s2100 = scalar_lea.vmem %s324, %s2099 [#allocation10]
          %2101 = vst [vmem:[%s2100] sm:$0xff] %v2098
          %v2102 = vmul.f32 %v2009, %v1016
          %v2103 = vmul.f32 %v2011, %v1018
          %v2104 = vadd.f32 %v2102, %v2103
          %vm2105 = vcmp.ge.f32.partialorder %v2104, 0.0
          %v2106 = vmul.f32 %v462, %v2104
          %v2107 = vsel %vm2105, %v2104, %v2106
          %s2108 = sadd.s32 %s367, 1696
          %s2109 = scalar_lea.vmem %s324, %s2108 [#allocation10]
          %2110 = vst [vmem:[%s2109] sm:$0xff] %v2107
          %v2111 = vmul.f32 %v2009, %v1026
          %v2112 = vmul.f32 %v2011, %v1028
          %v2113 = vadd.f32 %v2111, %v2112
          %vm2114 = vcmp.ge.f32.partialorder %v2113, 0.0
          %v2115 = vmul.f32 %v462, %v2113
          %v2116 = vsel %vm2114, %v2113, %v2115
          %s2117 = sadd.s32 %s367, 1712
          %s2118 = scalar_lea.vmem %s324, %s2117 [#allocation10]
          %2119 = vst [vmem:[%s2118] sm:$0xff] %v2116
          %v2120 = vmul.f32 %v2009, %v1036
          %v2121 = vmul.f32 %v2011, %v1038
          %v2122 = vadd.f32 %v2120, %v2121
          %vm2123 = vcmp.ge.f32.partialorder %v2122, 0.0
          %v2124 = vmul.f32 %v462, %v2122
          %v2125 = vsel %vm2123, %v2122, %v2124
          %s2126 = sadd.s32 %s367, 1728
          %s2127 = scalar_lea.vmem %s324, %s2126 [#allocation10]
          %2128 = vst [vmem:[%s2127] sm:$0xff] %v2125
          %v2129 = vmul.f32 %v2009, %v1046
          %v2130 = vmul.f32 %v2011, %v1048
          %v2131 = vadd.f32 %v2129, %v2130
          %vm2132 = vcmp.ge.f32.partialorder %v2131, 0.0
          %v2133 = vmul.f32 %v462, %v2131
          %v2134 = vsel %vm2132, %v2131, %v2133
          %s2135 = sadd.s32 %s367, 1744
          %s2136 = scalar_lea.vmem %s324, %s2135 [#allocation10]
          %2137 = vst [vmem:[%s2136] sm:$0xff] %v2134
          %v2138 = vmul.f32 %v2009, %v1056
          %v2139 = vmul.f32 %v2011, %v1058
          %v2140 = vadd.f32 %v2138, %v2139
          %vm2141 = vcmp.ge.f32.partialorder %v2140, 0.0
          %v2142 = vmul.f32 %v462, %v2140
          %v2143 = vsel %vm2141, %v2140, %v2142
          %s2144 = sadd.s32 %s367, 1760
          %s2145 = scalar_lea.vmem %s324, %s2144 [#allocation10]
          %2146 = vst [vmem:[%s2145] sm:$0xff] %v2143
          %v2147 = vmul.f32 %v2009, %v1066
          %v2148 = vmul.f32 %v2011, %v1068
          %v2149 = vadd.f32 %v2147, %v2148
          %vm2150 = vcmp.ge.f32.partialorder %v2149, 0.0
          %v2151 = vmul.f32 %v462, %v2149
          %v2152 = vsel %vm2150, %v2149, %v2151
          %s2153 = sadd.s32 %s367, 1776
          %s2154 = scalar_lea.vmem %s324, %s2153 [#allocation10]
          %2155 = vst [vmem:[%s2154] sm:$0xff] %v2152
          %vm2156 = vcmp.ge.f32.partialorder %v411, 0.0
          %v2157 = vmul.f32 %v462, %v411
          %v2158 = vsel %vm2156, %v411, %v2157
          %vm2159 = vcmp.ge.f32.partialorder %v414, 0.0
          %v2160 = vmul.f32 %v462, %v414
          %v2161 = vsel %vm2159, %v414, %v2160
          %v2162 = vld [vmem:[%s821] sm:$0xff]
          %v2163 = vmul.f32 %v2162, %v464
          %v2164 = vmul.f32 %v2162, %v467
          %v2165 = vld [vmem:[%s826] sm:$0xff]
          %v2166 = vmul.f32 %v2165, %v516
          %v2167 = vadd.f32 %v2163, %v2166
          %v2168 = vmul.f32 %v2165, %v519
          %v2169 = vadd.f32 %v2164, %v2168
          %v2170 = vld [vmem:[%s833] sm:$0xff]
          %v2171 = vmul.f32 %v2170, %v576
          %v2172 = vadd.f32 %v2167, %v2171
          %v2173 = vmul.f32 %v2170, %v579
          %v2174 = vadd.f32 %v2169, %v2173
          %v2175 = vld [vmem:[%s840] sm:$0xff]
          %v2176 = vmul.f32 %v2175, %v636
          %v2177 = vadd.f32 %v2172, %v2176
          %v2178 = vmul.f32 %v2175, %v639
          %v2179 = vadd.f32 %v2174, %v2178
          %v2180 = vld [vmem:[%s847] sm:$0xff]
          %v2181 = vmul.f32 %v2180, %v696
          %v2182 = vadd.f32 %v2177, %v2181
          %v2183 = vmul.f32 %v2180, %v699
          %v2184 = vadd.f32 %v2179, %v2183
          %v2185 = vld [vmem:[%s854] sm:$0xff]
          %v2186 = vmul.f32 %v2185, %v756
          %v2187 = vadd.f32 %v2182, %v2186
          %v2188 = vmul.f32 %v2185, %v759
          %v2189 = vadd.f32 %v2184, %v2188
          %v2190 = vld [vmem:[%s861] sm:$0xff]
          %v2191 = vmul.f32 %v2190, %v816
          %v2192 = vadd.f32 %v2187, %v2191
          %v2193 = vmul.f32 %v2190, %v819
          %v2194 = vadd.f32 %v2189, %v2193
          %v2195 = vld [vmem:[%s868] sm:$0xff]
          %v2196 = vmul.f32 %v2195, %v2158
          %v2197 = vadd.f32 %v2192, %v2196
          %v2198 = vmul.f32 %v2195, %v2161
          %v2199 = vadd.f32 %v2194, %v2198
          %v2200 = vmul.f32 %v2197, %v916
          %v2201 = vmul.f32 %v2199, %v918
          %v2202 = vadd.f32 %v2200, %v2201
          %vm2203 = vcmp.ge.f32.partialorder %v2202, 0.0
          %v2204 = vmul.f32 %v462, %v2202
          %v2205 = vsel %vm2203, %v2202, %v2204
          %s2206 = sadd.s32 %s367, 1792
          %s2207 = scalar_lea.vmem %s324, %s2206 [#allocation10]
          %2208 = vst [vmem:[%s2207] sm:$0xff] %v2205
          %v2209 = vmul.f32 %v2197, %v926
          %v2210 = vmul.f32 %v2199, %v928
          %v2211 = vadd.f32 %v2209, %v2210
          %vm2212 = vcmp.ge.f32.partialorder %v2211, 0.0
          %v2213 = vmul.f32 %v462, %v2211
          %v2214 = vsel %vm2212, %v2211, %v2213
          %s2215 = sadd.s32 %s367, 1808
          %s2216 = scalar_lea.vmem %s324, %s2215 [#allocation10]
          %2217 = vst [vmem:[%s2216] sm:$0xff] %v2214
          %v2218 = vmul.f32 %v2197, %v936
          %v2219 = vmul.f32 %v2199, %v938
          %v2220 = vadd.f32 %v2218, %v2219
          %vm2221 = vcmp.ge.f32.partialorder %v2220, 0.0
          %v2222 = vmul.f32 %v462, %v2220
          %v2223 = vsel %vm2221, %v2220, %v2222
          %s2224 = sadd.s32 %s367, 1824
          %s2225 = scalar_lea.vmem %s324, %s2224 [#allocation10]
          %2226 = vst [vmem:[%s2225] sm:$0xff] %v2223
          %v2227 = vmul.f32 %v2197, %v946
          %v2228 = vmul.f32 %v2199, %v948
          %v2229 = vadd.f32 %v2227, %v2228
          %vm2230 = vcmp.ge.f32.partialorder %v2229, 0.0
          %v2231 = vmul.f32 %v462, %v2229
          %v2232 = vsel %vm2230, %v2229, %v2231
          %s2233 = sadd.s32 %s367, 1840
          %s2234 = scalar_lea.vmem %s324, %s2233 [#allocation10]
          %2235 = vst [vmem:[%s2234] sm:$0xff] %v2232
          %v2236 = vmul.f32 %v2197, %v956
          %v2237 = vmul.f32 %v2199, %v958
          %v2238 = vadd.f32 %v2236, %v2237
          %vm2239 = vcmp.ge.f32.partialorder %v2238, 0.0
          %v2240 = vmul.f32 %v462, %v2238
          %v2241 = vsel %vm2239, %v2238, %v2240
          %s2242 = sadd.s32 %s367, 1856
          %s2243 = scalar_lea.vmem %s324, %s2242 [#allocation10]
          %2244 = vst [vmem:[%s2243] sm:$0xff] %v2241
          %v2245 = vmul.f32 %v2197, %v966
          %v2246 = vmul.f32 %v2199, %v968
          %v2247 = vadd.f32 %v2245, %v2246
          %vm2248 = vcmp.ge.f32.partialorder %v2247, 0.0
          %v2249 = vmul.f32 %v462, %v2247
          %v2250 = vsel %vm2248, %v2247, %v2249
          %s2251 = sadd.s32 %s367, 1872
          %s2252 = scalar_lea.vmem %s324, %s2251 [#allocation10]
          %2253 = vst [vmem:[%s2252] sm:$0xff] %v2250
          %v2254 = vmul.f32 %v2197, %v976
          %v2255 = vmul.f32 %v2199, %v978
          %v2256 = vadd.f32 %v2254, %v2255
          %vm2257 = vcmp.ge.f32.partialorder %v2256, 0.0
          %v2258 = vmul.f32 %v462, %v2256
          %v2259 = vsel %vm2257, %v2256, %v2258
          %s2260 = sadd.s32 %s367, 1888
          %s2261 = scalar_lea.vmem %s324, %s2260 [#allocation10]
          %2262 = vst [vmem:[%s2261] sm:$0xff] %v2259
          %v2263 = vmul.f32 %v2197, %v986
          %v2264 = vmul.f32 %v2199, %v988
          %v2265 = vadd.f32 %v2263, %v2264
          %vm2266 = vcmp.ge.f32.partialorder %v2265, 0.0
          %v2267 = vmul.f32 %v462, %v2265
          %v2268 = vsel %vm2266, %v2265, %v2267
          %s2269 = sadd.s32 %s367, 1904
          %s2270 = scalar_lea.vmem %s324, %s2269 [#allocation10]
          %2271 = vst [vmem:[%s2270] sm:$0xff] %v2268
          %v2272 = vmul.f32 %v2197, %v996
          %v2273 = vmul.f32 %v2199, %v998
          %v2274 = vadd.f32 %v2272, %v2273
          %vm2275 = vcmp.ge.f32.partialorder %v2274, 0.0
          %v2276 = vmul.f32 %v462, %v2274
          %v2277 = vsel %vm2275, %v2274, %v2276
          %s2278 = sadd.s32 %s367, 1920
          %s2279 = scalar_lea.vmem %s324, %s2278 [#allocation10]
          %2280 = vst [vmem:[%s2279] sm:$0xff] %v2277
          %v2281 = vmul.f32 %v2197, %v1006
          %v2282 = vmul.f32 %v2199, %v1008
          %v2283 = vadd.f32 %v2281, %v2282
          %vm2284 = vcmp.ge.f32.partialorder %v2283, 0.0
          %v2285 = vmul.f32 %v462, %v2283
          %v2286 = vsel %vm2284, %v2283, %v2285
          %s2287 = sadd.s32 %s367, 1936
          %s2288 = scalar_lea.vmem %s324, %s2287 [#allocation10]
          %2289 = vst [vmem:[%s2288] sm:$0xff] %v2286
          %v2290 = vmul.f32 %v2197, %v1016
          %v2291 = vmul.f32 %v2199, %v1018
          %v2292 = vadd.f32 %v2290, %v2291
          %vm2293 = vcmp.ge.f32.partialorder %v2292, 0.0
          %v2294 = vmul.f32 %v462, %v2292
          %v2295 = vsel %vm2293, %v2292, %v2294
          %s2296 = sadd.s32 %s367, 1952
          %s2297 = scalar_lea.vmem %s324, %s2296 [#allocation10]
          %2298 = vst [vmem:[%s2297] sm:$0xff] %v2295
          %v2299 = vmul.f32 %v2197, %v1026
          %v2300 = vmul.f32 %v2199, %v1028
          %v2301 = vadd.f32 %v2299, %v2300
          %vm2302 = vcmp.ge.f32.partialorder %v2301, 0.0
          %v2303 = vmul.f32 %v462, %v2301
          %v2304 = vsel %vm2302, %v2301, %v2303
          %s2305 = sadd.s32 %s367, 1968
          %s2306 = scalar_lea.vmem %s324, %s2305 [#allocation10]
          %2307 = vst [vmem:[%s2306] sm:$0xff] %v2304
          %v2308 = vmul.f32 %v2197, %v1036
          %v2309 = vmul.f32 %v2199, %v1038
          %v2310 = vadd.f32 %v2308, %v2309
          %vm2311 = vcmp.ge.f32.partialorder %v2310, 0.0
          %v2312 = vmul.f32 %v462, %v2310
          %v2313 = vsel %vm2311, %v2310, %v2312
          %s2314 = sadd.s32 %s367, 1984
          %s2315 = scalar_lea.vmem %s324, %s2314 [#allocation10]
          %2316 = vst [vmem:[%s2315] sm:$0xff] %v2313
          %v2317 = vmul.f32 %v2197, %v1046
          %v2318 = vmul.f32 %v2199, %v1048
          %v2319 = vadd.f32 %v2317, %v2318
          %vm2320 = vcmp.ge.f32.partialorder %v2319, 0.0
          %v2321 = vmul.f32 %v462, %v2319
          %v2322 = vsel %vm2320, %v2319, %v2321
          %s2323 = sadd.s32 %s367, 2000
          %s2324 = scalar_lea.vmem %s324, %s2323 [#allocation10]
          %2325 = vst [vmem:[%s2324] sm:$0xff] %v2322
          %v2326 = vmul.f32 %v2197, %v1056
          %v2327 = vmul.f32 %v2199, %v1058
          %v2328 = vadd.f32 %v2326, %v2327
          %vm2329 = vcmp.ge.f32.partialorder %v2328, 0.0
          %v2330 = vmul.f32 %v462, %v2328
          %v2331 = vsel %vm2329, %v2328, %v2330
          %s2332 = sadd.s32 %s367, 2016
          %s2333 = scalar_lea.vmem %s324, %s2332 [#allocation10]
          %2334 = vst [vmem:[%s2333] sm:$0xff] %v2331
          %v2335 = vmul.f32 %v2197, %v1066
          %v2336 = vmul.f32 %v2199, %v1068
          %v2337 = vadd.f32 %v2335, %v2336
          %vm2338 = vcmp.ge.f32.partialorder %v2337, 0.0
          %v2339 = vmul.f32 %v462, %v2337
          %v2340 = vsel %vm2338, %v2337, %v2339
          %s2341 = sadd.s32 %s367, 2032
          %s2342 = scalar_lea.vmem %s324, %s2341 [#allocation10]
          %2343 = vst [vmem:[%s2342] sm:$0xff] %v2340
        $region53: #{tpu_custom_call.1} parent=35 // loop_footer
          %s366 = sadd.s32 1, %s362
        $region54: #{tpu_custom_call.1} parent=35 // loop_footer_branch
          %361 = sbr.rel target = $region50
        $region55: #{tpu_custom_call.1} parent=35 // loop_exit
          _
        %s2344 = sand.u32 %s128, 1
        %s2345 = scalar_lea.sflag [#allocation5], %s2344
        %s2346 = sand.u32 %s128, 1
        %s2347 = smul.addr %s2346, 2048
        %s2348 = scalar_lea.vmem [#allocation10], %s2347
        // Predicated region
        $region56: #{tpu_custom_call.1} parent=35 // pred_check
          %p2349 = pneg %p138
        $region57: #{tpu_custom_call.1} parent=35 // pred_check_branch
          %2351 = sbr.rel (%p2349) target = $region59
        $region58: #{tpu_custom_call.1} parent=35 // pred_region
          #allocation16 [shape = 'u32[6]{0}', space=smem, size = 0x18, scoped, tag = 'DMA stride descriptor']
          %s2352 = smul.u32 2, %s26
          %2354 = vsyncadd %s2345, 0
          %s2355 = smul.addr %s2352, 8
          %s2356 = scalar_lea.hbm %s4, %s2355
          %s2358 = sshll.u32 1, 14
          %s2359 = sxor.u32 4294967295, %s2358
          %s2362 = sshll.u32 7, 18
          %s2363 = sxor.u32 4294967295, %s2362
          %s2364 = sand.u32 0, %s2363
          %s2366 = sor.u32 %s2364, 0
          %s2367 = sshll.u32 %s2348, 4
          %s2368 = int_to_ptr.vmem [resolvable:$true] %s2367
          %s2369 = sshll.u32 %s2356, 4
          %s2370 = int_to_ptr.hbm [resolvable:$true] %s2369
          %2376 = sst [smem:[#allocation16]] 256
          %s2377 = scalar_lea.smem [#allocation16], 1
          %2378 = sst [smem:[%s2377]] 512
          %s2379 = scalar_lea.smem [#allocation16], 2
          %2380 = sst [smem:[%s2379]] 2
          %s2381 = scalar_lea.smem [#allocation16], 3
          %2382 = sst [smem:[%s2381]] 128
          %s2383 = scalar_lea.smem [#allocation16], 4
          %2384 = sst [smem:[%s2383]] 128
          %s2385 = scalar_lea.smem [#allocation16], 5
          %2386 = sst [smem:[%s2385]] 8
          %2388 = dma.general %s2368, 32768, %s2370, %s2345, [#allocation15], [#allocation16], %s2366, 0
        $region59: #{tpu_custom_call.1} parent=35 // pred_fallthru
          _
      $region36: #{tpu_custom_call.1} parent=5 // pred_fallthru
        _
      %p2389 = scmp.le.s32.totalorder 2, %s21
      // Predicated region
      $region60: #{tpu_custom_call.1} parent=5 // pred_check
        %p2390 = pneg %p2389
      $region61: #{tpu_custom_call.1} parent=5 // pred_check_branch
        %2392 = sbr.rel (%p2390) target = $region63
      $region62: #{tpu_custom_call.1} parent=5 // pred_region
        %s2393 = ssub.s32 %s21, 2
        // Predicated region
        $region64: #{tpu_custom_call.1} parent=62 // pred_check
          %p2394 = pneg %p144
        $region65: #{tpu_custom_call.1} parent=62 // pred_check_branch
          %2396 = sbr.rel (%p2394) target = $region67
        $region66: #{tpu_custom_call.1} parent=62 // pred_region
          %s2397 = sand.u32 %s129, 1
          %s2398 = scalar_lea.sflag [#allocation5], %s2397
          %s2399 = sand.u32 %s129, 1
          %s2400 = smul.addr %s2399, 2048
          %s2401 = scalar_lea.vmem [#allocation10], %s2400
          %2403 = dma.done %s2398, 32768
        $region67: #{tpu_custom_call.1} parent=62 // pred_fallthru
          _
      $region63: #{tpu_custom_call.1} parent=5 // pred_fallthru
        _
    $region6: #{tpu_custom_call.1} parent=1 // loop_footer
      %s25 = sadd.s32 1, %s21
    $region7: #{tpu_custom_call.1} parent=1 // loop_footer_branch
      %20 = sbr.rel target = $region3
    $region8: #{tpu_custom_call.1} parent=1 // loop_exit
      _
    %2404 = vsyncpa [#allocation4], 1
    %s2405 = scalar_lea.sflag [#allocation4], 1
    %2406 = vsyncpa %s2405, 1
    %2407 = vsyncpa [#allocation9], 1
    %s2408 = scalar_lea.sflag [#allocation9], 1
    %2409 = vsyncpa %s2408, 1
    %2410 = vsyncpa [#allocation5], 1
    %s2411 = scalar_lea.sflag [#allocation5], 1
    %2412 = vsyncpa %s2411, 1
    %2413 = vsyncpa [#allocation6], 1
    %s2414 = scalar_lea.sflag [#allocation6], 1
    %2415 = vsyncpa %s2414, 1

</llo_original>
